<compile_context>
chip_gen: v6e
topology: v6e:2x2x1
jax: 0.10.0
libtpu: 0.0.40
codegen_flags: <defaults>
</compile_context>

<pallas_src>
import jax
import jax.numpy as jnp
from jax import lax
from jax.experimental import pallas as pl
from jax.experimental.pallas import tpu as pltpu

# EEGNet hyper-parameters (same names/values as the PyTorch module)
D_MULT = 2
F1 = 8
F2 = 16
KL2 = 16                    # second (depthwise) temporal kernel length
LANES = 128
HIGHEST = lax.Precision.HIGHEST


def final_conv_length_auto(T, KL):
    """Replicates the 'auto' computation of final_conv_length analytically."""
    T1 = T + 2 * (KL // 2) - KL + 1          # after conv1 (1 x KL, pad KL//2)
    W3 = T1 // 4                             # after AvgPool (1,4)
    W5 = W3 + 2 * (KL2 // 2) - KL2 + 1       # after depthwise conv (1x16, pad 8)
    return W5 // 8                           # after AvgPool (1,8)


def _round_up(n, m):
    return ((n + m - 1) // m) * m


def _derive_dims(B, C, T, KL, n_classes, n_lin):
    pad1 = KL // 2
    Tpad = T + 2 * pad1
    T1 = Tpad - KL + 1
    W3 = T1 // 4
    Y_W = 4 * W3                              # pre-pool4 width actually used
    PAD2 = KL2 // 2
    W5 = W3 + 2 * PAD2 - KL2 + 1
    Wf = W5 // 8
    V_W = 8 * Wf                              # pre-pool8 width actually used
    F1D = F1 * D_MULT
    feat_dim = F2 * Wf
    TS = _round_up(Tpad, LANES)               # 128-aligned per-batch time stride
    PS = _round_up(W3 + 2 * PAD2, 32)         # per-batch stride of padded pooled buf
    OUT_W = _round_up(n_classes + feat_dim + n_lin, LANES)
    assert feat_dim <= LANES and n_lin <= LANES and n_classes <= LANES
    return dict(B=B, C=C, T=T, KL=KL, pad1=pad1, Tpad=Tpad, W3=W3, Y_W=Y_W,
                PAD2=PAD2, Wf=Wf, V_W=V_W, F1D=F1D, feat_dim=feat_dim,
                TS=TS, PS=PS, OUT_W=OUT_W, n_classes=n_classes, n_lin=n_lin)


def _build_param_slab(p, dims):
    """Fold BN into the conv weights and pack everything into one (R,128) slab."""
    d = dims
    F1D, C, KL = d['F1D'], d['C'], d['KL']
    W3, Y_W, V_W, Wf = d['W3'], d['Y_W'], d['V_W'], d['Wf']
    g = jnp.arange(F1D) // D_MULT                               # owning F1 group

    w1mat = p['w1'].reshape(F1, KL)
    w2mat = p['w2'].reshape(F1D, C)
    w5mat = p['w5'].reshape(F1D, KL2)
    w6mat = p['w6'].reshape(F2, F1D)

    # conv1 temporal taps with BN1 and BN2 scales folded in
    wt = (p['bn2_scale'] * p['bn1_scale'][g])[:, None] * w1mat[g]       # (F1D, KL)
    # BN1 shift propagated through the spatial conv, folded with BN2 shift
    sh1 = (p['bn2_shift'] +
           p['bn2_scale'] * p['bn1_shift'][g] * jnp.sum(w2mat, axis=1))[:, None]
    w6s = p['bn3_scale'][:, None] * w6mat                               # (F2, F1D)
    sh3 = p['bn3_shift'][:, None]                                       # (F2, 1)

    # AvgPool(1,4) as a matmul
    p4 = jax.nn.one_hot(jnp.arange(Y_W) // 4, W3, dtype=jnp.float32) / 4.0
    # AvgPool(1,8) fused with the lane-replication used for the f-major flatten
    p8 = jax.nn.one_hot(jnp.arange(V_W) // 8, Wf, dtype=jnp.float32) / 8.0
    p8r = jnp.tile(p8, (1, F2))                                         # (V_W, F2*Wf)
    # mask selecting row f for output lanes [f*Wf, (f+1)*Wf)
    msk = jnp.repeat(jnp.eye(F2, dtype=jnp.float32), Wf, axis=1)        # (F2, F2*Wf)

    entries = [
        ('w2',  w2mat), ('wt',  wt), ('sh1', sh1), ('w5',  w5mat),
        ('w6s', w6s), ('sh3', sh3), ('p4',  p4), ('p8r', p8r), ('msk', msk),
        ('wct', p['wc'].T), ('bc', p['bc'][None, :]),
        ('wlt', p['wl'].T), ('bl', p['bl'][None, :]),
    ]
    layout, rows, r = {}, [], 0
    for name, arr in entries:
        arr = jnp.asarray(arr, jnp.float32)
        nr, nc = arr.shape
        assert nc <= LANES
        layout[name] = (r, nr, nc)
        rows.append(jnp.pad(arr, ((0, 0), (0, LANES - nc))))
        r += nr
    total = _round_up(r, 8)
    slab = jnp.concatenate(rows, axis=0)
    slab = jnp.pad(slab, ((0, total - r), (0, 0)))
    return slab, layout


def make_fused_kernel(dims, layout):
    B, KL = dims['B'], dims['KL']
    F1D, TS, PS, PAD2 = dims['F1D'], dims['TS'], dims['PS'], dims['PAD2']
    Y_W, W3, V_W = dims['Y_W'], dims['W3'], dims['V_W']
    feat_dim, n_classes, n_lin, OUT_W = (dims['feat_dim'], dims['n_classes'],
                                         dims['n_lin'], dims['OUT_W'])
    pad_cols = OUT_W - (n_classes + feat_dim + n_lin)

    def ld(ref, name):
        r0, nr, nc = layout[name]
        return ref[r0:r0 + nr, 0:nc]

    def elu(a):
        # TODO(synk): torch elu uses expm1; exp(min(a,0))-1 is equivalent well
        # within the test tolerance and is a proven Mosaic lowering.
        return jnp.where(a > 0, a, jnp.exp(jnp.minimum(a, 0.0)) - 1.0)

    def dot(a, b):
        return jnp.dot(a, b, preferred_element_type=jnp.float32, precision=HIGHEST)

    def kernel(x_ref, prm_ref, out_ref, u_scr, pp_scr):
        # ---- stage A: spatial (EEG-channel) contraction on the MXU; batch and
        #      time share the lane axis, so N is long and there is no kron ----
        w2 = ld(prm_ref, 'w2')                                   # (F1D, C)
        u_scr[...] = dot(w2, x_ref[...])                         # (F1D, B*TS)

        wt = ld(prm_ref, 'wt')                                   # (F1D, KL)
        sh1 = ld(prm_ref, 'sh1')                                 # (F1D, 1)
        p4 = ld(prm_ref, 'p4')                                   # (Y_W, W3)
        w5 = ld(prm_ref, 'w5')                                   # (F1D, KL2)
        pp_scr[...] = jnp.zeros((F1D, B * PS), jnp.float32)

        # ---- stages B-D per batch (static unroll; batch is on lanes) ----
        v_parts = []
        for b in range(B):
            base = b * TS
            # temporal conv (1 x KL) with BN1*BN2 folded into the taps; shifted
            # windows are loaded from the VMEM scratch ref (vld, not XLU rotates)
            y = jnp.zeros((F1D, Y_W), jnp.float32)
            for k in range(KL):
                y = y + wt[:, k:k + 1] * u_scr[:, base + k:base + k + Y_W]
            y = elu(y + sh1)
            pooled = dot(y, p4)                                  # AvgPool(1,4) on MXU
            # Dropout(p=0.25): identity in inference
            pb = b * PS
            pp_scr[:, pb + PAD2:pb + PAD2 + W3] = pooled
            # depthwise temporal conv (1 x 16), padding 8 (zeros pre-staged)
            vb = jnp.zeros((F1D, V_W), jnp.float32)
            for k in range(KL2):
                vb = vb + w5[:, k:k + 1] * pp_scr[:, pb + k:pb + k + V_W]
            v_parts.append(vb)
        v = jnp.concatenate(v_parts, axis=1) if B > 1 else v_parts[0]  # (F1D, B*V_W)

        # ---- stage E: pointwise 1x1 conv with BN3 scale folded (MXU) + ELU ----
        w6s = ld(prm_ref, 'w6s')
        sh3 = ld(prm_ref, 'sh3')
        z = elu(dot(w6s, v) + sh3)                               # (F2, B*V_W)

        # ---- stage F/G: AvgPool(1,8) + f-major flatten via matmul + mask,
        #      two Linear heads, one lane-dense packed output write ----
        p8r = ld(prm_ref, 'p8r')                                 # (V_W, F2*Wf)
        msk = ld(prm_ref, 'msk')                                 # (F2, F2*Wf)
        wct = ld(prm_ref, 'wct')                                 # (feat_dim, n_classes)
        bc = ld(prm_ref, 'bc')                                   # (1, n_classes)
        wlt = ld(prm_ref, 'wlt')                                 # (feat_dim, n_lin)
        bl = ld(prm_ref, 'bl')                                   # (1, n_lin)
        onesf = jnp.ones((1, F2), jnp.float32)
        for b in range(B):
            zb = z[:, b * V_W:(b + 1) * V_W]                     # (F2, V_W)
            zpx = dot(zb, p8r)                                   # pooled, replicated
            featb = dot(onesf, zpx * msk)                        # (1, feat_dim)
            outb = dot(featb, wct) + bc                          # classifier
            f2b = dot(featb, wlt) + bl                           # linear
            pieces = [outb, featb, f2b]
            if pad_cols:
                pieces.append(jnp.zeros((1, pad_cols), jnp.float32))
            out_ref[b:b + 1, :] = jnp.concatenate(pieces, axis=1)

    return kernel


def eegnet_pallas_forward(x, p):
    """x: (B, in_chans, T, 1) float32 -> (output, feature2, feature)."""
    B, C, T, _ = x.shape
    KL = p['kernel_length']
    n_classes = p['wc'].shape[0]
    n_lin = p['wl'].shape[0]
    dims = _derive_dims(B, C, T, KL, n_classes, n_lin)
    slab, layout = _build_param_slab(p, dims)

    # Input layout: EEG channels on rows, (batch, time) on lanes with a
    # 128-aligned per-batch stride; conv1 zero padding pre-applied.
    TS, pad1, Tpad = dims['TS'], dims['pad1'], dims['Tpad']
    xt = jnp.transpose(x[..., 0], (1, 0, 2))                     # (C, B, T)
    xpad = jnp.pad(xt, ((0, 0), (0, 0), (pad1, pad1 + TS - Tpad)))
    x_all = xpad.reshape(C, B * TS)

    kernel = make_fused_kernel(dims, layout)
    vmem = pl.BlockSpec(memory_space=pltpu.MemorySpace.VMEM)
    out_slab = pl.pallas_call(
        kernel,
        out_shape=jax.ShapeDtypeStruct((B, dims['OUT_W']), jnp.float32),
        in_specs=[vmem, vmem],
        out_specs=vmem,
        scratch_shapes=[pltpu.VMEM((dims['F1D'], B * TS), jnp.float32),
                        pltpu.VMEM((dims['F1D'], B * dims['PS']), jnp.float32)],
    )(x_all, slab)

    nc, fd = n_classes, dims['feat_dim']
    output = out_slab[:, 0:nc]
    feature = out_slab[:, nc:nc + fd]
    feature2 = out_slab[:, nc + fd:nc + fd + n_lin]
    return output, feature2, feature


def init_params(key, in_chans, kernel_length, n_classes, feat_dim):
    ks = jax.random.split(key, 24)
    eps = 1e-3

    def bn(k1, k2, k3, k4, n):
        gamma = 1.0 + 0.1 * jax.random.normal(k1, (n,), jnp.float32)
        beta = 0.1 * jax.random.normal(k2, (n,), jnp.float32)
        mean = 0.1 * jax.random.normal(k3, (n,), jnp.float32)
        var = 1.0 + 0.2 * jnp.abs(jax.random.normal(k4, (n,), jnp.float32))
        scale = gamma / jnp.sqrt(var + eps)
        shift = beta - mean * scale
        return scale, shift

    w1 = 0.2 * jax.random.normal(ks[0], (F1, 1, 1, kernel_length), jnp.float32)
    w2 = 0.5 * jax.random.normal(ks[1], (F1 * D_MULT, 1, in_chans, 1), jnp.float32)
    # Conv2dWithConstraint: renorm(p=2, dim=0, maxnorm=1)
    norms = jnp.sqrt(jnp.sum(w2 * w2, axis=(1, 2, 3), keepdims=True))
    w2 = w2 * jnp.where(norms > 1.0, 1.0 / norms, 1.0)
    w5 = 0.2 * jax.random.normal(ks[2], (F1 * D_MULT, 1, 1, KL2), jnp.float32)
    w6 = 0.3 * jax.random.normal(ks[3], (F2, F1 * D_MULT, 1, 1), jnp.float32)
    bn1_scale, bn1_shift = bn(ks[4], ks[5], ks[6], ks[7], F1)
    bn2_scale, bn2_shift = bn(ks[8], ks[9], ks[10], ks[11], F1 * D_MULT)
    bn3_scale, bn3_shift = bn(ks[12], ks[13], ks[14], ks[15], F2)
    wc = 0.1 * jax.random.normal(ks[16], (n_classes, feat_dim), jnp.float32)
    bc = 0.1 * jax.random.normal(ks[17], (n_classes,), jnp.float32)
    wl = 0.1 * jax.random.normal(ks[18], (128, feat_dim), jnp.float32)
    bl = 0.1 * jax.random.normal(ks[19], (128,), jnp.float32)

    return dict(kernel_length=kernel_length,
                w1=w1, w2=w2, w5=w5, w6=w6,
                bn1_scale=bn1_scale, bn1_shift=bn1_shift,
                bn2_scale=bn2_scale, bn2_shift=bn2_shift,
                bn3_scale=bn3_scale, bn3_shift=bn3_shift,
                wc=wc, bc=bc, wl=wl, bl=bl)


def reference_forward(x, p):
    """Pure-JAX (XLA) reference of the PyTorch forward, inference mode."""
    KL = p['kernel_length']
    dn = ('NCHW', 'OIHW', 'NCHW')
    h = jnp.transpose(x, (0, 3, 1, 2))                          # (B,1,C,T)
    h = lax.conv_general_dilated(h, p['w1'], (1, 1),
                                 ((0, 0), (KL // 2, KL // 2)), dimension_numbers=dn)
    h = h * p['bn1_scale'][None, :, None, None] + p['bn1_shift'][None, :, None, None]
    h = lax.conv_general_dilated(h, p['w2'], (1, 1), ((0, 0), (0, 0)),
                                 dimension_numbers=dn, feature_group_count=F1)
    h = h * p['bn2_scale'][None, :, None, None] + p['bn2_shift'][None, :, None, None]
    h = jnp.where(h > 0, h, jnp.exp(jnp.minimum(h, 0.0)) - 1.0)
    h = lax.reduce_window(h, 0.0, lax.add, (1, 1, 1, 4), (1, 1, 1, 4), 'VALID') / 4.0
    h = lax.conv_general_dilated(h, p['w5'], (1, 1), ((0, 0), (8, 8)),
                                 dimension_numbers=dn, feature_group_count=F1 * D_MULT)
    h = lax.conv_general_dilated(h, p['w6'], (1, 1), ((0, 0), (0, 0)),
                                 dimension_numbers=dn)
    h = h * p['bn3_scale'][None, :, None, None] + p['bn3_shift'][None, :, None, None]
    h = jnp.where(h > 0, h, jnp.exp(jnp.minimum(h, 0.0)) - 1.0)
    h = lax.reduce_window(h, 0.0, lax.add, (1, 1, 1, 8), (1, 1, 1, 8), 'VALID') / 8.0
    feat = h.reshape(h.shape[0], -1)
    out = feat @ p['wc'].T + p['bc']
    f2 = feat @ p['wl'].T + p['bl']
    return out, f2, feat


if __name__ == "__main__":
    B, in_chans, T, KL, n_classes = 2, 4, 128, 16, 4
    Wf = final_conv_length_auto(T, KL)                      # 'auto' final_conv_length
    feat_dim = F2 * Wf

    key = jax.random.PRNGKey(0)
    kx, kp = jax.random.split(key)
    x = jax.random.normal(kx, (B, in_chans, T, 1), jnp.float32)
    params = init_params(kp, in_chans, KL, n_classes, feat_dim)

    with jax.default_matmul_precision("highest"):
        out, feat2, feat = eegnet_pallas_forward(x, params)
        out, feat2, feat = jax.block_until_ready((out, feat2, feat))
        ref_out, ref_feat2, ref_feat = reference_forward(x, params)

    assert out.shape == (B, n_classes)
    assert feat2.shape == (B, 128)
    assert feat.shape == (B, feat_dim)
    assert jnp.allclose(feat, ref_feat, atol=2e-2, rtol=2e-2)
    assert jnp.allclose(out, ref_out, atol=2e-2, rtol=2e-2)
    assert jnp.allclose(feat2, ref_feat2, atol=2e-2, rtol=2e-2)
    print("KERNEL_OK")
</pallas_src>

<mosaic_0001>
module attributes {stable_mosaic.version = 11 : i64} {
  func.func @kernel(%arg0: memref<4x512xf32, #tpu.memory_space<vmem>>, %arg1: memref<408x128xf32, #tpu.memory_space<vmem>>, %arg2: memref<2x256xf32, #tpu.memory_space<vmem>>, %arg3: memref<16x512xf32, #tpu.memory_space<vmem>>, %arg4: memref<16x128xf32, #tpu.memory_space<vmem>>) attributes {dimension_semantics = [], scalar_prefetch = 0 : i64, scratch_operands = 2 : i64, tpu.core_type = #tpu.core_type<tc>} {
    %c0 = arith.constant 0 : index
    %c0_0 = arith.constant 0 : index
    %0 = vector.load %arg1[%c0, %c0_0] : memref<408x128xf32, #tpu.memory_space<vmem>>, vector<16x4xf32>
    %c0_1 = arith.constant 0 : index
    %c0_2 = arith.constant 0 : index
    %1 = vector.load %arg0[%c0_1, %c0_2] : memref<4x512xf32, #tpu.memory_space<vmem>>, vector<4x512xf32>
    %cst = arith.constant dense<0.000000e+00> : vector<16x512xf32>
    %2 = tpu.matmul %0, %1, %cst {dimension_numbers = #tpu.dot_dimension_numbers<[1], [0], [0], [1], [0, 0, 1, 1], [], []>, precision = #tpu.contract_precision<fp32>} : vector<16x4xf32>, vector<4x512xf32>, vector<16x512xf32> -> vector<16x512xf32>
    %c0_3 = arith.constant 0 : index
    %c0_4 = arith.constant 0 : index
    %3 = vector.load %arg3[%c0_3, %c0_4] : memref<16x512xf32, #tpu.memory_space<vmem>>, vector<16x512xf32>
    tpu.vector_store %arg3[%c0_3, %c0_4], %2 {strides = array<i32>} : memref<16x512xf32, #tpu.memory_space<vmem>>, vector<16x512xf32>,
    %c16 = arith.constant 16 : index
    %c0_5 = arith.constant 0 : index
    %4 = vector.load %arg1[%c16, %c0_5] : memref<408x128xf32, #tpu.memory_space<vmem>>, vector<16x16xf32>
    %c32 = arith.constant 32 : index
    %c0_6 = arith.constant 0 : index
    %5 = vector.load %arg1[%c32, %c0_6] : memref<408x128xf32, #tpu.memory_space<vmem>>, vector<16x1xf32>
    %c96 = arith.constant 96 : index
    %c0_7 = arith.constant 0 : index
    %6 = vector.load %arg1[%c96, %c0_7] : memref<408x128xf32, #tpu.memory_space<vmem>>, vector<128x32xf32>
    %c48 = arith.constant 48 : index
    %c0_8 = arith.constant 0 : index
    %7 = vector.load %arg1[%c48, %c0_8] : memref<408x128xf32, #tpu.memory_space<vmem>>, vector<16x16xf32>
    %cst_9 = arith.constant 0.000000e+00 : f32
    %8 = vector.broadcast %cst_9 : f32 to vector<16x128xf32>
    %c0_10 = arith.constant 0 : index
    %c0_11 = arith.constant 0 : index
    %9 = vector.load %arg4[%c0_10, %c0_11] : memref<16x128xf32, #tpu.memory_space<vmem>>, vector<16x128xf32>
    tpu.vector_store %arg4[%c0_10, %c0_11], %8 {strides = array<i32>} : memref<16x128xf32, #tpu.memory_space<vmem>>, vector<16x128xf32>,
    %cst_12 = arith.constant 0.000000e+00 : f32
    %10 = vector.broadcast %cst_12 : f32 to vector<16x128xf32>
    %11 = vector.extract_strided_slice %4 {offsets = [0, 0], sizes = [16, 1], strides = [1, 1]} : vector<16x16xf32> to vector<16x1xf32>
    %c0_13 = arith.constant 0 : index
    %c0_14 = arith.constant 0 : index
    %12 = vector.load %arg3[%c0_13, %c0_14] : memref<16x512xf32, #tpu.memory_space<vmem>>, vector<16x128xf32>
    %13 = vector.broadcast %11 : vector<16x1xf32> to vector<16x128xf32>
    %14 = arith.mulf %13, %12 : vector<16x128xf32>
    %15 = arith.addf %10, %14 : vector<16x128xf32>
    %16 = vector.extract_strided_slice %4 {offsets = [0, 1], sizes = [16, 1], strides = [1, 1]} : vector<16x16xf32> to vector<16x1xf32>
    %c0_15 = arith.constant 0 : index
    %c1 = arith.constant 1 : index
    %17 = vector.load %arg3[%c0_15, %c1] : memref<16x512xf32, #tpu.memory_space<vmem>>, vector<16x128xf32>
    %18 = vector.broadcast %16 : vector<16x1xf32> to vector<16x128xf32>
    %19 = arith.mulf %18, %17 : vector<16x128xf32>
    %20 = arith.addf %15, %19 : vector<16x128xf32>
    %21 = vector.extract_strided_slice %4 {offsets = [0, 2], sizes = [16, 1], strides = [1, 1]} : vector<16x16xf32> to vector<16x1xf32>
    %c0_16 = arith.constant 0 : index
    %c2 = arith.constant 2 : index
    %22 = vector.load %arg3[%c0_16, %c2] : memref<16x512xf32, #tpu.memory_space<vmem>>, vector<16x128xf32>
    %23 = vector.broadcast %21 : vector<16x1xf32> to vector<16x128xf32>
    %24 = arith.mulf %23, %22 : vector<16x128xf32>
    %25 = arith.addf %20, %24 : vector<16x128xf32>
    %26 = vector.extract_strided_slice %4 {offsets = [0, 3], sizes = [16, 1], strides = [1, 1]} : vector<16x16xf32> to vector<16x1xf32>
    %c0_17 = arith.constant 0 : index
    %c3 = arith.constant 3 : index
    %27 = vector.load %arg3[%c0_17, %c3] : memref<16x512xf32, #tpu.memory_space<vmem>>, vector<16x128xf32>
    %28 = vector.broadcast %26 : vector<16x1xf32> to vector<16x128xf32>
    %29 = arith.mulf %28, %27 : vector<16x128xf32>
    %30 = arith.addf %25, %29 : vector<16x128xf32>
    %31 = vector.extract_strided_slice %4 {offsets = [0, 4], sizes = [16, 1], strides = [1, 1]} : vector<16x16xf32> to vector<16x1xf32>
    %c0_18 = arith.constant 0 : index
    %c4 = arith.constant 4 : index
    %32 = vector.load %arg3[%c0_18, %c4] : memref<16x512xf32, #tpu.memory_space<vmem>>, vector<16x128xf32>
    %33 = vector.broadcast %31 : vector<16x1xf32> to vector<16x128xf32>
    %34 = arith.mulf %33, %32 : vector<16x128xf32>
    %35 = arith.addf %30, %34 : vector<16x128xf32>
    %36 = vector.extract_strided_slice %4 {offsets = [0, 5], sizes = [16, 1], strides = [1, 1]} : vector<16x16xf32> to vector<16x1xf32>
    %c0_19 = arith.constant 0 : index
    %c5 = arith.constant 5 : index
    %37 = vector.load %arg3[%c0_19, %c5] : memref<16x512xf32, #tpu.memory_space<vmem>>, vector<16x128xf32>
    %38 = vector.broadcast %36 : vector<16x1xf32> to vector<16x128xf32>
    %39 = arith.mulf %38, %37 : vector<16x128xf32>
    %40 = arith.addf %35, %39 : vector<16x128xf32>
    %41 = vector.extract_strided_slice %4 {offsets = [0, 6], sizes = [16, 1], strides = [1, 1]} : vector<16x16xf32> to vector<16x1xf32>
    %c0_20 = arith.constant 0 : index
    %c6 = arith.constant 6 : index
    %42 = vector.load %arg3[%c0_20, %c6] : memref<16x512xf32, #tpu.memory_space<vmem>>, vector<16x128xf32>
    %43 = vector.broadcast %41 : vector<16x1xf32> to vector<16x128xf32>
    %44 = arith.mulf %43, %42 : vector<16x128xf32>
    %45 = arith.addf %40, %44 : vector<16x128xf32>
    %46 = vector.extract_strided_slice %4 {offsets = [0, 7], sizes = [16, 1], strides = [1, 1]} : vector<16x16xf32> to vector<16x1xf32>
    %c0_21 = arith.constant 0 : index
    %c7 = arith.constant 7 : index
    %47 = vector.load %arg3[%c0_21, %c7] : memref<16x512xf32, #tpu.memory_space<vmem>>, vector<16x128xf32>
    %48 = vector.broadcast %46 : vector<16x1xf32> to vector<16x128xf32>
    %49 = arith.mulf %48, %47 : vector<16x128xf32>
    %50 = arith.addf %45, %49 : vector<16x128xf32>
    %51 = vector.extract_strided_slice %4 {offsets = [0, 8], sizes = [16, 1], strides = [1, 1]} : vector<16x16xf32> to vector<16x1xf32>
    %c0_22 = arith.constant 0 : index
    %c8 = arith.constant 8 : index
    %52 = vector.load %arg3[%c0_22, %c8] : memref<16x512xf32, #tpu.memory_space<vmem>>, vector<16x128xf32>
    %53 = vector.broadcast %51 : vector<16x1xf32> to vector<16x128xf32>
    %54 = arith.mulf %53, %52 : vector<16x128xf32>
    %55 = arith.addf %50, %54 : vector<16x128xf32>
    %56 = vector.extract_strided_slice %4 {offsets = [0, 9], sizes = [16, 1], strides = [1, 1]} : vector<16x16xf32> to vector<16x1xf32>
    %c0_23 = arith.constant 0 : index
    %c9 = arith.constant 9 : index
    %57 = vector.load %arg3[%c0_23, %c9] : memref<16x512xf32, #tpu.memory_space<vmem>>, vector<16x128xf32>
    %58 = vector.broadcast %56 : vector<16x1xf32> to vector<16x128xf32>
    %59 = arith.mulf %58, %57 : vector<16x128xf32>
    %60 = arith.addf %55, %59 : vector<16x128xf32>
    %61 = vector.extract_strided_slice %4 {offsets = [0, 10], sizes = [16, 1], strides = [1, 1]} : vector<16x16xf32> to vector<16x1xf32>
    %c0_24 = arith.constant 0 : index
    %c10 = arith.constant 10 : index
    %62 = vector.load %arg3[%c0_24, %c10] : memref<16x512xf32, #tpu.memory_space<vmem>>, vector<16x128xf32>
    %63 = vector.broadcast %61 : vector<16x1xf32> to vector<16x128xf32>
    %64 = arith.mulf %63, %62 : vector<16x128xf32>
    %65 = arith.addf %60, %64 : vector<16x128xf32>
    %66 = vector.extract_strided_slice %4 {offsets = [0, 11], sizes = [16, 1], strides = [1, 1]} : vector<16x16xf32> to vector<16x1xf32>
    %c0_25 = arith.constant 0 : index
    %c11 = arith.constant 11 : index
    %67 = vector.load %arg3[%c0_25, %c11] : memref<16x512xf32, #tpu.memory_space<vmem>>, vector<16x128xf32>
    %68 = vector.broadcast %66 : vector<16x1xf32> to vector<16x128xf32>
    %69 = arith.mulf %68, %67 : vector<16x128xf32>
    %70 = arith.addf %65, %69 : vector<16x128xf32>
    %71 = vector.extract_strided_slice %4 {offsets = [0, 12], sizes = [16, 1], strides = [1, 1]} : vector<16x16xf32> to vector<16x1xf32>
    %c0_26 = arith.constant 0 : index
    %c12 = arith.constant 12 : index
    %72 = vector.load %arg3[%c0_26, %c12] : memref<16x512xf32, #tpu.memory_space<vmem>>, vector<16x128xf32>
    %73 = vector.broadcast %71 : vector<16x1xf32> to vector<16x128xf32>
    %74 = arith.mulf %73, %72 : vector<16x128xf32>
    %75 = arith.addf %70, %74 : vector<16x128xf32>
    %76 = vector.extract_strided_slice %4 {offsets = [0, 13], sizes = [16, 1], strides = [1, 1]} : vector<16x16xf32> to vector<16x1xf32>
    %c0_27 = arith.constant 0 : index
    %c13 = arith.constant 13 : index
    %77 = vector.load %arg3[%c0_27, %c13] : memref<16x512xf32, #tpu.memory_space<vmem>>, vector<16x128xf32>
    %78 = vector.broadcast %76 : vector<16x1xf32> to vector<16x128xf32>
    %79 = arith.mulf %78, %77 : vector<16x128xf32>
    %80 = arith.addf %75, %79 : vector<16x128xf32>
    %81 = vector.extract_strided_slice %4 {offsets = [0, 14], sizes = [16, 1], strides = [1, 1]} : vector<16x16xf32> to vector<16x1xf32>
    %c0_28 = arith.constant 0 : index
    %c14 = arith.constant 14 : index
    %82 = vector.load %arg3[%c0_28, %c14] : memref<16x512xf32, #tpu.memory_space<vmem>>, vector<16x128xf32>
    %83 = vector.broadcast %81 : vector<16x1xf32> to vector<16x128xf32>
    %84 = arith.mulf %83, %82 : vector<16x128xf32>
    %85 = arith.addf %80, %84 : vector<16x128xf32>
    %86 = vector.extract_strided_slice %4 {offsets = [0, 15], sizes = [16, 1], strides = [1, 1]} : vector<16x16xf32> to vector<16x1xf32>
    %c0_29 = arith.constant 0 : index
    %c15 = arith.constant 15 : index
    %87 = vector.load %arg3[%c0_29, %c15] : memref<16x512xf32, #tpu.memory_space<vmem>>, vector<16x128xf32>
    %88 = vector.broadcast %86 : vector<16x1xf32> to vector<16x128xf32>
    %89 = arith.mulf %88, %87 : vector<16x128xf32>
    %90 = arith.addf %85, %89 : vector<16x128xf32>
    %91 = vector.broadcast %5 : vector<16x1xf32> to vector<16x128xf32>
    %92 = arith.addf %90, %91 : vector<16x128xf32>
    %cst_30 = arith.constant 0.000000e+00 : f32
    %93 = vector.broadcast %cst_30 : f32 to vector<16x128xf32>
    %94 = arith.cmpf ogt, %92, %93 : vector<16x128xf32>
    %cst_31 = arith.constant 0.000000e+00 : f32
    %95 = vector.broadcast %cst_31 : f32 to vector<16x128xf32>
    %96 = arith.minimumf %92, %95 : vector<16x128xf32>
    %97 = math.exp %96 : vector<16x128xf32>
    %cst_32 = arith.constant 1.000000e+00 : f32
    %98 = vector.broadcast %cst_32 : f32 to vector<16x128xf32>
    %99 = arith.subf %97, %98 : vector<16x128xf32>
    %100 = arith.select %94, %92, %99 : vector<16x128xi1>, vector<16x128xf32>
    %cst_33 = arith.constant dense<0.000000e+00> : vector<16x32xf32>
    %101 = tpu.matmul %100, %6, %cst_33 {dimension_numbers = #tpu.dot_dimension_numbers<[1], [0], [0], [1], [0, 0, 1, 1], [], []>, precision = #tpu.contract_precision<fp32>} : vector<16x128xf32>, vector<128x32xf32>, vector<16x32xf32> -> vector<16x32xf32>
    %c0_34 = arith.constant 0 : index
    %c8_35 = arith.constant 8 : index
    %102 = vector.load %arg4[%c0_34, %c8_35] : memref<16x128xf32, #tpu.memory_space<vmem>>, vector<16x32xf32>
    tpu.vector_store %arg4[%c0_34, %c8_35], %101 {strides = array<i32>} : memref<16x128xf32, #tpu.memory_space<vmem>>, vector<16x32xf32>,
    %cst_36 = arith.constant 0.000000e+00 : f32
    %103 = vector.broadcast %cst_36 : f32 to vector<16x32xf32>
    %104 = vector.extract_strided_slice %7 {offsets = [0, 0], sizes = [16, 1], strides = [1, 1]} : vector<16x16xf32> to vector<16x1xf32>
    %c0_37 = arith.constant 0 : index
    %c0_38 = arith.constant 0 : index
    %105 = vector.load %arg4[%c0_37, %c0_38] : memref<16x128xf32, #tpu.memory_space<vmem>>, vector<16x32xf32>
    %106 = vector.broadcast %104 : vector<16x1xf32> to vector<16x32xf32>
    %107 = arith.mulf %106, %105 : vector<16x32xf32>
    %108 = arith.addf %103, %107 : vector<16x32xf32>
    %109 = vector.extract_strided_slice %7 {offsets = [0, 1], sizes = [16, 1], strides = [1, 1]} : vector<16x16xf32> to vector<16x1xf32>
    %c0_39 = arith.constant 0 : index
    %c1_40 = arith.constant 1 : index
    %110 = vector.load %arg4[%c0_39, %c1_40] : memref<16x128xf32, #tpu.memory_space<vmem>>, vector<16x32xf32>
    %111 = vector.broadcast %109 : vector<16x1xf32> to vector<16x32xf32>
    %112 = arith.mulf %111, %110 : vector<16x32xf32>
    %113 = arith.addf %108, %112 : vector<16x32xf32>
    %114 = vector.extract_strided_slice %7 {offsets = [0, 2], sizes = [16, 1], strides = [1, 1]} : vector<16x16xf32> to vector<16x1xf32>
    %c0_41 = arith.constant 0 : index
    %c2_42 = arith.constant 2 : index
    %115 = vector.load %arg4[%c0_41, %c2_42] : memref<16x128xf32, #tpu.memory_space<vmem>>, vector<16x32xf32>
    %116 = vector.broadcast %114 : vector<16x1xf32> to vector<16x32xf32>
    %117 = arith.mulf %116, %115 : vector<16x32xf32>
    %118 = arith.addf %113, %117 : vector<16x32xf32>
    %119 = vector.extract_strided_slice %7 {offsets = [0, 3], sizes = [16, 1], strides = [1, 1]} : vector<16x16xf32> to vector<16x1xf32>
    %c0_43 = arith.constant 0 : index
    %c3_44 = arith.constant 3 : index
    %120 = vector.load %arg4[%c0_43, %c3_44] : memref<16x128xf32, #tpu.memory_space<vmem>>, vector<16x32xf32>
    %121 = vector.broadcast %119 : vector<16x1xf32> to vector<16x32xf32>
    %122 = arith.mulf %121, %120 : vector<16x32xf32>
    %123 = arith.addf %118, %122 : vector<16x32xf32>
    %124 = vector.extract_strided_slice %7 {offsets = [0, 4], sizes = [16, 1], strides = [1, 1]} : vector<16x16xf32> to vector<16x1xf32>
    %c0_45 = arith.constant 0 : index
    %c4_46 = arith.constant 4 : index
    %125 = vector.load %arg4[%c0_45, %c4_46] : memref<16x128xf32, #tpu.memory_space<vmem>>, vector<16x32xf32>
    %126 = vector.broadcast %124 : vector<16x1xf32> to vector<16x32xf32>
    %127 = arith.mulf %126, %125 : vector<16x32xf32>
    %128 = arith.addf %123, %127 : vector<16x32xf32>
    %129 = vector.extract_strided_slice %7 {offsets = [0, 5], sizes = [16, 1], strides = [1, 1]} : vector<16x16xf32> to vector<16x1xf32>
    %c0_47 = arith.constant 0 : index
    %c5_48 = arith.constant 5 : index
    %130 = vector.load %arg4[%c0_47, %c5_48] : memref<16x128xf32, #tpu.memory_space<vmem>>, vector<16x32xf32>
    %131 = vector.broadcast %129 : vector<16x1xf32> to vector<16x32xf32>
    %132 = arith.mulf %131, %130 : vector<16x32xf32>
    %133 = arith.addf %128, %132 : vector<16x32xf32>
    %134 = vector.extract_strided_slice %7 {offsets = [0, 6], sizes = [16, 1], strides = [1, 1]} : vector<16x16xf32> to vector<16x1xf32>
    %c0_49 = arith.constant 0 : index
    %c6_50 = arith.constant 6 : index
    %135 = vector.load %arg4[%c0_49, %c6_50] : memref<16x128xf32, #tpu.memory_space<vmem>>, vector<16x32xf32>
    %136 = vector.broadcast %134 : vector<16x1xf32> to vector<16x32xf32>
    %137 = arith.mulf %136, %135 : vector<16x32xf32>
    %138 = arith.addf %133, %137 : vector<16x32xf32>
    %139 = vector.extract_strided_slice %7 {offsets = [0, 7], sizes = [16, 1], strides = [1, 1]} : vector<16x16xf32> to vector<16x1xf32>
    %c0_51 = arith.constant 0 : index
    %c7_52 = arith.constant 7 : index
    %140 = vector.load %arg4[%c0_51, %c7_52] : memref<16x128xf32, #tpu.memory_space<vmem>>, vector<16x32xf32>
    %141 = vector.broadcast %139 : vector<16x1xf32> to vector<16x32xf32>
    %142 = arith.mulf %141, %140 : vector<16x32xf32>
    %143 = arith.addf %138, %142 : vector<16x32xf32>
    %144 = vector.extract_strided_slice %7 {offsets = [0, 8], sizes = [16, 1], strides = [1, 1]} : vector<16x16xf32> to vector<16x1xf32>
    %c0_53 = arith.constant 0 : index
    %c8_54 = arith.constant 8 : index
    %145 = vector.load %arg4[%c0_53, %c8_54] : memref<16x128xf32, #tpu.memory_space<vmem>>, vector<16x32xf32>
    %146 = vector.broadcast %144 : vector<16x1xf32> to vector<16x32xf32>
    %147 = arith.mulf %146, %145 : vector<16x32xf32>
    %148 = arith.addf %143, %147 : vector<16x32xf32>
    %149 = vector.extract_strided_slice %7 {offsets = [0, 9], sizes = [16, 1], strides = [1, 1]} : vector<16x16xf32> to vector<16x1xf32>
    %c0_55 = arith.constant 0 : index
    %c9_56 = arith.constant 9 : index
    %150 = vector.load %arg4[%c0_55, %c9_56] : memref<16x128xf32, #tpu.memory_space<vmem>>, vector<16x32xf32>
    %151 = vector.broadcast %149 : vector<16x1xf32> to vector<16x32xf32>
    %152 = arith.mulf %151, %150 : vector<16x32xf32>
    %153 = arith.addf %148, %152 : vector<16x32xf32>
    %154 = vector.extract_strided_slice %7 {offsets = [0, 10], sizes = [16, 1], strides = [1, 1]} : vector<16x16xf32> to vector<16x1xf32>
    %c0_57 = arith.constant 0 : index
    %c10_58 = arith.constant 10 : index
    %155 = vector.load %arg4[%c0_57, %c10_58] : memref<16x128xf32, #tpu.memory_space<vmem>>, vector<16x32xf32>
    %156 = vector.broadcast %154 : vector<16x1xf32> to vector<16x32xf32>
    %157 = arith.mulf %156, %155 : vector<16x32xf32>
    %158 = arith.addf %153, %157 : vector<16x32xf32>
    %159 = vector.extract_strided_slice %7 {offsets = [0, 11], sizes = [16, 1], strides = [1, 1]} : vector<16x16xf32> to vector<16x1xf32>
    %c0_59 = arith.constant 0 : index
    %c11_60 = arith.constant 11 : index
    %160 = vector.load %arg4[%c0_59, %c11_60] : memref<16x128xf32, #tpu.memory_space<vmem>>, vector<16x32xf32>
    %161 = vector.broadcast %159 : vector<16x1xf32> to vector<16x32xf32>
    %162 = arith.mulf %161, %160 : vector<16x32xf32>
    %163 = arith.addf %158, %162 : vector<16x32xf32>
    %164 = vector.extract_strided_slice %7 {offsets = [0, 12], sizes = [16, 1], strides = [1, 1]} : vector<16x16xf32> to vector<16x1xf32>
    %c0_61 = arith.constant 0 : index
    %c12_62 = arith.constant 12 : index
    %165 = vector.load %arg4[%c0_61, %c12_62] : memref<16x128xf32, #tpu.memory_space<vmem>>, vector<16x32xf32>
    %166 = vector.broadcast %164 : vector<16x1xf32> to vector<16x32xf32>
    %167 = arith.mulf %166, %165 : vector<16x32xf32>
    %168 = arith.addf %163, %167 : vector<16x32xf32>
    %169 = vector.extract_strided_slice %7 {offsets = [0, 13], sizes = [16, 1], strides = [1, 1]} : vector<16x16xf32> to vector<16x1xf32>
    %c0_63 = arith.constant 0 : index
    %c13_64 = arith.constant 13 : index
    %170 = vector.load %arg4[%c0_63, %c13_64] : memref<16x128xf32, #tpu.memory_space<vmem>>, vector<16x32xf32>
    %171 = vector.broadcast %169 : vector<16x1xf32> to vector<16x32xf32>
    %172 = arith.mulf %171, %170 : vector<16x32xf32>
    %173 = arith.addf %168, %172 : vector<16x32xf32>
    %174 = vector.extract_strided_slice %7 {offsets = [0, 14], sizes = [16, 1], strides = [1, 1]} : vector<16x16xf32> to vector<16x1xf32>
    %c0_65 = arith.constant 0 : index
    %c14_66 = arith.constant 14 : index
    %175 = vector.load %arg4[%c0_65, %c14_66] : memref<16x128xf32, #tpu.memory_space<vmem>>, vector<16x32xf32>
    %176 = vector.broadcast %174 : vector<16x1xf32> to vector<16x32xf32>
    %177 = arith.mulf %176, %175 : vector<16x32xf32>
    %178 = arith.addf %173, %177 : vector<16x32xf32>
    %179 = vector.extract_strided_slice %7 {offsets = [0, 15], sizes = [16, 1], strides = [1, 1]} : vector<16x16xf32> to vector<16x1xf32>
    %c0_67 = arith.constant 0 : index
    %c15_68 = arith.constant 15 : index
    %180 = vector.load %arg4[%c0_67, %c15_68] : memref<16x128xf32, #tpu.memory_space<vmem>>, vector<16x32xf32>
    %181 = vector.broadcast %179 : vector<16x1xf32> to vector<16x32xf32>
    %182 = arith.mulf %181, %180 : vector<16x32xf32>
    %183 = arith.addf %178, %182 : vector<16x32xf32>
    %cst_69 = arith.constant 0.000000e+00 : f32
    %184 = vector.broadcast %cst_69 : f32 to vector<16x128xf32>
    %185 = vector.extract_strided_slice %4 {offsets = [0, 0], sizes = [16, 1], strides = [1, 1]} : vector<16x16xf32> to vector<16x1xf32>
    %c0_70 = arith.constant 0 : index
    %c256 = arith.constant 256 : index
    %186 = vector.load %arg3[%c0_70, %c256] : memref<16x512xf32, #tpu.memory_space<vmem>>, vector<16x128xf32>
    %187 = vector.broadcast %185 : vector<16x1xf32> to vector<16x128xf32>
    %188 = arith.mulf %187, %186 : vector<16x128xf32>
    %189 = arith.addf %184, %188 : vector<16x128xf32>
    %190 = vector.extract_strided_slice %4 {offsets = [0, 1], sizes = [16, 1], strides = [1, 1]} : vector<16x16xf32> to vector<16x1xf32>
    %c0_71 = arith.constant 0 : index
    %c257 = arith.constant 257 : index
    %191 = vector.load %arg3[%c0_71, %c257] : memref<16x512xf32, #tpu.memory_space<vmem>>, vector<16x128xf32>
    %192 = vector.broadcast %190 : vector<16x1xf32> to vector<16x128xf32>
    %193 = arith.mulf %192, %191 : vector<16x128xf32>
    %194 = arith.addf %189, %193 : vector<16x128xf32>
    %195 = vector.extract_strided_slice %4 {offsets = [0, 2], sizes = [16, 1], strides = [1, 1]} : vector<16x16xf32> to vector<16x1xf32>
    %c0_72 = arith.constant 0 : index
    %c258 = arith.constant 258 : index
    %196 = vector.load %arg3[%c0_72, %c258] : memref<16x512xf32, #tpu.memory_space<vmem>>, vector<16x128xf32>
    %197 = vector.broadcast %195 : vector<16x1xf32> to vector<16x128xf32>
    %198 = arith.mulf %197, %196 : vector<16x128xf32>
    %199 = arith.addf %194, %198 : vector<16x128xf32>
    %200 = vector.extract_strided_slice %4 {offsets = [0, 3], sizes = [16, 1], strides = [1, 1]} : vector<16x16xf32> to vector<16x1xf32>
    %c0_73 = arith.constant 0 : index
    %c259 = arith.constant 259 : index
    %201 = vector.load %arg3[%c0_73, %c259] : memref<16x512xf32, #tpu.memory_space<vmem>>, vector<16x128xf32>
    %202 = vector.broadcast %200 : vector<16x1xf32> to vector<16x128xf32>
    %203 = arith.mulf %202, %201 : vector<16x128xf32>
    %204 = arith.addf %199, %203 : vector<16x128xf32>
    %205 = vector.extract_strided_slice %4 {offsets = [0, 4], sizes = [16, 1], strides = [1, 1]} : vector<16x16xf32> to vector<16x1xf32>
    %c0_74 = arith.constant 0 : index
    %c260 = arith.constant 260 : index
    %206 = vector.load %arg3[%c0_74, %c260] : memref<16x512xf32, #tpu.memory_space<vmem>>, vector<16x128xf32>
    %207 = vector.broadcast %205 : vector<16x1xf32> to vector<16x128xf32>
    %208 = arith.mulf %207, %206 : vector<16x128xf32>
    %209 = arith.addf %204, %208 : vector<16x128xf32>
    %210 = vector.extract_strided_slice %4 {offsets = [0, 5], sizes = [16, 1], strides = [1, 1]} : vector<16x16xf32> to vector<16x1xf32>
    %c0_75 = arith.constant 0 : index
    %c261 = arith.constant 261 : index
    %211 = vector.load %arg3[%c0_75, %c261] : memref<16x512xf32, #tpu.memory_space<vmem>>, vector<16x128xf32>
    %212 = vector.broadcast %210 : vector<16x1xf32> to vector<16x128xf32>
    %213 = arith.mulf %212, %211 : vector<16x128xf32>
    %214 = arith.addf %209, %213 : vector<16x128xf32>
    %215 = vector.extract_strided_slice %4 {offsets = [0, 6], sizes = [16, 1], strides = [1, 1]} : vector<16x16xf32> to vector<16x1xf32>
    %c0_76 = arith.constant 0 : index
    %c262 = arith.constant 262 : index
    %216 = vector.load %arg3[%c0_76, %c262] : memref<16x512xf32, #tpu.memory_space<vmem>>, vector<16x128xf32>
    %217 = vector.broadcast %215 : vector<16x1xf32> to vector<16x128xf32>
    %218 = arith.mulf %217, %216 : vector<16x128xf32>
    %219 = arith.addf %214, %218 : vector<16x128xf32>
    %220 = vector.extract_strided_slice %4 {offsets = [0, 7], sizes = [16, 1], strides = [1, 1]} : vector<16x16xf32> to vector<16x1xf32>
    %c0_77 = arith.constant 0 : index
    %c263 = arith.constant 263 : index
    %221 = vector.load %arg3[%c0_77, %c263] : memref<16x512xf32, #tpu.memory_space<vmem>>, vector<16x128xf32>
    %222 = vector.broadcast %220 : vector<16x1xf32> to vector<16x128xf32>
    %223 = arith.mulf %222, %221 : vector<16x128xf32>
    %224 = arith.addf %219, %223 : vector<16x128xf32>
    %225 = vector.extract_strided_slice %4 {offsets = [0, 8], sizes = [16, 1], strides = [1, 1]} : vector<16x16xf32> to vector<16x1xf32>
    %c0_78 = arith.constant 0 : index
    %c264 = arith.constant 264 : index
    %226 = vector.load %arg3[%c0_78, %c264] : memref<16x512xf32, #tpu.memory_space<vmem>>, vector<16x128xf32>
    %227 = vector.broadcast %225 : vector<16x1xf32> to vector<16x128xf32>
    %228 = arith.mulf %227, %226 : vector<16x128xf32>
    %229 = arith.addf %224, %228 : vector<16x128xf32>
    %230 = vector.extract_strided_slice %4 {offsets = [0, 9], sizes = [16, 1], strides = [1, 1]} : vector<16x16xf32> to vector<16x1xf32>
    %c0_79 = arith.constant 0 : index
    %c265 = arith.constant 265 : index
    %231 = vector.load %arg3[%c0_79, %c265] : memref<16x512xf32, #tpu.memory_space<vmem>>, vector<16x128xf32>
    %232 = vector.broadcast %230 : vector<16x1xf32> to vector<16x128xf32>
    %233 = arith.mulf %232, %231 : vector<16x128xf32>
    %234 = arith.addf %229, %233 : vector<16x128xf32>
    %235 = vector.extract_strided_slice %4 {offsets = [0, 10], sizes = [16, 1], strides = [1, 1]} : vector<16x16xf32> to vector<16x1xf32>
    %c0_80 = arith.constant 0 : index
    %c266 = arith.constant 266 : index
    %236 = vector.load %arg3[%c0_80, %c266] : memref<16x512xf32, #tpu.memory_space<vmem>>, vector<16x128xf32>
    %237 = vector.broadcast %235 : vector<16x1xf32> to vector<16x128xf32>
    %238 = arith.mulf %237, %236 : vector<16x128xf32>
    %239 = arith.addf %234, %238 : vector<16x128xf32>
    %240 = vector.extract_strided_slice %4 {offsets = [0, 11], sizes = [16, 1], strides = [1, 1]} : vector<16x16xf32> to vector<16x1xf32>
    %c0_81 = arith.constant 0 : index
    %c267 = arith.constant 267 : index
    %241 = vector.load %arg3[%c0_81, %c267] : memref<16x512xf32, #tpu.memory_space<vmem>>, vector<16x128xf32>
    %242 = vector.broadcast %240 : vector<16x1xf32> to vector<16x128xf32>
    %243 = arith.mulf %242, %241 : vector<16x128xf32>
    %244 = arith.addf %239, %243 : vector<16x128xf32>
    %245 = vector.extract_strided_slice %4 {offsets = [0, 12], sizes = [16, 1], strides = [1, 1]} : vector<16x16xf32> to vector<16x1xf32>
    %c0_82 = arith.constant 0 : index
    %c268 = arith.constant 268 : index
    %246 = vector.load %arg3[%c0_82, %c268] : memref<16x512xf32, #tpu.memory_space<vmem>>, vector<16x128xf32>
    %247 = vector.broadcast %245 : vector<16x1xf32> to vector<16x128xf32>
    %248 = arith.mulf %247, %246 : vector<16x128xf32>
    %249 = arith.addf %244, %248 : vector<16x128xf32>
    %250 = vector.extract_strided_slice %4 {offsets = [0, 13], sizes = [16, 1], strides = [1, 1]} : vector<16x16xf32> to vector<16x1xf32>
    %c0_83 = arith.constant 0 : index
    %c269 = arith.constant 269 : index
    %251 = vector.load %arg3[%c0_83, %c269] : memref<16x512xf32, #tpu.memory_space<vmem>>, vector<16x128xf32>
    %252 = vector.broadcast %250 : vector<16x1xf32> to vector<16x128xf32>
    %253 = arith.mulf %252, %251 : vector<16x128xf32>
    %254 = arith.addf %249, %253 : vector<16x128xf32>
    %255 = vector.extract_strided_slice %4 {offsets = [0, 14], sizes = [16, 1], strides = [1, 1]} : vector<16x16xf32> to vector<16x1xf32>
    %c0_84 = arith.constant 0 : index
    %c270 = arith.constant 270 : index
    %256 = vector.load %arg3[%c0_84, %c270] : memref<16x512xf32, #tpu.memory_space<vmem>>, vector<16x128xf32>
    %257 = vector.broadcast %255 : vector<16x1xf32> to vector<16x128xf32>
    %258 = arith.mulf %257, %256 : vector<16x128xf32>
    %259 = arith.addf %254, %258 : vector<16x128xf32>
    %260 = vector.extract_strided_slice %4 {offsets = [0, 15], sizes = [16, 1], strides = [1, 1]} : vector<16x16xf32> to vector<16x1xf32>
    %c0_85 = arith.constant 0 : index
    %c271 = arith.constant 271 : index
    %261 = vector.load %arg3[%c0_85, %c271] : memref<16x512xf32, #tpu.memory_space<vmem>>, vector<16x128xf32>
    %262 = vector.broadcast %260 : vector<16x1xf32> to vector<16x128xf32>
    %263 = arith.mulf %262, %261 : vector<16x128xf32>
    %264 = arith.addf %259, %263 : vector<16x128xf32>
    %265 = vector.broadcast %5 : vector<16x1xf32> to vector<16x128xf32>
    %266 = arith.addf %264, %265 : vector<16x128xf32>
    %cst_86 = arith.constant 0.000000e+00 : f32
    %267 = vector.broadcast %cst_86 : f32 to vector<16x128xf32>
    %268 = arith.cmpf ogt, %266, %267 : vector<16x128xf32>
    %cst_87 = arith.constant 0.000000e+00 : f32
    %269 = vector.broadcast %cst_87 : f32 to vector<16x128xf32>
    %270 = arith.minimumf %266, %269 : vector<16x128xf32>
    %271 = math.exp %270 : vector<16x128xf32>
    %cst_88 = arith.constant 1.000000e+00 : f32
    %272 = vector.broadcast %cst_88 : f32 to vector<16x128xf32>
    %273 = arith.subf %271, %272 : vector<16x128xf32>
    %274 = arith.select %268, %266, %273 : vector<16x128xi1>, vector<16x128xf32>
    %cst_89 = arith.constant dense<0.000000e+00> : vector<16x32xf32>
    %275 = tpu.matmul %274, %6, %cst_89 {dimension_numbers = #tpu.dot_dimension_numbers<[1], [0], [0], [1], [0, 0, 1, 1], [], []>, precision = #tpu.contract_precision<fp32>} : vector<16x128xf32>, vector<128x32xf32>, vector<16x32xf32> -> vector<16x32xf32>
    %c0_90 = arith.constant 0 : index
    %c72 = arith.constant 72 : index
    %276 = vector.load %arg4[%c0_90, %c72] : memref<16x128xf32, #tpu.memory_space<vmem>>, vector<16x32xf32>
    tpu.vector_store %arg4[%c0_90, %c72], %275 {strides = array<i32>} : memref<16x128xf32, #tpu.memory_space<vmem>>, vector<16x32xf32>,
    %cst_91 = arith.constant 0.000000e+00 : f32
    %277 = vector.broadcast %cst_91 : f32 to vector<16x32xf32>
    %278 = vector.extract_strided_slice %7 {offsets = [0, 0], sizes = [16, 1], strides = [1, 1]} : vector<16x16xf32> to vector<16x1xf32>
    %c0_92 = arith.constant 0 : index
    %c64 = arith.constant 64 : index
    %279 = vector.load %arg4[%c0_92, %c64] : memref<16x128xf32, #tpu.memory_space<vmem>>, vector<16x32xf32>
    %280 = vector.broadcast %278 : vector<16x1xf32> to vector<16x32xf32>
    %281 = arith.mulf %280, %279 : vector<16x32xf32>
    %282 = arith.addf %277, %281 : vector<16x32xf32>
    %283 = vector.extract_strided_slice %7 {offsets = [0, 1], sizes = [16, 1], strides = [1, 1]} : vector<16x16xf32> to vector<16x1xf32>
    %c0_93 = arith.constant 0 : index
    %c65 = arith.constant 65 : index
    %284 = vector.load %arg4[%c0_93, %c65] : memref<16x128xf32, #tpu.memory_space<vmem>>, vector<16x32xf32>
    %285 = vector.broadcast %283 : vector<16x1xf32> to vector<16x32xf32>
    %286 = arith.mulf %285, %284 : vector<16x32xf32>
    %287 = arith.addf %282, %286 : vector<16x32xf32>
    %288 = vector.extract_strided_slice %7 {offsets = [0, 2], sizes = [16, 1], strides = [1, 1]} : vector<16x16xf32> to vector<16x1xf32>
    %c0_94 = arith.constant 0 : index
    %c66 = arith.constant 66 : index
    %289 = vector.load %arg4[%c0_94, %c66] : memref<16x128xf32, #tpu.memory_space<vmem>>, vector<16x32xf32>
    %290 = vector.broadcast %288 : vector<16x1xf32> to vector<16x32xf32>
    %291 = arith.mulf %290, %289 : vector<16x32xf32>
    %292 = arith.addf %287, %291 : vector<16x32xf32>
    %293 = vector.extract_strided_slice %7 {offsets = [0, 3], sizes = [16, 1], strides = [1, 1]} : vector<16x16xf32> to vector<16x1xf32>
    %c0_95 = arith.constant 0 : index
    %c67 = arith.constant 67 : index
    %294 = vector.load %arg4[%c0_95, %c67] : memref<16x128xf32, #tpu.memory_space<vmem>>, vector<16x32xf32>
    %295 = vector.broadcast %293 : vector<16x1xf32> to vector<16x32xf32>
    %296 = arith.mulf %295, %294 : vector<16x32xf32>
    %297 = arith.addf %292, %296 : vector<16x32xf32>
    %298 = vector.extract_strided_slice %7 {offsets = [0, 4], sizes = [16, 1], strides = [1, 1]} : vector<16x16xf32> to vector<16x1xf32>
    %c0_96 = arith.constant 0 : index
    %c68 = arith.constant 68 : index
    %299 = vector.load %arg4[%c0_96, %c68] : memref<16x128xf32, #tpu.memory_space<vmem>>, vector<16x32xf32>
    %300 = vector.broadcast %298 : vector<16x1xf32> to vector<16x32xf32>
    %301 = arith.mulf %300, %299 : vector<16x32xf32>
    %302 = arith.addf %297, %301 : vector<16x32xf32>
    %303 = vector.extract_strided_slice %7 {offsets = [0, 5], sizes = [16, 1], strides = [1, 1]} : vector<16x16xf32> to vector<16x1xf32>
    %c0_97 = arith.constant 0 : index
    %c69 = arith.constant 69 : index
    %304 = vector.load %arg4[%c0_97, %c69] : memref<16x128xf32, #tpu.memory_space<vmem>>, vector<16x32xf32>
    %305 = vector.broadcast %303 : vector<16x1xf32> to vector<16x32xf32>
    %306 = arith.mulf %305, %304 : vector<16x32xf32>
    %307 = arith.addf %302, %306 : vector<16x32xf32>
    %308 = vector.extract_strided_slice %7 {offsets = [0, 6], sizes = [16, 1], strides = [1, 1]} : vector<16x16xf32> to vector<16x1xf32>
    %c0_98 = arith.constant 0 : index
    %c70 = arith.constant 70 : index
    %309 = vector.load %arg4[%c0_98, %c70] : memref<16x128xf32, #tpu.memory_space<vmem>>, vector<16x32xf32>
    %310 = vector.broadcast %308 : vector<16x1xf32> to vector<16x32xf32>
    %311 = arith.mulf %310, %309 : vector<16x32xf32>
    %312 = arith.addf %307, %311 : vector<16x32xf32>
    %313 = vector.extract_strided_slice %7 {offsets = [0, 7], sizes = [16, 1], strides = [1, 1]} : vector<16x16xf32> to vector<16x1xf32>
    %c0_99 = arith.constant 0 : index
    %c71 = arith.constant 71 : index
    %314 = vector.load %arg4[%c0_99, %c71] : memref<16x128xf32, #tpu.memory_space<vmem>>, vector<16x32xf32>
    %315 = vector.broadcast %313 : vector<16x1xf32> to vector<16x32xf32>
    %316 = arith.mulf %315, %314 : vector<16x32xf32>
    %317 = arith.addf %312, %316 : vector<16x32xf32>
    %318 = vector.extract_strided_slice %7 {offsets = [0, 8], sizes = [16, 1], strides = [1, 1]} : vector<16x16xf32> to vector<16x1xf32>
    %c0_100 = arith.constant 0 : index
    %c72_101 = arith.constant 72 : index
    %319 = vector.load %arg4[%c0_100, %c72_101] : memref<16x128xf32, #tpu.memory_space<vmem>>, vector<16x32xf32>
    %320 = vector.broadcast %318 : vector<16x1xf32> to vector<16x32xf32>
    %321 = arith.mulf %320, %319 : vector<16x32xf32>
    %322 = arith.addf %317, %321 : vector<16x32xf32>
    %323 = vector.extract_strided_slice %7 {offsets = [0, 9], sizes = [16, 1], strides = [1, 1]} : vector<16x16xf32> to vector<16x1xf32>
    %c0_102 = arith.constant 0 : index
    %c73 = arith.constant 73 : index
    %324 = vector.load %arg4[%c0_102, %c73] : memref<16x128xf32, #tpu.memory_space<vmem>>, vector<16x32xf32>
    %325 = vector.broadcast %323 : vector<16x1xf32> to vector<16x32xf32>
    %326 = arith.mulf %325, %324 : vector<16x32xf32>
    %327 = arith.addf %322, %326 : vector<16x32xf32>
    %328 = vector.extract_strided_slice %7 {offsets = [0, 10], sizes = [16, 1], strides = [1, 1]} : vector<16x16xf32> to vector<16x1xf32>
    %c0_103 = arith.constant 0 : index
    %c74 = arith.constant 74 : index
    %329 = vector.load %arg4[%c0_103, %c74] : memref<16x128xf32, #tpu.memory_space<vmem>>, vector<16x32xf32>
    %330 = vector.broadcast %328 : vector<16x1xf32> to vector<16x32xf32>
    %331 = arith.mulf %330, %329 : vector<16x32xf32>
    %332 = arith.addf %327, %331 : vector<16x32xf32>
    %333 = vector.extract_strided_slice %7 {offsets = [0, 11], sizes = [16, 1], strides = [1, 1]} : vector<16x16xf32> to vector<16x1xf32>
    %c0_104 = arith.constant 0 : index
    %c75 = arith.constant 75 : index
    %334 = vector.load %arg4[%c0_104, %c75] : memref<16x128xf32, #tpu.memory_space<vmem>>, vector<16x32xf32>
    %335 = vector.broadcast %333 : vector<16x1xf32> to vector<16x32xf32>
    %336 = arith.mulf %335, %334 : vector<16x32xf32>
    %337 = arith.addf %332, %336 : vector<16x32xf32>
    %338 = vector.extract_strided_slice %7 {offsets = [0, 12], sizes = [16, 1], strides = [1, 1]} : vector<16x16xf32> to vector<16x1xf32>
    %c0_105 = arith.constant 0 : index
    %c76 = arith.constant 76 : index
    %339 = vector.load %arg4[%c0_105, %c76] : memref<16x128xf32, #tpu.memory_space<vmem>>, vector<16x32xf32>
    %340 = vector.broadcast %338 : vector<16x1xf32> to vector<16x32xf32>
    %341 = arith.mulf %340, %339 : vector<16x32xf32>
    %342 = arith.addf %337, %341 : vector<16x32xf32>
    %343 = vector.extract_strided_slice %7 {offsets = [0, 13], sizes = [16, 1], strides = [1, 1]} : vector<16x16xf32> to vector<16x1xf32>
    %c0_106 = arith.constant 0 : index
    %c77 = arith.constant 77 : index
    %344 = vector.load %arg4[%c0_106, %c77] : memref<16x128xf32, #tpu.memory_space<vmem>>, vector<16x32xf32>
    %345 = vector.broadcast %343 : vector<16x1xf32> to vector<16x32xf32>
    %346 = arith.mulf %345, %344 : vector<16x32xf32>
    %347 = arith.addf %342, %346 : vector<16x32xf32>
    %348 = vector.extract_strided_slice %7 {offsets = [0, 14], sizes = [16, 1], strides = [1, 1]} : vector<16x16xf32> to vector<16x1xf32>
    %c0_107 = arith.constant 0 : index
    %c78 = arith.constant 78 : index
    %349 = vector.load %arg4[%c0_107, %c78] : memref<16x128xf32, #tpu.memory_space<vmem>>, vector<16x32xf32>
    %350 = vector.broadcast %348 : vector<16x1xf32> to vector<16x32xf32>
    %351 = arith.mulf %350, %349 : vector<16x32xf32>
    %352 = arith.addf %347, %351 : vector<16x32xf32>
    %353 = vector.extract_strided_slice %7 {offsets = [0, 15], sizes = [16, 1], strides = [1, 1]} : vector<16x16xf32> to vector<16x1xf32>
    %c0_108 = arith.constant 0 : index
    %c79 = arith.constant 79 : index
    %354 = vector.load %arg4[%c0_108, %c79] : memref<16x128xf32, #tpu.memory_space<vmem>>, vector<16x32xf32>
    %355 = vector.broadcast %353 : vector<16x1xf32> to vector<16x32xf32>
    %356 = arith.mulf %355, %354 : vector<16x32xf32>
    %357 = arith.addf %352, %356 : vector<16x32xf32>
    %358 = tpu.concatenate %183, %357 in 1 : vector<16x32xf32>, vector<16x32xf32> -> vector<16x64xf32>
    %c64_109 = arith.constant 64 : index
    %c0_110 = arith.constant 0 : index
    %359 = vector.load %arg1[%c64_109, %c0_110] : memref<408x128xf32, #tpu.memory_space<vmem>>, vector<16x16xf32>
    %c80 = arith.constant 80 : index
    %c0_111 = arith.constant 0 : index
    %360 = vector.load %arg1[%c80, %c0_111] : memref<408x128xf32, #tpu.memory_space<vmem>>, vector<16x1xf32>
    %cst_112 = arith.constant dense<0.000000e+00> : vector<16x64xf32>
    %361 = tpu.matmul %359, %358, %cst_112 {dimension_numbers = #tpu.dot_dimension_numbers<[1], [0], [0], [1], [0, 0, 1, 1], [], []>, precision = #tpu.contract_precision<fp32>} : vector<16x16xf32>, vector<16x64xf32>, vector<16x64xf32> -> vector<16x64xf32>
    %362 = vector.broadcast %360 : vector<16x1xf32> to vector<16x64xf32>
    %363 = arith.addf %361, %362 : vector<16x64xf32>
    %cst_113 = arith.constant 0.000000e+00 : f32
    %364 = vector.broadcast %cst_113 : f32 to vector<16x64xf32>
    %365 = arith.cmpf ogt, %363, %364 : vector<16x64xf32>
    %cst_114 = arith.constant 0.000000e+00 : f32
    %366 = vector.broadcast %cst_114 : f32 to vector<16x64xf32>
    %367 = arith.minimumf %363, %366 : vector<16x64xf32>
    %368 = math.exp %367 : vector<16x64xf32>
    %cst_115 = arith.constant 1.000000e+00 : f32
    %369 = vector.broadcast %cst_115 : f32 to vector<16x64xf32>
    %370 = arith.subf %368, %369 : vector<16x64xf32>
    %371 = arith.select %365, %363, %370 : vector<16x64xi1>, vector<16x64xf32>
    %c224 = arith.constant 224 : index
    %c0_116 = arith.constant 0 : index
    %372 = vector.load %arg1[%c224, %c0_116] : memref<408x128xf32, #tpu.memory_space<vmem>>, vector<32x64xf32>
    %c256_117 = arith.constant 256 : index
    %c0_118 = arith.constant 0 : index
    %373 = vector.load %arg1[%c256_117, %c0_118] : memref<408x128xf32, #tpu.memory_space<vmem>>, vector<16x64xf32>
    %c272 = arith.constant 272 : index
    %c0_119 = arith.constant 0 : index
    %374 = vector.load %arg1[%c272, %c0_119] : memref<408x128xf32, #tpu.memory_space<vmem>>, vector<64x4xf32>
    %c336 = arith.constant 336 : index
    %c0_120 = arith.constant 0 : index
    %375 = vector.load %arg1[%c336, %c0_120] : memref<408x128xf32, #tpu.memory_space<vmem>>, vector<1x4xf32>
    %c337 = arith.constant 337 : index
    %c0_121 = arith.constant 0 : index
    %376 = vector.load %arg1[%c337, %c0_121] : memref<408x128xf32, #tpu.memory_space<vmem>>, vector<64x128xf32>
    %c401 = arith.constant 401 : index
    %c0_122 = arith.constant 0 : index
    %377 = vector.load %arg1[%c401, %c0_122] : memref<408x128xf32, #tpu.memory_space<vmem>>, vector<1x128xf32>
    %cst_123 = arith.constant 1.000000e+00 : f32
    %378 = vector.broadcast %cst_123 : f32 to vector<1x16xf32>
    %379 = vector.extract_strided_slice %371 {offsets = [0, 0], sizes = [16, 32], strides = [1, 1]} : vector<16x64xf32> to vector<16x32xf32>
    %cst_124 = arith.constant dense<0.000000e+00> : vector<16x64xf32>
    %380 = tpu.matmul %379, %372, %cst_124 {dimension_numbers = #tpu.dot_dimension_numbers<[1], [0], [0], [1], [0, 0, 1, 1], [], []>, precision = #tpu.contract_precision<fp32>} : vector<16x32xf32>, vector<32x64xf32>, vector<16x64xf32> -> vector<16x64xf32>
    %381 = arith.mulf %380, %373 : vector<16x64xf32>
    %cst_125 = arith.constant dense<0.000000e+00> : vector<1x64xf32>
    %382 = tpu.matmul %378, %381, %cst_125 {dimension_numbers = #tpu.dot_dimension_numbers<[1], [0], [0], [1], [0, 0, 1, 1], [], []>, precision = #tpu.contract_precision<fp32>} : vector<1x16xf32>, vector<16x64xf32>, vector<1x64xf32> -> vector<1x64xf32>
    %cst_126 = arith.constant dense<0.000000e+00> : vector<1x4xf32>
    %383 = tpu.matmul %382, %374, %cst_126 {dimension_numbers = #tpu.dot_dimension_numbers<[1], [0], [0], [1], [0, 0, 1, 1], [], []>, precision = #tpu.contract_precision<fp32>} : vector<1x64xf32>, vector<64x4xf32>, vector<1x4xf32> -> vector<1x4xf32>
    %384 = arith.addf %383, %375 : vector<1x4xf32>
    %cst_127 = arith.constant dense<0.000000e+00> : vector<1x128xf32>
    %385 = tpu.matmul %382, %376, %cst_127 {dimension_numbers = #tpu.dot_dimension_numbers<[1], [0], [0], [1], [0, 0, 1, 1], [], []>, precision = #tpu.contract_precision<fp32>} : vector<1x64xf32>, vector<64x128xf32>, vector<1x128xf32> -> vector<1x128xf32>
    %386 = arith.addf %385, %377 : vector<1x128xf32>
    %cst_128 = arith.constant 0.000000e+00 : f32
    %387 = vector.broadcast %cst_128 : f32 to vector<1x60xf32>
    %388 = tpu.concatenate %384, %382, %386, %387 in 1 : vector<1x4xf32>, vector<1x64xf32>, vector<1x128xf32>, vector<1x60xf32> -> vector<1x256xf32>
    %c0_129 = arith.constant 0 : index
    %c0_130 = arith.constant 0 : index
    %389 = vector.load %arg2[%c0_129, %c0_130] : memref<2x256xf32, #tpu.memory_space<vmem>>, vector<1x256xf32>
    tpu.vector_store %arg2[%c0_129, %c0_130], %388 {strides = array<i32>} : memref<2x256xf32, #tpu.memory_space<vmem>>, vector<1x256xf32>,
    %390 = vector.extract_strided_slice %371 {offsets = [0, 32], sizes = [16, 32], strides = [1, 1]} : vector<16x64xf32> to vector<16x32xf32>
    %cst_131 = arith.constant dense<0.000000e+00> : vector<16x64xf32>
    %391 = tpu.matmul %390, %372, %cst_131 {dimension_numbers = #tpu.dot_dimension_numbers<[1], [0], [0], [1], [0, 0, 1, 1], [], []>, precision = #tpu.contract_precision<fp32>} : vector<16x32xf32>, vector<32x64xf32>, vector<16x64xf32> -> vector<16x64xf32>
    %392 = arith.mulf %391, %373 : vector<16x64xf32>
    %cst_132 = arith.constant dense<0.000000e+00> : vector<1x64xf32>
    %393 = tpu.matmul %378, %392, %cst_132 {dimension_numbers = #tpu.dot_dimension_numbers<[1], [0], [0], [1], [0, 0, 1, 1], [], []>, precision = #tpu.contract_precision<fp32>} : vector<1x16xf32>, vector<16x64xf32>, vector<1x64xf32> -> vector<1x64xf32>
    %cst_133 = arith.constant dense<0.000000e+00> : vector<1x4xf32>
    %394 = tpu.matmul %393, %374, %cst_133 {dimension_numbers = #tpu.dot_dimension_numbers<[1], [0], [0], [1], [0, 0, 1, 1], [], []>, precision = #tpu.contract_precision<fp32>} : vector<1x64xf32>, vector<64x4xf32>, vector<1x4xf32> -> vector<1x4xf32>
    %395 = arith.addf %394, %375 : vector<1x4xf32>
    %cst_134 = arith.constant dense<0.000000e+00> : vector<1x128xf32>
    %396 = tpu.matmul %393, %376, %cst_134 {dimension_numbers = #tpu.dot_dimension_numbers<[1], [0], [0], [1], [0, 0, 1, 1], [], []>, precision = #tpu.contract_precision<fp32>} : vector<1x64xf32>, vector<64x128xf32>, vector<1x128xf32> -> vector<1x128xf32>
    %397 = arith.addf %396, %377 : vector<1x128xf32>
    %cst_135 = arith.constant 0.000000e+00 : f32
    %398 = vector.broadcast %cst_135 : f32 to vector<1x60xf32>
    %399 = tpu.concatenate %395, %393, %397, %398 in 1 : vector<1x4xf32>, vector<1x64xf32>, vector<1x128xf32>, vector<1x60xf32> -> vector<1x256xf32>
    %c1_136 = arith.constant 1 : index
    %c0_137 = arith.constant 0 : index
    %400 = vector.load %arg2[%c1_136, %c0_137] : memref<2x256xf32, #tpu.memory_space<vmem>>, vector<1x256xf32>
    tpu.vector_store %arg2[%c1_136, %c0_137], %399 {strides = array<i32>} : memref<2x256xf32, #tpu.memory_space<vmem>>, vector<1x256xf32>,
    return
  }
}

</mosaic_0001>

<llo_original>
// kernel: tpu_custom_call.1
$region0: #{tpu_custom_call.1}
  #allocation0 [shape = 'u32[]', space=smem, size = 0x4, offset = 0x4, fixed_abs, tag = 'smem constant byte address 0x4 - core index']
  #allocation1 [shape = 'u32[144,128]{1,0:T(1,128)}', space=vmem, size = 0x12000, scoped, tag = 'internal scratch']
  #allocation2 [shape = 'f32[16,512]{1,0:T(8,128)}', space=vmem, size = 0x8000, scoped, tag = 'scratch operand']
  #allocation3 [shape = 'f32[16,128]{1,0:T(8,128)}', space=vmem, size = 0x2000, scoped, tag = 'scratch operand']
  %s0 = inlined_call_operand.hbm [shape: f32[4,512], index: 0, kind: input, shape index: {}]
  %s1 = inlined_call_operand.hbm [shape: f32[408,128], index: 1, kind: input, shape index: {}]
  %s2 = inlined_call_operand.hbm [shape: f32[2,256], index: 2, kind: output, shape index: {}]
  %s3 = sld [smem:[#allocation0]]
  $region26: #{tpu_custom_call.1} parent=0
    _
  %s5 = ssub.s32 1, %s3
  %s6 = scalar_select 0, %s5, %s3
  $region1: #{tpu_custom_call.1} parent=0
    #allocation4 [shape = 'u8[8192]{0}', space=vmem, size = 0x2000, scoped, tag = 'input window, operand 0, single buffered']
    #allocation5 [shape = 's32[1]{0}', space=sflag, size = 0x4, scoped, tag = 'scoped memory for tpu_custom_call.1']
    #allocation6 [shape = 's32[1]{0}', space=sflag, size = 0x4, scoped, tag = 'scoped memory for tpu_custom_call.1']
    #allocation7 [shape = 'u8[208896]{0}', space=vmem, size = 0x33000, scoped, tag = 'input window, operand 1, single buffered']
    #allocation8 [shape = 's32[1]{0}', space=sflag, size = 0x4, scoped, tag = 'scoped memory for tpu_custom_call.1']
    #allocation9 [shape = 'u8[2048]{0}', space=vmem, size = 0x800, scoped, tag = 'output window, operand 0, single buffered']
    %7 = vsyncpa [#allocation5], 0
    %8 = vsyncpa [#allocation8], 0
    %9 = vsyncpa [#allocation6], 0
    // Predicated region
    $region2: #{tpu_custom_call.1} parent=1 // pred_check
      _
    $region3: #{tpu_custom_call.1} parent=1 // pred_check_branch
      %11 = sbr.rel (0) target = $region5
    $region4: #{tpu_custom_call.1} parent=1 // pred_region
      %s13 = ssub.s32 256, 256
      %14 = vsyncadd [#allocation5], %s13
      %s16 = sshll.u32 [#allocation4], 4
      %s17 = int_to_ptr.vmem [resolvable:$true] %s16
      %19 = dma.hbm_to_vmem [thread:$0]  %s0, 256, %s17, [#allocation5]
    $region5: #{tpu_custom_call.1} parent=1 // pred_fallthru
      _
    // Predicated region
    $region6: #{tpu_custom_call.1} parent=1 // pred_check
      _
    $region7: #{tpu_custom_call.1} parent=1 // pred_check_branch
      %21 = sbr.rel (0) target = $region9
    $region8: #{tpu_custom_call.1} parent=1 // pred_region
      %s23 = ssub.s32 6528, 6528
      %24 = vsyncadd [#allocation8], %s23
      %s25 = sshll.u32 [#allocation7], 4
      %s26 = int_to_ptr.vmem [resolvable:$true] %s25
      %31 = dma.hbm_to_vmem [thread:$0]  %s1, 6528, %s26, [#allocation8], 128, 128, 8
    $region9: #{tpu_custom_call.1} parent=1 // pred_fallthru
      _
    // Predicated region
    $region10: #{tpu_custom_call.1} parent=1 // pred_check
      _
    $region11: #{tpu_custom_call.1} parent=1 // pred_check_branch
      %33 = sbr.rel (0) target = $region13
    $region12: #{tpu_custom_call.1} parent=1 // pred_region
      %34 = dma.done [#allocation5], 256
    $region13: #{tpu_custom_call.1} parent=1 // pred_fallthru
      _
    // Predicated region
    $region14: #{tpu_custom_call.1} parent=1 // pred_check
      _
    $region15: #{tpu_custom_call.1} parent=1 // pred_check_branch
      %36 = sbr.rel (0) target = $region17
    $region16: #{tpu_custom_call.1} parent=1 // pred_region
      %37 = dma.done [#allocation8], 6528
    $region17: #{tpu_custom_call.1} parent=1 // pred_fallthru
      _
    %v38 = vld [vmem:[#allocation7] sm:$0xff]
    %v39 = vld [vmem:[#allocation7 + $0x8] sm:$0xff]
    %v40 = vld [vmem:[#allocation4] sm:$0xff]
    %v41 = vld [vmem:[#allocation4 + $0x8] sm:$0xff]
    %v44 = vcombine.high %v40, %v40
    %v45 = vcombine.high %v41, %v41
    %vm46 = vcmask 31744
    %v48 = vsel %vm46, %v38, 0
    %v51 = vsel %vm46, %v39, 0
    %vm53 = vcmask 1043456
    %v54 = vsel %vm53, %v40, 0
    %v56 = vsel %vm53, %v44, 0
    %v58 = vsel %vm53, %v41, 0
    %v60 = vsel %vm53, %v45, 0
    %62 = vmatprep.subr.mxu0 0.0
    %63 = vmatpush1.msra.mxu0 0.0
    %64 = vmatprep.subr.mxu0 0.0
    %65 = vmatpush1.msra.mxu0 0.0
    %66 = vmatprep.subr.mxu0 0.0
    %67 = vmatpush1.msra.mxu0 0.0
    %68 = vmatprep.subr.mxu0 0.0
    %69 = vmatpush1.msra.mxu0 0.0
    %70 = vmatprep.subr.mxu0 0.0
    %71 = vmatpush1.msra.mxu0 0.0
    %72 = vmatprep.subr.mxu0 0.0
    %73 = vmatpush1.msra.mxu0 0.0
    %74 = vmatprep.subr.mxu0 0.0
    %75 = vmatpush1.msra.mxu0 0.0
    %76 = vmatprep.subr.mxu0 0.0
    %77 = vmatpush1.msra.mxu0 0.0
    %78 = vmatprep.subr.mxu0 0.0
    %79 = vmatpush1.msra.mxu0 0.0
    %80 = vmatprep.subr.mxu0 0.0
    %81 = vmatpush1.msra.mxu0 0.0
    %82 = vmatprep.subr.mxu0 0.0
    %83 = vmatpush1.msra.mxu0 0.0
    %84 = vmatprep.subr.mxu0 0.0
    %85 = vmatpush1.msra.mxu0 0.0
    %86 = vmatprep.subr.mxu0 0.0
    %87 = vmatpush1.msra.mxu0 0.0
    %88 = vmatprep.subr.mxu0 0.0
    %89 = vmatpush1.msra.mxu0 0.0
    %90 = vmatprep.subr.mxu0 0.0
    %91 = vmatpush1.msra.mxu0 0.0
    %v92 = vand.u32 %v56, 4294901760
    %93 = vmatprep.subr.mxu0 %v92
    %v94 = vand.u32 %v54, 4294901760
    %95 = vmatpush1.msra.mxu0 %v94
    %96 = vmatprep.subr.mxu0 0.0
    %97 = vmatpush2.msra.mxu0 0.0
    %98 = vmatprep.subr.mxu0 0.0
    %99 = vmatpush2.msra.mxu0 0.0
    %100 = vmatprep.subr.mxu0 0.0
    %101 = vmatpush2.msra.mxu0 0.0
    %102 = vmatprep.subr.mxu0 0.0
    %103 = vmatpush2.msra.mxu0 0.0
    %104 = vmatprep.subr.mxu0 0.0
    %105 = vmatpush2.msra.mxu0 0.0
    %106 = vmatprep.subr.mxu0 0.0
    %107 = vmatpush2.msra.mxu0 0.0
    %108 = vmatprep.subr.mxu0 0.0
    %109 = vmatpush2.msra.mxu0 0.0
    %110 = vmatprep.subr.mxu0 0.0
    %111 = vmatpush2.msra.mxu0 0.0
    %112 = vmatprep.subr.mxu0 0.0
    %113 = vmatpush2.msra.mxu0 0.0
    %114 = vmatprep.subr.mxu0 0.0
    %115 = vmatpush2.msra.mxu0 0.0
    %116 = vmatprep.subr.mxu0 0.0
    %117 = vmatpush2.msra.mxu0 0.0
    %118 = vmatprep.subr.mxu0 0.0
    %119 = vmatpush2.msra.mxu0 0.0
    %120 = vmatprep.subr.mxu0 0.0
    %121 = vmatpush2.msra.mxu0 0.0
    %122 = vmatprep.subr.mxu0 0.0
    %123 = vmatpush2.msra.mxu0 0.0
    %124 = vmatprep.subr.mxu0 0.0
    %125 = vmatpush2.msra.mxu0 0.0
    %126 = vmatprep.subr.mxu0 0.0
    %127 = vmatpush2.msra.mxu0 0.0
    %128 = vmatprep.mubr.f32.mxu0 0.0
    %v129 = vand.u32 %v48, 4294901760
    %v130 = vsub.f32 %v48, %v129
    %v131 = vand.u32 %v130, 4294901760
    %v132 = vsub.f32 %v130, %v131
    %v133 = vand.u32 %v132, 4294901760
    %134 = vmatmul.mubr.f32.gmra.mxu0 %v133
    %v135 = vpop.f32.mrf.mxu0
    %v136 = vadd.f32 0.0, %v135
    %v137 = vpop.f32.mrf.mxu0
    %v138 = vadd.f32 0.0, %v137
    %139 = vmatprep.mubr.f32.mxu0 0.0
    %v140 = vand.u32 %v51, 4294901760
    %v141 = vsub.f32 %v51, %v140
    %v142 = vand.u32 %v141, 4294901760
    %v143 = vsub.f32 %v141, %v142
    %v144 = vand.u32 %v143, 4294901760
    %145 = vmatmul.mubr.f32.gmra.mxu0 %v144
    %v146 = vpop.f32.mrf.mxu0
    %v147 = vadd.f32 0.0, %v146
    %v148 = vpop.f32.mrf.mxu0
    %v149 = vadd.f32 0.0, %v148
    %150 = vdwg.mxu0
    %151 = vmatprep.subr.mxu0 0.0
    %152 = vmatpush1.msra.mxu0 0.0
    %153 = vmatprep.subr.mxu0 0.0
    %154 = vmatpush1.msra.mxu0 0.0
    %155 = vmatprep.subr.mxu0 0.0
    %156 = vmatpush1.msra.mxu0 0.0
    %157 = vmatprep.subr.mxu0 0.0
    %158 = vmatpush1.msra.mxu0 0.0
    %159 = vmatprep.subr.mxu0 0.0
    %160 = vmatpush1.msra.mxu0 0.0
    %161 = vmatprep.subr.mxu0 0.0
    %162 = vmatpush1.msra.mxu0 0.0
    %163 = vmatprep.subr.mxu0 0.0
    %164 = vmatpush1.msra.mxu0 0.0
    %165 = vmatprep.subr.mxu0 0.0
    %166 = vmatpush1.msra.mxu0 0.0
    %167 = vmatprep.subr.mxu0 0.0
    %168 = vmatpush1.msra.mxu0 0.0
    %169 = vmatprep.subr.mxu0 0.0
    %170 = vmatpush1.msra.mxu0 0.0
    %171 = vmatprep.subr.mxu0 0.0
    %172 = vmatpush1.msra.mxu0 0.0
    %173 = vmatprep.subr.mxu0 0.0
    %174 = vmatpush1.msra.mxu0 0.0
    %175 = vmatprep.subr.mxu0 0.0
    %176 = vmatpush1.msra.mxu0 0.0
    %177 = vmatprep.subr.mxu0 0.0
    %178 = vmatpush1.msra.mxu0 0.0
    %179 = vmatprep.subr.mxu0 0.0
    %180 = vmatpush1.msra.mxu0 0.0
    %v181 = vand.u32 %v56, 4294901760
    %v182 = vsub.f32 %v56, %v181
    %v183 = vand.u32 %v182, 4294901760
    %v184 = vsub.f32 %v182, %v183
    %v185 = vand.u32 %v184, 4294901760
    %186 = vmatprep.subr.mxu0 %v185
    %v187 = vand.u32 %v54, 4294901760
    %v188 = vsub.f32 %v54, %v187
    %v189 = vand.u32 %v188, 4294901760
    %v190 = vsub.f32 %v188, %v189
    %v191 = vand.u32 %v190, 4294901760
    %192 = vmatpush1.msra.mxu0 %v191
    %193 = vmatprep.subr.mxu0 0.0
    %194 = vmatpush2.msra.mxu0 0.0
    %195 = vmatprep.subr.mxu0 0.0
    %196 = vmatpush2.msra.mxu0 0.0
    %197 = vmatprep.subr.mxu0 0.0
    %198 = vmatpush2.msra.mxu0 0.0
    %199 = vmatprep.subr.mxu0 0.0
    %200 = vmatpush2.msra.mxu0 0.0
    %201 = vmatprep.subr.mxu0 0.0
    %202 = vmatpush2.msra.mxu0 0.0
    %203 = vmatprep.subr.mxu0 0.0
    %204 = vmatpush2.msra.mxu0 0.0
    %205 = vmatprep.subr.mxu0 0.0
    %206 = vmatpush2.msra.mxu0 0.0
    %207 = vmatprep.subr.mxu0 0.0
    %208 = vmatpush2.msra.mxu0 0.0
    %209 = vmatprep.subr.mxu0 0.0
    %210 = vmatpush2.msra.mxu0 0.0
    %211 = vmatprep.subr.mxu0 0.0
    %212 = vmatpush2.msra.mxu0 0.0
    %213 = vmatprep.subr.mxu0 0.0
    %214 = vmatpush2.msra.mxu0 0.0
    %215 = vmatprep.subr.mxu0 0.0
    %216 = vmatpush2.msra.mxu0 0.0
    %217 = vmatprep.subr.mxu0 0.0
    %218 = vmatpush2.msra.mxu0 0.0
    %219 = vmatprep.subr.mxu0 0.0
    %220 = vmatpush2.msra.mxu0 0.0
    %221 = vmatprep.subr.mxu0 0.0
    %222 = vmatpush2.msra.mxu0 0.0
    %223 = vmatprep.subr.mxu0 0.0
    %224 = vmatpush2.msra.mxu0 0.0
    %225 = vmatprep.mubr.f32.mxu0 0.0
    %v226 = vand.u32 %v48, 4294901760
    %227 = vmatmul.mubr.f32.gmra.mxu0 %v226
    %v228 = vpop.f32.mrf.mxu0
    %v229 = vadd.f32 %v136, %v228
    %v230 = vpop.f32.mrf.mxu0
    %v231 = vadd.f32 %v138, %v230
    %232 = vmatprep.mubr.f32.mxu0 0.0
    %v233 = vand.u32 %v51, 4294901760
    %234 = vmatmul.mubr.f32.gmra.mxu0 %v233
    %v235 = vpop.f32.mrf.mxu0
    %v236 = vadd.f32 %v147, %v235
    %v237 = vpop.f32.mrf.mxu0
    %v238 = vadd.f32 %v149, %v237
    %239 = vdwg.mxu0
    %240 = vmatprep.subr.mxu0 0.0
    %241 = vmatpush1.msra.mxu0 0.0
    %242 = vmatprep.subr.mxu0 0.0
    %243 = vmatpush1.msra.mxu0 0.0
    %244 = vmatprep.subr.mxu0 0.0
    %245 = vmatpush1.msra.mxu0 0.0
    %246 = vmatprep.subr.mxu0 0.0
    %247 = vmatpush1.msra.mxu0 0.0
    %248 = vmatprep.subr.mxu0 0.0
    %249 = vmatpush1.msra.mxu0 0.0
    %250 = vmatprep.subr.mxu0 0.0
    %251 = vmatpush1.msra.mxu0 0.0
    %252 = vmatprep.subr.mxu0 0.0
    %253 = vmatpush1.msra.mxu0 0.0
    %254 = vmatprep.subr.mxu0 0.0
    %255 = vmatpush1.msra.mxu0 0.0
    %256 = vmatprep.subr.mxu0 0.0
    %257 = vmatpush1.msra.mxu0 0.0
    %258 = vmatprep.subr.mxu0 0.0
    %259 = vmatpush1.msra.mxu0 0.0
    %260 = vmatprep.subr.mxu0 0.0
    %261 = vmatpush1.msra.mxu0 0.0
    %262 = vmatprep.subr.mxu0 0.0
    %263 = vmatpush1.msra.mxu0 0.0
    %264 = vmatprep.subr.mxu0 0.0
    %265 = vmatpush1.msra.mxu0 0.0
    %266 = vmatprep.subr.mxu0 0.0
    %267 = vmatpush1.msra.mxu0 0.0
    %268 = vmatprep.subr.mxu0 0.0
    %269 = vmatpush1.msra.mxu0 0.0
    %v270 = vand.u32 %v56, 4294901760
    %v271 = vsub.f32 %v56, %v270
    %272 = vmatprep.subr.mxu0 %v271
    %v273 = vand.u32 %v54, 4294901760
    %v274 = vsub.f32 %v54, %v273
    %275 = vmatpush1.msra.mxu0 %v274
    %276 = vmatprep.subr.mxu0 0.0
    %277 = vmatpush2.msra.mxu0 0.0
    %278 = vmatprep.subr.mxu0 0.0
    %279 = vmatpush2.msra.mxu0 0.0
    %280 = vmatprep.subr.mxu0 0.0
    %281 = vmatpush2.msra.mxu0 0.0
    %282 = vmatprep.subr.mxu0 0.0
    %283 = vmatpush2.msra.mxu0 0.0
    %284 = vmatprep.subr.mxu0 0.0
    %285 = vmatpush2.msra.mxu0 0.0
    %286 = vmatprep.subr.mxu0 0.0
    %287 = vmatpush2.msra.mxu0 0.0
    %288 = vmatprep.subr.mxu0 0.0
    %289 = vmatpush2.msra.mxu0 0.0
    %290 = vmatprep.subr.mxu0 0.0
    %291 = vmatpush2.msra.mxu0 0.0
    %292 = vmatprep.subr.mxu0 0.0
    %293 = vmatpush2.msra.mxu0 0.0
    %294 = vmatprep.subr.mxu0 0.0
    %295 = vmatpush2.msra.mxu0 0.0
    %296 = vmatprep.subr.mxu0 0.0
    %297 = vmatpush2.msra.mxu0 0.0
    %298 = vmatprep.subr.mxu0 0.0
    %299 = vmatpush2.msra.mxu0 0.0
    %300 = vmatprep.subr.mxu0 0.0
    %301 = vmatpush2.msra.mxu0 0.0
    %302 = vmatprep.subr.mxu0 0.0
    %303 = vmatpush2.msra.mxu0 0.0
    %304 = vmatprep.subr.mxu0 0.0
    %305 = vmatpush2.msra.mxu0 0.0
    %306 = vmatprep.subr.mxu0 0.0
    %307 = vmatpush2.msra.mxu0 0.0
    %308 = vmatprep.mubr.f32.mxu0 0.0
    %v309 = vand.u32 %v48, 4294901760
    %v310 = vsub.f32 %v48, %v309
    %311 = vmatmul.mubr.f32.gmra.mxu0 %v310
    %v312 = vpop.f32.mrf.mxu0
    %v313 = vadd.f32 %v229, %v312
    %v314 = vpop.f32.mrf.mxu0
    %v315 = vadd.f32 %v231, %v314
    %316 = vmatprep.mubr.f32.mxu0 0.0
    %v317 = vand.u32 %v51, 4294901760
    %v318 = vsub.f32 %v51, %v317
    %319 = vmatmul.mubr.f32.gmra.mxu0 %v318
    %v320 = vpop.f32.mrf.mxu0
    %v321 = vadd.f32 %v236, %v320
    %v322 = vpop.f32.mrf.mxu0
    %v323 = vadd.f32 %v238, %v322
    %324 = vdwg.mxu0
    %325 = vmatprep.subr.mxu0 0.0
    %326 = vmatpush1.msra.mxu0 0.0
    %327 = vmatprep.subr.mxu0 0.0
    %328 = vmatpush1.msra.mxu0 0.0
    %329 = vmatprep.subr.mxu0 0.0
    %330 = vmatpush1.msra.mxu0 0.0
    %331 = vmatprep.subr.mxu0 0.0
    %332 = vmatpush1.msra.mxu0 0.0
    %333 = vmatprep.subr.mxu0 0.0
    %334 = vmatpush1.msra.mxu0 0.0
    %335 = vmatprep.subr.mxu0 0.0
    %336 = vmatpush1.msra.mxu0 0.0
    %337 = vmatprep.subr.mxu0 0.0
    %338 = vmatpush1.msra.mxu0 0.0
    %339 = vmatprep.subr.mxu0 0.0
    %340 = vmatpush1.msra.mxu0 0.0
    %341 = vmatprep.subr.mxu0 0.0
    %342 = vmatpush1.msra.mxu0 0.0
    %343 = vmatprep.subr.mxu0 0.0
    %344 = vmatpush1.msra.mxu0 0.0
    %345 = vmatprep.subr.mxu0 0.0
    %346 = vmatpush1.msra.mxu0 0.0
    %347 = vmatprep.subr.mxu0 0.0
    %348 = vmatpush1.msra.mxu0 0.0
    %349 = vmatprep.subr.mxu0 0.0
    %350 = vmatpush1.msra.mxu0 0.0
    %351 = vmatprep.subr.mxu0 0.0
    %352 = vmatpush1.msra.mxu0 0.0
    %353 = vmatprep.subr.mxu0 0.0
    %354 = vmatpush1.msra.mxu0 0.0
    %v355 = vand.u32 %v56, 4294901760
    %356 = vmatprep.subr.mxu0 %v355
    %v357 = vand.u32 %v54, 4294901760
    %358 = vmatpush1.msra.mxu0 %v357
    %359 = vmatprep.subr.mxu0 0.0
    %360 = vmatpush2.msra.mxu0 0.0
    %361 = vmatprep.subr.mxu0 0.0
    %362 = vmatpush2.msra.mxu0 0.0
    %363 = vmatprep.subr.mxu0 0.0
    %364 = vmatpush2.msra.mxu0 0.0
    %365 = vmatprep.subr.mxu0 0.0
    %366 = vmatpush2.msra.mxu0 0.0
    %367 = vmatprep.subr.mxu0 0.0
    %368 = vmatpush2.msra.mxu0 0.0
    %369 = vmatprep.subr.mxu0 0.0
    %370 = vmatpush2.msra.mxu0 0.0
    %371 = vmatprep.subr.mxu0 0.0
    %372 = vmatpush2.msra.mxu0 0.0
    %373 = vmatprep.subr.mxu0 0.0
    %374 = vmatpush2.msra.mxu0 0.0
    %375 = vmatprep.subr.mxu0 0.0
    %376 = vmatpush2.msra.mxu0 0.0
    %377 = vmatprep.subr.mxu0 0.0
    %378 = vmatpush2.msra.mxu0 0.0
    %379 = vmatprep.subr.mxu0 0.0
    %380 = vmatpush2.msra.mxu0 0.0
    %381 = vmatprep.subr.mxu0 0.0
    %382 = vmatpush2.msra.mxu0 0.0
    %383 = vmatprep.subr.mxu0 0.0
    %384 = vmatpush2.msra.mxu0 0.0
    %385 = vmatprep.subr.mxu0 0.0
    %386 = vmatpush2.msra.mxu0 0.0
    %387 = vmatprep.subr.mxu0 0.0
    %388 = vmatpush2.msra.mxu0 0.0
    %389 = vmatprep.subr.mxu0 0.0
    %390 = vmatpush2.msra.mxu0 0.0
    %391 = vmatprep.mubr.f32.mxu0 0.0
    %v392 = vand.u32 %v48, 4294901760
    %v393 = vsub.f32 %v48, %v392
    %v394 = vand.u32 %v393, 4294901760
    %395 = vmatmul.mubr.f32.gmra.mxu0 %v394
    %v396 = vpop.f32.mrf.mxu0
    %v397 = vadd.f32 %v313, %v396
    %v398 = vpop.f32.mrf.mxu0
    %v399 = vadd.f32 %v315, %v398
    %400 = vmatprep.mubr.f32.mxu0 0.0
    %v401 = vand.u32 %v51, 4294901760
    %v402 = vsub.f32 %v51, %v401
    %v403 = vand.u32 %v402, 4294901760
    %404 = vmatmul.mubr.f32.gmra.mxu0 %v403
    %v405 = vpop.f32.mrf.mxu0
    %v406 = vadd.f32 %v321, %v405
    %v407 = vpop.f32.mrf.mxu0
    %v408 = vadd.f32 %v323, %v407
    %409 = vdwg.mxu0
    %410 = vmatprep.subr.mxu0 0.0
    %411 = vmatpush1.msra.mxu0 0.0
    %412 = vmatprep.subr.mxu0 0.0
    %413 = vmatpush1.msra.mxu0 0.0
    %414 = vmatprep.subr.mxu0 0.0
    %415 = vmatpush1.msra.mxu0 0.0
    %416 = vmatprep.subr.mxu0 0.0
    %417 = vmatpush1.msra.mxu0 0.0
    %418 = vmatprep.subr.mxu0 0.0
    %419 = vmatpush1.msra.mxu0 0.0
    %420 = vmatprep.subr.mxu0 0.0
    %421 = vmatpush1.msra.mxu0 0.0
    %422 = vmatprep.subr.mxu0 0.0
    %423 = vmatpush1.msra.mxu0 0.0
    %424 = vmatprep.subr.mxu0 0.0
    %425 = vmatpush1.msra.mxu0 0.0
    %426 = vmatprep.subr.mxu0 0.0
    %427 = vmatpush1.msra.mxu0 0.0
    %428 = vmatprep.subr.mxu0 0.0
    %429 = vmatpush1.msra.mxu0 0.0
    %430 = vmatprep.subr.mxu0 0.0
    %431 = vmatpush1.msra.mxu0 0.0
    %432 = vmatprep.subr.mxu0 0.0
    %433 = vmatpush1.msra.mxu0 0.0
    %434 = vmatprep.subr.mxu0 0.0
    %435 = vmatpush1.msra.mxu0 0.0
    %436 = vmatprep.subr.mxu0 0.0
    %437 = vmatpush1.msra.mxu0 0.0
    %438 = vmatprep.subr.mxu0 0.0
    %439 = vmatpush1.msra.mxu0 0.0
    %v440 = vand.u32 %v56, 4294901760
    %v441 = vsub.f32 %v56, %v440
    %v442 = vand.u32 %v441, 4294901760
    %443 = vmatprep.subr.mxu0 %v442
    %v444 = vand.u32 %v54, 4294901760
    %v445 = vsub.f32 %v54, %v444
    %v446 = vand.u32 %v445, 4294901760
    %447 = vmatpush1.msra.mxu0 %v446
    %448 = vmatprep.subr.mxu0 0.0
    %449 = vmatpush2.msra.mxu0 0.0
    %450 = vmatprep.subr.mxu0 0.0
    %451 = vmatpush2.msra.mxu0 0.0
    %452 = vmatprep.subr.mxu0 0.0
    %453 = vmatpush2.msra.mxu0 0.0
    %454 = vmatprep.subr.mxu0 0.0
    %455 = vmatpush2.msra.mxu0 0.0
    %456 = vmatprep.subr.mxu0 0.0
    %457 = vmatpush2.msra.mxu0 0.0
    %458 = vmatprep.subr.mxu0 0.0
    %459 = vmatpush2.msra.mxu0 0.0
    %460 = vmatprep.subr.mxu0 0.0
    %461 = vmatpush2.msra.mxu0 0.0
    %462 = vmatprep.subr.mxu0 0.0
    %463 = vmatpush2.msra.mxu0 0.0
    %464 = vmatprep.subr.mxu0 0.0
    %465 = vmatpush2.msra.mxu0 0.0
    %466 = vmatprep.subr.mxu0 0.0
    %467 = vmatpush2.msra.mxu0 0.0
    %468 = vmatprep.subr.mxu0 0.0
    %469 = vmatpush2.msra.mxu0 0.0
    %470 = vmatprep.subr.mxu0 0.0
    %471 = vmatpush2.msra.mxu0 0.0
    %472 = vmatprep.subr.mxu0 0.0
    %473 = vmatpush2.msra.mxu0 0.0
    %474 = vmatprep.subr.mxu0 0.0
    %475 = vmatpush2.msra.mxu0 0.0
    %476 = vmatprep.subr.mxu0 0.0
    %477 = vmatpush2.msra.mxu0 0.0
    %478 = vmatprep.subr.mxu0 0.0
    %479 = vmatpush2.msra.mxu0 0.0
    %480 = vmatprep.mubr.f32.mxu0 0.0
    %v481 = vand.u32 %v48, 4294901760
    %482 = vmatmul.mubr.f32.gmra.mxu0 %v481
    %v483 = vpop.f32.mrf.mxu0
    %v484 = vadd.f32 %v397, %v483
    %v485 = vpop.f32.mrf.mxu0
    %v486 = vadd.f32 %v399, %v485
    %487 = vmatprep.mubr.f32.mxu0 0.0
    %v488 = vand.u32 %v51, 4294901760
    %489 = vmatmul.mubr.f32.gmra.mxu0 %v488
    %v490 = vpop.f32.mrf.mxu0
    %v491 = vadd.f32 %v406, %v490
    %v492 = vpop.f32.mrf.mxu0
    %v493 = vadd.f32 %v408, %v492
    %494 = vdwg.mxu0
    %495 = vmatprep.subr.mxu0 0.0
    %496 = vmatpush1.msra.mxu0 0.0
    %497 = vmatprep.subr.mxu0 0.0
    %498 = vmatpush1.msra.mxu0 0.0
    %499 = vmatprep.subr.mxu0 0.0
    %500 = vmatpush1.msra.mxu0 0.0
    %501 = vmatprep.subr.mxu0 0.0
    %502 = vmatpush1.msra.mxu0 0.0
    %503 = vmatprep.subr.mxu0 0.0
    %504 = vmatpush1.msra.mxu0 0.0
    %505 = vmatprep.subr.mxu0 0.0
    %506 = vmatpush1.msra.mxu0 0.0
    %507 = vmatprep.subr.mxu0 0.0
    %508 = vmatpush1.msra.mxu0 0.0
    %509 = vmatprep.subr.mxu0 0.0
    %510 = vmatpush1.msra.mxu0 0.0
    %511 = vmatprep.subr.mxu0 0.0
    %512 = vmatpush1.msra.mxu0 0.0
    %513 = vmatprep.subr.mxu0 0.0
    %514 = vmatpush1.msra.mxu0 0.0
    %515 = vmatprep.subr.mxu0 0.0
    %516 = vmatpush1.msra.mxu0 0.0
    %517 = vmatprep.subr.mxu0 0.0
    %518 = vmatpush1.msra.mxu0 0.0
    %519 = vmatprep.subr.mxu0 0.0
    %520 = vmatpush1.msra.mxu0 0.0
    %521 = vmatprep.subr.mxu0 0.0
    %522 = vmatpush1.msra.mxu0 0.0
    %523 = vmatprep.subr.mxu0 0.0
    %524 = vmatpush1.msra.mxu0 0.0
    %v525 = vand.u32 %v56, 4294901760
    %526 = vmatprep.subr.mxu0 %v525
    %v527 = vand.u32 %v54, 4294901760
    %528 = vmatpush1.msra.mxu0 %v527
    %529 = vmatprep.subr.mxu0 0.0
    %530 = vmatpush2.msra.mxu0 0.0
    %531 = vmatprep.subr.mxu0 0.0
    %532 = vmatpush2.msra.mxu0 0.0
    %533 = vmatprep.subr.mxu0 0.0
    %534 = vmatpush2.msra.mxu0 0.0
    %535 = vmatprep.subr.mxu0 0.0
    %536 = vmatpush2.msra.mxu0 0.0
    %537 = vmatprep.subr.mxu0 0.0
    %538 = vmatpush2.msra.mxu0 0.0
    %539 = vmatprep.subr.mxu0 0.0
    %540 = vmatpush2.msra.mxu0 0.0
    %541 = vmatprep.subr.mxu0 0.0
    %542 = vmatpush2.msra.mxu0 0.0
    %543 = vmatprep.subr.mxu0 0.0
    %544 = vmatpush2.msra.mxu0 0.0
    %545 = vmatprep.subr.mxu0 0.0
    %546 = vmatpush2.msra.mxu0 0.0
    %547 = vmatprep.subr.mxu0 0.0
    %548 = vmatpush2.msra.mxu0 0.0
    %549 = vmatprep.subr.mxu0 0.0
    %550 = vmatpush2.msra.mxu0 0.0
    %551 = vmatprep.subr.mxu0 0.0
    %552 = vmatpush2.msra.mxu0 0.0
    %553 = vmatprep.subr.mxu0 0.0
    %554 = vmatpush2.msra.mxu0 0.0
    %555 = vmatprep.subr.mxu0 0.0
    %556 = vmatpush2.msra.mxu0 0.0
    %557 = vmatprep.subr.mxu0 0.0
    %558 = vmatpush2.msra.mxu0 0.0
    %559 = vmatprep.subr.mxu0 0.0
    %560 = vmatpush2.msra.mxu0 0.0
    %561 = vmatprep.mubr.f32.mxu0 0.0
    %v562 = vand.u32 %v48, 4294901760
    %563 = vmatmul.mubr.f32.gmra.mxu0 %v562
    %v564 = vpop.f32.mrf.mxu0
    %v565 = vadd.f32 %v484, %v564
    %v566 = vpop.f32.mrf.mxu0
    %v567 = vadd.f32 %v486, %v566
    %568 = vmatprep.mubr.f32.mxu0 0.0
    %v569 = vand.u32 %v51, 4294901760
    %570 = vmatmul.mubr.f32.gmra.mxu0 %v569
    %v571 = vpop.f32.mrf.mxu0
    %v572 = vadd.f32 %v491, %v571
    %v573 = vpop.f32.mrf.mxu0
    %v574 = vadd.f32 %v493, %v573
    %575 = vdwg.mxu0
    %576 = vmatprep.subr.mxu0 0.0
    %577 = vmatpush1.msra.mxu0 0.0
    %578 = vmatprep.subr.mxu0 0.0
    %579 = vmatpush1.msra.mxu0 0.0
    %580 = vmatprep.subr.mxu0 0.0
    %581 = vmatpush1.msra.mxu0 0.0
    %582 = vmatprep.subr.mxu0 0.0
    %583 = vmatpush1.msra.mxu0 0.0
    %584 = vmatprep.subr.mxu0 0.0
    %585 = vmatpush1.msra.mxu0 0.0
    %586 = vmatprep.subr.mxu0 0.0
    %587 = vmatpush1.msra.mxu0 0.0
    %588 = vmatprep.subr.mxu0 0.0
    %589 = vmatpush1.msra.mxu0 0.0
    %590 = vmatprep.subr.mxu0 0.0
    %591 = vmatpush1.msra.mxu0 0.0
    %592 = vmatprep.subr.mxu0 0.0
    %593 = vmatpush1.msra.mxu0 0.0
    %594 = vmatprep.subr.mxu0 0.0
    %595 = vmatpush1.msra.mxu0 0.0
    %596 = vmatprep.subr.mxu0 0.0
    %597 = vmatpush1.msra.mxu0 0.0
    %598 = vmatprep.subr.mxu0 0.0
    %599 = vmatpush1.msra.mxu0 0.0
    %600 = vmatprep.subr.mxu0 0.0
    %601 = vmatpush1.msra.mxu0 0.0
    %602 = vmatprep.subr.mxu0 0.0
    %603 = vmatpush1.msra.mxu0 0.0
    %604 = vmatprep.subr.mxu0 0.0
    %605 = vmatpush1.msra.mxu0 0.0
    %v606 = vand.u32 %v60, 4294901760
    %607 = vmatprep.subr.mxu0 %v606
    %v608 = vand.u32 %v58, 4294901760
    %609 = vmatpush1.msra.mxu0 %v608
    %610 = vmatprep.subr.mxu0 0.0
    %611 = vmatpush2.msra.mxu0 0.0
    %612 = vmatprep.subr.mxu0 0.0
    %613 = vmatpush2.msra.mxu0 0.0
    %614 = vmatprep.subr.mxu0 0.0
    %615 = vmatpush2.msra.mxu0 0.0
    %616 = vmatprep.subr.mxu0 0.0
    %617 = vmatpush2.msra.mxu0 0.0
    %618 = vmatprep.subr.mxu0 0.0
    %619 = vmatpush2.msra.mxu0 0.0
    %620 = vmatprep.subr.mxu0 0.0
    %621 = vmatpush2.msra.mxu0 0.0
    %622 = vmatprep.subr.mxu0 0.0
    %623 = vmatpush2.msra.mxu0 0.0
    %624 = vmatprep.subr.mxu0 0.0
    %625 = vmatpush2.msra.mxu0 0.0
    %626 = vmatprep.subr.mxu0 0.0
    %627 = vmatpush2.msra.mxu0 0.0
    %628 = vmatprep.subr.mxu0 0.0
    %629 = vmatpush2.msra.mxu0 0.0
    %630 = vmatprep.subr.mxu0 0.0
    %631 = vmatpush2.msra.mxu0 0.0
    %632 = vmatprep.subr.mxu0 0.0
    %633 = vmatpush2.msra.mxu0 0.0
    %634 = vmatprep.subr.mxu0 0.0
    %635 = vmatpush2.msra.mxu0 0.0
    %636 = vmatprep.subr.mxu0 0.0
    %637 = vmatpush2.msra.mxu0 0.0
    %638 = vmatprep.subr.mxu0 0.0
    %639 = vmatpush2.msra.mxu0 0.0
    %640 = vmatprep.subr.mxu0 0.0
    %641 = vmatpush2.msra.mxu0 0.0
    %642 = vmatprep.mubr.f32.mxu0 0.0
    %v643 = vand.u32 %v48, 4294901760
    %v644 = vsub.f32 %v48, %v643
    %v645 = vand.u32 %v644, 4294901760
    %v646 = vsub.f32 %v644, %v645
    %v647 = vand.u32 %v646, 4294901760
    %648 = vmatmul.mubr.f32.gmra.mxu0 %v647
    %v649 = vpop.f32.mrf.mxu0
    %v650 = vadd.f32 0.0, %v649
    %v651 = vpop.f32.mrf.mxu0
    %v652 = vadd.f32 0.0, %v651
    %653 = vmatprep.mubr.f32.mxu0 0.0
    %v654 = vand.u32 %v51, 4294901760
    %v655 = vsub.f32 %v51, %v654
    %v656 = vand.u32 %v655, 4294901760
    %v657 = vsub.f32 %v655, %v656
    %v658 = vand.u32 %v657, 4294901760
    %659 = vmatmul.mubr.f32.gmra.mxu0 %v658
    %v660 = vpop.f32.mrf.mxu0
    %v661 = vadd.f32 0.0, %v660
    %v662 = vpop.f32.mrf.mxu0
    %v663 = vadd.f32 0.0, %v662
    %664 = vdwg.mxu0
    %665 = vmatprep.subr.mxu0 0.0
    %666 = vmatpush1.msra.mxu0 0.0
    %667 = vmatprep.subr.mxu0 0.0
    %668 = vmatpush1.msra.mxu0 0.0
    %669 = vmatprep.subr.mxu0 0.0
    %670 = vmatpush1.msra.mxu0 0.0
    %671 = vmatprep.subr.mxu0 0.0
    %672 = vmatpush1.msra.mxu0 0.0
    %673 = vmatprep.subr.mxu0 0.0
    %674 = vmatpush1.msra.mxu0 0.0
    %675 = vmatprep.subr.mxu0 0.0
    %676 = vmatpush1.msra.mxu0 0.0
    %677 = vmatprep.subr.mxu0 0.0
    %678 = vmatpush1.msra.mxu0 0.0
    %679 = vmatprep.subr.mxu0 0.0
    %680 = vmatpush1.msra.mxu0 0.0
    %681 = vmatprep.subr.mxu0 0.0
    %682 = vmatpush1.msra.mxu0 0.0
    %683 = vmatprep.subr.mxu0 0.0
    %684 = vmatpush1.msra.mxu0 0.0
    %685 = vmatprep.subr.mxu0 0.0
    %686 = vmatpush1.msra.mxu0 0.0
    %687 = vmatprep.subr.mxu0 0.0
    %688 = vmatpush1.msra.mxu0 0.0
    %689 = vmatprep.subr.mxu0 0.0
    %690 = vmatpush1.msra.mxu0 0.0
    %691 = vmatprep.subr.mxu0 0.0
    %692 = vmatpush1.msra.mxu0 0.0
    %693 = vmatprep.subr.mxu0 0.0
    %694 = vmatpush1.msra.mxu0 0.0
    %v695 = vand.u32 %v60, 4294901760
    %v696 = vsub.f32 %v60, %v695
    %v697 = vand.u32 %v696, 4294901760
    %v698 = vsub.f32 %v696, %v697
    %v699 = vand.u32 %v698, 4294901760
    %700 = vmatprep.subr.mxu0 %v699
    %v701 = vand.u32 %v58, 4294901760
    %v702 = vsub.f32 %v58, %v701
    %v703 = vand.u32 %v702, 4294901760
    %v704 = vsub.f32 %v702, %v703
    %v705 = vand.u32 %v704, 4294901760
    %706 = vmatpush1.msra.mxu0 %v705
    %707 = vmatprep.subr.mxu0 0.0
    %708 = vmatpush2.msra.mxu0 0.0
    %709 = vmatprep.subr.mxu0 0.0
    %710 = vmatpush2.msra.mxu0 0.0
    %711 = vmatprep.subr.mxu0 0.0
    %712 = vmatpush2.msra.mxu0 0.0
    %713 = vmatprep.subr.mxu0 0.0
    %714 = vmatpush2.msra.mxu0 0.0
    %715 = vmatprep.subr.mxu0 0.0
    %716 = vmatpush2.msra.mxu0 0.0
    %717 = vmatprep.subr.mxu0 0.0
    %718 = vmatpush2.msra.mxu0 0.0
    %719 = vmatprep.subr.mxu0 0.0
    %720 = vmatpush2.msra.mxu0 0.0
    %721 = vmatprep.subr.mxu0 0.0
    %722 = vmatpush2.msra.mxu0 0.0
    %723 = vmatprep.subr.mxu0 0.0
    %724 = vmatpush2.msra.mxu0 0.0
    %725 = vmatprep.subr.mxu0 0.0
    %726 = vmatpush2.msra.mxu0 0.0
    %727 = vmatprep.subr.mxu0 0.0
    %728 = vmatpush2.msra.mxu0 0.0
    %729 = vmatprep.subr.mxu0 0.0
    %730 = vmatpush2.msra.mxu0 0.0
    %731 = vmatprep.subr.mxu0 0.0
    %732 = vmatpush2.msra.mxu0 0.0
    %733 = vmatprep.subr.mxu0 0.0
    %734 = vmatpush2.msra.mxu0 0.0
    %735 = vmatprep.subr.mxu0 0.0
    %736 = vmatpush2.msra.mxu0 0.0
    %737 = vmatprep.subr.mxu0 0.0
    %738 = vmatpush2.msra.mxu0 0.0
    %739 = vmatprep.mubr.f32.mxu0 0.0
    %v740 = vand.u32 %v48, 4294901760
    %741 = vmatmul.mubr.f32.gmra.mxu0 %v740
    %v742 = vpop.f32.mrf.mxu0
    %v743 = vadd.f32 %v650, %v742
    %v744 = vpop.f32.mrf.mxu0
    %v745 = vadd.f32 %v652, %v744
    %746 = vmatprep.mubr.f32.mxu0 0.0
    %v747 = vand.u32 %v51, 4294901760
    %748 = vmatmul.mubr.f32.gmra.mxu0 %v747
    %v749 = vpop.f32.mrf.mxu0
    %v750 = vadd.f32 %v661, %v749
    %v751 = vpop.f32.mrf.mxu0
    %v752 = vadd.f32 %v663, %v751
    %753 = vdwg.mxu0
    %754 = vmatprep.subr.mxu0 0.0
    %755 = vmatpush1.msra.mxu0 0.0
    %756 = vmatprep.subr.mxu0 0.0
    %757 = vmatpush1.msra.mxu0 0.0
    %758 = vmatprep.subr.mxu0 0.0
    %759 = vmatpush1.msra.mxu0 0.0
    %760 = vmatprep.subr.mxu0 0.0
    %761 = vmatpush1.msra.mxu0 0.0
    %762 = vmatprep.subr.mxu0 0.0
    %763 = vmatpush1.msra.mxu0 0.0
    %764 = vmatprep.subr.mxu0 0.0
    %765 = vmatpush1.msra.mxu0 0.0
    %766 = vmatprep.subr.mxu0 0.0
    %767 = vmatpush1.msra.mxu0 0.0
    %768 = vmatprep.subr.mxu0 0.0
    %769 = vmatpush1.msra.mxu0 0.0
    %770 = vmatprep.subr.mxu0 0.0
    %771 = vmatpush1.msra.mxu0 0.0
    %772 = vmatprep.subr.mxu0 0.0
    %773 = vmatpush1.msra.mxu0 0.0
    %774 = vmatprep.subr.mxu0 0.0
    %775 = vmatpush1.msra.mxu0 0.0
    %776 = vmatprep.subr.mxu0 0.0
    %777 = vmatpush1.msra.mxu0 0.0
    %778 = vmatprep.subr.mxu0 0.0
    %779 = vmatpush1.msra.mxu0 0.0
    %780 = vmatprep.subr.mxu0 0.0
    %781 = vmatpush1.msra.mxu0 0.0
    %782 = vmatprep.subr.mxu0 0.0
    %783 = vmatpush1.msra.mxu0 0.0
    %v784 = vand.u32 %v60, 4294901760
    %v785 = vsub.f32 %v60, %v784
    %786 = vmatprep.subr.mxu0 %v785
    %v787 = vand.u32 %v58, 4294901760
    %v788 = vsub.f32 %v58, %v787
    %789 = vmatpush1.msra.mxu0 %v788
    %790 = vmatprep.subr.mxu0 0.0
    %791 = vmatpush2.msra.mxu0 0.0
    %792 = vmatprep.subr.mxu0 0.0
    %793 = vmatpush2.msra.mxu0 0.0
    %794 = vmatprep.subr.mxu0 0.0
    %795 = vmatpush2.msra.mxu0 0.0
    %796 = vmatprep.subr.mxu0 0.0
    %797 = vmatpush2.msra.mxu0 0.0
    %798 = vmatprep.subr.mxu0 0.0
    %799 = vmatpush2.msra.mxu0 0.0
    %800 = vmatprep.subr.mxu0 0.0
    %801 = vmatpush2.msra.mxu0 0.0
    %802 = vmatprep.subr.mxu0 0.0
    %803 = vmatpush2.msra.mxu0 0.0
    %804 = vmatprep.subr.mxu0 0.0
    %805 = vmatpush2.msra.mxu0 0.0
    %806 = vmatprep.subr.mxu0 0.0
    %807 = vmatpush2.msra.mxu0 0.0
    %808 = vmatprep.subr.mxu0 0.0
    %809 = vmatpush2.msra.mxu0 0.0
    %810 = vmatprep.subr.mxu0 0.0
    %811 = vmatpush2.msra.mxu0 0.0
    %812 = vmatprep.subr.mxu0 0.0
    %813 = vmatpush2.msra.mxu0 0.0
    %814 = vmatprep.subr.mxu0 0.0
    %815 = vmatpush2.msra.mxu0 0.0
    %816 = vmatprep.subr.mxu0 0.0
    %817 = vmatpush2.msra.mxu0 0.0
    %818 = vmatprep.subr.mxu0 0.0
    %819 = vmatpush2.msra.mxu0 0.0
    %820 = vmatprep.subr.mxu0 0.0
    %821 = vmatpush2.msra.mxu0 0.0
    %822 = vmatprep.mubr.f32.mxu0 0.0
    %v823 = vand.u32 %v48, 4294901760
    %v824 = vsub.f32 %v48, %v823
    %825 = vmatmul.mubr.f32.gmra.mxu0 %v824
    %v826 = vpop.f32.mrf.mxu0
    %v827 = vadd.f32 %v743, %v826
    %v828 = vpop.f32.mrf.mxu0
    %v829 = vadd.f32 %v745, %v828
    %830 = vmatprep.mubr.f32.mxu0 0.0
    %v831 = vand.u32 %v51, 4294901760
    %v832 = vsub.f32 %v51, %v831
    %833 = vmatmul.mubr.f32.gmra.mxu0 %v832
    %v834 = vpop.f32.mrf.mxu0
    %v835 = vadd.f32 %v750, %v834
    %v836 = vpop.f32.mrf.mxu0
    %v837 = vadd.f32 %v752, %v836
    %838 = vdwg.mxu0
    %839 = vmatprep.subr.mxu0 0.0
    %840 = vmatpush1.msra.mxu0 0.0
    %841 = vmatprep.subr.mxu0 0.0
    %842 = vmatpush1.msra.mxu0 0.0
    %843 = vmatprep.subr.mxu0 0.0
    %844 = vmatpush1.msra.mxu0 0.0
    %845 = vmatprep.subr.mxu0 0.0
    %846 = vmatpush1.msra.mxu0 0.0
    %847 = vmatprep.subr.mxu0 0.0
    %848 = vmatpush1.msra.mxu0 0.0
    %849 = vmatprep.subr.mxu0 0.0
    %850 = vmatpush1.msra.mxu0 0.0
    %851 = vmatprep.subr.mxu0 0.0
    %852 = vmatpush1.msra.mxu0 0.0
    %853 = vmatprep.subr.mxu0 0.0
    %854 = vmatpush1.msra.mxu0 0.0
    %855 = vmatprep.subr.mxu0 0.0
    %856 = vmatpush1.msra.mxu0 0.0
    %857 = vmatprep.subr.mxu0 0.0
    %858 = vmatpush1.msra.mxu0 0.0
    %859 = vmatprep.subr.mxu0 0.0
    %860 = vmatpush1.msra.mxu0 0.0
    %861 = vmatprep.subr.mxu0 0.0
    %862 = vmatpush1.msra.mxu0 0.0
    %863 = vmatprep.subr.mxu0 0.0
    %864 = vmatpush1.msra.mxu0 0.0
    %865 = vmatprep.subr.mxu0 0.0
    %866 = vmatpush1.msra.mxu0 0.0
    %867 = vmatprep.subr.mxu0 0.0
    %868 = vmatpush1.msra.mxu0 0.0
    %v869 = vand.u32 %v60, 4294901760
    %870 = vmatprep.subr.mxu0 %v869
    %v871 = vand.u32 %v58, 4294901760
    %872 = vmatpush1.msra.mxu0 %v871
    %873 = vmatprep.subr.mxu0 0.0
    %874 = vmatpush2.msra.mxu0 0.0
    %875 = vmatprep.subr.mxu0 0.0
    %876 = vmatpush2.msra.mxu0 0.0
    %877 = vmatprep.subr.mxu0 0.0
    %878 = vmatpush2.msra.mxu0 0.0
    %879 = vmatprep.subr.mxu0 0.0
    %880 = vmatpush2.msra.mxu0 0.0
    %881 = vmatprep.subr.mxu0 0.0
    %882 = vmatpush2.msra.mxu0 0.0
    %883 = vmatprep.subr.mxu0 0.0
    %884 = vmatpush2.msra.mxu0 0.0
    %885 = vmatprep.subr.mxu0 0.0
    %886 = vmatpush2.msra.mxu0 0.0
    %887 = vmatprep.subr.mxu0 0.0
    %888 = vmatpush2.msra.mxu0 0.0
    %889 = vmatprep.subr.mxu0 0.0
    %890 = vmatpush2.msra.mxu0 0.0
    %891 = vmatprep.subr.mxu0 0.0
    %892 = vmatpush2.msra.mxu0 0.0
    %893 = vmatprep.subr.mxu0 0.0
    %894 = vmatpush2.msra.mxu0 0.0
    %895 = vmatprep.subr.mxu0 0.0
    %896 = vmatpush2.msra.mxu0 0.0
    %897 = vmatprep.subr.mxu0 0.0
    %898 = vmatpush2.msra.mxu0 0.0
    %899 = vmatprep.subr.mxu0 0.0
    %900 = vmatpush2.msra.mxu0 0.0
    %901 = vmatprep.subr.mxu0 0.0
    %902 = vmatpush2.msra.mxu0 0.0
    %903 = vmatprep.subr.mxu0 0.0
    %904 = vmatpush2.msra.mxu0 0.0
    %905 = vmatprep.mubr.f32.mxu0 0.0
    %v906 = vand.u32 %v48, 4294901760
    %v907 = vsub.f32 %v48, %v906
    %v908 = vand.u32 %v907, 4294901760
    %909 = vmatmul.mubr.f32.gmra.mxu0 %v908
    %v910 = vpop.f32.mrf.mxu0
    %v911 = vadd.f32 %v827, %v910
    %v912 = vpop.f32.mrf.mxu0
    %v913 = vadd.f32 %v829, %v912
    %914 = vmatprep.mubr.f32.mxu0 0.0
    %v915 = vand.u32 %v51, 4294901760
    %v916 = vsub.f32 %v51, %v915
    %v917 = vand.u32 %v916, 4294901760
    %918 = vmatmul.mubr.f32.gmra.mxu0 %v917
    %v919 = vpop.f32.mrf.mxu0
    %v920 = vadd.f32 %v835, %v919
    %v921 = vpop.f32.mrf.mxu0
    %v922 = vadd.f32 %v837, %v921
    %923 = vdwg.mxu0
    %924 = vmatprep.subr.mxu0 0.0
    %925 = vmatpush1.msra.mxu0 0.0
    %926 = vmatprep.subr.mxu0 0.0
    %927 = vmatpush1.msra.mxu0 0.0
    %928 = vmatprep.subr.mxu0 0.0
    %929 = vmatpush1.msra.mxu0 0.0
    %930 = vmatprep.subr.mxu0 0.0
    %931 = vmatpush1.msra.mxu0 0.0
    %932 = vmatprep.subr.mxu0 0.0
    %933 = vmatpush1.msra.mxu0 0.0
    %934 = vmatprep.subr.mxu0 0.0
    %935 = vmatpush1.msra.mxu0 0.0
    %936 = vmatprep.subr.mxu0 0.0
    %937 = vmatpush1.msra.mxu0 0.0
    %938 = vmatprep.subr.mxu0 0.0
    %939 = vmatpush1.msra.mxu0 0.0
    %940 = vmatprep.subr.mxu0 0.0
    %941 = vmatpush1.msra.mxu0 0.0
    %942 = vmatprep.subr.mxu0 0.0
    %943 = vmatpush1.msra.mxu0 0.0
    %944 = vmatprep.subr.mxu0 0.0
    %945 = vmatpush1.msra.mxu0 0.0
    %946 = vmatprep.subr.mxu0 0.0
    %947 = vmatpush1.msra.mxu0 0.0
    %948 = vmatprep.subr.mxu0 0.0
    %949 = vmatpush1.msra.mxu0 0.0
    %950 = vmatprep.subr.mxu0 0.0
    %951 = vmatpush1.msra.mxu0 0.0
    %952 = vmatprep.subr.mxu0 0.0
    %953 = vmatpush1.msra.mxu0 0.0
    %v954 = vand.u32 %v60, 4294901760
    %v955 = vsub.f32 %v60, %v954
    %v956 = vand.u32 %v955, 4294901760
    %957 = vmatprep.subr.mxu0 %v956
    %v958 = vand.u32 %v58, 4294901760
    %v959 = vsub.f32 %v58, %v958
    %v960 = vand.u32 %v959, 4294901760
    %961 = vmatpush1.msra.mxu0 %v960
    %962 = vmatprep.subr.mxu0 0.0
    %963 = vmatpush2.msra.mxu0 0.0
    %964 = vmatprep.subr.mxu0 0.0
    %965 = vmatpush2.msra.mxu0 0.0
    %966 = vmatprep.subr.mxu0 0.0
    %967 = vmatpush2.msra.mxu0 0.0
    %968 = vmatprep.subr.mxu0 0.0
    %969 = vmatpush2.msra.mxu0 0.0
    %970 = vmatprep.subr.mxu0 0.0
    %971 = vmatpush2.msra.mxu0 0.0
    %972 = vmatprep.subr.mxu0 0.0
    %973 = vmatpush2.msra.mxu0 0.0
    %974 = vmatprep.subr.mxu0 0.0
    %975 = vmatpush2.msra.mxu0 0.0
    %976 = vmatprep.subr.mxu0 0.0
    %977 = vmatpush2.msra.mxu0 0.0
    %978 = vmatprep.subr.mxu0 0.0
    %979 = vmatpush2.msra.mxu0 0.0
    %980 = vmatprep.subr.mxu0 0.0
    %981 = vmatpush2.msra.mxu0 0.0
    %982 = vmatprep.subr.mxu0 0.0
    %983 = vmatpush2.msra.mxu0 0.0
    %984 = vmatprep.subr.mxu0 0.0
    %985 = vmatpush2.msra.mxu0 0.0
    %986 = vmatprep.subr.mxu0 0.0
    %987 = vmatpush2.msra.mxu0 0.0
    %988 = vmatprep.subr.mxu0 0.0
    %989 = vmatpush2.msra.mxu0 0.0
    %990 = vmatprep.subr.mxu0 0.0
    %991 = vmatpush2.msra.mxu0 0.0
    %992 = vmatprep.subr.mxu0 0.0
    %993 = vmatpush2.msra.mxu0 0.0
    %994 = vmatprep.mubr.f32.mxu0 0.0
    %v995 = vand.u32 %v48, 4294901760
    %996 = vmatmul.mubr.f32.gmra.mxu0 %v995
    %v997 = vpop.f32.mrf.mxu0
    %v998 = vadd.f32 %v911, %v997
    %v999 = vpop.f32.mrf.mxu0
    %v1000 = vadd.f32 %v913, %v999
    %1001 = vmatprep.mubr.f32.mxu0 0.0
    %v1002 = vand.u32 %v51, 4294901760
    %1003 = vmatmul.mubr.f32.gmra.mxu0 %v1002
    %v1004 = vpop.f32.mrf.mxu0
    %v1005 = vadd.f32 %v920, %v1004
    %v1006 = vpop.f32.mrf.mxu0
    %v1007 = vadd.f32 %v922, %v1006
    %1008 = vdwg.mxu0
    %1009 = vmatprep.subr.mxu0 0.0
    %1010 = vmatpush1.msra.mxu0 0.0
    %1011 = vmatprep.subr.mxu0 0.0
    %1012 = vmatpush1.msra.mxu0 0.0
    %1013 = vmatprep.subr.mxu0 0.0
    %1014 = vmatpush1.msra.mxu0 0.0
    %1015 = vmatprep.subr.mxu0 0.0
    %1016 = vmatpush1.msra.mxu0 0.0
    %1017 = vmatprep.subr.mxu0 0.0
    %1018 = vmatpush1.msra.mxu0 0.0
    %1019 = vmatprep.subr.mxu0 0.0
    %1020 = vmatpush1.msra.mxu0 0.0
    %1021 = vmatprep.subr.mxu0 0.0
    %1022 = vmatpush1.msra.mxu0 0.0
    %1023 = vmatprep.subr.mxu0 0.0
    %1024 = vmatpush1.msra.mxu0 0.0
    %1025 = vmatprep.subr.mxu0 0.0
    %1026 = vmatpush1.msra.mxu0 0.0
    %1027 = vmatprep.subr.mxu0 0.0
    %1028 = vmatpush1.msra.mxu0 0.0
    %1029 = vmatprep.subr.mxu0 0.0
    %1030 = vmatpush1.msra.mxu0 0.0
    %1031 = vmatprep.subr.mxu0 0.0
    %1032 = vmatpush1.msra.mxu0 0.0
    %1033 = vmatprep.subr.mxu0 0.0
    %1034 = vmatpush1.msra.mxu0 0.0
    %1035 = vmatprep.subr.mxu0 0.0
    %1036 = vmatpush1.msra.mxu0 0.0
    %1037 = vmatprep.subr.mxu0 0.0
    %1038 = vmatpush1.msra.mxu0 0.0
    %v1039 = vand.u32 %v60, 4294901760
    %1040 = vmatprep.subr.mxu0 %v1039
    %v1041 = vand.u32 %v58, 4294901760
    %1042 = vmatpush1.msra.mxu0 %v1041
    %1043 = vmatprep.subr.mxu0 0.0
    %1044 = vmatpush2.msra.mxu0 0.0
    %1045 = vmatprep.subr.mxu0 0.0
    %1046 = vmatpush2.msra.mxu0 0.0
    %1047 = vmatprep.subr.mxu0 0.0
    %1048 = vmatpush2.msra.mxu0 0.0
    %1049 = vmatprep.subr.mxu0 0.0
    %1050 = vmatpush2.msra.mxu0 0.0
    %1051 = vmatprep.subr.mxu0 0.0
    %1052 = vmatpush2.msra.mxu0 0.0
    %1053 = vmatprep.subr.mxu0 0.0
    %1054 = vmatpush2.msra.mxu0 0.0
    %1055 = vmatprep.subr.mxu0 0.0
    %1056 = vmatpush2.msra.mxu0 0.0
    %1057 = vmatprep.subr.mxu0 0.0
    %1058 = vmatpush2.msra.mxu0 0.0
    %1059 = vmatprep.subr.mxu0 0.0
    %1060 = vmatpush2.msra.mxu0 0.0
    %1061 = vmatprep.subr.mxu0 0.0
    %1062 = vmatpush2.msra.mxu0 0.0
    %1063 = vmatprep.subr.mxu0 0.0
    %1064 = vmatpush2.msra.mxu0 0.0
    %1065 = vmatprep.subr.mxu0 0.0
    %1066 = vmatpush2.msra.mxu0 0.0
    %1067 = vmatprep.subr.mxu0 0.0
    %1068 = vmatpush2.msra.mxu0 0.0
    %1069 = vmatprep.subr.mxu0 0.0
    %1070 = vmatpush2.msra.mxu0 0.0
    %1071 = vmatprep.subr.mxu0 0.0
    %1072 = vmatpush2.msra.mxu0 0.0
    %1073 = vmatprep.subr.mxu0 0.0
    %1074 = vmatpush2.msra.mxu0 0.0
    %1075 = vmatprep.mubr.f32.mxu0 0.0
    %v1076 = vand.u32 %v48, 4294901760
    %1077 = vmatmul.mubr.f32.gmra.mxu0 %v1076
    %v1078 = vpop.f32.mrf.mxu0
    %v1079 = vadd.f32 %v998, %v1078
    %v1080 = vpop.f32.mrf.mxu0
    %v1081 = vadd.f32 %v1000, %v1080
    %1082 = vmatprep.mubr.f32.mxu0 0.0
    %v1083 = vand.u32 %v51, 4294901760
    %1084 = vmatmul.mubr.f32.gmra.mxu0 %v1083
    %v1085 = vpop.f32.mrf.mxu0
    %v1086 = vadd.f32 %v1005, %v1085
    %v1087 = vpop.f32.mrf.mxu0
    %v1088 = vadd.f32 %v1007, %v1087
    %1089 = vdwg.mxu0
    %1090 = vst [vmem:[#allocation2] sm:$0xff] %v565
    %1091 = vst [vmem:[#allocation2 + $0x8] sm:$0xff] %v567
    %1092 = vst [vmem:[#allocation2 + $0x10] sm:$0xff] %v1079
    %1093 = vst [vmem:[#allocation2 + $0x18] sm:$0xff] %v1081
    %1094 = vst [vmem:[#allocation2 + $0x20] sm:$0xff] %v572
    %1095 = vst [vmem:[#allocation2 + $0x28] sm:$0xff] %v574
    %1096 = vst [vmem:[#allocation2 + $0x30] sm:$0xff] %v1086
    %1097 = vst [vmem:[#allocation2 + $0x38] sm:$0xff] %v1088
    %v1098 = vld [vmem:[#allocation7 + $0x10] sm:$0xff]
    %v1099 = vld [vmem:[#allocation7 + $0x18] sm:$0xff]
    %v1100 = vld [vmem:[#allocation7 + $0x20] sm:$0xff]
    %v1101 = vld [vmem:[#allocation7 + $0x28] sm:$0xff]
    %v1102 = vld [vmem:[#allocation7 + $0x60] sm:$0xff]
    %v1103 = vld [vmem:[#allocation7 + $0x68] sm:$0xff]
    %v1104 = vld [vmem:[#allocation7 + $0x70] sm:$0xff]
    %v1105 = vld [vmem:[#allocation7 + $0x78] sm:$0xff]
    %v1106 = vld [vmem:[#allocation7 + $0x80] sm:$0xff]
    %v1107 = vld [vmem:[#allocation7 + $0x88] sm:$0xff]
    %v1108 = vld [vmem:[#allocation7 + $0x90] sm:$0xff]
    %v1109 = vld [vmem:[#allocation7 + $0x98] sm:$0xff]
    %v1110 = vld [vmem:[#allocation7 + $0xa0] sm:$0xff]
    %v1111 = vld [vmem:[#allocation7 + $0xa8] sm:$0xff]
    %v1112 = vld [vmem:[#allocation7 + $0xb0] sm:$0xff]
    %v1113 = vld [vmem:[#allocation7 + $0xb8] sm:$0xff]
    %v1114 = vld [vmem:[#allocation7 + $0xc0] sm:$0xff]
    %v1115 = vld [vmem:[#allocation7 + $0xc8] sm:$0xff]
    %v1116 = vld [vmem:[#allocation7 + $0xd0] sm:$0xff]
    %v1117 = vld [vmem:[#allocation7 + $0xd8] sm:$0xff]
    %v1118 = vld [vmem:[#allocation7 + $0x30] sm:$0xff]
    %v1119 = vld [vmem:[#allocation7 + $0x38] sm:$0xff]
    %1120 = vst [vmem:[#allocation3] sm:$0xff] 0.0
    %1121 = vst [vmem:[#allocation3 + $0x8] sm:$0xff] 0.0
    %v1122 = vld [vmem:[#allocation2] sm:$0xff]
    %v1123 = vld [vmem:[#allocation2 + $0x20] sm:$0xff]
    %1125 = vset.pattern.permute.xlu0 0
    %1126 = vperm.xlu0 %1125, %v1098
    %v1127 = vpop.permute.xlu0 %1126
    %1130 = vset.pattern.permute.xlu0 0
    %1131 = vperm.xlu0 %1130, %v1099
    %v1132 = vpop.permute.xlu0 %1131
    %v1134 = vmul.f32 %v1127, %v1122
    %v1135 = vmul.f32 %v1132, %v1123
    %v1136 = vadd.f32 %v1134, 0.0
    %v1137 = vadd.f32 %v1135, 0.0
    %v1138 = vld [vmem:[#allocation2] sm:$0xff]
    %v1139 = vld [vmem:[#allocation2 + $0x8] sm:$0xff]
    %v1140 = vld [vmem:[#allocation2 + $0x20] sm:$0xff]
    %v1141 = vld [vmem:[#allocation2 + $0x28] sm:$0xff]
    %1142 = vset.pattern.permute.xlu0 1
    %1143 = vperm.xlu0 %1142, %v1098
    %v1144 = vpop.permute.xlu0 %1143
    %1146 = vset.pattern.permute.xlu0 1
    %1147 = vperm.xlu0 %1146, %v1099
    %v1148 = vpop.permute.xlu0 %1147
    %v1150 = vmul.f32 %v1144, %v1138
    %v1151 = vmul.f32 %v1144, %v1139
    %v1152 = vmul.f32 %v1148, %v1140
    %v1153 = vmul.f32 %v1148, %v1141
    %1158 = vrot.lane.b32.xlu0 %v1150, 127
    %v1159 = vpop.permute.xlu0 %1158
    %1160 = vrot.lane.b32.xlu0 %v1151, 127
    %v1161 = vpop.permute.xlu0 %1160
    %1162 = vrot.lane.b32.xlu0 %v1152, 127
    %v1163 = vpop.permute.xlu0 %1162
    %1164 = vrot.lane.b32.xlu0 %v1153, 127
    %v1165 = vpop.permute.xlu0 %1164
    %vm1166 = vcmask 1039360
    %v1167 = vsel %vm1166, %v1159, %v1161
    %v1168 = vsel %vm1166, %v1163, %v1165
    %v1171 = vadd.f32 %v1136, %v1167
    %v1172 = vadd.f32 %v1137, %v1168
    %1173 = vset.pattern.permute.xlu0 2
    %1174 = vperm.xlu0 %1173, %v1098
    %v1175 = vpop.permute.xlu0 %1174
    %1177 = vset.pattern.permute.xlu0 2
    %1178 = vperm.xlu0 %1177, %v1099
    %v1179 = vpop.permute.xlu0 %1178
    %v1181 = vmul.f32 %v1175, %v1138
    %v1182 = vmul.f32 %v1175, %v1139
    %v1183 = vmul.f32 %v1179, %v1140
    %v1184 = vmul.f32 %v1179, %v1141
    %1189 = vrot.lane.b32.xlu0 %v1181, 126
    %v1190 = vpop.permute.xlu0 %1189
    %1191 = vrot.lane.b32.xlu0 %v1182, 126
    %v1192 = vpop.permute.xlu0 %1191
    %1193 = vrot.lane.b32.xlu0 %v1183, 126
    %v1194 = vpop.permute.xlu0 %1193
    %1195 = vrot.lane.b32.xlu0 %v1184, 126
    %v1196 = vpop.permute.xlu0 %1195
    %vm1197 = vcmask 1031168
    %v1198 = vsel %vm1197, %v1190, %v1192
    %v1199 = vsel %vm1197, %v1194, %v1196
    %v1202 = vadd.f32 %v1171, %v1198
    %v1203 = vadd.f32 %v1172, %v1199
    %1204 = vset.pattern.permute.xlu0 3
    %1205 = vperm.xlu0 %1204, %v1098
    %v1206 = vpop.permute.xlu0 %1205
    %1208 = vset.pattern.permute.xlu0 3
    %1209 = vperm.xlu0 %1208, %v1099
    %v1210 = vpop.permute.xlu0 %1209
    %v1212 = vmul.f32 %v1206, %v1138
    %v1213 = vmul.f32 %v1206, %v1139
    %v1214 = vmul.f32 %v1210, %v1140
    %v1215 = vmul.f32 %v1210, %v1141
    %1220 = vrot.lane.b32.xlu0 %v1212, 125
    %v1221 = vpop.permute.xlu0 %1220
    %1222 = vrot.lane.b32.xlu0 %v1213, 125
    %v1223 = vpop.permute.xlu0 %1222
    %1224 = vrot.lane.b32.xlu0 %v1214, 125
    %v1225 = vpop.permute.xlu0 %1224
    %1226 = vrot.lane.b32.xlu0 %v1215, 125
    %v1227 = vpop.permute.xlu0 %1226
    %vm1228 = vcmask 1022976
    %v1229 = vsel %vm1228, %v1221, %v1223
    %v1230 = vsel %vm1228, %v1225, %v1227
    %v1233 = vadd.f32 %v1202, %v1229
    %v1234 = vadd.f32 %v1203, %v1230
    %1235 = vset.pattern.permute.xlu0 4
    %1236 = vperm.xlu0 %1235, %v1098
    %v1237 = vpop.permute.xlu0 %1236
    %1239 = vset.pattern.permute.xlu0 4
    %1240 = vperm.xlu0 %1239, %v1099
    %v1241 = vpop.permute.xlu0 %1240
    %v1243 = vmul.f32 %v1237, %v1138
    %v1244 = vmul.f32 %v1237, %v1139
    %v1245 = vmul.f32 %v1241, %v1140
    %v1246 = vmul.f32 %v1241, %v1141
    %1251 = vrot.lane.b32.xlu0 %v1243, 124
    %v1252 = vpop.permute.xlu0 %1251
    %1253 = vrot.lane.b32.xlu0 %v1244, 124
    %v1254 = vpop.permute.xlu0 %1253
    %1255 = vrot.lane.b32.xlu0 %v1245, 124
    %v1256 = vpop.permute.xlu0 %1255
    %1257 = vrot.lane.b32.xlu0 %v1246, 124
    %v1258 = vpop.permute.xlu0 %1257
    %vm1259 = vcmask 1014784
    %v1260 = vsel %vm1259, %v1252, %v1254
    %v1261 = vsel %vm1259, %v1256, %v1258
    %v1264 = vadd.f32 %v1233, %v1260
    %v1265 = vadd.f32 %v1234, %v1261
    %1266 = vset.pattern.permute.xlu0 5
    %1267 = vperm.xlu0 %1266, %v1098
    %v1268 = vpop.permute.xlu0 %1267
    %1270 = vset.pattern.permute.xlu0 5
    %1271 = vperm.xlu0 %1270, %v1099
    %v1272 = vpop.permute.xlu0 %1271
    %v1274 = vmul.f32 %v1268, %v1138
    %v1275 = vmul.f32 %v1268, %v1139
    %v1276 = vmul.f32 %v1272, %v1140
    %v1277 = vmul.f32 %v1272, %v1141
    %1282 = vrot.lane.b32.xlu0 %v1274, 123
    %v1283 = vpop.permute.xlu0 %1282
    %1284 = vrot.lane.b32.xlu0 %v1275, 123
    %v1285 = vpop.permute.xlu0 %1284
    %1286 = vrot.lane.b32.xlu0 %v1276, 123
    %v1287 = vpop.permute.xlu0 %1286
    %1288 = vrot.lane.b32.xlu0 %v1277, 123
    %v1289 = vpop.permute.xlu0 %1288
    %vm1290 = vcmask 1006592
    %v1291 = vsel %vm1290, %v1283, %v1285
    %v1292 = vsel %vm1290, %v1287, %v1289
    %v1295 = vadd.f32 %v1264, %v1291
    %v1296 = vadd.f32 %v1265, %v1292
    %1297 = vset.pattern.permute.xlu0 6
    %1298 = vperm.xlu0 %1297, %v1098
    %v1299 = vpop.permute.xlu0 %1298
    %1301 = vset.pattern.permute.xlu0 6
    %1302 = vperm.xlu0 %1301, %v1099
    %v1303 = vpop.permute.xlu0 %1302
    %v1305 = vmul.f32 %v1299, %v1138
    %v1306 = vmul.f32 %v1299, %v1139
    %v1307 = vmul.f32 %v1303, %v1140
    %v1308 = vmul.f32 %v1303, %v1141
    %1313 = vrot.lane.b32.xlu0 %v1305, 122
    %v1314 = vpop.permute.xlu0 %1313
    %1315 = vrot.lane.b32.xlu0 %v1306, 122
    %v1316 = vpop.permute.xlu0 %1315
    %1317 = vrot.lane.b32.xlu0 %v1307, 122
    %v1318 = vpop.permute.xlu0 %1317
    %1319 = vrot.lane.b32.xlu0 %v1308, 122
    %v1320 = vpop.permute.xlu0 %1319
    %vm1321 = vcmask 998400
    %v1322 = vsel %vm1321, %v1314, %v1316
    %v1323 = vsel %vm1321, %v1318, %v1320
    %v1326 = vadd.f32 %v1295, %v1322
    %v1327 = vadd.f32 %v1296, %v1323
    %1328 = vset.pattern.permute.xlu0 7
    %1329 = vperm.xlu0 %1328, %v1098
    %v1330 = vpop.permute.xlu0 %1329
    %1332 = vset.pattern.permute.xlu0 7
    %1333 = vperm.xlu0 %1332, %v1099
    %v1334 = vpop.permute.xlu0 %1333
    %v1336 = vmul.f32 %v1330, %v1138
    %v1337 = vmul.f32 %v1330, %v1139
    %v1338 = vmul.f32 %v1334, %v1140
    %v1339 = vmul.f32 %v1334, %v1141
    %1344 = vrot.lane.b32.xlu0 %v1336, 121
    %v1345 = vpop.permute.xlu0 %1344
    %1346 = vrot.lane.b32.xlu0 %v1337, 121
    %v1347 = vpop.permute.xlu0 %1346
    %1348 = vrot.lane.b32.xlu0 %v1338, 121
    %v1349 = vpop.permute.xlu0 %1348
    %1350 = vrot.lane.b32.xlu0 %v1339, 121
    %v1351 = vpop.permute.xlu0 %1350
    %vm1352 = vcmask 990208
    %v1353 = vsel %vm1352, %v1345, %v1347
    %v1354 = vsel %vm1352, %v1349, %v1351
    %v1357 = vadd.f32 %v1326, %v1353
    %v1358 = vadd.f32 %v1327, %v1354
    %1359 = vset.pattern.permute.xlu0 8
    %1360 = vperm.xlu0 %1359, %v1098
    %v1361 = vpop.permute.xlu0 %1360
    %1363 = vset.pattern.permute.xlu0 8
    %1364 = vperm.xlu0 %1363, %v1099
    %v1365 = vpop.permute.xlu0 %1364
    %v1367 = vmul.f32 %v1361, %v1138
    %v1368 = vmul.f32 %v1361, %v1139
    %v1369 = vmul.f32 %v1365, %v1140
    %v1370 = vmul.f32 %v1365, %v1141
    %1375 = vrot.lane.b32.xlu0 %v1367, 120
    %v1376 = vpop.permute.xlu0 %1375
    %1377 = vrot.lane.b32.xlu0 %v1368, 120
    %v1378 = vpop.permute.xlu0 %1377
    %1379 = vrot.lane.b32.xlu0 %v1369, 120
    %v1380 = vpop.permute.xlu0 %1379
    %1381 = vrot.lane.b32.xlu0 %v1370, 120
    %v1382 = vpop.permute.xlu0 %1381
    %vm1383 = vcmask 982016
    %v1384 = vsel %vm1383, %v1376, %v1378
    %v1385 = vsel %vm1383, %v1380, %v1382
    %v1388 = vadd.f32 %v1357, %v1384
    %v1389 = vadd.f32 %v1358, %v1385
    %1390 = vset.pattern.permute.xlu0 9
    %1391 = vperm.xlu0 %1390, %v1098
    %v1392 = vpop.permute.xlu0 %1391
    %1394 = vset.pattern.permute.xlu0 9
    %1395 = vperm.xlu0 %1394, %v1099
    %v1396 = vpop.permute.xlu0 %1395
    %v1398 = vmul.f32 %v1392, %v1138
    %v1399 = vmul.f32 %v1392, %v1139
    %v1400 = vmul.f32 %v1396, %v1140
    %v1401 = vmul.f32 %v1396, %v1141
    %1406 = vrot.lane.b32.xlu0 %v1398, 119
    %v1407 = vpop.permute.xlu0 %1406
    %1408 = vrot.lane.b32.xlu0 %v1399, 119
    %v1409 = vpop.permute.xlu0 %1408
    %1410 = vrot.lane.b32.xlu0 %v1400, 119
    %v1411 = vpop.permute.xlu0 %1410
    %1412 = vrot.lane.b32.xlu0 %v1401, 119
    %v1413 = vpop.permute.xlu0 %1412
    %vm1414 = vcmask 973824
    %v1415 = vsel %vm1414, %v1407, %v1409
    %v1416 = vsel %vm1414, %v1411, %v1413
    %v1419 = vadd.f32 %v1388, %v1415
    %v1420 = vadd.f32 %v1389, %v1416
    %1421 = vset.pattern.permute.xlu0 10
    %1422 = vperm.xlu0 %1421, %v1098
    %v1423 = vpop.permute.xlu0 %1422
    %1425 = vset.pattern.permute.xlu0 10
    %1426 = vperm.xlu0 %1425, %v1099
    %v1427 = vpop.permute.xlu0 %1426
    %v1429 = vmul.f32 %v1423, %v1138
    %v1430 = vmul.f32 %v1423, %v1139
    %v1431 = vmul.f32 %v1427, %v1140
    %v1432 = vmul.f32 %v1427, %v1141
    %1437 = vrot.lane.b32.xlu0 %v1429, 118
    %v1438 = vpop.permute.xlu0 %1437
    %1439 = vrot.lane.b32.xlu0 %v1430, 118
    %v1440 = vpop.permute.xlu0 %1439
    %1441 = vrot.lane.b32.xlu0 %v1431, 118
    %v1442 = vpop.permute.xlu0 %1441
    %1443 = vrot.lane.b32.xlu0 %v1432, 118
    %v1444 = vpop.permute.xlu0 %1443
    %vm1445 = vcmask 965632
    %v1446 = vsel %vm1445, %v1438, %v1440
    %v1447 = vsel %vm1445, %v1442, %v1444
    %v1450 = vadd.f32 %v1419, %v1446
    %v1451 = vadd.f32 %v1420, %v1447
    %1452 = vset.pattern.permute.xlu0 11
    %1453 = vperm.xlu0 %1452, %v1098
    %v1454 = vpop.permute.xlu0 %1453
    %1456 = vset.pattern.permute.xlu0 11
    %1457 = vperm.xlu0 %1456, %v1099
    %v1458 = vpop.permute.xlu0 %1457
    %v1460 = vmul.f32 %v1454, %v1138
    %v1461 = vmul.f32 %v1454, %v1139
    %v1462 = vmul.f32 %v1458, %v1140
    %v1463 = vmul.f32 %v1458, %v1141
    %1468 = vrot.lane.b32.xlu0 %v1460, 117
    %v1469 = vpop.permute.xlu0 %1468
    %1470 = vrot.lane.b32.xlu0 %v1461, 117
    %v1471 = vpop.permute.xlu0 %1470
    %1472 = vrot.lane.b32.xlu0 %v1462, 117
    %v1473 = vpop.permute.xlu0 %1472
    %1474 = vrot.lane.b32.xlu0 %v1463, 117
    %v1475 = vpop.permute.xlu0 %1474
    %vm1476 = vcmask 957440
    %v1477 = vsel %vm1476, %v1469, %v1471
    %v1478 = vsel %vm1476, %v1473, %v1475
    %v1481 = vadd.f32 %v1450, %v1477
    %v1482 = vadd.f32 %v1451, %v1478
    %1483 = vset.pattern.permute.xlu0 12
    %1484 = vperm.xlu0 %1483, %v1098
    %v1485 = vpop.permute.xlu0 %1484
    %1487 = vset.pattern.permute.xlu0 12
    %1488 = vperm.xlu0 %1487, %v1099
    %v1489 = vpop.permute.xlu0 %1488
    %v1491 = vmul.f32 %v1485, %v1138
    %v1492 = vmul.f32 %v1485, %v1139
    %v1493 = vmul.f32 %v1489, %v1140
    %v1494 = vmul.f32 %v1489, %v1141
    %1499 = vrot.lane.b32.xlu0 %v1491, 116
    %v1500 = vpop.permute.xlu0 %1499
    %1501 = vrot.lane.b32.xlu0 %v1492, 116
    %v1502 = vpop.permute.xlu0 %1501
    %1503 = vrot.lane.b32.xlu0 %v1493, 116
    %v1504 = vpop.permute.xlu0 %1503
    %1505 = vrot.lane.b32.xlu0 %v1494, 116
    %v1506 = vpop.permute.xlu0 %1505
    %vm1507 = vcmask 949248
    %v1508 = vsel %vm1507, %v1500, %v1502
    %v1509 = vsel %vm1507, %v1504, %v1506
    %v1512 = vadd.f32 %v1481, %v1508
    %v1513 = vadd.f32 %v1482, %v1509
    %1514 = vset.pattern.permute.xlu0 13
    %1515 = vperm.xlu0 %1514, %v1098
    %v1516 = vpop.permute.xlu0 %1515
    %1518 = vset.pattern.permute.xlu0 13
    %1519 = vperm.xlu0 %1518, %v1099
    %v1520 = vpop.permute.xlu0 %1519
    %v1522 = vmul.f32 %v1516, %v1138
    %v1523 = vmul.f32 %v1516, %v1139
    %v1524 = vmul.f32 %v1520, %v1140
    %v1525 = vmul.f32 %v1520, %v1141
    %1530 = vrot.lane.b32.xlu0 %v1522, 115
    %v1531 = vpop.permute.xlu0 %1530
    %1532 = vrot.lane.b32.xlu0 %v1523, 115
    %v1533 = vpop.permute.xlu0 %1532
    %1534 = vrot.lane.b32.xlu0 %v1524, 115
    %v1535 = vpop.permute.xlu0 %1534
    %1536 = vrot.lane.b32.xlu0 %v1525, 115
    %v1537 = vpop.permute.xlu0 %1536
    %vm1538 = vcmask 941056
    %v1539 = vsel %vm1538, %v1531, %v1533
    %v1540 = vsel %vm1538, %v1535, %v1537
    %v1543 = vadd.f32 %v1512, %v1539
    %v1544 = vadd.f32 %v1513, %v1540
    %1545 = vset.pattern.permute.xlu0 14
    %1546 = vperm.xlu0 %1545, %v1098
    %v1547 = vpop.permute.xlu0 %1546
    %1549 = vset.pattern.permute.xlu0 14
    %1550 = vperm.xlu0 %1549, %v1099
    %v1551 = vpop.permute.xlu0 %1550
    %v1553 = vmul.f32 %v1547, %v1138
    %v1554 = vmul.f32 %v1547, %v1139
    %v1555 = vmul.f32 %v1551, %v1140
    %v1556 = vmul.f32 %v1551, %v1141
    %1561 = vrot.lane.b32.xlu0 %v1553, 114
    %v1562 = vpop.permute.xlu0 %1561
    %1563 = vrot.lane.b32.xlu0 %v1554, 114
    %v1564 = vpop.permute.xlu0 %1563
    %1565 = vrot.lane.b32.xlu0 %v1555, 114
    %v1566 = vpop.permute.xlu0 %1565
    %1567 = vrot.lane.b32.xlu0 %v1556, 114
    %v1568 = vpop.permute.xlu0 %1567
    %vm1569 = vcmask 932864
    %v1570 = vsel %vm1569, %v1562, %v1564
    %v1571 = vsel %vm1569, %v1566, %v1568
    %v1574 = vadd.f32 %v1543, %v1570
    %v1575 = vadd.f32 %v1544, %v1571
    %1576 = vset.pattern.permute.xlu0 15
    %1577 = vperm.xlu0 %1576, %v1098
    %v1578 = vpop.permute.xlu0 %1577
    %1580 = vset.pattern.permute.xlu0 15
    %1581 = vperm.xlu0 %1580, %v1099
    %v1582 = vpop.permute.xlu0 %1581
    %v1584 = vmul.f32 %v1578, %v1138
    %v1585 = vmul.f32 %v1578, %v1139
    %v1586 = vmul.f32 %v1582, %v1140
    %v1587 = vmul.f32 %v1582, %v1141
    %1592 = vrot.lane.b32.xlu0 %v1584, 113
    %v1593 = vpop.permute.xlu0 %1592
    %1594 = vrot.lane.b32.xlu0 %v1585, 113
    %v1595 = vpop.permute.xlu0 %1594
    %1596 = vrot.lane.b32.xlu0 %v1586, 113
    %v1597 = vpop.permute.xlu0 %1596
    %1598 = vrot.lane.b32.xlu0 %v1587, 113
    %v1599 = vpop.permute.xlu0 %1598
    %vm1600 = vcmask 924672
    %v1601 = vsel %vm1600, %v1593, %v1595
    %v1602 = vsel %vm1600, %v1597, %v1599
    %v1605 = vadd.f32 %v1574, %v1601
    %v1606 = vadd.f32 %v1575, %v1602
    %1608 = vset.pattern.permute.xlu0 0
    %1609 = vperm.xlu0 %1608, %v1100
    %v1610 = vpop.permute.xlu0 %1609
    %1613 = vset.pattern.permute.xlu0 0
    %1614 = vperm.xlu0 %1613, %v1101
    %v1615 = vpop.permute.xlu0 %1614
    %v1617 = vadd.f32 %v1605, %v1610
    %v1618 = vadd.f32 %v1606, %v1615
    %vm1619 = vcmp.gt.f32.partialorder %v1617, 0.0
    %vm1620 = vcmp.gt.f32.partialorder %v1618, 0.0
    %v1621 = vmin.f32 %v1617, 0.0
    %v1622 = vmin.f32 %v1618, 0.0
    %v1623 = vmul.f32 %v1621, 1.442695
    %v1624 = vpow.pop %v1623
    %v1625 = vmul.f32 %v1622, 1.442695
    %v1626 = vpow.pop %v1625
    %v1627 = vsub.f32 %v1624, 1.0
    %v1628 = vsub.f32 %v1626, 1.0
    %v1629 = vsel %vm1619, %v1617, %v1627
    %v1630 = vsel %vm1620, %v1618, %v1628
    %1631 = vmatprep.subr.mxu0 0.0
    %v1632 = vand.u32 %v1117, 4294901760
    %1633 = vmatpush1.msra.mxu0 %v1632
    %1634 = vmatprep.subr.mxu0 0.0
    %v1635 = vand.u32 %v1116, 4294901760
    %1636 = vmatpush1.msra.mxu0 %v1635
    %1637 = vmatprep.subr.mxu0 0.0
    %v1638 = vand.u32 %v1115, 4294901760
    %1639 = vmatpush1.msra.mxu0 %v1638
    %1640 = vmatprep.subr.mxu0 0.0
    %v1641 = vand.u32 %v1114, 4294901760
    %1642 = vmatpush1.msra.mxu0 %v1641
    %1643 = vmatprep.subr.mxu0 0.0
    %v1644 = vand.u32 %v1113, 4294901760
    %1645 = vmatpush1.msra.mxu0 %v1644
    %1646 = vmatprep.subr.mxu0 0.0
    %v1647 = vand.u32 %v1112, 4294901760
    %1648 = vmatpush1.msra.mxu0 %v1647
    %1649 = vmatprep.subr.mxu0 0.0
    %v1650 = vand.u32 %v1111, 4294901760
    %1651 = vmatpush1.msra.mxu0 %v1650
    %1652 = vmatprep.subr.mxu0 0.0
    %v1653 = vand.u32 %v1110, 4294901760
    %1654 = vmatpush1.msra.mxu0 %v1653
    %1655 = vmatprep.subr.mxu0 0.0
    %v1656 = vand.u32 %v1109, 4294901760
    %1657 = vmatpush1.msra.mxu0 %v1656
    %1658 = vmatprep.subr.mxu0 0.0
    %v1659 = vand.u32 %v1108, 4294901760
    %1660 = vmatpush1.msra.mxu0 %v1659
    %1661 = vmatprep.subr.mxu0 0.0
    %v1662 = vand.u32 %v1107, 4294901760
    %1663 = vmatpush1.msra.mxu0 %v1662
    %1664 = vmatprep.subr.mxu0 0.0
    %v1665 = vand.u32 %v1106, 4294901760
    %1666 = vmatpush1.msra.mxu0 %v1665
    %1667 = vmatprep.subr.mxu0 0.0
    %v1668 = vand.u32 %v1105, 4294901760
    %1669 = vmatpush1.msra.mxu0 %v1668
    %1670 = vmatprep.subr.mxu0 0.0
    %v1671 = vand.u32 %v1104, 4294901760
    %1672 = vmatpush1.msra.mxu0 %v1671
    %1673 = vmatprep.subr.mxu0 0.0
    %v1674 = vand.u32 %v1103, 4294901760
    %1675 = vmatpush1.msra.mxu0 %v1674
    %1676 = vmatprep.subr.mxu0 0.0
    %v1677 = vand.u32 %v1102, 4294901760
    %1678 = vmatpush1.msra.mxu0 %v1677
    %1679 = vmatprep.subr.mxu0 0.0
    %1680 = vmatpush2.msra.mxu0 0.0
    %1681 = vmatprep.subr.mxu0 0.0
    %1682 = vmatpush2.msra.mxu0 0.0
    %1683 = vmatprep.subr.mxu0 0.0
    %1684 = vmatpush2.msra.mxu0 0.0
    %1685 = vmatprep.subr.mxu0 0.0
    %1686 = vmatpush2.msra.mxu0 0.0
    %1687 = vmatprep.subr.mxu0 0.0
    %1688 = vmatpush2.msra.mxu0 0.0
    %1689 = vmatprep.subr.mxu0 0.0
    %1690 = vmatpush2.msra.mxu0 0.0
    %1691 = vmatprep.subr.mxu0 0.0
    %1692 = vmatpush2.msra.mxu0 0.0
    %1693 = vmatprep.subr.mxu0 0.0
    %1694 = vmatpush2.msra.mxu0 0.0
    %1695 = vmatprep.subr.mxu0 0.0
    %1696 = vmatpush2.msra.mxu0 0.0
    %1697 = vmatprep.subr.mxu0 0.0
    %1698 = vmatpush2.msra.mxu0 0.0
    %1699 = vmatprep.subr.mxu0 0.0
    %1700 = vmatpush2.msra.mxu0 0.0
    %1701 = vmatprep.subr.mxu0 0.0
    %1702 = vmatpush2.msra.mxu0 0.0
    %1703 = vmatprep.subr.mxu0 0.0
    %1704 = vmatpush2.msra.mxu0 0.0
    %1705 = vmatprep.subr.mxu0 0.0
    %1706 = vmatpush2.msra.mxu0 0.0
    %1707 = vmatprep.subr.mxu0 0.0
    %1708 = vmatpush2.msra.mxu0 0.0
    %1709 = vmatprep.subr.mxu0 0.0
    %1710 = vmatpush2.msra.mxu0 0.0
    %1711 = vmatprep.mubr.f32.mxu0 0.0
    %v1712 = vand.u32 %v1629, 4294901760
    %v1713 = vsub.f32 %v1629, %v1712
    %v1714 = vand.u32 %v1713, 4294901760
    %v1715 = vsub.f32 %v1713, %v1714
    %v1716 = vand.u32 %v1715, 4294901760
    %1717 = vmatmul.mubr.f32.gmra.mxu0 %v1716
    %v1718 = vpop.f32.mrf.mxu0
    %v1719 = vadd.f32 0.0, %v1718
    %v1720 = vpop.f32.mrf.mxu0
    %1721 = vmatprep.mubr.f32.mxu0 0.0
    %v1722 = vand.u32 %v1630, 4294901760
    %v1723 = vsub.f32 %v1630, %v1722
    %v1724 = vand.u32 %v1723, 4294901760
    %v1725 = vsub.f32 %v1723, %v1724
    %v1726 = vand.u32 %v1725, 4294901760
    %1727 = vmatmul.mubr.f32.gmra.mxu0 %v1726
    %v1728 = vpop.f32.mrf.mxu0
    %v1729 = vadd.f32 0.0, %v1728
    %v1730 = vpop.f32.mrf.mxu0
    %1731 = vdwg.mxu0
    %1732 = vmatprep.subr.mxu0 0.0
    %v1733 = vand.u32 %v1117, 4294901760
    %v1734 = vsub.f32 %v1117, %v1733
    %v1735 = vand.u32 %v1734, 4294901760
    %v1736 = vsub.f32 %v1734, %v1735
    %v1737 = vand.u32 %v1736, 4294901760
    %1738 = vmatpush1.msra.mxu0 %v1737
    %1739 = vmatprep.subr.mxu0 0.0
    %v1740 = vand.u32 %v1116, 4294901760
    %v1741 = vsub.f32 %v1116, %v1740
    %v1742 = vand.u32 %v1741, 4294901760
    %v1743 = vsub.f32 %v1741, %v1742
    %v1744 = vand.u32 %v1743, 4294901760
    %1745 = vmatpush1.msra.mxu0 %v1744
    %1746 = vmatprep.subr.mxu0 0.0
    %v1747 = vand.u32 %v1115, 4294901760
    %v1748 = vsub.f32 %v1115, %v1747
    %v1749 = vand.u32 %v1748, 4294901760
    %v1750 = vsub.f32 %v1748, %v1749
    %v1751 = vand.u32 %v1750, 4294901760
    %1752 = vmatpush1.msra.mxu0 %v1751
    %1753 = vmatprep.subr.mxu0 0.0
    %v1754 = vand.u32 %v1114, 4294901760
    %v1755 = vsub.f32 %v1114, %v1754
    %v1756 = vand.u32 %v1755, 4294901760
    %v1757 = vsub.f32 %v1755, %v1756
    %v1758 = vand.u32 %v1757, 4294901760
    %1759 = vmatpush1.msra.mxu0 %v1758
    %1760 = vmatprep.subr.mxu0 0.0
    %v1761 = vand.u32 %v1113, 4294901760
    %v1762 = vsub.f32 %v1113, %v1761
    %v1763 = vand.u32 %v1762, 4294901760
    %v1764 = vsub.f32 %v1762, %v1763
    %v1765 = vand.u32 %v1764, 4294901760
    %1766 = vmatpush1.msra.mxu0 %v1765
    %1767 = vmatprep.subr.mxu0 0.0
    %v1768 = vand.u32 %v1112, 4294901760
    %v1769 = vsub.f32 %v1112, %v1768
    %v1770 = vand.u32 %v1769, 4294901760
    %v1771 = vsub.f32 %v1769, %v1770
    %v1772 = vand.u32 %v1771, 4294901760
    %1773 = vmatpush1.msra.mxu0 %v1772
    %1774 = vmatprep.subr.mxu0 0.0
    %v1775 = vand.u32 %v1111, 4294901760
    %v1776 = vsub.f32 %v1111, %v1775
    %v1777 = vand.u32 %v1776, 4294901760
    %v1778 = vsub.f32 %v1776, %v1777
    %v1779 = vand.u32 %v1778, 4294901760
    %1780 = vmatpush1.msra.mxu0 %v1779
    %1781 = vmatprep.subr.mxu0 0.0
    %v1782 = vand.u32 %v1110, 4294901760
    %v1783 = vsub.f32 %v1110, %v1782
    %v1784 = vand.u32 %v1783, 4294901760
    %v1785 = vsub.f32 %v1783, %v1784
    %v1786 = vand.u32 %v1785, 4294901760
    %1787 = vmatpush1.msra.mxu0 %v1786
    %1788 = vmatprep.subr.mxu0 0.0
    %v1789 = vand.u32 %v1109, 4294901760
    %v1790 = vsub.f32 %v1109, %v1789
    %v1791 = vand.u32 %v1790, 4294901760
    %v1792 = vsub.f32 %v1790, %v1791
    %v1793 = vand.u32 %v1792, 4294901760
    %1794 = vmatpush1.msra.mxu0 %v1793
    %1795 = vmatprep.subr.mxu0 0.0
    %v1796 = vand.u32 %v1108, 4294901760
    %v1797 = vsub.f32 %v1108, %v1796
    %v1798 = vand.u32 %v1797, 4294901760
    %v1799 = vsub.f32 %v1797, %v1798
    %v1800 = vand.u32 %v1799, 4294901760
    %1801 = vmatpush1.msra.mxu0 %v1800
    %1802 = vmatprep.subr.mxu0 0.0
    %v1803 = vand.u32 %v1107, 4294901760
    %v1804 = vsub.f32 %v1107, %v1803
    %v1805 = vand.u32 %v1804, 4294901760
    %v1806 = vsub.f32 %v1804, %v1805
    %v1807 = vand.u32 %v1806, 4294901760
    %1808 = vmatpush1.msra.mxu0 %v1807
    %1809 = vmatprep.subr.mxu0 0.0
    %v1810 = vand.u32 %v1106, 4294901760
    %v1811 = vsub.f32 %v1106, %v1810
    %v1812 = vand.u32 %v1811, 4294901760
    %v1813 = vsub.f32 %v1811, %v1812
    %v1814 = vand.u32 %v1813, 4294901760
    %1815 = vmatpush1.msra.mxu0 %v1814
    %1816 = vmatprep.subr.mxu0 0.0
    %v1817 = vand.u32 %v1105, 4294901760
    %v1818 = vsub.f32 %v1105, %v1817
    %v1819 = vand.u32 %v1818, 4294901760
    %v1820 = vsub.f32 %v1818, %v1819
    %v1821 = vand.u32 %v1820, 4294901760
    %1822 = vmatpush1.msra.mxu0 %v1821
    %1823 = vmatprep.subr.mxu0 0.0
    %v1824 = vand.u32 %v1104, 4294901760
    %v1825 = vsub.f32 %v1104, %v1824
    %v1826 = vand.u32 %v1825, 4294901760
    %v1827 = vsub.f32 %v1825, %v1826
    %v1828 = vand.u32 %v1827, 4294901760
    %1829 = vmatpush1.msra.mxu0 %v1828
    %1830 = vmatprep.subr.mxu0 0.0
    %v1831 = vand.u32 %v1103, 4294901760
    %v1832 = vsub.f32 %v1103, %v1831
    %v1833 = vand.u32 %v1832, 4294901760
    %v1834 = vsub.f32 %v1832, %v1833
    %v1835 = vand.u32 %v1834, 4294901760
    %1836 = vmatpush1.msra.mxu0 %v1835
    %1837 = vmatprep.subr.mxu0 0.0
    %v1838 = vand.u32 %v1102, 4294901760
    %v1839 = vsub.f32 %v1102, %v1838
    %v1840 = vand.u32 %v1839, 4294901760
    %v1841 = vsub.f32 %v1839, %v1840
    %v1842 = vand.u32 %v1841, 4294901760
    %1843 = vmatpush1.msra.mxu0 %v1842
    %1844 = vmatprep.subr.mxu0 0.0
    %1845 = vmatpush2.msra.mxu0 0.0
    %1846 = vmatprep.subr.mxu0 0.0
    %1847 = vmatpush2.msra.mxu0 0.0
    %1848 = vmatprep.subr.mxu0 0.0
    %1849 = vmatpush2.msra.mxu0 0.0
    %1850 = vmatprep.subr.mxu0 0.0
    %1851 = vmatpush2.msra.mxu0 0.0
    %1852 = vmatprep.subr.mxu0 0.0
    %1853 = vmatpush2.msra.mxu0 0.0
    %1854 = vmatprep.subr.mxu0 0.0
    %1855 = vmatpush2.msra.mxu0 0.0
    %1856 = vmatprep.subr.mxu0 0.0
    %1857 = vmatpush2.msra.mxu0 0.0
    %1858 = vmatprep.subr.mxu0 0.0
    %1859 = vmatpush2.msra.mxu0 0.0
    %1860 = vmatprep.subr.mxu0 0.0
    %1861 = vmatpush2.msra.mxu0 0.0
    %1862 = vmatprep.subr.mxu0 0.0
    %1863 = vmatpush2.msra.mxu0 0.0
    %1864 = vmatprep.subr.mxu0 0.0
    %1865 = vmatpush2.msra.mxu0 0.0
    %1866 = vmatprep.subr.mxu0 0.0
    %1867 = vmatpush2.msra.mxu0 0.0
    %1868 = vmatprep.subr.mxu0 0.0
    %1869 = vmatpush2.msra.mxu0 0.0
    %1870 = vmatprep.subr.mxu0 0.0
    %1871 = vmatpush2.msra.mxu0 0.0
    %1872 = vmatprep.subr.mxu0 0.0
    %1873 = vmatpush2.msra.mxu0 0.0
    %1874 = vmatprep.subr.mxu0 0.0
    %1875 = vmatpush2.msra.mxu0 0.0
    %1876 = vmatprep.mubr.f32.mxu0 0.0
    %v1877 = vand.u32 %v1629, 4294901760
    %1878 = vmatmul.mubr.f32.gmra.mxu0 %v1877
    %v1879 = vpop.f32.mrf.mxu0
    %v1880 = vadd.f32 %v1719, %v1879
    %v1881 = vpop.f32.mrf.mxu0
    %1882 = vmatprep.mubr.f32.mxu0 0.0
    %v1883 = vand.u32 %v1630, 4294901760
    %1884 = vmatmul.mubr.f32.gmra.mxu0 %v1883
    %v1885 = vpop.f32.mrf.mxu0
    %v1886 = vadd.f32 %v1729, %v1885
    %v1887 = vpop.f32.mrf.mxu0
    %1888 = vdwg.mxu0
    %1889 = vmatprep.subr.mxu0 0.0
    %v1890 = vand.u32 %v1117, 4294901760
    %v1891 = vsub.f32 %v1117, %v1890
    %1892 = vmatpush1.msra.mxu0 %v1891
    %1893 = vmatprep.subr.mxu0 0.0
    %v1894 = vand.u32 %v1116, 4294901760
    %v1895 = vsub.f32 %v1116, %v1894
    %1896 = vmatpush1.msra.mxu0 %v1895
    %1897 = vmatprep.subr.mxu0 0.0
    %v1898 = vand.u32 %v1115, 4294901760
    %v1899 = vsub.f32 %v1115, %v1898
    %1900 = vmatpush1.msra.mxu0 %v1899
    %1901 = vmatprep.subr.mxu0 0.0
    %v1902 = vand.u32 %v1114, 4294901760
    %v1903 = vsub.f32 %v1114, %v1902
    %1904 = vmatpush1.msra.mxu0 %v1903
    %1905 = vmatprep.subr.mxu0 0.0
    %v1906 = vand.u32 %v1113, 4294901760
    %v1907 = vsub.f32 %v1113, %v1906
    %1908 = vmatpush1.msra.mxu0 %v1907
    %1909 = vmatprep.subr.mxu0 0.0
    %v1910 = vand.u32 %v1112, 4294901760
    %v1911 = vsub.f32 %v1112, %v1910
    %1912 = vmatpush1.msra.mxu0 %v1911
    %1913 = vmatprep.subr.mxu0 0.0
    %v1914 = vand.u32 %v1111, 4294901760
    %v1915 = vsub.f32 %v1111, %v1914
    %1916 = vmatpush1.msra.mxu0 %v1915
    %1917 = vmatprep.subr.mxu0 0.0
    %v1918 = vand.u32 %v1110, 4294901760
    %v1919 = vsub.f32 %v1110, %v1918
    %1920 = vmatpush1.msra.mxu0 %v1919
    %1921 = vmatprep.subr.mxu0 0.0
    %v1922 = vand.u32 %v1109, 4294901760
    %v1923 = vsub.f32 %v1109, %v1922
    %1924 = vmatpush1.msra.mxu0 %v1923
    %1925 = vmatprep.subr.mxu0 0.0
    %v1926 = vand.u32 %v1108, 4294901760
    %v1927 = vsub.f32 %v1108, %v1926
    %1928 = vmatpush1.msra.mxu0 %v1927
    %1929 = vmatprep.subr.mxu0 0.0
    %v1930 = vand.u32 %v1107, 4294901760
    %v1931 = vsub.f32 %v1107, %v1930
    %1932 = vmatpush1.msra.mxu0 %v1931
    %1933 = vmatprep.subr.mxu0 0.0
    %v1934 = vand.u32 %v1106, 4294901760
    %v1935 = vsub.f32 %v1106, %v1934
    %1936 = vmatpush1.msra.mxu0 %v1935
    %1937 = vmatprep.subr.mxu0 0.0
    %v1938 = vand.u32 %v1105, 4294901760
    %v1939 = vsub.f32 %v1105, %v1938
    %1940 = vmatpush1.msra.mxu0 %v1939
    %1941 = vmatprep.subr.mxu0 0.0
    %v1942 = vand.u32 %v1104, 4294901760
    %v1943 = vsub.f32 %v1104, %v1942
    %1944 = vmatpush1.msra.mxu0 %v1943
    %1945 = vmatprep.subr.mxu0 0.0
    %v1946 = vand.u32 %v1103, 4294901760
    %v1947 = vsub.f32 %v1103, %v1946
    %1948 = vmatpush1.msra.mxu0 %v1947
    %1949 = vmatprep.subr.mxu0 0.0
    %v1950 = vand.u32 %v1102, 4294901760
    %v1951 = vsub.f32 %v1102, %v1950
    %1952 = vmatpush1.msra.mxu0 %v1951
    %1953 = vmatprep.subr.mxu0 0.0
    %1954 = vmatpush2.msra.mxu0 0.0
    %1955 = vmatprep.subr.mxu0 0.0
    %1956 = vmatpush2.msra.mxu0 0.0
    %1957 = vmatprep.subr.mxu0 0.0
    %1958 = vmatpush2.msra.mxu0 0.0
    %1959 = vmatprep.subr.mxu0 0.0
    %1960 = vmatpush2.msra.mxu0 0.0
    %1961 = vmatprep.subr.mxu0 0.0
    %1962 = vmatpush2.msra.mxu0 0.0
    %1963 = vmatprep.subr.mxu0 0.0
    %1964 = vmatpush2.msra.mxu0 0.0
    %1965 = vmatprep.subr.mxu0 0.0
    %1966 = vmatpush2.msra.mxu0 0.0
    %1967 = vmatprep.subr.mxu0 0.0
    %1968 = vmatpush2.msra.mxu0 0.0
    %1969 = vmatprep.subr.mxu0 0.0
    %1970 = vmatpush2.msra.mxu0 0.0
    %1971 = vmatprep.subr.mxu0 0.0
    %1972 = vmatpush2.msra.mxu0 0.0
    %1973 = vmatprep.subr.mxu0 0.0
    %1974 = vmatpush2.msra.mxu0 0.0
    %1975 = vmatprep.subr.mxu0 0.0
    %1976 = vmatpush2.msra.mxu0 0.0
    %1977 = vmatprep.subr.mxu0 0.0
    %1978 = vmatpush2.msra.mxu0 0.0
    %1979 = vmatprep.subr.mxu0 0.0
    %1980 = vmatpush2.msra.mxu0 0.0
    %1981 = vmatprep.subr.mxu0 0.0
    %1982 = vmatpush2.msra.mxu0 0.0
    %1983 = vmatprep.subr.mxu0 0.0
    %1984 = vmatpush2.msra.mxu0 0.0
    %1985 = vmatprep.mubr.f32.mxu0 0.0
    %v1986 = vand.u32 %v1629, 4294901760
    %v1987 = vsub.f32 %v1629, %v1986
    %1988 = vmatmul.mubr.f32.gmra.mxu0 %v1987
    %v1989 = vpop.f32.mrf.mxu0
    %v1990 = vadd.f32 %v1880, %v1989
    %v1991 = vpop.f32.mrf.mxu0
    %1992 = vmatprep.mubr.f32.mxu0 0.0
    %v1993 = vand.u32 %v1630, 4294901760
    %v1994 = vsub.f32 %v1630, %v1993
    %1995 = vmatmul.mubr.f32.gmra.mxu0 %v1994
    %v1996 = vpop.f32.mrf.mxu0
    %v1997 = vadd.f32 %v1886, %v1996
    %v1998 = vpop.f32.mrf.mxu0
    %1999 = vdwg.mxu0
    %2000 = vmatprep.subr.mxu0 0.0
    %v2001 = vand.u32 %v1117, 4294901760
    %2002 = vmatpush1.msra.mxu0 %v2001
    %2003 = vmatprep.subr.mxu0 0.0
    %v2004 = vand.u32 %v1116, 4294901760
    %2005 = vmatpush1.msra.mxu0 %v2004
    %2006 = vmatprep.subr.mxu0 0.0
    %v2007 = vand.u32 %v1115, 4294901760
    %2008 = vmatpush1.msra.mxu0 %v2007
    %2009 = vmatprep.subr.mxu0 0.0
    %v2010 = vand.u32 %v1114, 4294901760
    %2011 = vmatpush1.msra.mxu0 %v2010
    %2012 = vmatprep.subr.mxu0 0.0
    %v2013 = vand.u32 %v1113, 4294901760
    %2014 = vmatpush1.msra.mxu0 %v2013
    %2015 = vmatprep.subr.mxu0 0.0
    %v2016 = vand.u32 %v1112, 4294901760
    %2017 = vmatpush1.msra.mxu0 %v2016
    %2018 = vmatprep.subr.mxu0 0.0
    %v2019 = vand.u32 %v1111, 4294901760
    %2020 = vmatpush1.msra.mxu0 %v2019
    %2021 = vmatprep.subr.mxu0 0.0
    %v2022 = vand.u32 %v1110, 4294901760
    %2023 = vmatpush1.msra.mxu0 %v2022
    %2024 = vmatprep.subr.mxu0 0.0
    %v2025 = vand.u32 %v1109, 4294901760
    %2026 = vmatpush1.msra.mxu0 %v2025
    %2027 = vmatprep.subr.mxu0 0.0
    %v2028 = vand.u32 %v1108, 4294901760
    %2029 = vmatpush1.msra.mxu0 %v2028
    %2030 = vmatprep.subr.mxu0 0.0
    %v2031 = vand.u32 %v1107, 4294901760
    %2032 = vmatpush1.msra.mxu0 %v2031
    %2033 = vmatprep.subr.mxu0 0.0
    %v2034 = vand.u32 %v1106, 4294901760
    %2035 = vmatpush1.msra.mxu0 %v2034
    %2036 = vmatprep.subr.mxu0 0.0
    %v2037 = vand.u32 %v1105, 4294901760
    %2038 = vmatpush1.msra.mxu0 %v2037
    %2039 = vmatprep.subr.mxu0 0.0
    %v2040 = vand.u32 %v1104, 4294901760
    %2041 = vmatpush1.msra.mxu0 %v2040
    %2042 = vmatprep.subr.mxu0 0.0
    %v2043 = vand.u32 %v1103, 4294901760
    %2044 = vmatpush1.msra.mxu0 %v2043
    %2045 = vmatprep.subr.mxu0 0.0
    %v2046 = vand.u32 %v1102, 4294901760
    %2047 = vmatpush1.msra.mxu0 %v2046
    %2048 = vmatprep.subr.mxu0 0.0
    %2049 = vmatpush2.msra.mxu0 0.0
    %2050 = vmatprep.subr.mxu0 0.0
    %2051 = vmatpush2.msra.mxu0 0.0
    %2052 = vmatprep.subr.mxu0 0.0
    %2053 = vmatpush2.msra.mxu0 0.0
    %2054 = vmatprep.subr.mxu0 0.0
    %2055 = vmatpush2.msra.mxu0 0.0
    %2056 = vmatprep.subr.mxu0 0.0
    %2057 = vmatpush2.msra.mxu0 0.0
    %2058 = vmatprep.subr.mxu0 0.0
    %2059 = vmatpush2.msra.mxu0 0.0
    %2060 = vmatprep.subr.mxu0 0.0
    %2061 = vmatpush2.msra.mxu0 0.0
    %2062 = vmatprep.subr.mxu0 0.0
    %2063 = vmatpush2.msra.mxu0 0.0
    %2064 = vmatprep.subr.mxu0 0.0
    %2065 = vmatpush2.msra.mxu0 0.0
    %2066 = vmatprep.subr.mxu0 0.0
    %2067 = vmatpush2.msra.mxu0 0.0
    %2068 = vmatprep.subr.mxu0 0.0
    %2069 = vmatpush2.msra.mxu0 0.0
    %2070 = vmatprep.subr.mxu0 0.0
    %2071 = vmatpush2.msra.mxu0 0.0
    %2072 = vmatprep.subr.mxu0 0.0
    %2073 = vmatpush2.msra.mxu0 0.0
    %2074 = vmatprep.subr.mxu0 0.0
    %2075 = vmatpush2.msra.mxu0 0.0
    %2076 = vmatprep.subr.mxu0 0.0
    %2077 = vmatpush2.msra.mxu0 0.0
    %2078 = vmatprep.subr.mxu0 0.0
    %2079 = vmatpush2.msra.mxu0 0.0
    %2080 = vmatprep.mubr.f32.mxu0 0.0
    %v2081 = vand.u32 %v1629, 4294901760
    %v2082 = vsub.f32 %v1629, %v2081
    %v2083 = vand.u32 %v2082, 4294901760
    %2084 = vmatmul.mubr.f32.gmra.mxu0 %v2083
    %v2085 = vpop.f32.mrf.mxu0
    %v2086 = vadd.f32 %v1990, %v2085
    %v2087 = vpop.f32.mrf.mxu0
    %2088 = vmatprep.mubr.f32.mxu0 0.0
    %v2089 = vand.u32 %v1630, 4294901760
    %v2090 = vsub.f32 %v1630, %v2089
    %v2091 = vand.u32 %v2090, 4294901760
    %2092 = vmatmul.mubr.f32.gmra.mxu0 %v2091
    %v2093 = vpop.f32.mrf.mxu0
    %v2094 = vadd.f32 %v1997, %v2093
    %v2095 = vpop.f32.mrf.mxu0
    %2096 = vdwg.mxu0
    %2097 = vmatprep.subr.mxu0 0.0
    %v2098 = vand.u32 %v1117, 4294901760
    %v2099 = vsub.f32 %v1117, %v2098
    %v2100 = vand.u32 %v2099, 4294901760
    %2101 = vmatpush1.msra.mxu0 %v2100
    %2102 = vmatprep.subr.mxu0 0.0
    %v2103 = vand.u32 %v1116, 4294901760
    %v2104 = vsub.f32 %v1116, %v2103
    %v2105 = vand.u32 %v2104, 4294901760
    %2106 = vmatpush1.msra.mxu0 %v2105
    %2107 = vmatprep.subr.mxu0 0.0
    %v2108 = vand.u32 %v1115, 4294901760
    %v2109 = vsub.f32 %v1115, %v2108
    %v2110 = vand.u32 %v2109, 4294901760
    %2111 = vmatpush1.msra.mxu0 %v2110
    %2112 = vmatprep.subr.mxu0 0.0
    %v2113 = vand.u32 %v1114, 4294901760
    %v2114 = vsub.f32 %v1114, %v2113
    %v2115 = vand.u32 %v2114, 4294901760
    %2116 = vmatpush1.msra.mxu0 %v2115
    %2117 = vmatprep.subr.mxu0 0.0
    %v2118 = vand.u32 %v1113, 4294901760
    %v2119 = vsub.f32 %v1113, %v2118
    %v2120 = vand.u32 %v2119, 4294901760
    %2121 = vmatpush1.msra.mxu0 %v2120
    %2122 = vmatprep.subr.mxu0 0.0
    %v2123 = vand.u32 %v1112, 4294901760
    %v2124 = vsub.f32 %v1112, %v2123
    %v2125 = vand.u32 %v2124, 4294901760
    %2126 = vmatpush1.msra.mxu0 %v2125
    %2127 = vmatprep.subr.mxu0 0.0
    %v2128 = vand.u32 %v1111, 4294901760
    %v2129 = vsub.f32 %v1111, %v2128
    %v2130 = vand.u32 %v2129, 4294901760
    %2131 = vmatpush1.msra.mxu0 %v2130
    %2132 = vmatprep.subr.mxu0 0.0
    %v2133 = vand.u32 %v1110, 4294901760
    %v2134 = vsub.f32 %v1110, %v2133
    %v2135 = vand.u32 %v2134, 4294901760
    %2136 = vmatpush1.msra.mxu0 %v2135
    %2137 = vmatprep.subr.mxu0 0.0
    %v2138 = vand.u32 %v1109, 4294901760
    %v2139 = vsub.f32 %v1109, %v2138
    %v2140 = vand.u32 %v2139, 4294901760
    %2141 = vmatpush1.msra.mxu0 %v2140
    %2142 = vmatprep.subr.mxu0 0.0
    %v2143 = vand.u32 %v1108, 4294901760
    %v2144 = vsub.f32 %v1108, %v2143
    %v2145 = vand.u32 %v2144, 4294901760
    %2146 = vmatpush1.msra.mxu0 %v2145
    %2147 = vmatprep.subr.mxu0 0.0
    %v2148 = vand.u32 %v1107, 4294901760
    %v2149 = vsub.f32 %v1107, %v2148
    %v2150 = vand.u32 %v2149, 4294901760
    %2151 = vmatpush1.msra.mxu0 %v2150
    %2152 = vmatprep.subr.mxu0 0.0
    %v2153 = vand.u32 %v1106, 4294901760
    %v2154 = vsub.f32 %v1106, %v2153
    %v2155 = vand.u32 %v2154, 4294901760
    %2156 = vmatpush1.msra.mxu0 %v2155
    %2157 = vmatprep.subr.mxu0 0.0
    %v2158 = vand.u32 %v1105, 4294901760
    %v2159 = vsub.f32 %v1105, %v2158
    %v2160 = vand.u32 %v2159, 4294901760
    %2161 = vmatpush1.msra.mxu0 %v2160
    %2162 = vmatprep.subr.mxu0 0.0
    %v2163 = vand.u32 %v1104, 4294901760
    %v2164 = vsub.f32 %v1104, %v2163
    %v2165 = vand.u32 %v2164, 4294901760
    %2166 = vmatpush1.msra.mxu0 %v2165
    %2167 = vmatprep.subr.mxu0 0.0
    %v2168 = vand.u32 %v1103, 4294901760
    %v2169 = vsub.f32 %v1103, %v2168
    %v2170 = vand.u32 %v2169, 4294901760
    %2171 = vmatpush1.msra.mxu0 %v2170
    %2172 = vmatprep.subr.mxu0 0.0
    %v2173 = vand.u32 %v1102, 4294901760
    %v2174 = vsub.f32 %v1102, %v2173
    %v2175 = vand.u32 %v2174, 4294901760
    %2176 = vmatpush1.msra.mxu0 %v2175
    %2177 = vmatprep.subr.mxu0 0.0
    %2178 = vmatpush2.msra.mxu0 0.0
    %2179 = vmatprep.subr.mxu0 0.0
    %2180 = vmatpush2.msra.mxu0 0.0
    %2181 = vmatprep.subr.mxu0 0.0
    %2182 = vmatpush2.msra.mxu0 0.0
    %2183 = vmatprep.subr.mxu0 0.0
    %2184 = vmatpush2.msra.mxu0 0.0
    %2185 = vmatprep.subr.mxu0 0.0
    %2186 = vmatpush2.msra.mxu0 0.0
    %2187 = vmatprep.subr.mxu0 0.0
    %2188 = vmatpush2.msra.mxu0 0.0
    %2189 = vmatprep.subr.mxu0 0.0
    %2190 = vmatpush2.msra.mxu0 0.0
    %2191 = vmatprep.subr.mxu0 0.0
    %2192 = vmatpush2.msra.mxu0 0.0
    %2193 = vmatprep.subr.mxu0 0.0
    %2194 = vmatpush2.msra.mxu0 0.0
    %2195 = vmatprep.subr.mxu0 0.0
    %2196 = vmatpush2.msra.mxu0 0.0
    %2197 = vmatprep.subr.mxu0 0.0
    %2198 = vmatpush2.msra.mxu0 0.0
    %2199 = vmatprep.subr.mxu0 0.0
    %2200 = vmatpush2.msra.mxu0 0.0
    %2201 = vmatprep.subr.mxu0 0.0
    %2202 = vmatpush2.msra.mxu0 0.0
    %2203 = vmatprep.subr.mxu0 0.0
    %2204 = vmatpush2.msra.mxu0 0.0
    %2205 = vmatprep.subr.mxu0 0.0
    %2206 = vmatpush2.msra.mxu0 0.0
    %2207 = vmatprep.subr.mxu0 0.0
    %2208 = vmatpush2.msra.mxu0 0.0
    %2209 = vmatprep.mubr.f32.mxu0 0.0
    %v2210 = vand.u32 %v1629, 4294901760
    %2211 = vmatmul.mubr.f32.gmra.mxu0 %v2210
    %v2212 = vpop.f32.mrf.mxu0
    %v2213 = vadd.f32 %v2086, %v2212
    %v2214 = vpop.f32.mrf.mxu0
    %2215 = vmatprep.mubr.f32.mxu0 0.0
    %v2216 = vand.u32 %v1630, 4294901760
    %2217 = vmatmul.mubr.f32.gmra.mxu0 %v2216
    %v2218 = vpop.f32.mrf.mxu0
    %v2219 = vadd.f32 %v2094, %v2218
    %v2220 = vpop.f32.mrf.mxu0
    %2221 = vdwg.mxu0
    %2222 = vmatprep.subr.mxu0 0.0
    %v2223 = vand.u32 %v1117, 4294901760
    %2224 = vmatpush1.msra.mxu0 %v2223
    %2225 = vmatprep.subr.mxu0 0.0
    %v2226 = vand.u32 %v1116, 4294901760
    %2227 = vmatpush1.msra.mxu0 %v2226
    %2228 = vmatprep.subr.mxu0 0.0
    %v2229 = vand.u32 %v1115, 4294901760
    %2230 = vmatpush1.msra.mxu0 %v2229
    %2231 = vmatprep.subr.mxu0 0.0
    %v2232 = vand.u32 %v1114, 4294901760
    %2233 = vmatpush1.msra.mxu0 %v2232
    %2234 = vmatprep.subr.mxu0 0.0
    %v2235 = vand.u32 %v1113, 4294901760
    %2236 = vmatpush1.msra.mxu0 %v2235
    %2237 = vmatprep.subr.mxu0 0.0
    %v2238 = vand.u32 %v1112, 4294901760
    %2239 = vmatpush1.msra.mxu0 %v2238
    %2240 = vmatprep.subr.mxu0 0.0
    %v2241 = vand.u32 %v1111, 4294901760
    %2242 = vmatpush1.msra.mxu0 %v2241
    %2243 = vmatprep.subr.mxu0 0.0
    %v2244 = vand.u32 %v1110, 4294901760
    %2245 = vmatpush1.msra.mxu0 %v2244
    %2246 = vmatprep.subr.mxu0 0.0
    %v2247 = vand.u32 %v1109, 4294901760
    %2248 = vmatpush1.msra.mxu0 %v2247
    %2249 = vmatprep.subr.mxu0 0.0
    %v2250 = vand.u32 %v1108, 4294901760
    %2251 = vmatpush1.msra.mxu0 %v2250
    %2252 = vmatprep.subr.mxu0 0.0
    %v2253 = vand.u32 %v1107, 4294901760
    %2254 = vmatpush1.msra.mxu0 %v2253
    %2255 = vmatprep.subr.mxu0 0.0
    %v2256 = vand.u32 %v1106, 4294901760
    %2257 = vmatpush1.msra.mxu0 %v2256
    %2258 = vmatprep.subr.mxu0 0.0
    %v2259 = vand.u32 %v1105, 4294901760
    %2260 = vmatpush1.msra.mxu0 %v2259
    %2261 = vmatprep.subr.mxu0 0.0
    %v2262 = vand.u32 %v1104, 4294901760
    %2263 = vmatpush1.msra.mxu0 %v2262
    %2264 = vmatprep.subr.mxu0 0.0
    %v2265 = vand.u32 %v1103, 4294901760
    %2266 = vmatpush1.msra.mxu0 %v2265
    %2267 = vmatprep.subr.mxu0 0.0
    %v2268 = vand.u32 %v1102, 4294901760
    %2269 = vmatpush1.msra.mxu0 %v2268
    %2270 = vmatprep.subr.mxu0 0.0
    %2271 = vmatpush2.msra.mxu0 0.0
    %2272 = vmatprep.subr.mxu0 0.0
    %2273 = vmatpush2.msra.mxu0 0.0
    %2274 = vmatprep.subr.mxu0 0.0
    %2275 = vmatpush2.msra.mxu0 0.0
    %2276 = vmatprep.subr.mxu0 0.0
    %2277 = vmatpush2.msra.mxu0 0.0
    %2278 = vmatprep.subr.mxu0 0.0
    %2279 = vmatpush2.msra.mxu0 0.0
    %2280 = vmatprep.subr.mxu0 0.0
    %2281 = vmatpush2.msra.mxu0 0.0
    %2282 = vmatprep.subr.mxu0 0.0
    %2283 = vmatpush2.msra.mxu0 0.0
    %2284 = vmatprep.subr.mxu0 0.0
    %2285 = vmatpush2.msra.mxu0 0.0
    %2286 = vmatprep.subr.mxu0 0.0
    %2287 = vmatpush2.msra.mxu0 0.0
    %2288 = vmatprep.subr.mxu0 0.0
    %2289 = vmatpush2.msra.mxu0 0.0
    %2290 = vmatprep.subr.mxu0 0.0
    %2291 = vmatpush2.msra.mxu0 0.0
    %2292 = vmatprep.subr.mxu0 0.0
    %2293 = vmatpush2.msra.mxu0 0.0
    %2294 = vmatprep.subr.mxu0 0.0
    %2295 = vmatpush2.msra.mxu0 0.0
    %2296 = vmatprep.subr.mxu0 0.0
    %2297 = vmatpush2.msra.mxu0 0.0
    %2298 = vmatprep.subr.mxu0 0.0
    %2299 = vmatpush2.msra.mxu0 0.0
    %2300 = vmatprep.subr.mxu0 0.0
    %2301 = vmatpush2.msra.mxu0 0.0
    %2302 = vmatprep.mubr.f32.mxu0 0.0
    %v2303 = vand.u32 %v1629, 4294901760
    %2304 = vmatmul.mubr.f32.gmra.mxu0 %v2303
    %v2305 = vpop.f32.mrf.mxu0
    %v2306 = vadd.f32 %v2213, %v2305
    %v2307 = vpop.f32.mrf.mxu0
    %2308 = vmatprep.mubr.f32.mxu0 0.0
    %v2309 = vand.u32 %v1630, 4294901760
    %2310 = vmatmul.mubr.f32.gmra.mxu0 %v2309
    %v2311 = vpop.f32.mrf.mxu0
    %v2312 = vadd.f32 %v2219, %v2311
    %v2313 = vpop.f32.mrf.mxu0
    %2314 = vdwg.mxu0
    %2317 = vrot.lane.b32.xlu0 %v2306, 8
    %v2318 = vpop.permute.xlu0 %2317
    %2319 = vrot.lane.b32.xlu0 %v2312, 8
    %v2320 = vpop.permute.xlu0 %2319
    %vm2323 = vcmask 326720
    %2324 = vst.msk [vmem:[#allocation3] sm:$0xff] %vm2323, %v2318
    %2325 = vst.msk [vmem:[#allocation3 + $0x8] sm:$0xff] %vm2323, %v2320
    %v2326 = vld [vmem:[#allocation3] sm:$0xff]
    %v2327 = vld [vmem:[#allocation3 + $0x8] sm:$0xff]
    %2329 = vset.pattern.permute.xlu0 0
    %2330 = vperm.xlu0 %2329, %v1118
    %v2331 = vpop.permute.xlu0 %2330
    %2334 = vset.pattern.permute.xlu0 0
    %2335 = vperm.xlu0 %2334, %v1119
    %v2336 = vpop.permute.xlu0 %2335
    %v2338 = vmul.f32 %v2331, %v2326
    %v2339 = vmul.f32 %v2336, %v2327
    %v2340 = vadd.f32 %v2338, 0.0
    %v2341 = vadd.f32 %v2339, 0.0
    %2342 = vset.pattern.permute.xlu0 1
    %2343 = vperm.xlu0 %2342, %v1118
    %v2344 = vpop.permute.xlu0 %2343
    %2346 = vset.pattern.permute.xlu0 1
    %2347 = vperm.xlu0 %2346, %v1119
    %v2348 = vpop.permute.xlu0 %2347
    %v2350 = vmul.f32 %v2344, %v2326
    %v2351 = vmul.f32 %v2348, %v2327
    %2354 = vrot.lane.b32.xlu0 %v2350, 127
    %v2355 = vpop.permute.xlu0 %2354
    %2356 = vrot.lane.b32.xlu0 %v2351, 127
    %v2357 = vpop.permute.xlu0 %2356
    %v2360 = vadd.f32 %v2340, %v2355
    %v2361 = vadd.f32 %v2341, %v2357
    %2362 = vset.pattern.permute.xlu0 2
    %2363 = vperm.xlu0 %2362, %v1118
    %v2364 = vpop.permute.xlu0 %2363
    %2366 = vset.pattern.permute.xlu0 2
    %2367 = vperm.xlu0 %2366, %v1119
    %v2368 = vpop.permute.xlu0 %2367
    %v2370 = vmul.f32 %v2364, %v2326
    %v2371 = vmul.f32 %v2368, %v2327
    %2374 = vrot.lane.b32.xlu0 %v2370, 126
    %v2375 = vpop.permute.xlu0 %2374
    %2376 = vrot.lane.b32.xlu0 %v2371, 126
    %v2377 = vpop.permute.xlu0 %2376
    %v2380 = vadd.f32 %v2360, %v2375
    %v2381 = vadd.f32 %v2361, %v2377
    %2382 = vset.pattern.permute.xlu0 3
    %2383 = vperm.xlu0 %2382, %v1118
    %v2384 = vpop.permute.xlu0 %2383
    %2386 = vset.pattern.permute.xlu0 3
    %2387 = vperm.xlu0 %2386, %v1119
    %v2388 = vpop.permute.xlu0 %2387
    %v2390 = vmul.f32 %v2384, %v2326
    %v2391 = vmul.f32 %v2388, %v2327
    %2394 = vrot.lane.b32.xlu0 %v2390, 125
    %v2395 = vpop.permute.xlu0 %2394
    %2396 = vrot.lane.b32.xlu0 %v2391, 125
    %v2397 = vpop.permute.xlu0 %2396
    %v2400 = vadd.f32 %v2380, %v2395
    %v2401 = vadd.f32 %v2381, %v2397
    %2402 = vset.pattern.permute.xlu0 4
    %2403 = vperm.xlu0 %2402, %v1118
    %v2404 = vpop.permute.xlu0 %2403
    %2406 = vset.pattern.permute.xlu0 4
    %2407 = vperm.xlu0 %2406, %v1119
    %v2408 = vpop.permute.xlu0 %2407
    %v2410 = vmul.f32 %v2404, %v2326
    %v2411 = vmul.f32 %v2408, %v2327
    %2414 = vrot.lane.b32.xlu0 %v2410, 124
    %v2415 = vpop.permute.xlu0 %2414
    %2416 = vrot.lane.b32.xlu0 %v2411, 124
    %v2417 = vpop.permute.xlu0 %2416
    %v2420 = vadd.f32 %v2400, %v2415
    %v2421 = vadd.f32 %v2401, %v2417
    %2422 = vset.pattern.permute.xlu0 5
    %2423 = vperm.xlu0 %2422, %v1118
    %v2424 = vpop.permute.xlu0 %2423
    %2426 = vset.pattern.permute.xlu0 5
    %2427 = vperm.xlu0 %2426, %v1119
    %v2428 = vpop.permute.xlu0 %2427
    %v2430 = vmul.f32 %v2424, %v2326
    %v2431 = vmul.f32 %v2428, %v2327
    %2434 = vrot.lane.b32.xlu0 %v2430, 123
    %v2435 = vpop.permute.xlu0 %2434
    %2436 = vrot.lane.b32.xlu0 %v2431, 123
    %v2437 = vpop.permute.xlu0 %2436
    %v2440 = vadd.f32 %v2420, %v2435
    %v2441 = vadd.f32 %v2421, %v2437
    %2442 = vset.pattern.permute.xlu0 6
    %2443 = vperm.xlu0 %2442, %v1118
    %v2444 = vpop.permute.xlu0 %2443
    %2446 = vset.pattern.permute.xlu0 6
    %2447 = vperm.xlu0 %2446, %v1119
    %v2448 = vpop.permute.xlu0 %2447
    %v2450 = vmul.f32 %v2444, %v2326
    %v2451 = vmul.f32 %v2448, %v2327
    %2454 = vrot.lane.b32.xlu0 %v2450, 122
    %v2455 = vpop.permute.xlu0 %2454
    %2456 = vrot.lane.b32.xlu0 %v2451, 122
    %v2457 = vpop.permute.xlu0 %2456
    %v2460 = vadd.f32 %v2440, %v2455
    %v2461 = vadd.f32 %v2441, %v2457
    %2462 = vset.pattern.permute.xlu0 7
    %2463 = vperm.xlu0 %2462, %v1118
    %v2464 = vpop.permute.xlu0 %2463
    %2466 = vset.pattern.permute.xlu0 7
    %2467 = vperm.xlu0 %2466, %v1119
    %v2468 = vpop.permute.xlu0 %2467
    %v2470 = vmul.f32 %v2464, %v2326
    %v2471 = vmul.f32 %v2468, %v2327
    %2474 = vrot.lane.b32.xlu0 %v2470, 121
    %v2475 = vpop.permute.xlu0 %2474
    %2476 = vrot.lane.b32.xlu0 %v2471, 121
    %v2477 = vpop.permute.xlu0 %2476
    %v2480 = vadd.f32 %v2460, %v2475
    %v2481 = vadd.f32 %v2461, %v2477
    %2482 = vset.pattern.permute.xlu0 8
    %2483 = vperm.xlu0 %2482, %v1118
    %v2484 = vpop.permute.xlu0 %2483
    %2486 = vset.pattern.permute.xlu0 8
    %2487 = vperm.xlu0 %2486, %v1119
    %v2488 = vpop.permute.xlu0 %2487
    %v2490 = vmul.f32 %v2484, %v2326
    %v2491 = vmul.f32 %v2488, %v2327
    %2494 = vrot.lane.b32.xlu0 %v2490, 120
    %v2495 = vpop.permute.xlu0 %2494
    %2496 = vrot.lane.b32.xlu0 %v2491, 120
    %v2497 = vpop.permute.xlu0 %2496
    %v2500 = vadd.f32 %v2480, %v2495
    %v2501 = vadd.f32 %v2481, %v2497
    %2502 = vset.pattern.permute.xlu0 9
    %2503 = vperm.xlu0 %2502, %v1118
    %v2504 = vpop.permute.xlu0 %2503
    %2506 = vset.pattern.permute.xlu0 9
    %2507 = vperm.xlu0 %2506, %v1119
    %v2508 = vpop.permute.xlu0 %2507
    %v2510 = vmul.f32 %v2504, %v2326
    %v2511 = vmul.f32 %v2508, %v2327
    %2514 = vrot.lane.b32.xlu0 %v2510, 119
    %v2515 = vpop.permute.xlu0 %2514
    %2516 = vrot.lane.b32.xlu0 %v2511, 119
    %v2517 = vpop.permute.xlu0 %2516
    %v2520 = vadd.f32 %v2500, %v2515
    %v2521 = vadd.f32 %v2501, %v2517
    %2522 = vset.pattern.permute.xlu0 10
    %2523 = vperm.xlu0 %2522, %v1118
    %v2524 = vpop.permute.xlu0 %2523
    %2526 = vset.pattern.permute.xlu0 10
    %2527 = vperm.xlu0 %2526, %v1119
    %v2528 = vpop.permute.xlu0 %2527
    %v2530 = vmul.f32 %v2524, %v2326
    %v2531 = vmul.f32 %v2528, %v2327
    %2534 = vrot.lane.b32.xlu0 %v2530, 118
    %v2535 = vpop.permute.xlu0 %2534
    %2536 = vrot.lane.b32.xlu0 %v2531, 118
    %v2537 = vpop.permute.xlu0 %2536
    %v2540 = vadd.f32 %v2520, %v2535
    %v2541 = vadd.f32 %v2521, %v2537
    %2542 = vset.pattern.permute.xlu0 11
    %2543 = vperm.xlu0 %2542, %v1118
    %v2544 = vpop.permute.xlu0 %2543
    %2546 = vset.pattern.permute.xlu0 11
    %2547 = vperm.xlu0 %2546, %v1119
    %v2548 = vpop.permute.xlu0 %2547
    %v2550 = vmul.f32 %v2544, %v2326
    %v2551 = vmul.f32 %v2548, %v2327
    %2554 = vrot.lane.b32.xlu0 %v2550, 117
    %v2555 = vpop.permute.xlu0 %2554
    %2556 = vrot.lane.b32.xlu0 %v2551, 117
    %v2557 = vpop.permute.xlu0 %2556
    %v2560 = vadd.f32 %v2540, %v2555
    %v2561 = vadd.f32 %v2541, %v2557
    %2562 = vset.pattern.permute.xlu0 12
    %2563 = vperm.xlu0 %2562, %v1118
    %v2564 = vpop.permute.xlu0 %2563
    %2566 = vset.pattern.permute.xlu0 12
    %2567 = vperm.xlu0 %2566, %v1119
    %v2568 = vpop.permute.xlu0 %2567
    %v2570 = vmul.f32 %v2564, %v2326
    %v2571 = vmul.f32 %v2568, %v2327
    %2574 = vrot.lane.b32.xlu0 %v2570, 116
    %v2575 = vpop.permute.xlu0 %2574
    %2576 = vrot.lane.b32.xlu0 %v2571, 116
    %v2577 = vpop.permute.xlu0 %2576
    %v2580 = vadd.f32 %v2560, %v2575
    %v2581 = vadd.f32 %v2561, %v2577
    %2582 = vset.pattern.permute.xlu0 13
    %2583 = vperm.xlu0 %2582, %v1118
    %v2584 = vpop.permute.xlu0 %2583
    %2586 = vset.pattern.permute.xlu0 13
    %2587 = vperm.xlu0 %2586, %v1119
    %v2588 = vpop.permute.xlu0 %2587
    %v2590 = vmul.f32 %v2584, %v2326
    %v2591 = vmul.f32 %v2588, %v2327
    %2594 = vrot.lane.b32.xlu0 %v2590, 115
    %v2595 = vpop.permute.xlu0 %2594
    %2596 = vrot.lane.b32.xlu0 %v2591, 115
    %v2597 = vpop.permute.xlu0 %2596
    %v2600 = vadd.f32 %v2580, %v2595
    %v2601 = vadd.f32 %v2581, %v2597
    %2602 = vset.pattern.permute.xlu0 14
    %2603 = vperm.xlu0 %2602, %v1118
    %v2604 = vpop.permute.xlu0 %2603
    %2606 = vset.pattern.permute.xlu0 14
    %2607 = vperm.xlu0 %2606, %v1119
    %v2608 = vpop.permute.xlu0 %2607
    %v2610 = vmul.f32 %v2604, %v2326
    %v2611 = vmul.f32 %v2608, %v2327
    %2614 = vrot.lane.b32.xlu0 %v2610, 114
    %v2615 = vpop.permute.xlu0 %2614
    %2616 = vrot.lane.b32.xlu0 %v2611, 114
    %v2617 = vpop.permute.xlu0 %2616
    %v2620 = vadd.f32 %v2600, %v2615
    %v2621 = vadd.f32 %v2601, %v2617
    %2622 = vset.pattern.permute.xlu0 15
    %2623 = vperm.xlu0 %2622, %v1118
    %v2624 = vpop.permute.xlu0 %2623
    %2626 = vset.pattern.permute.xlu0 15
    %2627 = vperm.xlu0 %2626, %v1119
    %v2628 = vpop.permute.xlu0 %2627
    %v2630 = vmul.f32 %v2624, %v2326
    %v2631 = vmul.f32 %v2628, %v2327
    %2634 = vrot.lane.b32.xlu0 %v2630, 113
    %v2635 = vpop.permute.xlu0 %2634
    %2636 = vrot.lane.b32.xlu0 %v2631, 113
    %v2637 = vpop.permute.xlu0 %2636
    %v2640 = vadd.f32 %v2620, %v2635
    %v2641 = vadd.f32 %v2621, %v2637
    %v2642 = vld [vmem:[#allocation2 + $0x10] sm:$0xff]
    %v2643 = vld [vmem:[#allocation2 + $0x30] sm:$0xff]
    %v2644 = vmul.f32 %v1127, %v2642
    %v2645 = vmul.f32 %v1132, %v2643
    %v2646 = vadd.f32 %v2644, 0.0
    %v2647 = vadd.f32 %v2645, 0.0
    %v2648 = vld [vmem:[#allocation2 + $0x10] sm:$0xff]
    %v2649 = vld [vmem:[#allocation2 + $0x18] sm:$0xff]
    %v2650 = vld [vmem:[#allocation2 + $0x30] sm:$0xff]
    %v2651 = vld [vmem:[#allocation2 + $0x38] sm:$0xff]
    %v2652 = vmul.f32 %v1144, %v2648
    %v2653 = vmul.f32 %v1144, %v2649
    %v2654 = vmul.f32 %v1148, %v2650
    %v2655 = vmul.f32 %v1148, %v2651
    %2660 = vrot.lane.b32.xlu0 %v2652, 127
    %v2661 = vpop.permute.xlu0 %2660
    %2662 = vrot.lane.b32.xlu0 %v2653, 127
    %v2663 = vpop.permute.xlu0 %2662
    %2664 = vrot.lane.b32.xlu0 %v2654, 127
    %v2665 = vpop.permute.xlu0 %2664
    %2666 = vrot.lane.b32.xlu0 %v2655, 127
    %v2667 = vpop.permute.xlu0 %2666
    %v2668 = vsel %vm1166, %v2661, %v2663
    %v2669 = vsel %vm1166, %v2665, %v2667
    %v2672 = vadd.f32 %v2646, %v2668
    %v2673 = vadd.f32 %v2647, %v2669
    %v2674 = vmul.f32 %v1175, %v2648
    %v2675 = vmul.f32 %v1175, %v2649
    %v2676 = vmul.f32 %v1179, %v2650
    %v2677 = vmul.f32 %v1179, %v2651
    %2682 = vrot.lane.b32.xlu0 %v2674, 126
    %v2683 = vpop.permute.xlu0 %2682
    %2684 = vrot.lane.b32.xlu0 %v2675, 126
    %v2685 = vpop.permute.xlu0 %2684
    %2686 = vrot.lane.b32.xlu0 %v2676, 126
    %v2687 = vpop.permute.xlu0 %2686
    %2688 = vrot.lane.b32.xlu0 %v2677, 126
    %v2689 = vpop.permute.xlu0 %2688
    %v2690 = vsel %vm1197, %v2683, %v2685
    %v2691 = vsel %vm1197, %v2687, %v2689
    %v2694 = vadd.f32 %v2672, %v2690
    %v2695 = vadd.f32 %v2673, %v2691
    %v2696 = vmul.f32 %v1206, %v2648
    %v2697 = vmul.f32 %v1206, %v2649
    %v2698 = vmul.f32 %v1210, %v2650
    %v2699 = vmul.f32 %v1210, %v2651
    %2704 = vrot.lane.b32.xlu0 %v2696, 125
    %v2705 = vpop.permute.xlu0 %2704
    %2706 = vrot.lane.b32.xlu0 %v2697, 125
    %v2707 = vpop.permute.xlu0 %2706
    %2708 = vrot.lane.b32.xlu0 %v2698, 125
    %v2709 = vpop.permute.xlu0 %2708
    %2710 = vrot.lane.b32.xlu0 %v2699, 125
    %v2711 = vpop.permute.xlu0 %2710
    %v2712 = vsel %vm1228, %v2705, %v2707
    %v2713 = vsel %vm1228, %v2709, %v2711
    %v2716 = vadd.f32 %v2694, %v2712
    %v2717 = vadd.f32 %v2695, %v2713
    %v2718 = vmul.f32 %v1237, %v2648
    %v2719 = vmul.f32 %v1237, %v2649
    %v2720 = vmul.f32 %v1241, %v2650
    %v2721 = vmul.f32 %v1241, %v2651
    %2726 = vrot.lane.b32.xlu0 %v2718, 124
    %v2727 = vpop.permute.xlu0 %2726
    %2728 = vrot.lane.b32.xlu0 %v2719, 124
    %v2729 = vpop.permute.xlu0 %2728
    %2730 = vrot.lane.b32.xlu0 %v2720, 124
    %v2731 = vpop.permute.xlu0 %2730
    %2732 = vrot.lane.b32.xlu0 %v2721, 124
    %v2733 = vpop.permute.xlu0 %2732
    %v2734 = vsel %vm1259, %v2727, %v2729
    %v2735 = vsel %vm1259, %v2731, %v2733
    %v2738 = vadd.f32 %v2716, %v2734
    %v2739 = vadd.f32 %v2717, %v2735
    %v2740 = vmul.f32 %v1268, %v2648
    %v2741 = vmul.f32 %v1268, %v2649
    %v2742 = vmul.f32 %v1272, %v2650
    %v2743 = vmul.f32 %v1272, %v2651
    %2748 = vrot.lane.b32.xlu0 %v2740, 123
    %v2749 = vpop.permute.xlu0 %2748
    %2750 = vrot.lane.b32.xlu0 %v2741, 123
    %v2751 = vpop.permute.xlu0 %2750
    %2752 = vrot.lane.b32.xlu0 %v2742, 123
    %v2753 = vpop.permute.xlu0 %2752
    %2754 = vrot.lane.b32.xlu0 %v2743, 123
    %v2755 = vpop.permute.xlu0 %2754
    %v2756 = vsel %vm1290, %v2749, %v2751
    %v2757 = vsel %vm1290, %v2753, %v2755
    %v2760 = vadd.f32 %v2738, %v2756
    %v2761 = vadd.f32 %v2739, %v2757
    %v2762 = vmul.f32 %v1299, %v2648
    %v2763 = vmul.f32 %v1299, %v2649
    %v2764 = vmul.f32 %v1303, %v2650
    %v2765 = vmul.f32 %v1303, %v2651
    %2770 = vrot.lane.b32.xlu0 %v2762, 122
    %v2771 = vpop.permute.xlu0 %2770
    %2772 = vrot.lane.b32.xlu0 %v2763, 122
    %v2773 = vpop.permute.xlu0 %2772
    %2774 = vrot.lane.b32.xlu0 %v2764, 122
    %v2775 = vpop.permute.xlu0 %2774
    %2776 = vrot.lane.b32.xlu0 %v2765, 122
    %v2777 = vpop.permute.xlu0 %2776
    %v2778 = vsel %vm1321, %v2771, %v2773
    %v2779 = vsel %vm1321, %v2775, %v2777
    %v2782 = vadd.f32 %v2760, %v2778
    %v2783 = vadd.f32 %v2761, %v2779
    %v2784 = vmul.f32 %v1330, %v2648
    %v2785 = vmul.f32 %v1330, %v2649
    %v2786 = vmul.f32 %v1334, %v2650
    %v2787 = vmul.f32 %v1334, %v2651
    %2792 = vrot.lane.b32.xlu0 %v2784, 121
    %v2793 = vpop.permute.xlu0 %2792
    %2794 = vrot.lane.b32.xlu0 %v2785, 121
    %v2795 = vpop.permute.xlu0 %2794
    %2796 = vrot.lane.b32.xlu0 %v2786, 121
    %v2797 = vpop.permute.xlu0 %2796
    %2798 = vrot.lane.b32.xlu0 %v2787, 121
    %v2799 = vpop.permute.xlu0 %2798
    %v2800 = vsel %vm1352, %v2793, %v2795
    %v2801 = vsel %vm1352, %v2797, %v2799
    %v2804 = vadd.f32 %v2782, %v2800
    %v2805 = vadd.f32 %v2783, %v2801
    %v2806 = vmul.f32 %v1361, %v2648
    %v2807 = vmul.f32 %v1361, %v2649
    %v2808 = vmul.f32 %v1365, %v2650
    %v2809 = vmul.f32 %v1365, %v2651
    %2814 = vrot.lane.b32.xlu0 %v2806, 120
    %v2815 = vpop.permute.xlu0 %2814
    %2816 = vrot.lane.b32.xlu0 %v2807, 120
    %v2817 = vpop.permute.xlu0 %2816
    %2818 = vrot.lane.b32.xlu0 %v2808, 120
    %v2819 = vpop.permute.xlu0 %2818
    %2820 = vrot.lane.b32.xlu0 %v2809, 120
    %v2821 = vpop.permute.xlu0 %2820
    %v2822 = vsel %vm1383, %v2815, %v2817
    %v2823 = vsel %vm1383, %v2819, %v2821
    %v2826 = vadd.f32 %v2804, %v2822
    %v2827 = vadd.f32 %v2805, %v2823
    %v2828 = vmul.f32 %v1392, %v2648
    %v2829 = vmul.f32 %v1392, %v2649
    %v2830 = vmul.f32 %v1396, %v2650
    %v2831 = vmul.f32 %v1396, %v2651
    %2836 = vrot.lane.b32.xlu0 %v2828, 119
    %v2837 = vpop.permute.xlu0 %2836
    %2838 = vrot.lane.b32.xlu0 %v2829, 119
    %v2839 = vpop.permute.xlu0 %2838
    %2840 = vrot.lane.b32.xlu0 %v2830, 119
    %v2841 = vpop.permute.xlu0 %2840
    %2842 = vrot.lane.b32.xlu0 %v2831, 119
    %v2843 = vpop.permute.xlu0 %2842
    %v2844 = vsel %vm1414, %v2837, %v2839
    %v2845 = vsel %vm1414, %v2841, %v2843
    %v2848 = vadd.f32 %v2826, %v2844
    %v2849 = vadd.f32 %v2827, %v2845
    %v2850 = vmul.f32 %v1423, %v2648
    %v2851 = vmul.f32 %v1423, %v2649
    %v2852 = vmul.f32 %v1427, %v2650
    %v2853 = vmul.f32 %v1427, %v2651
    %2858 = vrot.lane.b32.xlu0 %v2850, 118
    %v2859 = vpop.permute.xlu0 %2858
    %2860 = vrot.lane.b32.xlu0 %v2851, 118
    %v2861 = vpop.permute.xlu0 %2860
    %2862 = vrot.lane.b32.xlu0 %v2852, 118
    %v2863 = vpop.permute.xlu0 %2862
    %2864 = vrot.lane.b32.xlu0 %v2853, 118
    %v2865 = vpop.permute.xlu0 %2864
    %v2866 = vsel %vm1445, %v2859, %v2861
    %v2867 = vsel %vm1445, %v2863, %v2865
    %v2870 = vadd.f32 %v2848, %v2866
    %v2871 = vadd.f32 %v2849, %v2867
    %v2872 = vmul.f32 %v1454, %v2648
    %v2873 = vmul.f32 %v1454, %v2649
    %v2874 = vmul.f32 %v1458, %v2650
    %v2875 = vmul.f32 %v1458, %v2651
    %2880 = vrot.lane.b32.xlu0 %v2872, 117
    %v2881 = vpop.permute.xlu0 %2880
    %2882 = vrot.lane.b32.xlu0 %v2873, 117
    %v2883 = vpop.permute.xlu0 %2882
    %2884 = vrot.lane.b32.xlu0 %v2874, 117
    %v2885 = vpop.permute.xlu0 %2884
    %2886 = vrot.lane.b32.xlu0 %v2875, 117
    %v2887 = vpop.permute.xlu0 %2886
    %v2888 = vsel %vm1476, %v2881, %v2883
    %v2889 = vsel %vm1476, %v2885, %v2887
    %v2892 = vadd.f32 %v2870, %v2888
    %v2893 = vadd.f32 %v2871, %v2889
    %v2894 = vmul.f32 %v1485, %v2648
    %v2895 = vmul.f32 %v1485, %v2649
    %v2896 = vmul.f32 %v1489, %v2650
    %v2897 = vmul.f32 %v1489, %v2651
    %2902 = vrot.lane.b32.xlu0 %v2894, 116
    %v2903 = vpop.permute.xlu0 %2902
    %2904 = vrot.lane.b32.xlu0 %v2895, 116
    %v2905 = vpop.permute.xlu0 %2904
    %2906 = vrot.lane.b32.xlu0 %v2896, 116
    %v2907 = vpop.permute.xlu0 %2906
    %2908 = vrot.lane.b32.xlu0 %v2897, 116
    %v2909 = vpop.permute.xlu0 %2908
    %v2910 = vsel %vm1507, %v2903, %v2905
    %v2911 = vsel %vm1507, %v2907, %v2909
    %v2914 = vadd.f32 %v2892, %v2910
    %v2915 = vadd.f32 %v2893, %v2911
    %v2916 = vmul.f32 %v1516, %v2648
    %v2917 = vmul.f32 %v1516, %v2649
    %v2918 = vmul.f32 %v1520, %v2650
    %v2919 = vmul.f32 %v1520, %v2651
    %2924 = vrot.lane.b32.xlu0 %v2916, 115
    %v2925 = vpop.permute.xlu0 %2924
    %2926 = vrot.lane.b32.xlu0 %v2917, 115
    %v2927 = vpop.permute.xlu0 %2926
    %2928 = vrot.lane.b32.xlu0 %v2918, 115
    %v2929 = vpop.permute.xlu0 %2928
    %2930 = vrot.lane.b32.xlu0 %v2919, 115
    %v2931 = vpop.permute.xlu0 %2930
    %v2932 = vsel %vm1538, %v2925, %v2927
    %v2933 = vsel %vm1538, %v2929, %v2931
    %v2936 = vadd.f32 %v2914, %v2932
    %v2937 = vadd.f32 %v2915, %v2933
    %v2938 = vmul.f32 %v1547, %v2648
    %v2939 = vmul.f32 %v1547, %v2649
    %v2940 = vmul.f32 %v1551, %v2650
    %v2941 = vmul.f32 %v1551, %v2651
    %2946 = vrot.lane.b32.xlu0 %v2938, 114
    %v2947 = vpop.permute.xlu0 %2946
    %2948 = vrot.lane.b32.xlu0 %v2939, 114
    %v2949 = vpop.permute.xlu0 %2948
    %2950 = vrot.lane.b32.xlu0 %v2940, 114
    %v2951 = vpop.permute.xlu0 %2950
    %2952 = vrot.lane.b32.xlu0 %v2941, 114
    %v2953 = vpop.permute.xlu0 %2952
    %v2954 = vsel %vm1569, %v2947, %v2949
    %v2955 = vsel %vm1569, %v2951, %v2953
    %v2958 = vadd.f32 %v2936, %v2954
    %v2959 = vadd.f32 %v2937, %v2955
    %v2960 = vmul.f32 %v1578, %v2648
    %v2961 = vmul.f32 %v1578, %v2649
    %v2962 = vmul.f32 %v1582, %v2650
    %v2963 = vmul.f32 %v1582, %v2651
    %2968 = vrot.lane.b32.xlu0 %v2960, 113
    %v2969 = vpop.permute.xlu0 %2968
    %2970 = vrot.lane.b32.xlu0 %v2961, 113
    %v2971 = vpop.permute.xlu0 %2970
    %2972 = vrot.lane.b32.xlu0 %v2962, 113
    %v2973 = vpop.permute.xlu0 %2972
    %2974 = vrot.lane.b32.xlu0 %v2963, 113
    %v2975 = vpop.permute.xlu0 %2974
    %v2976 = vsel %vm1600, %v2969, %v2971
    %v2977 = vsel %vm1600, %v2973, %v2975
    %v2980 = vadd.f32 %v2958, %v2976
    %v2981 = vadd.f32 %v2959, %v2977
    %v2982 = vadd.f32 %v2980, %v1610
    %v2983 = vadd.f32 %v2981, %v1615
    %vm2984 = vcmp.gt.f32.partialorder %v2982, 0.0
    %vm2985 = vcmp.gt.f32.partialorder %v2983, 0.0
    %v2986 = vmin.f32 %v2982, 0.0
    %v2987 = vmin.f32 %v2983, 0.0
    %v2988 = vmul.f32 %v2986, 1.442695
    %v2989 = vpow.pop %v2988
    %v2990 = vmul.f32 %v2987, 1.442695
    %v2991 = vpow.pop %v2990
    %v2992 = vsub.f32 %v2989, 1.0
    %v2993 = vsub.f32 %v2991, 1.0
    %v2994 = vsel %vm2984, %v2982, %v2992
    %v2995 = vsel %vm2985, %v2983, %v2993
    %2996 = vmatprep.subr.mxu0 0.0
    %v2997 = vand.u32 %v1117, 4294901760
    %2998 = vmatpush1.msra.mxu0 %v2997
    %2999 = vmatprep.subr.mxu0 0.0
    %v3000 = vand.u32 %v1116, 4294901760
    %3001 = vmatpush1.msra.mxu0 %v3000
    %3002 = vmatprep.subr.mxu0 0.0
    %v3003 = vand.u32 %v1115, 4294901760
    %3004 = vmatpush1.msra.mxu0 %v3003
    %3005 = vmatprep.subr.mxu0 0.0
    %v3006 = vand.u32 %v1114, 4294901760
    %3007 = vmatpush1.msra.mxu0 %v3006
    %3008 = vmatprep.subr.mxu0 0.0
    %v3009 = vand.u32 %v1113, 4294901760
    %3010 = vmatpush1.msra.mxu0 %v3009
    %3011 = vmatprep.subr.mxu0 0.0
    %v3012 = vand.u32 %v1112, 4294901760
    %3013 = vmatpush1.msra.mxu0 %v3012
    %3014 = vmatprep.subr.mxu0 0.0
    %v3015 = vand.u32 %v1111, 4294901760
    %3016 = vmatpush1.msra.mxu0 %v3015
    %3017 = vmatprep.subr.mxu0 0.0
    %v3018 = vand.u32 %v1110, 4294901760
    %3019 = vmatpush1.msra.mxu0 %v3018
    %3020 = vmatprep.subr.mxu0 0.0
    %v3021 = vand.u32 %v1109, 4294901760
    %3022 = vmatpush1.msra.mxu0 %v3021
    %3023 = vmatprep.subr.mxu0 0.0
    %v3024 = vand.u32 %v1108, 4294901760
    %3025 = vmatpush1.msra.mxu0 %v3024
    %3026 = vmatprep.subr.mxu0 0.0
    %v3027 = vand.u32 %v1107, 4294901760
    %3028 = vmatpush1.msra.mxu0 %v3027
    %3029 = vmatprep.subr.mxu0 0.0
    %v3030 = vand.u32 %v1106, 4294901760
    %3031 = vmatpush1.msra.mxu0 %v3030
    %3032 = vmatprep.subr.mxu0 0.0
    %v3033 = vand.u32 %v1105, 4294901760
    %3034 = vmatpush1.msra.mxu0 %v3033
    %3035 = vmatprep.subr.mxu0 0.0
    %v3036 = vand.u32 %v1104, 4294901760
    %3037 = vmatpush1.msra.mxu0 %v3036
    %3038 = vmatprep.subr.mxu0 0.0
    %v3039 = vand.u32 %v1103, 4294901760
    %3040 = vmatpush1.msra.mxu0 %v3039
    %3041 = vmatprep.subr.mxu0 0.0
    %v3042 = vand.u32 %v1102, 4294901760
    %3043 = vmatpush1.msra.mxu0 %v3042
    %3044 = vmatprep.subr.mxu0 0.0
    %3045 = vmatpush2.msra.mxu0 0.0
    %3046 = vmatprep.subr.mxu0 0.0
    %3047 = vmatpush2.msra.mxu0 0.0
    %3048 = vmatprep.subr.mxu0 0.0
    %3049 = vmatpush2.msra.mxu0 0.0
    %3050 = vmatprep.subr.mxu0 0.0
    %3051 = vmatpush2.msra.mxu0 0.0
    %3052 = vmatprep.subr.mxu0 0.0
    %3053 = vmatpush2.msra.mxu0 0.0
    %3054 = vmatprep.subr.mxu0 0.0
    %3055 = vmatpush2.msra.mxu0 0.0
    %3056 = vmatprep.subr.mxu0 0.0
    %3057 = vmatpush2.msra.mxu0 0.0
    %3058 = vmatprep.subr.mxu0 0.0
    %3059 = vmatpush2.msra.mxu0 0.0
    %3060 = vmatprep.subr.mxu0 0.0
    %3061 = vmatpush2.msra.mxu0 0.0
    %3062 = vmatprep.subr.mxu0 0.0
    %3063 = vmatpush2.msra.mxu0 0.0
    %3064 = vmatprep.subr.mxu0 0.0
    %3065 = vmatpush2.msra.mxu0 0.0
    %3066 = vmatprep.subr.mxu0 0.0
    %3067 = vmatpush2.msra.mxu0 0.0
    %3068 = vmatprep.subr.mxu0 0.0
    %3069 = vmatpush2.msra.mxu0 0.0
    %3070 = vmatprep.subr.mxu0 0.0
    %3071 = vmatpush2.msra.mxu0 0.0
    %3072 = vmatprep.subr.mxu0 0.0
    %3073 = vmatpush2.msra.mxu0 0.0
    %3074 = vmatprep.subr.mxu0 0.0
    %3075 = vmatpush2.msra.mxu0 0.0
    %3076 = vmatprep.mubr.f32.mxu0 0.0
    %v3077 = vand.u32 %v2994, 4294901760
    %v3078 = vsub.f32 %v2994, %v3077
    %v3079 = vand.u32 %v3078, 4294901760
    %v3080 = vsub.f32 %v3078, %v3079
    %v3081 = vand.u32 %v3080, 4294901760
    %3082 = vmatmul.mubr.f32.gmra.mxu0 %v3081
    %v3083 = vpop.f32.mrf.mxu0
    %v3084 = vadd.f32 0.0, %v3083
    %v3085 = vpop.f32.mrf.mxu0
    %3086 = vmatprep.mubr.f32.mxu0 0.0
    %v3087 = vand.u32 %v2995, 4294901760
    %v3088 = vsub.f32 %v2995, %v3087
    %v3089 = vand.u32 %v3088, 4294901760
    %v3090 = vsub.f32 %v3088, %v3089
    %v3091 = vand.u32 %v3090, 4294901760
    %3092 = vmatmul.mubr.f32.gmra.mxu0 %v3091
    %v3093 = vpop.f32.mrf.mxu0
    %v3094 = vadd.f32 0.0, %v3093
    %v3095 = vpop.f32.mrf.mxu0
    %3096 = vdwg.mxu0
    %3097 = vmatprep.subr.mxu0 0.0
    %v3098 = vand.u32 %v1117, 4294901760
    %v3099 = vsub.f32 %v1117, %v3098
    %v3100 = vand.u32 %v3099, 4294901760
    %v3101 = vsub.f32 %v3099, %v3100
    %v3102 = vand.u32 %v3101, 4294901760
    %3103 = vmatpush1.msra.mxu0 %v3102
    %3104 = vmatprep.subr.mxu0 0.0
    %v3105 = vand.u32 %v1116, 4294901760
    %v3106 = vsub.f32 %v1116, %v3105
    %v3107 = vand.u32 %v3106, 4294901760
    %v3108 = vsub.f32 %v3106, %v3107
    %v3109 = vand.u32 %v3108, 4294901760
    %3110 = vmatpush1.msra.mxu0 %v3109
    %3111 = vmatprep.subr.mxu0 0.0
    %v3112 = vand.u32 %v1115, 4294901760
    %v3113 = vsub.f32 %v1115, %v3112
    %v3114 = vand.u32 %v3113, 4294901760
    %v3115 = vsub.f32 %v3113, %v3114
    %v3116 = vand.u32 %v3115, 4294901760
    %3117 = vmatpush1.msra.mxu0 %v3116
    %3118 = vmatprep.subr.mxu0 0.0
    %v3119 = vand.u32 %v1114, 4294901760
    %v3120 = vsub.f32 %v1114, %v3119
    %v3121 = vand.u32 %v3120, 4294901760
    %v3122 = vsub.f32 %v3120, %v3121
    %v3123 = vand.u32 %v3122, 4294901760
    %3124 = vmatpush1.msra.mxu0 %v3123
    %3125 = vmatprep.subr.mxu0 0.0
    %v3126 = vand.u32 %v1113, 4294901760
    %v3127 = vsub.f32 %v1113, %v3126
    %v3128 = vand.u32 %v3127, 4294901760
    %v3129 = vsub.f32 %v3127, %v3128
    %v3130 = vand.u32 %v3129, 4294901760
    %3131 = vmatpush1.msra.mxu0 %v3130
    %3132 = vmatprep.subr.mxu0 0.0
    %v3133 = vand.u32 %v1112, 4294901760
    %v3134 = vsub.f32 %v1112, %v3133
    %v3135 = vand.u32 %v3134, 4294901760
    %v3136 = vsub.f32 %v3134, %v3135
    %v3137 = vand.u32 %v3136, 4294901760
    %3138 = vmatpush1.msra.mxu0 %v3137
    %3139 = vmatprep.subr.mxu0 0.0
    %v3140 = vand.u32 %v1111, 4294901760
    %v3141 = vsub.f32 %v1111, %v3140
    %v3142 = vand.u32 %v3141, 4294901760
    %v3143 = vsub.f32 %v3141, %v3142
    %v3144 = vand.u32 %v3143, 4294901760
    %3145 = vmatpush1.msra.mxu0 %v3144
    %3146 = vmatprep.subr.mxu0 0.0
    %v3147 = vand.u32 %v1110, 4294901760
    %v3148 = vsub.f32 %v1110, %v3147
    %v3149 = vand.u32 %v3148, 4294901760
    %v3150 = vsub.f32 %v3148, %v3149
    %v3151 = vand.u32 %v3150, 4294901760
    %3152 = vmatpush1.msra.mxu0 %v3151
    %3153 = vmatprep.subr.mxu0 0.0
    %v3154 = vand.u32 %v1109, 4294901760
    %v3155 = vsub.f32 %v1109, %v3154
    %v3156 = vand.u32 %v3155, 4294901760
    %v3157 = vsub.f32 %v3155, %v3156
    %v3158 = vand.u32 %v3157, 4294901760
    %3159 = vmatpush1.msra.mxu0 %v3158
    %3160 = vmatprep.subr.mxu0 0.0
    %v3161 = vand.u32 %v1108, 4294901760
    %v3162 = vsub.f32 %v1108, %v3161
    %v3163 = vand.u32 %v3162, 4294901760
    %v3164 = vsub.f32 %v3162, %v3163
    %v3165 = vand.u32 %v3164, 4294901760
    %3166 = vmatpush1.msra.mxu0 %v3165
    %3167 = vmatprep.subr.mxu0 0.0
    %v3168 = vand.u32 %v1107, 4294901760
    %v3169 = vsub.f32 %v1107, %v3168
    %v3170 = vand.u32 %v3169, 4294901760
    %v3171 = vsub.f32 %v3169, %v3170
    %v3172 = vand.u32 %v3171, 4294901760
    %3173 = vmatpush1.msra.mxu0 %v3172
    %3174 = vmatprep.subr.mxu0 0.0
    %v3175 = vand.u32 %v1106, 4294901760
    %v3176 = vsub.f32 %v1106, %v3175
    %v3177 = vand.u32 %v3176, 4294901760
    %v3178 = vsub.f32 %v3176, %v3177
    %v3179 = vand.u32 %v3178, 4294901760
    %3180 = vmatpush1.msra.mxu0 %v3179
    %3181 = vmatprep.subr.mxu0 0.0
    %v3182 = vand.u32 %v1105, 4294901760
    %v3183 = vsub.f32 %v1105, %v3182
    %v3184 = vand.u32 %v3183, 4294901760
    %v3185 = vsub.f32 %v3183, %v3184
    %v3186 = vand.u32 %v3185, 4294901760
    %3187 = vmatpush1.msra.mxu0 %v3186
    %3188 = vmatprep.subr.mxu0 0.0
    %v3189 = vand.u32 %v1104, 4294901760
    %v3190 = vsub.f32 %v1104, %v3189
    %v3191 = vand.u32 %v3190, 4294901760
    %v3192 = vsub.f32 %v3190, %v3191
    %v3193 = vand.u32 %v3192, 4294901760
    %3194 = vmatpush1.msra.mxu0 %v3193
    %3195 = vmatprep.subr.mxu0 0.0
    %v3196 = vand.u32 %v1103, 4294901760
    %v3197 = vsub.f32 %v1103, %v3196
    %v3198 = vand.u32 %v3197, 4294901760
    %v3199 = vsub.f32 %v3197, %v3198
    %v3200 = vand.u32 %v3199, 4294901760
    %3201 = vmatpush1.msra.mxu0 %v3200
    %3202 = vmatprep.subr.mxu0 0.0
    %v3203 = vand.u32 %v1102, 4294901760
    %v3204 = vsub.f32 %v1102, %v3203
    %v3205 = vand.u32 %v3204, 4294901760
    %v3206 = vsub.f32 %v3204, %v3205
    %v3207 = vand.u32 %v3206, 4294901760
    %3208 = vmatpush1.msra.mxu0 %v3207
    %3209 = vmatprep.subr.mxu0 0.0
    %3210 = vmatpush2.msra.mxu0 0.0
    %3211 = vmatprep.subr.mxu0 0.0
    %3212 = vmatpush2.msra.mxu0 0.0
    %3213 = vmatprep.subr.mxu0 0.0
    %3214 = vmatpush2.msra.mxu0 0.0
    %3215 = vmatprep.subr.mxu0 0.0
    %3216 = vmatpush2.msra.mxu0 0.0
    %3217 = vmatprep.subr.mxu0 0.0
    %3218 = vmatpush2.msra.mxu0 0.0
    %3219 = vmatprep.subr.mxu0 0.0
    %3220 = vmatpush2.msra.mxu0 0.0
    %3221 = vmatprep.subr.mxu0 0.0
    %3222 = vmatpush2.msra.mxu0 0.0
    %3223 = vmatprep.subr.mxu0 0.0
    %3224 = vmatpush2.msra.mxu0 0.0
    %3225 = vmatprep.subr.mxu0 0.0
    %3226 = vmatpush2.msra.mxu0 0.0
    %3227 = vmatprep.subr.mxu0 0.0
    %3228 = vmatpush2.msra.mxu0 0.0
    %3229 = vmatprep.subr.mxu0 0.0
    %3230 = vmatpush2.msra.mxu0 0.0
    %3231 = vmatprep.subr.mxu0 0.0
    %3232 = vmatpush2.msra.mxu0 0.0
    %3233 = vmatprep.subr.mxu0 0.0
    %3234 = vmatpush2.msra.mxu0 0.0
    %3235 = vmatprep.subr.mxu0 0.0
    %3236 = vmatpush2.msra.mxu0 0.0
    %3237 = vmatprep.subr.mxu0 0.0
    %3238 = vmatpush2.msra.mxu0 0.0
    %3239 = vmatprep.subr.mxu0 0.0
    %3240 = vmatpush2.msra.mxu0 0.0
    %3241 = vmatprep.mubr.f32.mxu0 0.0
    %v3242 = vand.u32 %v2994, 4294901760
    %3243 = vmatmul.mubr.f32.gmra.mxu0 %v3242
    %v3244 = vpop.f32.mrf.mxu0
    %v3245 = vadd.f32 %v3084, %v3244
    %v3246 = vpop.f32.mrf.mxu0
    %3247 = vmatprep.mubr.f32.mxu0 0.0
    %v3248 = vand.u32 %v2995, 4294901760
    %3249 = vmatmul.mubr.f32.gmra.mxu0 %v3248
    %v3250 = vpop.f32.mrf.mxu0
    %v3251 = vadd.f32 %v3094, %v3250
    %v3252 = vpop.f32.mrf.mxu0
    %3253 = vdwg.mxu0
    %3254 = vmatprep.subr.mxu0 0.0
    %v3255 = vand.u32 %v1117, 4294901760
    %v3256 = vsub.f32 %v1117, %v3255
    %3257 = vmatpush1.msra.mxu0 %v3256
    %3258 = vmatprep.subr.mxu0 0.0
    %v3259 = vand.u32 %v1116, 4294901760
    %v3260 = vsub.f32 %v1116, %v3259
    %3261 = vmatpush1.msra.mxu0 %v3260
    %3262 = vmatprep.subr.mxu0 0.0
    %v3263 = vand.u32 %v1115, 4294901760
    %v3264 = vsub.f32 %v1115, %v3263
    %3265 = vmatpush1.msra.mxu0 %v3264
    %3266 = vmatprep.subr.mxu0 0.0
    %v3267 = vand.u32 %v1114, 4294901760
    %v3268 = vsub.f32 %v1114, %v3267
    %3269 = vmatpush1.msra.mxu0 %v3268
    %3270 = vmatprep.subr.mxu0 0.0
    %v3271 = vand.u32 %v1113, 4294901760
    %v3272 = vsub.f32 %v1113, %v3271
    %3273 = vmatpush1.msra.mxu0 %v3272
    %3274 = vmatprep.subr.mxu0 0.0
    %v3275 = vand.u32 %v1112, 4294901760
    %v3276 = vsub.f32 %v1112, %v3275
    %3277 = vmatpush1.msra.mxu0 %v3276
    %3278 = vmatprep.subr.mxu0 0.0
    %v3279 = vand.u32 %v1111, 4294901760
    %v3280 = vsub.f32 %v1111, %v3279
    %3281 = vmatpush1.msra.mxu0 %v3280
    %3282 = vmatprep.subr.mxu0 0.0
    %v3283 = vand.u32 %v1110, 4294901760
    %v3284 = vsub.f32 %v1110, %v3283
    %3285 = vmatpush1.msra.mxu0 %v3284
    %3286 = vmatprep.subr.mxu0 0.0
    %v3287 = vand.u32 %v1109, 4294901760
    %v3288 = vsub.f32 %v1109, %v3287
    %3289 = vmatpush1.msra.mxu0 %v3288
    %3290 = vmatprep.subr.mxu0 0.0
    %v3291 = vand.u32 %v1108, 4294901760
    %v3292 = vsub.f32 %v1108, %v3291
    %3293 = vmatpush1.msra.mxu0 %v3292
    %3294 = vmatprep.subr.mxu0 0.0
    %v3295 = vand.u32 %v1107, 4294901760
    %v3296 = vsub.f32 %v1107, %v3295
    %3297 = vmatpush1.msra.mxu0 %v3296
    %3298 = vmatprep.subr.mxu0 0.0
    %v3299 = vand.u32 %v1106, 4294901760
    %v3300 = vsub.f32 %v1106, %v3299
    %3301 = vmatpush1.msra.mxu0 %v3300
    %3302 = vmatprep.subr.mxu0 0.0
    %v3303 = vand.u32 %v1105, 4294901760
    %v3304 = vsub.f32 %v1105, %v3303
    %3305 = vmatpush1.msra.mxu0 %v3304
    %3306 = vmatprep.subr.mxu0 0.0
    %v3307 = vand.u32 %v1104, 4294901760
    %v3308 = vsub.f32 %v1104, %v3307
    %3309 = vmatpush1.msra.mxu0 %v3308
    %3310 = vmatprep.subr.mxu0 0.0
    %v3311 = vand.u32 %v1103, 4294901760
    %v3312 = vsub.f32 %v1103, %v3311
    %3313 = vmatpush1.msra.mxu0 %v3312
    %3314 = vmatprep.subr.mxu0 0.0
    %v3315 = vand.u32 %v1102, 4294901760
    %v3316 = vsub.f32 %v1102, %v3315
    %3317 = vmatpush1.msra.mxu0 %v3316
    %3318 = vmatprep.subr.mxu0 0.0
    %3319 = vmatpush2.msra.mxu0 0.0
    %3320 = vmatprep.subr.mxu0 0.0
    %3321 = vmatpush2.msra.mxu0 0.0
    %3322 = vmatprep.subr.mxu0 0.0
    %3323 = vmatpush2.msra.mxu0 0.0
    %3324 = vmatprep.subr.mxu0 0.0
    %3325 = vmatpush2.msra.mxu0 0.0
    %3326 = vmatprep.subr.mxu0 0.0
    %3327 = vmatpush2.msra.mxu0 0.0
    %3328 = vmatprep.subr.mxu0 0.0
    %3329 = vmatpush2.msra.mxu0 0.0
    %3330 = vmatprep.subr.mxu0 0.0
    %3331 = vmatpush2.msra.mxu0 0.0
    %3332 = vmatprep.subr.mxu0 0.0
    %3333 = vmatpush2.msra.mxu0 0.0
    %3334 = vmatprep.subr.mxu0 0.0
    %3335 = vmatpush2.msra.mxu0 0.0
    %3336 = vmatprep.subr.mxu0 0.0
    %3337 = vmatpush2.msra.mxu0 0.0
    %3338 = vmatprep.subr.mxu0 0.0
    %3339 = vmatpush2.msra.mxu0 0.0
    %3340 = vmatprep.subr.mxu0 0.0
    %3341 = vmatpush2.msra.mxu0 0.0
    %3342 = vmatprep.subr.mxu0 0.0
    %3343 = vmatpush2.msra.mxu0 0.0
    %3344 = vmatprep.subr.mxu0 0.0
    %3345 = vmatpush2.msra.mxu0 0.0
    %3346 = vmatprep.subr.mxu0 0.0
    %3347 = vmatpush2.msra.mxu0 0.0
    %3348 = vmatprep.subr.mxu0 0.0
    %3349 = vmatpush2.msra.mxu0 0.0
    %3350 = vmatprep.mubr.f32.mxu0 0.0
    %v3351 = vand.u32 %v2994, 4294901760
    %v3352 = vsub.f32 %v2994, %v3351
    %3353 = vmatmul.mubr.f32.gmra.mxu0 %v3352
    %v3354 = vpop.f32.mrf.mxu0
    %v3355 = vadd.f32 %v3245, %v3354
    %v3356 = vpop.f32.mrf.mxu0
    %3357 = vmatprep.mubr.f32.mxu0 0.0
    %v3358 = vand.u32 %v2995, 4294901760
    %v3359 = vsub.f32 %v2995, %v3358
    %3360 = vmatmul.mubr.f32.gmra.mxu0 %v3359
    %v3361 = vpop.f32.mrf.mxu0
    %v3362 = vadd.f32 %v3251, %v3361
    %v3363 = vpop.f32.mrf.mxu0
    %3364 = vdwg.mxu0
    %3365 = vmatprep.subr.mxu0 0.0
    %v3366 = vand.u32 %v1117, 4294901760
    %3367 = vmatpush1.msra.mxu0 %v3366
    %3368 = vmatprep.subr.mxu0 0.0
    %v3369 = vand.u32 %v1116, 4294901760
    %3370 = vmatpush1.msra.mxu0 %v3369
    %3371 = vmatprep.subr.mxu0 0.0
    %v3372 = vand.u32 %v1115, 4294901760
    %3373 = vmatpush1.msra.mxu0 %v3372
    %3374 = vmatprep.subr.mxu0 0.0
    %v3375 = vand.u32 %v1114, 4294901760
    %3376 = vmatpush1.msra.mxu0 %v3375
    %3377 = vmatprep.subr.mxu0 0.0
    %v3378 = vand.u32 %v1113, 4294901760
    %3379 = vmatpush1.msra.mxu0 %v3378
    %3380 = vmatprep.subr.mxu0 0.0
    %v3381 = vand.u32 %v1112, 4294901760
    %3382 = vmatpush1.msra.mxu0 %v3381
    %3383 = vmatprep.subr.mxu0 0.0
    %v3384 = vand.u32 %v1111, 4294901760
    %3385 = vmatpush1.msra.mxu0 %v3384
    %3386 = vmatprep.subr.mxu0 0.0
    %v3387 = vand.u32 %v1110, 4294901760
    %3388 = vmatpush1.msra.mxu0 %v3387
    %3389 = vmatprep.subr.mxu0 0.0
    %v3390 = vand.u32 %v1109, 4294901760
    %3391 = vmatpush1.msra.mxu0 %v3390
    %3392 = vmatprep.subr.mxu0 0.0
    %v3393 = vand.u32 %v1108, 4294901760
    %3394 = vmatpush1.msra.mxu0 %v3393
    %3395 = vmatprep.subr.mxu0 0.0
    %v3396 = vand.u32 %v1107, 4294901760
    %3397 = vmatpush1.msra.mxu0 %v3396
    %3398 = vmatprep.subr.mxu0 0.0
    %v3399 = vand.u32 %v1106, 4294901760
    %3400 = vmatpush1.msra.mxu0 %v3399
    %3401 = vmatprep.subr.mxu0 0.0
    %v3402 = vand.u32 %v1105, 4294901760
    %3403 = vmatpush1.msra.mxu0 %v3402
    %3404 = vmatprep.subr.mxu0 0.0
    %v3405 = vand.u32 %v1104, 4294901760
    %3406 = vmatpush1.msra.mxu0 %v3405
    %3407 = vmatprep.subr.mxu0 0.0
    %v3408 = vand.u32 %v1103, 4294901760
    %3409 = vmatpush1.msra.mxu0 %v3408
    %3410 = vmatprep.subr.mxu0 0.0
    %v3411 = vand.u32 %v1102, 4294901760
    %3412 = vmatpush1.msra.mxu0 %v3411
    %3413 = vmatprep.subr.mxu0 0.0
    %3414 = vmatpush2.msra.mxu0 0.0
    %3415 = vmatprep.subr.mxu0 0.0
    %3416 = vmatpush2.msra.mxu0 0.0
    %3417 = vmatprep.subr.mxu0 0.0
    %3418 = vmatpush2.msra.mxu0 0.0
    %3419 = vmatprep.subr.mxu0 0.0
    %3420 = vmatpush2.msra.mxu0 0.0
    %3421 = vmatprep.subr.mxu0 0.0
    %3422 = vmatpush2.msra.mxu0 0.0
    %3423 = vmatprep.subr.mxu0 0.0
    %3424 = vmatpush2.msra.mxu0 0.0
    %3425 = vmatprep.subr.mxu0 0.0
    %3426 = vmatpush2.msra.mxu0 0.0
    %3427 = vmatprep.subr.mxu0 0.0
    %3428 = vmatpush2.msra.mxu0 0.0
    %3429 = vmatprep.subr.mxu0 0.0
    %3430 = vmatpush2.msra.mxu0 0.0
    %3431 = vmatprep.subr.mxu0 0.0
    %3432 = vmatpush2.msra.mxu0 0.0
    %3433 = vmatprep.subr.mxu0 0.0
    %3434 = vmatpush2.msra.mxu0 0.0
    %3435 = vmatprep.subr.mxu0 0.0
    %3436 = vmatpush2.msra.mxu0 0.0
    %3437 = vmatprep.subr.mxu0 0.0
    %3438 = vmatpush2.msra.mxu0 0.0
    %3439 = vmatprep.subr.mxu0 0.0
    %3440 = vmatpush2.msra.mxu0 0.0
    %3441 = vmatprep.subr.mxu0 0.0
    %3442 = vmatpush2.msra.mxu0 0.0
    %3443 = vmatprep.subr.mxu0 0.0
    %3444 = vmatpush2.msra.mxu0 0.0
    %3445 = vmatprep.mubr.f32.mxu0 0.0
    %v3446 = vand.u32 %v2994, 4294901760
    %v3447 = vsub.f32 %v2994, %v3446
    %v3448 = vand.u32 %v3447, 4294901760
    %3449 = vmatmul.mubr.f32.gmra.mxu0 %v3448
    %v3450 = vpop.f32.mrf.mxu0
    %v3451 = vadd.f32 %v3355, %v3450
    %v3452 = vpop.f32.mrf.mxu0
    %3453 = vmatprep.mubr.f32.mxu0 0.0
    %v3454 = vand.u32 %v2995, 4294901760
    %v3455 = vsub.f32 %v2995, %v3454
    %v3456 = vand.u32 %v3455, 4294901760
    %3457 = vmatmul.mubr.f32.gmra.mxu0 %v3456
    %v3458 = vpop.f32.mrf.mxu0
    %v3459 = vadd.f32 %v3362, %v3458
    %v3460 = vpop.f32.mrf.mxu0
    %3461 = vdwg.mxu0
    %3462 = vmatprep.subr.mxu0 0.0
    %v3463 = vand.u32 %v1117, 4294901760
    %v3464 = vsub.f32 %v1117, %v3463
    %v3465 = vand.u32 %v3464, 4294901760
    %3466 = vmatpush1.msra.mxu0 %v3465
    %3467 = vmatprep.subr.mxu0 0.0
    %v3468 = vand.u32 %v1116, 4294901760
    %v3469 = vsub.f32 %v1116, %v3468
    %v3470 = vand.u32 %v3469, 4294901760
    %3471 = vmatpush1.msra.mxu0 %v3470
    %3472 = vmatprep.subr.mxu0 0.0
    %v3473 = vand.u32 %v1115, 4294901760
    %v3474 = vsub.f32 %v1115, %v3473
    %v3475 = vand.u32 %v3474, 4294901760
    %3476 = vmatpush1.msra.mxu0 %v3475
    %3477 = vmatprep.subr.mxu0 0.0
    %v3478 = vand.u32 %v1114, 4294901760
    %v3479 = vsub.f32 %v1114, %v3478
    %v3480 = vand.u32 %v3479, 4294901760
    %3481 = vmatpush1.msra.mxu0 %v3480
    %3482 = vmatprep.subr.mxu0 0.0
    %v3483 = vand.u32 %v1113, 4294901760
    %v3484 = vsub.f32 %v1113, %v3483
    %v3485 = vand.u32 %v3484, 4294901760
    %3486 = vmatpush1.msra.mxu0 %v3485
    %3487 = vmatprep.subr.mxu0 0.0
    %v3488 = vand.u32 %v1112, 4294901760
    %v3489 = vsub.f32 %v1112, %v3488
    %v3490 = vand.u32 %v3489, 4294901760
    %3491 = vmatpush1.msra.mxu0 %v3490
    %3492 = vmatprep.subr.mxu0 0.0
    %v3493 = vand.u32 %v1111, 4294901760
    %v3494 = vsub.f32 %v1111, %v3493
    %v3495 = vand.u32 %v3494, 4294901760
    %3496 = vmatpush1.msra.mxu0 %v3495
    %3497 = vmatprep.subr.mxu0 0.0
    %v3498 = vand.u32 %v1110, 4294901760
    %v3499 = vsub.f32 %v1110, %v3498
    %v3500 = vand.u32 %v3499, 4294901760
    %3501 = vmatpush1.msra.mxu0 %v3500
    %3502 = vmatprep.subr.mxu0 0.0
    %v3503 = vand.u32 %v1109, 4294901760
    %v3504 = vsub.f32 %v1109, %v3503
    %v3505 = vand.u32 %v3504, 4294901760
    %3506 = vmatpush1.msra.mxu0 %v3505
    %3507 = vmatprep.subr.mxu0 0.0
    %v3508 = vand.u32 %v1108, 4294901760
    %v3509 = vsub.f32 %v1108, %v3508
    %v3510 = vand.u32 %v3509, 4294901760
    %3511 = vmatpush1.msra.mxu0 %v3510
    %3512 = vmatprep.subr.mxu0 0.0
    %v3513 = vand.u32 %v1107, 4294901760
    %v3514 = vsub.f32 %v1107, %v3513
    %v3515 = vand.u32 %v3514, 4294901760
    %3516 = vmatpush1.msra.mxu0 %v3515
    %3517 = vmatprep.subr.mxu0 0.0
    %v3518 = vand.u32 %v1106, 4294901760
    %v3519 = vsub.f32 %v1106, %v3518
    %v3520 = vand.u32 %v3519, 4294901760
    %3521 = vmatpush1.msra.mxu0 %v3520
    %3522 = vmatprep.subr.mxu0 0.0
    %v3523 = vand.u32 %v1105, 4294901760
    %v3524 = vsub.f32 %v1105, %v3523
    %v3525 = vand.u32 %v3524, 4294901760
    %3526 = vmatpush1.msra.mxu0 %v3525
    %3527 = vmatprep.subr.mxu0 0.0
    %v3528 = vand.u32 %v1104, 4294901760
    %v3529 = vsub.f32 %v1104, %v3528
    %v3530 = vand.u32 %v3529, 4294901760
    %3531 = vmatpush1.msra.mxu0 %v3530
    %3532 = vmatprep.subr.mxu0 0.0
    %v3533 = vand.u32 %v1103, 4294901760
    %v3534 = vsub.f32 %v1103, %v3533
    %v3535 = vand.u32 %v3534, 4294901760
    %3536 = vmatpush1.msra.mxu0 %v3535
    %3537 = vmatprep.subr.mxu0 0.0
    %v3538 = vand.u32 %v1102, 4294901760
    %v3539 = vsub.f32 %v1102, %v3538
    %v3540 = vand.u32 %v3539, 4294901760
    %3541 = vmatpush1.msra.mxu0 %v3540
    %3542 = vmatprep.subr.mxu0 0.0
    %3543 = vmatpush2.msra.mxu0 0.0
    %3544 = vmatprep.subr.mxu0 0.0
    %3545 = vmatpush2.msra.mxu0 0.0
    %3546 = vmatprep.subr.mxu0 0.0
    %3547 = vmatpush2.msra.mxu0 0.0
    %3548 = vmatprep.subr.mxu0 0.0
    %3549 = vmatpush2.msra.mxu0 0.0
    %3550 = vmatprep.subr.mxu0 0.0
    %3551 = vmatpush2.msra.mxu0 0.0
    %3552 = vmatprep.subr.mxu0 0.0
    %3553 = vmatpush2.msra.mxu0 0.0
    %3554 = vmatprep.subr.mxu0 0.0
    %3555 = vmatpush2.msra.mxu0 0.0
    %3556 = vmatprep.subr.mxu0 0.0
    %3557 = vmatpush2.msra.mxu0 0.0
    %3558 = vmatprep.subr.mxu0 0.0
    %3559 = vmatpush2.msra.mxu0 0.0
    %3560 = vmatprep.subr.mxu0 0.0
    %3561 = vmatpush2.msra.mxu0 0.0
    %3562 = vmatprep.subr.mxu0 0.0
    %3563 = vmatpush2.msra.mxu0 0.0
    %3564 = vmatprep.subr.mxu0 0.0
    %3565 = vmatpush2.msra.mxu0 0.0
    %3566 = vmatprep.subr.mxu0 0.0
    %3567 = vmatpush2.msra.mxu0 0.0
    %3568 = vmatprep.subr.mxu0 0.0
    %3569 = vmatpush2.msra.mxu0 0.0
    %3570 = vmatprep.subr.mxu0 0.0
    %3571 = vmatpush2.msra.mxu0 0.0
    %3572 = vmatprep.subr.mxu0 0.0
    %3573 = vmatpush2.msra.mxu0 0.0
    %3574 = vmatprep.mubr.f32.mxu0 0.0
    %v3575 = vand.u32 %v2994, 4294901760
    %3576 = vmatmul.mubr.f32.gmra.mxu0 %v3575
    %v3577 = vpop.f32.mrf.mxu0
    %v3578 = vadd.f32 %v3451, %v3577
    %v3579 = vpop.f32.mrf.mxu0
    %3580 = vmatprep.mubr.f32.mxu0 0.0
    %v3581 = vand.u32 %v2995, 4294901760
    %3582 = vmatmul.mubr.f32.gmra.mxu0 %v3581
    %v3583 = vpop.f32.mrf.mxu0
    %v3584 = vadd.f32 %v3459, %v3583
    %v3585 = vpop.f32.mrf.mxu0
    %3586 = vdwg.mxu0
    %3587 = vmatprep.subr.mxu0 0.0
    %v3588 = vand.u32 %v1117, 4294901760
    %3589 = vmatpush1.msra.mxu0 %v3588
    %3590 = vmatprep.subr.mxu0 0.0
    %v3591 = vand.u32 %v1116, 4294901760
    %3592 = vmatpush1.msra.mxu0 %v3591
    %3593 = vmatprep.subr.mxu0 0.0
    %v3594 = vand.u32 %v1115, 4294901760
    %3595 = vmatpush1.msra.mxu0 %v3594
    %3596 = vmatprep.subr.mxu0 0.0
    %v3597 = vand.u32 %v1114, 4294901760
    %3598 = vmatpush1.msra.mxu0 %v3597
    %3599 = vmatprep.subr.mxu0 0.0
    %v3600 = vand.u32 %v1113, 4294901760
    %3601 = vmatpush1.msra.mxu0 %v3600
    %3602 = vmatprep.subr.mxu0 0.0
    %v3603 = vand.u32 %v1112, 4294901760
    %3604 = vmatpush1.msra.mxu0 %v3603
    %3605 = vmatprep.subr.mxu0 0.0
    %v3606 = vand.u32 %v1111, 4294901760
    %3607 = vmatpush1.msra.mxu0 %v3606
    %3608 = vmatprep.subr.mxu0 0.0
    %v3609 = vand.u32 %v1110, 4294901760
    %3610 = vmatpush1.msra.mxu0 %v3609
    %3611 = vmatprep.subr.mxu0 0.0
    %v3612 = vand.u32 %v1109, 4294901760
    %3613 = vmatpush1.msra.mxu0 %v3612
    %3614 = vmatprep.subr.mxu0 0.0
    %v3615 = vand.u32 %v1108, 4294901760
    %3616 = vmatpush1.msra.mxu0 %v3615
    %3617 = vmatprep.subr.mxu0 0.0
    %v3618 = vand.u32 %v1107, 4294901760
    %3619 = vmatpush1.msra.mxu0 %v3618
    %3620 = vmatprep.subr.mxu0 0.0
    %v3621 = vand.u32 %v1106, 4294901760
    %3622 = vmatpush1.msra.mxu0 %v3621
    %3623 = vmatprep.subr.mxu0 0.0
    %v3624 = vand.u32 %v1105, 4294901760
    %3625 = vmatpush1.msra.mxu0 %v3624
    %3626 = vmatprep.subr.mxu0 0.0
    %v3627 = vand.u32 %v1104, 4294901760
    %3628 = vmatpush1.msra.mxu0 %v3627
    %3629 = vmatprep.subr.mxu0 0.0
    %v3630 = vand.u32 %v1103, 4294901760
    %3631 = vmatpush1.msra.mxu0 %v3630
    %3632 = vmatprep.subr.mxu0 0.0
    %v3633 = vand.u32 %v1102, 4294901760
    %3634 = vmatpush1.msra.mxu0 %v3633
    %3635 = vmatprep.subr.mxu0 0.0
    %3636 = vmatpush2.msra.mxu0 0.0
    %3637 = vmatprep.subr.mxu0 0.0
    %3638 = vmatpush2.msra.mxu0 0.0
    %3639 = vmatprep.subr.mxu0 0.0
    %3640 = vmatpush2.msra.mxu0 0.0
    %3641 = vmatprep.subr.mxu0 0.0
    %3642 = vmatpush2.msra.mxu0 0.0
    %3643 = vmatprep.subr.mxu0 0.0
    %3644 = vmatpush2.msra.mxu0 0.0
    %3645 = vmatprep.subr.mxu0 0.0
    %3646 = vmatpush2.msra.mxu0 0.0
    %3647 = vmatprep.subr.mxu0 0.0
    %3648 = vmatpush2.msra.mxu0 0.0
    %3649 = vmatprep.subr.mxu0 0.0
    %3650 = vmatpush2.msra.mxu0 0.0
    %3651 = vmatprep.subr.mxu0 0.0
    %3652 = vmatpush2.msra.mxu0 0.0
    %3653 = vmatprep.subr.mxu0 0.0
    %3654 = vmatpush2.msra.mxu0 0.0
    %3655 = vmatprep.subr.mxu0 0.0
    %3656 = vmatpush2.msra.mxu0 0.0
    %3657 = vmatprep.subr.mxu0 0.0
    %3658 = vmatpush2.msra.mxu0 0.0
    %3659 = vmatprep.subr.mxu0 0.0
    %3660 = vmatpush2.msra.mxu0 0.0
    %3661 = vmatprep.subr.mxu0 0.0
    %3662 = vmatpush2.msra.mxu0 0.0
    %3663 = vmatprep.subr.mxu0 0.0
    %3664 = vmatpush2.msra.mxu0 0.0
    %3665 = vmatprep.subr.mxu0 0.0
    %3666 = vmatpush2.msra.mxu0 0.0
    %3667 = vmatprep.mubr.f32.mxu0 0.0
    %v3668 = vand.u32 %v2994, 4294901760
    %3669 = vmatmul.mubr.f32.gmra.mxu0 %v3668
    %v3670 = vpop.f32.mrf.mxu0
    %v3671 = vadd.f32 %v3578, %v3670
    %v3672 = vpop.f32.mrf.mxu0
    %3673 = vmatprep.mubr.f32.mxu0 0.0
    %v3674 = vand.u32 %v2995, 4294901760
    %3675 = vmatmul.mubr.f32.gmra.mxu0 %v3674
    %v3676 = vpop.f32.mrf.mxu0
    %v3677 = vadd.f32 %v3584, %v3676
    %v3678 = vpop.f32.mrf.mxu0
    %3679 = vdwg.mxu0
    %3682 = vrot.lane.b32.xlu0 %v3671, 72
    %v3683 = vpop.permute.xlu0 %3682
    %3684 = vrot.lane.b32.xlu0 %v3677, 72
    %v3685 = vpop.permute.xlu0 %3684
    %vm3688 = vcmask 851520
    %3689 = vst.msk [vmem:[#allocation3] sm:$0xff] %vm3688, %v3683
    %3690 = vst.msk [vmem:[#allocation3 + $0x8] sm:$0xff] %vm3688, %v3685
    %v3691 = vld [vmem:[#allocation3] sm:$0xff]
    %v3692 = vld [vmem:[#allocation3 + $0x8] sm:$0xff]
    %v3693 = vmul.f32 %v2331, %v3691
    %v3694 = vmul.f32 %v2336, %v3692
    %v3695 = vadd.f32 %v3693, 0.0
    %v3696 = vadd.f32 %v3694, 0.0
    %v3697 = vmul.f32 %v2344, %v3691
    %v3698 = vmul.f32 %v2348, %v3692
    %3701 = vrot.lane.b32.xlu0 %v3697, 127
    %v3702 = vpop.permute.xlu0 %3701
    %3703 = vrot.lane.b32.xlu0 %v3698, 127
    %v3704 = vpop.permute.xlu0 %3703
    %v3707 = vadd.f32 %v3695, %v3702
    %v3708 = vadd.f32 %v3696, %v3704
    %v3709 = vmul.f32 %v2364, %v3691
    %v3710 = vmul.f32 %v2368, %v3692
    %3713 = vrot.lane.b32.xlu0 %v3709, 126
    %v3714 = vpop.permute.xlu0 %3713
    %3715 = vrot.lane.b32.xlu0 %v3710, 126
    %v3716 = vpop.permute.xlu0 %3715
    %v3719 = vadd.f32 %v3707, %v3714
    %v3720 = vadd.f32 %v3708, %v3716
    %v3721 = vmul.f32 %v2384, %v3691
    %v3722 = vmul.f32 %v2388, %v3692
    %3725 = vrot.lane.b32.xlu0 %v3721, 125
    %v3726 = vpop.permute.xlu0 %3725
    %3727 = vrot.lane.b32.xlu0 %v3722, 125
    %v3728 = vpop.permute.xlu0 %3727
    %v3731 = vadd.f32 %v3719, %v3726
    %v3732 = vadd.f32 %v3720, %v3728
    %v3733 = vmul.f32 %v2404, %v3691
    %v3734 = vmul.f32 %v2408, %v3692
    %3737 = vrot.lane.b32.xlu0 %v3733, 124
    %v3738 = vpop.permute.xlu0 %3737
    %3739 = vrot.lane.b32.xlu0 %v3734, 124
    %v3740 = vpop.permute.xlu0 %3739
    %v3743 = vadd.f32 %v3731, %v3738
    %v3744 = vadd.f32 %v3732, %v3740
    %v3745 = vmul.f32 %v2424, %v3691
    %v3746 = vmul.f32 %v2428, %v3692
    %3749 = vrot.lane.b32.xlu0 %v3745, 123
    %v3750 = vpop.permute.xlu0 %3749
    %3751 = vrot.lane.b32.xlu0 %v3746, 123
    %v3752 = vpop.permute.xlu0 %3751
    %v3755 = vadd.f32 %v3743, %v3750
    %v3756 = vadd.f32 %v3744, %v3752
    %v3757 = vmul.f32 %v2444, %v3691
    %v3758 = vmul.f32 %v2448, %v3692
    %3761 = vrot.lane.b32.xlu0 %v3757, 122
    %v3762 = vpop.permute.xlu0 %3761
    %3763 = vrot.lane.b32.xlu0 %v3758, 122
    %v3764 = vpop.permute.xlu0 %3763
    %v3767 = vadd.f32 %v3755, %v3762
    %v3768 = vadd.f32 %v3756, %v3764
    %v3769 = vmul.f32 %v2464, %v3691
    %v3770 = vmul.f32 %v2468, %v3692
    %3773 = vrot.lane.b32.xlu0 %v3769, 121
    %v3774 = vpop.permute.xlu0 %3773
    %3775 = vrot.lane.b32.xlu0 %v3770, 121
    %v3776 = vpop.permute.xlu0 %3775
    %v3779 = vadd.f32 %v3767, %v3774
    %v3780 = vadd.f32 %v3768, %v3776
    %v3781 = vmul.f32 %v2484, %v3691
    %v3782 = vmul.f32 %v2488, %v3692
    %3785 = vrot.lane.b32.xlu0 %v3781, 120
    %v3786 = vpop.permute.xlu0 %3785
    %3787 = vrot.lane.b32.xlu0 %v3782, 120
    %v3788 = vpop.permute.xlu0 %3787
    %v3791 = vadd.f32 %v3779, %v3786
    %v3792 = vadd.f32 %v3780, %v3788
    %v3793 = vmul.f32 %v2504, %v3691
    %v3794 = vmul.f32 %v2508, %v3692
    %3797 = vrot.lane.b32.xlu0 %v3793, 119
    %v3798 = vpop.permute.xlu0 %3797
    %3799 = vrot.lane.b32.xlu0 %v3794, 119
    %v3800 = vpop.permute.xlu0 %3799
    %v3803 = vadd.f32 %v3791, %v3798
    %v3804 = vadd.f32 %v3792, %v3800
    %v3805 = vmul.f32 %v2524, %v3691
    %v3806 = vmul.f32 %v2528, %v3692
    %3809 = vrot.lane.b32.xlu0 %v3805, 118
    %v3810 = vpop.permute.xlu0 %3809
    %3811 = vrot.lane.b32.xlu0 %v3806, 118
    %v3812 = vpop.permute.xlu0 %3811
    %v3815 = vadd.f32 %v3803, %v3810
    %v3816 = vadd.f32 %v3804, %v3812
    %v3817 = vmul.f32 %v2544, %v3691
    %v3818 = vmul.f32 %v2548, %v3692
    %3821 = vrot.lane.b32.xlu0 %v3817, 117
    %v3822 = vpop.permute.xlu0 %3821
    %3823 = vrot.lane.b32.xlu0 %v3818, 117
    %v3824 = vpop.permute.xlu0 %3823
    %v3827 = vadd.f32 %v3815, %v3822
    %v3828 = vadd.f32 %v3816, %v3824
    %v3829 = vmul.f32 %v2564, %v3691
    %v3830 = vmul.f32 %v2568, %v3692
    %3833 = vrot.lane.b32.xlu0 %v3829, 116
    %v3834 = vpop.permute.xlu0 %3833
    %3835 = vrot.lane.b32.xlu0 %v3830, 116
    %v3836 = vpop.permute.xlu0 %3835
    %v3839 = vadd.f32 %v3827, %v3834
    %v3840 = vadd.f32 %v3828, %v3836
    %v3841 = vmul.f32 %v2584, %v3691
    %v3842 = vmul.f32 %v2588, %v3692
    %3845 = vrot.lane.b32.xlu0 %v3841, 115
    %v3846 = vpop.permute.xlu0 %3845
    %3847 = vrot.lane.b32.xlu0 %v3842, 115
    %v3848 = vpop.permute.xlu0 %3847
    %v3851 = vadd.f32 %v3839, %v3846
    %v3852 = vadd.f32 %v3840, %v3848
    %v3853 = vmul.f32 %v2604, %v3691
    %v3854 = vmul.f32 %v2608, %v3692
    %3857 = vrot.lane.b32.xlu0 %v3853, 114
    %v3858 = vpop.permute.xlu0 %3857
    %3859 = vrot.lane.b32.xlu0 %v3854, 114
    %v3860 = vpop.permute.xlu0 %3859
    %v3863 = vadd.f32 %v3851, %v3858
    %v3864 = vadd.f32 %v3852, %v3860
    %v3865 = vmul.f32 %v2624, %v3691
    %v3866 = vmul.f32 %v2628, %v3692
    %3869 = vrot.lane.b32.xlu0 %v3865, 113
    %v3870 = vpop.permute.xlu0 %3869
    %3871 = vrot.lane.b32.xlu0 %v3866, 113
    %v3872 = vpop.permute.xlu0 %3871
    %v3875 = vadd.f32 %v3863, %v3870
    %v3876 = vadd.f32 %v3864, %v3872
    %3879 = vrot.lane.b32.xlu0 %v3875, 96
    %v3880 = vpop.permute.xlu0 %3879
    %3881 = vrot.lane.b32.xlu0 %v3876, 96
    %v3882 = vpop.permute.xlu0 %3881
    %vm3885 = vcmask 261120
    %v3886 = vsel %vm3885, %v2640, %v3880
    %v3887 = vsel %vm3885, %v2641, %v3882
    %v3888 = vld [vmem:[#allocation7 + $0x40] sm:$0xff]
    %v3889 = vld [vmem:[#allocation7 + $0x48] sm:$0xff]
    %v3890 = vld [vmem:[#allocation7 + $0x50] sm:$0xff]
    %v3891 = vld [vmem:[#allocation7 + $0x58] sm:$0xff]
    %3893 = vset.pattern.permute.xlu0 0
    %3894 = vperm.xlu0 %3893, %v3890
    %v3895 = vpop.permute.xlu0 %3894
    %3898 = vset.pattern.permute.xlu0 0
    %3899 = vperm.xlu0 %3898, %v3891
    %v3900 = vpop.permute.xlu0 %3899
    %vm3902 = vcmask 130048
    %v3904 = vsel %vm3902, %v3888, 0
    %v3907 = vsel %vm3902, %v3889, 0
    %3909 = vmatprep.subr.mxu0 0.0
    %3910 = vmatpush1.msra.mxu0 0.0
    %3911 = vmatprep.subr.mxu0 0.0
    %3912 = vmatpush1.msra.mxu0 0.0
    %3913 = vmatprep.subr.mxu0 0.0
    %3914 = vmatpush1.msra.mxu0 0.0
    %3915 = vmatprep.subr.mxu0 0.0
    %3916 = vmatpush1.msra.mxu0 0.0
    %3917 = vmatprep.subr.mxu0 0.0
    %3918 = vmatpush1.msra.mxu0 0.0
    %3919 = vmatprep.subr.mxu0 0.0
    %3920 = vmatpush1.msra.mxu0 0.0
    %3921 = vmatprep.subr.mxu0 0.0
    %3922 = vmatpush1.msra.mxu0 0.0
    %3923 = vmatprep.subr.mxu0 0.0
    %3924 = vmatpush1.msra.mxu0 0.0
    %3925 = vmatprep.subr.mxu0 0.0
    %3926 = vmatpush1.msra.mxu0 0.0
    %3927 = vmatprep.subr.mxu0 0.0
    %3928 = vmatpush1.msra.mxu0 0.0
    %3929 = vmatprep.subr.mxu0 0.0
    %3930 = vmatpush1.msra.mxu0 0.0
    %3931 = vmatprep.subr.mxu0 0.0
    %3932 = vmatpush1.msra.mxu0 0.0
    %3933 = vmatprep.subr.mxu0 0.0
    %3934 = vmatpush1.msra.mxu0 0.0
    %3935 = vmatprep.subr.mxu0 0.0
    %3936 = vmatpush1.msra.mxu0 0.0
    %3937 = vmatprep.subr.mxu0 0.0
    %v3938 = vand.u32 %v3887, 4294901760
    %3939 = vmatpush1.msra.mxu0 %v3938
    %3940 = vmatprep.subr.mxu0 0.0
    %v3941 = vand.u32 %v3886, 4294901760
    %3942 = vmatpush1.msra.mxu0 %v3941
    %3943 = vmatprep.subr.mxu0 0.0
    %3944 = vmatpush2.msra.mxu0 0.0
    %3945 = vmatprep.subr.mxu0 0.0
    %3946 = vmatpush2.msra.mxu0 0.0
    %3947 = vmatprep.subr.mxu0 0.0
    %3948 = vmatpush2.msra.mxu0 0.0
    %3949 = vmatprep.subr.mxu0 0.0
    %3950 = vmatpush2.msra.mxu0 0.0
    %3951 = vmatprep.subr.mxu0 0.0
    %3952 = vmatpush2.msra.mxu0 0.0
    %3953 = vmatprep.subr.mxu0 0.0
    %3954 = vmatpush2.msra.mxu0 0.0
    %3955 = vmatprep.subr.mxu0 0.0
    %3956 = vmatpush2.msra.mxu0 0.0
    %3957 = vmatprep.subr.mxu0 0.0
    %3958 = vmatpush2.msra.mxu0 0.0
    %3959 = vmatprep.subr.mxu0 0.0
    %3960 = vmatpush2.msra.mxu0 0.0
    %3961 = vmatprep.subr.mxu0 0.0
    %3962 = vmatpush2.msra.mxu0 0.0
    %3963 = vmatprep.subr.mxu0 0.0
    %3964 = vmatpush2.msra.mxu0 0.0
    %3965 = vmatprep.subr.mxu0 0.0
    %3966 = vmatpush2.msra.mxu0 0.0
    %3967 = vmatprep.subr.mxu0 0.0
    %3968 = vmatpush2.msra.mxu0 0.0
    %3969 = vmatprep.subr.mxu0 0.0
    %3970 = vmatpush2.msra.mxu0 0.0
    %3971 = vmatprep.subr.mxu0 0.0
    %3972 = vmatpush2.msra.mxu0 0.0
    %3973 = vmatprep.subr.mxu0 0.0
    %3974 = vmatpush2.msra.mxu0 0.0
    %3975 = vmatprep.mubr.f32.mxu0 0.0
    %v3976 = vand.u32 %v3904, 4294901760
    %v3977 = vsub.f32 %v3904, %v3976
    %v3978 = vand.u32 %v3977, 4294901760
    %v3979 = vsub.f32 %v3977, %v3978
    %v3980 = vand.u32 %v3979, 4294901760
    %3981 = vmatmul.mubr.f32.gmra.mxu0 %v3980
    %v3982 = vpop.f32.mrf.mxu0
    %v3983 = vadd.f32 %v3895, %v3982
    %v3984 = vpop.f32.mrf.mxu0
    %3985 = vmatprep.mubr.f32.mxu0 0.0
    %v3986 = vand.u32 %v3907, 4294901760
    %v3987 = vsub.f32 %v3907, %v3986
    %v3988 = vand.u32 %v3987, 4294901760
    %v3989 = vsub.f32 %v3987, %v3988
    %v3990 = vand.u32 %v3989, 4294901760
    %3991 = vmatmul.mubr.f32.gmra.mxu0 %v3990
    %v3992 = vpop.f32.mrf.mxu0
    %v3993 = vadd.f32 %v3900, %v3992
    %v3994 = vpop.f32.mrf.mxu0
    %3995 = vdwg.mxu0
    %3996 = vmatprep.subr.mxu0 0.0
    %3997 = vmatpush1.msra.mxu0 0.0
    %3998 = vmatprep.subr.mxu0 0.0
    %3999 = vmatpush1.msra.mxu0 0.0
    %4000 = vmatprep.subr.mxu0 0.0
    %4001 = vmatpush1.msra.mxu0 0.0
    %4002 = vmatprep.subr.mxu0 0.0
    %4003 = vmatpush1.msra.mxu0 0.0
    %4004 = vmatprep.subr.mxu0 0.0
    %4005 = vmatpush1.msra.mxu0 0.0
    %4006 = vmatprep.subr.mxu0 0.0
    %4007 = vmatpush1.msra.mxu0 0.0
    %4008 = vmatprep.subr.mxu0 0.0
    %4009 = vmatpush1.msra.mxu0 0.0
    %4010 = vmatprep.subr.mxu0 0.0
    %4011 = vmatpush1.msra.mxu0 0.0
    %4012 = vmatprep.subr.mxu0 0.0
    %4013 = vmatpush1.msra.mxu0 0.0
    %4014 = vmatprep.subr.mxu0 0.0
    %4015 = vmatpush1.msra.mxu0 0.0
    %4016 = vmatprep.subr.mxu0 0.0
    %4017 = vmatpush1.msra.mxu0 0.0
    %4018 = vmatprep.subr.mxu0 0.0
    %4019 = vmatpush1.msra.mxu0 0.0
    %4020 = vmatprep.subr.mxu0 0.0
    %4021 = vmatpush1.msra.mxu0 0.0
    %4022 = vmatprep.subr.mxu0 0.0
    %4023 = vmatpush1.msra.mxu0 0.0
    %4024 = vmatprep.subr.mxu0 0.0
    %v4025 = vand.u32 %v3887, 4294901760
    %v4026 = vsub.f32 %v3887, %v4025
    %v4027 = vand.u32 %v4026, 4294901760
    %v4028 = vsub.f32 %v4026, %v4027
    %v4029 = vand.u32 %v4028, 4294901760
    %4030 = vmatpush1.msra.mxu0 %v4029
    %4031 = vmatprep.subr.mxu0 0.0
    %v4032 = vand.u32 %v3886, 4294901760
    %v4033 = vsub.f32 %v3886, %v4032
    %v4034 = vand.u32 %v4033, 4294901760
    %v4035 = vsub.f32 %v4033, %v4034
    %v4036 = vand.u32 %v4035, 4294901760
    %4037 = vmatpush1.msra.mxu0 %v4036
    %4038 = vmatprep.subr.mxu0 0.0
    %4039 = vmatpush2.msra.mxu0 0.0
    %4040 = vmatprep.subr.mxu0 0.0
    %4041 = vmatpush2.msra.mxu0 0.0
    %4042 = vmatprep.subr.mxu0 0.0
    %4043 = vmatpush2.msra.mxu0 0.0
    %4044 = vmatprep.subr.mxu0 0.0
    %4045 = vmatpush2.msra.mxu0 0.0
    %4046 = vmatprep.subr.mxu0 0.0
    %4047 = vmatpush2.msra.mxu0 0.0
    %4048 = vmatprep.subr.mxu0 0.0
    %4049 = vmatpush2.msra.mxu0 0.0
    %4050 = vmatprep.subr.mxu0 0.0
    %4051 = vmatpush2.msra.mxu0 0.0
    %4052 = vmatprep.subr.mxu0 0.0
    %4053 = vmatpush2.msra.mxu0 0.0
    %4054 = vmatprep.subr.mxu0 0.0
    %4055 = vmatpush2.msra.mxu0 0.0
    %4056 = vmatprep.subr.mxu0 0.0
    %4057 = vmatpush2.msra.mxu0 0.0
    %4058 = vmatprep.subr.mxu0 0.0
    %4059 = vmatpush2.msra.mxu0 0.0
    %4060 = vmatprep.subr.mxu0 0.0
    %4061 = vmatpush2.msra.mxu0 0.0
    %4062 = vmatprep.subr.mxu0 0.0
    %4063 = vmatpush2.msra.mxu0 0.0
    %4064 = vmatprep.subr.mxu0 0.0
    %4065 = vmatpush2.msra.mxu0 0.0
    %4066 = vmatprep.subr.mxu0 0.0
    %4067 = vmatpush2.msra.mxu0 0.0
    %4068 = vmatprep.subr.mxu0 0.0
    %4069 = vmatpush2.msra.mxu0 0.0
    %4070 = vmatprep.mubr.f32.mxu0 0.0
    %v4071 = vand.u32 %v3904, 4294901760
    %4072 = vmatmul.mubr.f32.gmra.mxu0 %v4071
    %v4073 = vpop.f32.mrf.mxu0
    %v4074 = vadd.f32 %v3983, %v4073
    %v4075 = vpop.f32.mrf.mxu0
    %4076 = vmatprep.mubr.f32.mxu0 0.0
    %v4077 = vand.u32 %v3907, 4294901760
    %4078 = vmatmul.mubr.f32.gmra.mxu0 %v4077
    %v4079 = vpop.f32.mrf.mxu0
    %v4080 = vadd.f32 %v3993, %v4079
    %v4081 = vpop.f32.mrf.mxu0
    %4082 = vdwg.mxu0
    %4083 = vmatprep.subr.mxu0 0.0
    %4084 = vmatpush1.msra.mxu0 0.0
    %4085 = vmatprep.subr.mxu0 0.0
    %4086 = vmatpush1.msra.mxu0 0.0
    %4087 = vmatprep.subr.mxu0 0.0
    %4088 = vmatpush1.msra.mxu0 0.0
    %4089 = vmatprep.subr.mxu0 0.0
    %4090 = vmatpush1.msra.mxu0 0.0
    %4091 = vmatprep.subr.mxu0 0.0
    %4092 = vmatpush1.msra.mxu0 0.0
    %4093 = vmatprep.subr.mxu0 0.0
    %4094 = vmatpush1.msra.mxu0 0.0
    %4095 = vmatprep.subr.mxu0 0.0
    %4096 = vmatpush1.msra.mxu0 0.0
    %4097 = vmatprep.subr.mxu0 0.0
    %4098 = vmatpush1.msra.mxu0 0.0
    %4099 = vmatprep.subr.mxu0 0.0
    %4100 = vmatpush1.msra.mxu0 0.0
    %4101 = vmatprep.subr.mxu0 0.0
    %4102 = vmatpush1.msra.mxu0 0.0
    %4103 = vmatprep.subr.mxu0 0.0
    %4104 = vmatpush1.msra.mxu0 0.0
    %4105 = vmatprep.subr.mxu0 0.0
    %4106 = vmatpush1.msra.mxu0 0.0
    %4107 = vmatprep.subr.mxu0 0.0
    %4108 = vmatpush1.msra.mxu0 0.0
    %4109 = vmatprep.subr.mxu0 0.0
    %4110 = vmatpush1.msra.mxu0 0.0
    %4111 = vmatprep.subr.mxu0 0.0
    %v4112 = vand.u32 %v3887, 4294901760
    %v4113 = vsub.f32 %v3887, %v4112
    %4114 = vmatpush1.msra.mxu0 %v4113
    %4115 = vmatprep.subr.mxu0 0.0
    %v4116 = vand.u32 %v3886, 4294901760
    %v4117 = vsub.f32 %v3886, %v4116
    %4118 = vmatpush1.msra.mxu0 %v4117
    %4119 = vmatprep.subr.mxu0 0.0
    %4120 = vmatpush2.msra.mxu0 0.0
    %4121 = vmatprep.subr.mxu0 0.0
    %4122 = vmatpush2.msra.mxu0 0.0
    %4123 = vmatprep.subr.mxu0 0.0
    %4124 = vmatpush2.msra.mxu0 0.0
    %4125 = vmatprep.subr.mxu0 0.0
    %4126 = vmatpush2.msra.mxu0 0.0
    %4127 = vmatprep.subr.mxu0 0.0
    %4128 = vmatpush2.msra.mxu0 0.0
    %4129 = vmatprep.subr.mxu0 0.0
    %4130 = vmatpush2.msra.mxu0 0.0
    %4131 = vmatprep.subr.mxu0 0.0
    %4132 = vmatpush2.msra.mxu0 0.0
    %4133 = vmatprep.subr.mxu0 0.0
    %4134 = vmatpush2.msra.mxu0 0.0
    %4135 = vmatprep.subr.mxu0 0.0
    %4136 = vmatpush2.msra.mxu0 0.0
    %4137 = vmatprep.subr.mxu0 0.0
    %4138 = vmatpush2.msra.mxu0 0.0
    %4139 = vmatprep.subr.mxu0 0.0
    %4140 = vmatpush2.msra.mxu0 0.0
    %4141 = vmatprep.subr.mxu0 0.0
    %4142 = vmatpush2.msra.mxu0 0.0
    %4143 = vmatprep.subr.mxu0 0.0
    %4144 = vmatpush2.msra.mxu0 0.0
    %4145 = vmatprep.subr.mxu0 0.0
    %4146 = vmatpush2.msra.mxu0 0.0
    %4147 = vmatprep.subr.mxu0 0.0
    %4148 = vmatpush2.msra.mxu0 0.0
    %4149 = vmatprep.subr.mxu0 0.0
    %4150 = vmatpush2.msra.mxu0 0.0
    %4151 = vmatprep.mubr.f32.mxu0 0.0
    %v4152 = vand.u32 %v3904, 4294901760
    %v4153 = vsub.f32 %v3904, %v4152
    %4154 = vmatmul.mubr.f32.gmra.mxu0 %v4153
    %v4155 = vpop.f32.mrf.mxu0
    %v4156 = vadd.f32 %v4074, %v4155
    %v4157 = vpop.f32.mrf.mxu0
    %4158 = vmatprep.mubr.f32.mxu0 0.0
    %v4159 = vand.u32 %v3907, 4294901760
    %v4160 = vsub.f32 %v3907, %v4159
    %4161 = vmatmul.mubr.f32.gmra.mxu0 %v4160
    %v4162 = vpop.f32.mrf.mxu0
    %v4163 = vadd.f32 %v4080, %v4162
    %v4164 = vpop.f32.mrf.mxu0
    %4165 = vdwg.mxu0
    %4166 = vmatprep.subr.mxu0 0.0
    %4167 = vmatpush1.msra.mxu0 0.0
    %4168 = vmatprep.subr.mxu0 0.0
    %4169 = vmatpush1.msra.mxu0 0.0
    %4170 = vmatprep.subr.mxu0 0.0
    %4171 = vmatpush1.msra.mxu0 0.0
    %4172 = vmatprep.subr.mxu0 0.0
    %4173 = vmatpush1.msra.mxu0 0.0
    %4174 = vmatprep.subr.mxu0 0.0
    %4175 = vmatpush1.msra.mxu0 0.0
    %4176 = vmatprep.subr.mxu0 0.0
    %4177 = vmatpush1.msra.mxu0 0.0
    %4178 = vmatprep.subr.mxu0 0.0
    %4179 = vmatpush1.msra.mxu0 0.0
    %4180 = vmatprep.subr.mxu0 0.0
    %4181 = vmatpush1.msra.mxu0 0.0
    %4182 = vmatprep.subr.mxu0 0.0
    %4183 = vmatpush1.msra.mxu0 0.0
    %4184 = vmatprep.subr.mxu0 0.0
    %4185 = vmatpush1.msra.mxu0 0.0
    %4186 = vmatprep.subr.mxu0 0.0
    %4187 = vmatpush1.msra.mxu0 0.0
    %4188 = vmatprep.subr.mxu0 0.0
    %4189 = vmatpush1.msra.mxu0 0.0
    %4190 = vmatprep.subr.mxu0 0.0
    %4191 = vmatpush1.msra.mxu0 0.0
    %4192 = vmatprep.subr.mxu0 0.0
    %4193 = vmatpush1.msra.mxu0 0.0
    %4194 = vmatprep.subr.mxu0 0.0
    %v4195 = vand.u32 %v3887, 4294901760
    %4196 = vmatpush1.msra.mxu0 %v4195
    %4197 = vmatprep.subr.mxu0 0.0
    %v4198 = vand.u32 %v3886, 4294901760
    %4199 = vmatpush1.msra.mxu0 %v4198
    %4200 = vmatprep.subr.mxu0 0.0
    %4201 = vmatpush2.msra.mxu0 0.0
    %4202 = vmatprep.subr.mxu0 0.0
    %4203 = vmatpush2.msra.mxu0 0.0
    %4204 = vmatprep.subr.mxu0 0.0
    %4205 = vmatpush2.msra.mxu0 0.0
    %4206 = vmatprep.subr.mxu0 0.0
    %4207 = vmatpush2.msra.mxu0 0.0
    %4208 = vmatprep.subr.mxu0 0.0
    %4209 = vmatpush2.msra.mxu0 0.0
    %4210 = vmatprep.subr.mxu0 0.0
    %4211 = vmatpush2.msra.mxu0 0.0
    %4212 = vmatprep.subr.mxu0 0.0
    %4213 = vmatpush2.msra.mxu0 0.0
    %4214 = vmatprep.subr.mxu0 0.0
    %4215 = vmatpush2.msra.mxu0 0.0
    %4216 = vmatprep.subr.mxu0 0.0
    %4217 = vmatpush2.msra.mxu0 0.0
    %4218 = vmatprep.subr.mxu0 0.0
    %4219 = vmatpush2.msra.mxu0 0.0
    %4220 = vmatprep.subr.mxu0 0.0
    %4221 = vmatpush2.msra.mxu0 0.0
    %4222 = vmatprep.subr.mxu0 0.0
    %4223 = vmatpush2.msra.mxu0 0.0
    %4224 = vmatprep.subr.mxu0 0.0
    %4225 = vmatpush2.msra.mxu0 0.0
    %4226 = vmatprep.subr.mxu0 0.0
    %4227 = vmatpush2.msra.mxu0 0.0
    %4228 = vmatprep.subr.mxu0 0.0
    %4229 = vmatpush2.msra.mxu0 0.0
    %4230 = vmatprep.subr.mxu0 0.0
    %4231 = vmatpush2.msra.mxu0 0.0
    %4232 = vmatprep.mubr.f32.mxu0 0.0
    %v4233 = vand.u32 %v3904, 4294901760
    %v4234 = vsub.f32 %v3904, %v4233
    %v4235 = vand.u32 %v4234, 4294901760
    %4236 = vmatmul.mubr.f32.gmra.mxu0 %v4235
    %v4237 = vpop.f32.mrf.mxu0
    %v4238 = vadd.f32 %v4156, %v4237
    %v4239 = vpop.f32.mrf.mxu0
    %4240 = vmatprep.mubr.f32.mxu0 0.0
    %v4241 = vand.u32 %v3907, 4294901760
    %v4242 = vsub.f32 %v3907, %v4241
    %v4243 = vand.u32 %v4242, 4294901760
    %4244 = vmatmul.mubr.f32.gmra.mxu0 %v4243
    %v4245 = vpop.f32.mrf.mxu0
    %v4246 = vadd.f32 %v4163, %v4245
    %v4247 = vpop.f32.mrf.mxu0
    %4248 = vdwg.mxu0
    %4249 = vmatprep.subr.mxu0 0.0
    %4250 = vmatpush1.msra.mxu0 0.0
    %4251 = vmatprep.subr.mxu0 0.0
    %4252 = vmatpush1.msra.mxu0 0.0
    %4253 = vmatprep.subr.mxu0 0.0
    %4254 = vmatpush1.msra.mxu0 0.0
    %4255 = vmatprep.subr.mxu0 0.0
    %4256 = vmatpush1.msra.mxu0 0.0
    %4257 = vmatprep.subr.mxu0 0.0
    %4258 = vmatpush1.msra.mxu0 0.0
    %4259 = vmatprep.subr.mxu0 0.0
    %4260 = vmatpush1.msra.mxu0 0.0
    %4261 = vmatprep.subr.mxu0 0.0
    %4262 = vmatpush1.msra.mxu0 0.0
    %4263 = vmatprep.subr.mxu0 0.0
    %4264 = vmatpush1.msra.mxu0 0.0
    %4265 = vmatprep.subr.mxu0 0.0
    %4266 = vmatpush1.msra.mxu0 0.0
    %4267 = vmatprep.subr.mxu0 0.0
    %4268 = vmatpush1.msra.mxu0 0.0
    %4269 = vmatprep.subr.mxu0 0.0
    %4270 = vmatpush1.msra.mxu0 0.0
    %4271 = vmatprep.subr.mxu0 0.0
    %4272 = vmatpush1.msra.mxu0 0.0
    %4273 = vmatprep.subr.mxu0 0.0
    %4274 = vmatpush1.msra.mxu0 0.0
    %4275 = vmatprep.subr.mxu0 0.0
    %4276 = vmatpush1.msra.mxu0 0.0
    %4277 = vmatprep.subr.mxu0 0.0
    %v4278 = vand.u32 %v3887, 4294901760
    %v4279 = vsub.f32 %v3887, %v4278
    %v4280 = vand.u32 %v4279, 4294901760
    %4281 = vmatpush1.msra.mxu0 %v4280
    %4282 = vmatprep.subr.mxu0 0.0
    %v4283 = vand.u32 %v3886, 4294901760
    %v4284 = vsub.f32 %v3886, %v4283
    %v4285 = vand.u32 %v4284, 4294901760
    %4286 = vmatpush1.msra.mxu0 %v4285
    %4287 = vmatprep.subr.mxu0 0.0
    %4288 = vmatpush2.msra.mxu0 0.0
    %4289 = vmatprep.subr.mxu0 0.0
    %4290 = vmatpush2.msra.mxu0 0.0
    %4291 = vmatprep.subr.mxu0 0.0
    %4292 = vmatpush2.msra.mxu0 0.0
    %4293 = vmatprep.subr.mxu0 0.0
    %4294 = vmatpush2.msra.mxu0 0.0
    %4295 = vmatprep.subr.mxu0 0.0
    %4296 = vmatpush2.msra.mxu0 0.0
    %4297 = vmatprep.subr.mxu0 0.0
    %4298 = vmatpush2.msra.mxu0 0.0
    %4299 = vmatprep.subr.mxu0 0.0
    %4300 = vmatpush2.msra.mxu0 0.0
    %4301 = vmatprep.subr.mxu0 0.0
    %4302 = vmatpush2.msra.mxu0 0.0
    %4303 = vmatprep.subr.mxu0 0.0
    %4304 = vmatpush2.msra.mxu0 0.0
    %4305 = vmatprep.subr.mxu0 0.0
    %4306 = vmatpush2.msra.mxu0 0.0
    %4307 = vmatprep.subr.mxu0 0.0
    %4308 = vmatpush2.msra.mxu0 0.0
    %4309 = vmatprep.subr.mxu0 0.0
    %4310 = vmatpush2.msra.mxu0 0.0
    %4311 = vmatprep.subr.mxu0 0.0
    %4312 = vmatpush2.msra.mxu0 0.0
    %4313 = vmatprep.subr.mxu0 0.0
    %4314 = vmatpush2.msra.mxu0 0.0
    %4315 = vmatprep.subr.mxu0 0.0
    %4316 = vmatpush2.msra.mxu0 0.0
    %4317 = vmatprep.subr.mxu0 0.0
    %4318 = vmatpush2.msra.mxu0 0.0
    %4319 = vmatprep.mubr.f32.mxu0 0.0
    %v4320 = vand.u32 %v3904, 4294901760
    %4321 = vmatmul.mubr.f32.gmra.mxu0 %v4320
    %v4322 = vpop.f32.mrf.mxu0
    %v4323 = vadd.f32 %v4238, %v4322
    %v4324 = vpop.f32.mrf.mxu0
    %4325 = vmatprep.mubr.f32.mxu0 0.0
    %v4326 = vand.u32 %v3907, 4294901760
    %4327 = vmatmul.mubr.f32.gmra.mxu0 %v4326
    %v4328 = vpop.f32.mrf.mxu0
    %v4329 = vadd.f32 %v4246, %v4328
    %v4330 = vpop.f32.mrf.mxu0
    %4331 = vdwg.mxu0
    %4332 = vmatprep.subr.mxu0 0.0
    %4333 = vmatpush1.msra.mxu0 0.0
    %4334 = vmatprep.subr.mxu0 0.0
    %4335 = vmatpush1.msra.mxu0 0.0
    %4336 = vmatprep.subr.mxu0 0.0
    %4337 = vmatpush1.msra.mxu0 0.0
    %4338 = vmatprep.subr.mxu0 0.0
    %4339 = vmatpush1.msra.mxu0 0.0
    %4340 = vmatprep.subr.mxu0 0.0
    %4341 = vmatpush1.msra.mxu0 0.0
    %4342 = vmatprep.subr.mxu0 0.0
    %4343 = vmatpush1.msra.mxu0 0.0
    %4344 = vmatprep.subr.mxu0 0.0
    %4345 = vmatpush1.msra.mxu0 0.0
    %4346 = vmatprep.subr.mxu0 0.0
    %4347 = vmatpush1.msra.mxu0 0.0
    %4348 = vmatprep.subr.mxu0 0.0
    %4349 = vmatpush1.msra.mxu0 0.0
    %4350 = vmatprep.subr.mxu0 0.0
    %4351 = vmatpush1.msra.mxu0 0.0
    %4352 = vmatprep.subr.mxu0 0.0
    %4353 = vmatpush1.msra.mxu0 0.0
    %4354 = vmatprep.subr.mxu0 0.0
    %4355 = vmatpush1.msra.mxu0 0.0
    %4356 = vmatprep.subr.mxu0 0.0
    %4357 = vmatpush1.msra.mxu0 0.0
    %4358 = vmatprep.subr.mxu0 0.0
    %4359 = vmatpush1.msra.mxu0 0.0
    %4360 = vmatprep.subr.mxu0 0.0
    %v4361 = vand.u32 %v3887, 4294901760
    %4362 = vmatpush1.msra.mxu0 %v4361
    %4363 = vmatprep.subr.mxu0 0.0
    %v4364 = vand.u32 %v3886, 4294901760
    %4365 = vmatpush1.msra.mxu0 %v4364
    %4366 = vmatprep.subr.mxu0 0.0
    %4367 = vmatpush2.msra.mxu0 0.0
    %4368 = vmatprep.subr.mxu0 0.0
    %4369 = vmatpush2.msra.mxu0 0.0
    %4370 = vmatprep.subr.mxu0 0.0
    %4371 = vmatpush2.msra.mxu0 0.0
    %4372 = vmatprep.subr.mxu0 0.0
    %4373 = vmatpush2.msra.mxu0 0.0
    %4374 = vmatprep.subr.mxu0 0.0
    %4375 = vmatpush2.msra.mxu0 0.0
    %4376 = vmatprep.subr.mxu0 0.0
    %4377 = vmatpush2.msra.mxu0 0.0
    %4378 = vmatprep.subr.mxu0 0.0
    %4379 = vmatpush2.msra.mxu0 0.0
    %4380 = vmatprep.subr.mxu0 0.0
    %4381 = vmatpush2.msra.mxu0 0.0
    %4382 = vmatprep.subr.mxu0 0.0
    %4383 = vmatpush2.msra.mxu0 0.0
    %4384 = vmatprep.subr.mxu0 0.0
    %4385 = vmatpush2.msra.mxu0 0.0
    %4386 = vmatprep.subr.mxu0 0.0
    %4387 = vmatpush2.msra.mxu0 0.0
    %4388 = vmatprep.subr.mxu0 0.0
    %4389 = vmatpush2.msra.mxu0 0.0
    %4390 = vmatprep.subr.mxu0 0.0
    %4391 = vmatpush2.msra.mxu0 0.0
    %4392 = vmatprep.subr.mxu0 0.0
    %4393 = vmatpush2.msra.mxu0 0.0
    %4394 = vmatprep.subr.mxu0 0.0
    %4395 = vmatpush2.msra.mxu0 0.0
    %4396 = vmatprep.subr.mxu0 0.0
    %4397 = vmatpush2.msra.mxu0 0.0
    %4398 = vmatprep.mubr.f32.mxu0 0.0
    %v4399 = vand.u32 %v3904, 4294901760
    %4400 = vmatmul.mubr.f32.gmra.mxu0 %v4399
    %v4401 = vpop.f32.mrf.mxu0
    %v4402 = vadd.f32 %v4323, %v4401
    %v4403 = vpop.f32.mrf.mxu0
    %4404 = vmatprep.mubr.f32.mxu0 0.0
    %v4405 = vand.u32 %v3907, 4294901760
    %4406 = vmatmul.mubr.f32.gmra.mxu0 %v4405
    %v4407 = vpop.f32.mrf.mxu0
    %v4408 = vadd.f32 %v4329, %v4407
    %v4409 = vpop.f32.mrf.mxu0
    %4410 = vdwg.mxu0
    %vm4411 = vcmp.gt.f32.partialorder %v4402, 0.0
    %vm4412 = vcmp.gt.f32.partialorder %v4408, 0.0
    %v4413 = vmin.f32 %v4402, 0.0
    %v4414 = vmin.f32 %v4408, 0.0
    %v4415 = vmul.f32 %v4413, 1.442695
    %v4416 = vpow.pop %v4415
    %v4417 = vmul.f32 %v4414, 1.442695
    %v4418 = vpow.pop %v4417
    %v4419 = vsub.f32 %v4416, 1.0
    %v4420 = vsub.f32 %v4418, 1.0
    %v4421 = vsel %vm4411, %v4402, %v4419
    %v4422 = vsel %vm4412, %v4408, %v4420
    %v4423 = vld [vmem:[#allocation7 + $0xe0] sm:$0xff]
    %v4424 = vld [vmem:[#allocation7 + $0xe8] sm:$0xff]
    %v4425 = vld [vmem:[#allocation7 + $0xf0] sm:$0xff]
    %v4426 = vld [vmem:[#allocation7 + $0xf8] sm:$0xff]
    %v4427 = vld [vmem:[#allocation7 + $0x100] sm:$0xff]
    %v4428 = vld [vmem:[#allocation7 + $0x108] sm:$0xff]
    %v4429 = vld [vmem:[#allocation7 + $0x110] sm:$0xff]
    %v4430 = vld [vmem:[#allocation7 + $0x118] sm:$0xff]
    %v4431 = vld [vmem:[#allocation7 + $0x120] sm:$0xff]
    %v4432 = vld [vmem:[#allocation7 + $0x128] sm:$0xff]
    %v4433 = vld [vmem:[#allocation7 + $0x130] sm:$0xff]
    %v4434 = vld [vmem:[#allocation7 + $0x138] sm:$0xff]
    %v4435 = vld [vmem:[#allocation7 + $0x140] sm:$0xff]
    %v4436 = vld [vmem:[#allocation7 + $0x148] sm:$0xff]
    %v4437 = vld [vmem:[#allocation7 + $0x150] sm:$0x1]
    %v4438 = vld [vmem:[#allocation7 + $0x151] sm:$0xff]
    %v4439 = vld [vmem:[#allocation7 + $0x159] sm:$0xff]
    %v4440 = vld [vmem:[#allocation7 + $0x161] sm:$0xff]
    %v4441 = vld [vmem:[#allocation7 + $0x169] sm:$0xff]
    %v4442 = vld [vmem:[#allocation7 + $0x171] sm:$0xff]
    %v4443 = vld [vmem:[#allocation7 + $0x179] sm:$0xff]
    %v4444 = vld [vmem:[#allocation7 + $0x181] sm:$0xff]
    %v4445 = vld [vmem:[#allocation7 + $0x189] sm:$0xff]
    %v4446 = vld [vmem:[#allocation7 + $0x191] sm:$0x1]
    %v4448 = vsel %vm3885, %v4421, 0
    %v4451 = vsel %vm3885, %v4422, 0
    %4453 = vmatprep.subr.mxu0 0.0
    %4454 = vmatpush1.msra.mxu0 0.0
    %4455 = vmatprep.subr.mxu0 0.0
    %4456 = vmatpush1.msra.mxu0 0.0
    %4457 = vmatprep.subr.mxu0 0.0
    %4458 = vmatpush1.msra.mxu0 0.0
    %4459 = vmatprep.subr.mxu0 0.0
    %4460 = vmatpush1.msra.mxu0 0.0
    %4461 = vmatprep.subr.mxu0 0.0
    %4462 = vmatpush1.msra.mxu0 0.0
    %4463 = vmatprep.subr.mxu0 0.0
    %4464 = vmatpush1.msra.mxu0 0.0
    %4465 = vmatprep.subr.mxu0 0.0
    %4466 = vmatpush1.msra.mxu0 0.0
    %4467 = vmatprep.subr.mxu0 0.0
    %4468 = vmatpush1.msra.mxu0 0.0
    %4469 = vmatprep.subr.mxu0 0.0
    %4470 = vmatpush1.msra.mxu0 0.0
    %4471 = vmatprep.subr.mxu0 0.0
    %4472 = vmatpush1.msra.mxu0 0.0
    %4473 = vmatprep.subr.mxu0 0.0
    %4474 = vmatpush1.msra.mxu0 0.0
    %4475 = vmatprep.subr.mxu0 0.0
    %4476 = vmatpush1.msra.mxu0 0.0
    %4477 = vmatprep.subr.mxu0 0.0
    %v4478 = vand.u32 %v4426, 4294901760
    %4479 = vmatpush1.msra.mxu0 %v4478
    %4480 = vmatprep.subr.mxu0 0.0
    %v4481 = vand.u32 %v4425, 4294901760
    %4482 = vmatpush1.msra.mxu0 %v4481
    %4483 = vmatprep.subr.mxu0 0.0
    %v4484 = vand.u32 %v4424, 4294901760
    %4485 = vmatpush1.msra.mxu0 %v4484
    %4486 = vmatprep.subr.mxu0 0.0
    %v4487 = vand.u32 %v4423, 4294901760
    %4488 = vmatpush1.msra.mxu0 %v4487
    %4489 = vmatprep.subr.mxu0 0.0
    %4490 = vmatpush2.msra.mxu0 0.0
    %4491 = vmatprep.subr.mxu0 0.0
    %4492 = vmatpush2.msra.mxu0 0.0
    %4493 = vmatprep.subr.mxu0 0.0
    %4494 = vmatpush2.msra.mxu0 0.0
    %4495 = vmatprep.subr.mxu0 0.0
    %4496 = vmatpush2.msra.mxu0 0.0
    %4497 = vmatprep.subr.mxu0 0.0
    %4498 = vmatpush2.msra.mxu0 0.0
    %4499 = vmatprep.subr.mxu0 0.0
    %4500 = vmatpush2.msra.mxu0 0.0
    %4501 = vmatprep.subr.mxu0 0.0
    %4502 = vmatpush2.msra.mxu0 0.0
    %4503 = vmatprep.subr.mxu0 0.0
    %4504 = vmatpush2.msra.mxu0 0.0
    %4505 = vmatprep.subr.mxu0 0.0
    %4506 = vmatpush2.msra.mxu0 0.0
    %4507 = vmatprep.subr.mxu0 0.0
    %4508 = vmatpush2.msra.mxu0 0.0
    %4509 = vmatprep.subr.mxu0 0.0
    %4510 = vmatpush2.msra.mxu0 0.0
    %4511 = vmatprep.subr.mxu0 0.0
    %4512 = vmatpush2.msra.mxu0 0.0
    %4513 = vmatprep.subr.mxu0 0.0
    %4514 = vmatpush2.msra.mxu0 0.0
    %4515 = vmatprep.subr.mxu0 0.0
    %4516 = vmatpush2.msra.mxu0 0.0
    %4517 = vmatprep.subr.mxu0 0.0
    %4518 = vmatpush2.msra.mxu0 0.0
    %4519 = vmatprep.subr.mxu0 0.0
    %4520 = vmatpush2.msra.mxu0 0.0
    %4521 = vmatprep.mubr.f32.mxu0 0.0
    %v4522 = vand.u32 %v4448, 4294901760
    %v4523 = vsub.f32 %v4448, %v4522
    %v4524 = vand.u32 %v4523, 4294901760
    %v4525 = vsub.f32 %v4523, %v4524
    %v4526 = vand.u32 %v4525, 4294901760
    %4527 = vmatmul.mubr.f32.gmra.mxu0 %v4526
    %v4528 = vpop.f32.mrf.mxu0
    %v4529 = vadd.f32 0.0, %v4528
    %v4530 = vpop.f32.mrf.mxu0
    %4531 = vmatprep.mubr.f32.mxu0 0.0
    %v4532 = vand.u32 %v4451, 4294901760
    %v4533 = vsub.f32 %v4451, %v4532
    %v4534 = vand.u32 %v4533, 4294901760
    %v4535 = vsub.f32 %v4533, %v4534
    %v4536 = vand.u32 %v4535, 4294901760
    %4537 = vmatmul.mubr.f32.gmra.mxu0 %v4536
    %v4538 = vpop.f32.mrf.mxu0
    %v4539 = vadd.f32 0.0, %v4538
    %v4540 = vpop.f32.mrf.mxu0
    %4541 = vdwg.mxu0
    %4542 = vmatprep.subr.mxu0 0.0
    %4543 = vmatpush1.msra.mxu0 0.0
    %4544 = vmatprep.subr.mxu0 0.0
    %4545 = vmatpush1.msra.mxu0 0.0
    %4546 = vmatprep.subr.mxu0 0.0
    %4547 = vmatpush1.msra.mxu0 0.0
    %4548 = vmatprep.subr.mxu0 0.0
    %4549 = vmatpush1.msra.mxu0 0.0
    %4550 = vmatprep.subr.mxu0 0.0
    %4551 = vmatpush1.msra.mxu0 0.0
    %4552 = vmatprep.subr.mxu0 0.0
    %4553 = vmatpush1.msra.mxu0 0.0
    %4554 = vmatprep.subr.mxu0 0.0
    %4555 = vmatpush1.msra.mxu0 0.0
    %4556 = vmatprep.subr.mxu0 0.0
    %4557 = vmatpush1.msra.mxu0 0.0
    %4558 = vmatprep.subr.mxu0 0.0
    %4559 = vmatpush1.msra.mxu0 0.0
    %4560 = vmatprep.subr.mxu0 0.0
    %4561 = vmatpush1.msra.mxu0 0.0
    %4562 = vmatprep.subr.mxu0 0.0
    %4563 = vmatpush1.msra.mxu0 0.0
    %4564 = vmatprep.subr.mxu0 0.0
    %4565 = vmatpush1.msra.mxu0 0.0
    %4566 = vmatprep.subr.mxu0 0.0
    %v4567 = vand.u32 %v4426, 4294901760
    %v4568 = vsub.f32 %v4426, %v4567
    %v4569 = vand.u32 %v4568, 4294901760
    %v4570 = vsub.f32 %v4568, %v4569
    %v4571 = vand.u32 %v4570, 4294901760
    %4572 = vmatpush1.msra.mxu0 %v4571
    %4573 = vmatprep.subr.mxu0 0.0
    %v4574 = vand.u32 %v4425, 4294901760
    %v4575 = vsub.f32 %v4425, %v4574
    %v4576 = vand.u32 %v4575, 4294901760
    %v4577 = vsub.f32 %v4575, %v4576
    %v4578 = vand.u32 %v4577, 4294901760
    %4579 = vmatpush1.msra.mxu0 %v4578
    %4580 = vmatprep.subr.mxu0 0.0
    %v4581 = vand.u32 %v4424, 4294901760
    %v4582 = vsub.f32 %v4424, %v4581
    %v4583 = vand.u32 %v4582, 4294901760
    %v4584 = vsub.f32 %v4582, %v4583
    %v4585 = vand.u32 %v4584, 4294901760
    %4586 = vmatpush1.msra.mxu0 %v4585
    %4587 = vmatprep.subr.mxu0 0.0
    %v4588 = vand.u32 %v4423, 4294901760
    %v4589 = vsub.f32 %v4423, %v4588
    %v4590 = vand.u32 %v4589, 4294901760
    %v4591 = vsub.f32 %v4589, %v4590
    %v4592 = vand.u32 %v4591, 4294901760
    %4593 = vmatpush1.msra.mxu0 %v4592
    %4594 = vmatprep.subr.mxu0 0.0
    %4595 = vmatpush2.msra.mxu0 0.0
    %4596 = vmatprep.subr.mxu0 0.0
    %4597 = vmatpush2.msra.mxu0 0.0
    %4598 = vmatprep.subr.mxu0 0.0
    %4599 = vmatpush2.msra.mxu0 0.0
    %4600 = vmatprep.subr.mxu0 0.0
    %4601 = vmatpush2.msra.mxu0 0.0
    %4602 = vmatprep.subr.mxu0 0.0
    %4603 = vmatpush2.msra.mxu0 0.0
    %4604 = vmatprep.subr.mxu0 0.0
    %4605 = vmatpush2.msra.mxu0 0.0
    %4606 = vmatprep.subr.mxu0 0.0
    %4607 = vmatpush2.msra.mxu0 0.0
    %4608 = vmatprep.subr.mxu0 0.0
    %4609 = vmatpush2.msra.mxu0 0.0
    %4610 = vmatprep.subr.mxu0 0.0
    %4611 = vmatpush2.msra.mxu0 0.0
    %4612 = vmatprep.subr.mxu0 0.0
    %4613 = vmatpush2.msra.mxu0 0.0
    %4614 = vmatprep.subr.mxu0 0.0
    %4615 = vmatpush2.msra.mxu0 0.0
    %4616 = vmatprep.subr.mxu0 0.0
    %4617 = vmatpush2.msra.mxu0 0.0
    %4618 = vmatprep.subr.mxu0 0.0
    %4619 = vmatpush2.msra.mxu0 0.0
    %4620 = vmatprep.subr.mxu0 0.0
    %4621 = vmatpush2.msra.mxu0 0.0
    %4622 = vmatprep.subr.mxu0 0.0
    %4623 = vmatpush2.msra.mxu0 0.0
    %4624 = vmatprep.subr.mxu0 0.0
    %4625 = vmatpush2.msra.mxu0 0.0
    %4626 = vmatprep.mubr.f32.mxu0 0.0
    %v4627 = vand.u32 %v4448, 4294901760
    %4628 = vmatmul.mubr.f32.gmra.mxu0 %v4627
    %v4629 = vpop.f32.mrf.mxu0
    %v4630 = vadd.f32 %v4529, %v4629
    %v4631 = vpop.f32.mrf.mxu0
    %4632 = vmatprep.mubr.f32.mxu0 0.0
    %v4633 = vand.u32 %v4451, 4294901760
    %4634 = vmatmul.mubr.f32.gmra.mxu0 %v4633
    %v4635 = vpop.f32.mrf.mxu0
    %v4636 = vadd.f32 %v4539, %v4635
    %v4637 = vpop.f32.mrf.mxu0
    %4638 = vdwg.mxu0
    %4639 = vmatprep.subr.mxu0 0.0
    %4640 = vmatpush1.msra.mxu0 0.0
    %4641 = vmatprep.subr.mxu0 0.0
    %4642 = vmatpush1.msra.mxu0 0.0
    %4643 = vmatprep.subr.mxu0 0.0
    %4644 = vmatpush1.msra.mxu0 0.0
    %4645 = vmatprep.subr.mxu0 0.0
    %4646 = vmatpush1.msra.mxu0 0.0
    %4647 = vmatprep.subr.mxu0 0.0
    %4648 = vmatpush1.msra.mxu0 0.0
    %4649 = vmatprep.subr.mxu0 0.0
    %4650 = vmatpush1.msra.mxu0 0.0
    %4651 = vmatprep.subr.mxu0 0.0
    %4652 = vmatpush1.msra.mxu0 0.0
    %4653 = vmatprep.subr.mxu0 0.0
    %4654 = vmatpush1.msra.mxu0 0.0
    %4655 = vmatprep.subr.mxu0 0.0
    %4656 = vmatpush1.msra.mxu0 0.0
    %4657 = vmatprep.subr.mxu0 0.0
    %4658 = vmatpush1.msra.mxu0 0.0
    %4659 = vmatprep.subr.mxu0 0.0
    %4660 = vmatpush1.msra.mxu0 0.0
    %4661 = vmatprep.subr.mxu0 0.0
    %4662 = vmatpush1.msra.mxu0 0.0
    %4663 = vmatprep.subr.mxu0 0.0
    %v4664 = vand.u32 %v4426, 4294901760
    %v4665 = vsub.f32 %v4426, %v4664
    %4666 = vmatpush1.msra.mxu0 %v4665
    %4667 = vmatprep.subr.mxu0 0.0
    %v4668 = vand.u32 %v4425, 4294901760
    %v4669 = vsub.f32 %v4425, %v4668
    %4670 = vmatpush1.msra.mxu0 %v4669
    %4671 = vmatprep.subr.mxu0 0.0
    %v4672 = vand.u32 %v4424, 4294901760
    %v4673 = vsub.f32 %v4424, %v4672
    %4674 = vmatpush1.msra.mxu0 %v4673
    %4675 = vmatprep.subr.mxu0 0.0
    %v4676 = vand.u32 %v4423, 4294901760
    %v4677 = vsub.f32 %v4423, %v4676
    %4678 = vmatpush1.msra.mxu0 %v4677
    %4679 = vmatprep.subr.mxu0 0.0
    %4680 = vmatpush2.msra.mxu0 0.0
    %4681 = vmatprep.subr.mxu0 0.0
    %4682 = vmatpush2.msra.mxu0 0.0
    %4683 = vmatprep.subr.mxu0 0.0
    %4684 = vmatpush2.msra.mxu0 0.0
    %4685 = vmatprep.subr.mxu0 0.0
    %4686 = vmatpush2.msra.mxu0 0.0
    %4687 = vmatprep.subr.mxu0 0.0
    %4688 = vmatpush2.msra.mxu0 0.0
    %4689 = vmatprep.subr.mxu0 0.0
    %4690 = vmatpush2.msra.mxu0 0.0
    %4691 = vmatprep.subr.mxu0 0.0
    %4692 = vmatpush2.msra.mxu0 0.0
    %4693 = vmatprep.subr.mxu0 0.0
    %4694 = vmatpush2.msra.mxu0 0.0
    %4695 = vmatprep.subr.mxu0 0.0
    %4696 = vmatpush2.msra.mxu0 0.0
    %4697 = vmatprep.subr.mxu0 0.0
    %4698 = vmatpush2.msra.mxu0 0.0
    %4699 = vmatprep.subr.mxu0 0.0
    %4700 = vmatpush2.msra.mxu0 0.0
    %4701 = vmatprep.subr.mxu0 0.0
    %4702 = vmatpush2.msra.mxu0 0.0
    %4703 = vmatprep.subr.mxu0 0.0
    %4704 = vmatpush2.msra.mxu0 0.0
    %4705 = vmatprep.subr.mxu0 0.0
    %4706 = vmatpush2.msra.mxu0 0.0
    %4707 = vmatprep.subr.mxu0 0.0
    %4708 = vmatpush2.msra.mxu0 0.0
    %4709 = vmatprep.subr.mxu0 0.0
    %4710 = vmatpush2.msra.mxu0 0.0
    %4711 = vmatprep.mubr.f32.mxu0 0.0
    %v4712 = vand.u32 %v4448, 4294901760
    %v4713 = vsub.f32 %v4448, %v4712
    %4714 = vmatmul.mubr.f32.gmra.mxu0 %v4713
    %v4715 = vpop.f32.mrf.mxu0
    %v4716 = vadd.f32 %v4630, %v4715
    %v4717 = vpop.f32.mrf.mxu0
    %4718 = vmatprep.mubr.f32.mxu0 0.0
    %v4719 = vand.u32 %v4451, 4294901760
    %v4720 = vsub.f32 %v4451, %v4719
    %4721 = vmatmul.mubr.f32.gmra.mxu0 %v4720
    %v4722 = vpop.f32.mrf.mxu0
    %v4723 = vadd.f32 %v4636, %v4722
    %v4724 = vpop.f32.mrf.mxu0
    %4725 = vdwg.mxu0
    %4726 = vmatprep.subr.mxu0 0.0
    %4727 = vmatpush1.msra.mxu0 0.0
    %4728 = vmatprep.subr.mxu0 0.0
    %4729 = vmatpush1.msra.mxu0 0.0
    %4730 = vmatprep.subr.mxu0 0.0
    %4731 = vmatpush1.msra.mxu0 0.0
    %4732 = vmatprep.subr.mxu0 0.0
    %4733 = vmatpush1.msra.mxu0 0.0
    %4734 = vmatprep.subr.mxu0 0.0
    %4735 = vmatpush1.msra.mxu0 0.0
    %4736 = vmatprep.subr.mxu0 0.0
    %4737 = vmatpush1.msra.mxu0 0.0
    %4738 = vmatprep.subr.mxu0 0.0
    %4739 = vmatpush1.msra.mxu0 0.0
    %4740 = vmatprep.subr.mxu0 0.0
    %4741 = vmatpush1.msra.mxu0 0.0
    %4742 = vmatprep.subr.mxu0 0.0
    %4743 = vmatpush1.msra.mxu0 0.0
    %4744 = vmatprep.subr.mxu0 0.0
    %4745 = vmatpush1.msra.mxu0 0.0
    %4746 = vmatprep.subr.mxu0 0.0
    %4747 = vmatpush1.msra.mxu0 0.0
    %4748 = vmatprep.subr.mxu0 0.0
    %4749 = vmatpush1.msra.mxu0 0.0
    %4750 = vmatprep.subr.mxu0 0.0
    %v4751 = vand.u32 %v4426, 4294901760
    %4752 = vmatpush1.msra.mxu0 %v4751
    %4753 = vmatprep.subr.mxu0 0.0
    %v4754 = vand.u32 %v4425, 4294901760
    %4755 = vmatpush1.msra.mxu0 %v4754
    %4756 = vmatprep.subr.mxu0 0.0
    %v4757 = vand.u32 %v4424, 4294901760
    %4758 = vmatpush1.msra.mxu0 %v4757
    %4759 = vmatprep.subr.mxu0 0.0
    %v4760 = vand.u32 %v4423, 4294901760
    %4761 = vmatpush1.msra.mxu0 %v4760
    %4762 = vmatprep.subr.mxu0 0.0
    %4763 = vmatpush2.msra.mxu0 0.0
    %4764 = vmatprep.subr.mxu0 0.0
    %4765 = vmatpush2.msra.mxu0 0.0
    %4766 = vmatprep.subr.mxu0 0.0
    %4767 = vmatpush2.msra.mxu0 0.0
    %4768 = vmatprep.subr.mxu0 0.0
    %4769 = vmatpush2.msra.mxu0 0.0
    %4770 = vmatprep.subr.mxu0 0.0
    %4771 = vmatpush2.msra.mxu0 0.0
    %4772 = vmatprep.subr.mxu0 0.0
    %4773 = vmatpush2.msra.mxu0 0.0
    %4774 = vmatprep.subr.mxu0 0.0
    %4775 = vmatpush2.msra.mxu0 0.0
    %4776 = vmatprep.subr.mxu0 0.0
    %4777 = vmatpush2.msra.mxu0 0.0
    %4778 = vmatprep.subr.mxu0 0.0
    %4779 = vmatpush2.msra.mxu0 0.0
    %4780 = vmatprep.subr.mxu0 0.0
    %4781 = vmatpush2.msra.mxu0 0.0
    %4782 = vmatprep.subr.mxu0 0.0
    %4783 = vmatpush2.msra.mxu0 0.0
    %4784 = vmatprep.subr.mxu0 0.0
    %4785 = vmatpush2.msra.mxu0 0.0
    %4786 = vmatprep.subr.mxu0 0.0
    %4787 = vmatpush2.msra.mxu0 0.0
    %4788 = vmatprep.subr.mxu0 0.0
    %4789 = vmatpush2.msra.mxu0 0.0
    %4790 = vmatprep.subr.mxu0 0.0
    %4791 = vmatpush2.msra.mxu0 0.0
    %4792 = vmatprep.subr.mxu0 0.0
    %4793 = vmatpush2.msra.mxu0 0.0
    %4794 = vmatprep.mubr.f32.mxu0 0.0
    %v4795 = vand.u32 %v4448, 4294901760
    %v4796 = vsub.f32 %v4448, %v4795
    %v4797 = vand.u32 %v4796, 4294901760
    %4798 = vmatmul.mubr.f32.gmra.mxu0 %v4797
    %v4799 = vpop.f32.mrf.mxu0
    %v4800 = vadd.f32 %v4716, %v4799
    %v4801 = vpop.f32.mrf.mxu0
    %4802 = vmatprep.mubr.f32.mxu0 0.0
    %v4803 = vand.u32 %v4451, 4294901760
    %v4804 = vsub.f32 %v4451, %v4803
    %v4805 = vand.u32 %v4804, 4294901760
    %4806 = vmatmul.mubr.f32.gmra.mxu0 %v4805
    %v4807 = vpop.f32.mrf.mxu0
    %v4808 = vadd.f32 %v4723, %v4807
    %v4809 = vpop.f32.mrf.mxu0
    %4810 = vdwg.mxu0
    %4811 = vmatprep.subr.mxu0 0.0
    %4812 = vmatpush1.msra.mxu0 0.0
    %4813 = vmatprep.subr.mxu0 0.0
    %4814 = vmatpush1.msra.mxu0 0.0
    %4815 = vmatprep.subr.mxu0 0.0
    %4816 = vmatpush1.msra.mxu0 0.0
    %4817 = vmatprep.subr.mxu0 0.0
    %4818 = vmatpush1.msra.mxu0 0.0
    %4819 = vmatprep.subr.mxu0 0.0
    %4820 = vmatpush1.msra.mxu0 0.0
    %4821 = vmatprep.subr.mxu0 0.0
    %4822 = vmatpush1.msra.mxu0 0.0
    %4823 = vmatprep.subr.mxu0 0.0
    %4824 = vmatpush1.msra.mxu0 0.0
    %4825 = vmatprep.subr.mxu0 0.0
    %4826 = vmatpush1.msra.mxu0 0.0
    %4827 = vmatprep.subr.mxu0 0.0
    %4828 = vmatpush1.msra.mxu0 0.0
    %4829 = vmatprep.subr.mxu0 0.0
    %4830 = vmatpush1.msra.mxu0 0.0
    %4831 = vmatprep.subr.mxu0 0.0
    %4832 = vmatpush1.msra.mxu0 0.0
    %4833 = vmatprep.subr.mxu0 0.0
    %4834 = vmatpush1.msra.mxu0 0.0
    %4835 = vmatprep.subr.mxu0 0.0
    %v4836 = vand.u32 %v4426, 4294901760
    %v4837 = vsub.f32 %v4426, %v4836
    %v4838 = vand.u32 %v4837, 4294901760
    %4839 = vmatpush1.msra.mxu0 %v4838
    %4840 = vmatprep.subr.mxu0 0.0
    %v4841 = vand.u32 %v4425, 4294901760
    %v4842 = vsub.f32 %v4425, %v4841
    %v4843 = vand.u32 %v4842, 4294901760
    %4844 = vmatpush1.msra.mxu0 %v4843
    %4845 = vmatprep.subr.mxu0 0.0
    %v4846 = vand.u32 %v4424, 4294901760
    %v4847 = vsub.f32 %v4424, %v4846
    %v4848 = vand.u32 %v4847, 4294901760
    %4849 = vmatpush1.msra.mxu0 %v4848
    %4850 = vmatprep.subr.mxu0 0.0
    %v4851 = vand.u32 %v4423, 4294901760
    %v4852 = vsub.f32 %v4423, %v4851
    %v4853 = vand.u32 %v4852, 4294901760
    %4854 = vmatpush1.msra.mxu0 %v4853
    %4855 = vmatprep.subr.mxu0 0.0
    %4856 = vmatpush2.msra.mxu0 0.0
    %4857 = vmatprep.subr.mxu0 0.0
    %4858 = vmatpush2.msra.mxu0 0.0
    %4859 = vmatprep.subr.mxu0 0.0
    %4860 = vmatpush2.msra.mxu0 0.0
    %4861 = vmatprep.subr.mxu0 0.0
    %4862 = vmatpush2.msra.mxu0 0.0
    %4863 = vmatprep.subr.mxu0 0.0
    %4864 = vmatpush2.msra.mxu0 0.0
    %4865 = vmatprep.subr.mxu0 0.0
    %4866 = vmatpush2.msra.mxu0 0.0
    %4867 = vmatprep.subr.mxu0 0.0
    %4868 = vmatpush2.msra.mxu0 0.0
    %4869 = vmatprep.subr.mxu0 0.0
    %4870 = vmatpush2.msra.mxu0 0.0
    %4871 = vmatprep.subr.mxu0 0.0
    %4872 = vmatpush2.msra.mxu0 0.0
    %4873 = vmatprep.subr.mxu0 0.0
    %4874 = vmatpush2.msra.mxu0 0.0
    %4875 = vmatprep.subr.mxu0 0.0
    %4876 = vmatpush2.msra.mxu0 0.0
    %4877 = vmatprep.subr.mxu0 0.0
    %4878 = vmatpush2.msra.mxu0 0.0
    %4879 = vmatprep.subr.mxu0 0.0
    %4880 = vmatpush2.msra.mxu0 0.0
    %4881 = vmatprep.subr.mxu0 0.0
    %4882 = vmatpush2.msra.mxu0 0.0
    %4883 = vmatprep.subr.mxu0 0.0
    %4884 = vmatpush2.msra.mxu0 0.0
    %4885 = vmatprep.subr.mxu0 0.0
    %4886 = vmatpush2.msra.mxu0 0.0
    %4887 = vmatprep.mubr.f32.mxu0 0.0
    %v4888 = vand.u32 %v4448, 4294901760
    %4889 = vmatmul.mubr.f32.gmra.mxu0 %v4888
    %v4890 = vpop.f32.mrf.mxu0
    %v4891 = vadd.f32 %v4800, %v4890
    %v4892 = vpop.f32.mrf.mxu0
    %4893 = vmatprep.mubr.f32.mxu0 0.0
    %v4894 = vand.u32 %v4451, 4294901760
    %4895 = vmatmul.mubr.f32.gmra.mxu0 %v4894
    %v4896 = vpop.f32.mrf.mxu0
    %v4897 = vadd.f32 %v4808, %v4896
    %v4898 = vpop.f32.mrf.mxu0
    %4899 = vdwg.mxu0
    %4900 = vmatprep.subr.mxu0 0.0
    %4901 = vmatpush1.msra.mxu0 0.0
    %4902 = vmatprep.subr.mxu0 0.0
    %4903 = vmatpush1.msra.mxu0 0.0
    %4904 = vmatprep.subr.mxu0 0.0
    %4905 = vmatpush1.msra.mxu0 0.0
    %4906 = vmatprep.subr.mxu0 0.0
    %4907 = vmatpush1.msra.mxu0 0.0
    %4908 = vmatprep.subr.mxu0 0.0
    %4909 = vmatpush1.msra.mxu0 0.0
    %4910 = vmatprep.subr.mxu0 0.0
    %4911 = vmatpush1.msra.mxu0 0.0
    %4912 = vmatprep.subr.mxu0 0.0
    %4913 = vmatpush1.msra.mxu0 0.0
    %4914 = vmatprep.subr.mxu0 0.0
    %4915 = vmatpush1.msra.mxu0 0.0
    %4916 = vmatprep.subr.mxu0 0.0
    %4917 = vmatpush1.msra.mxu0 0.0
    %4918 = vmatprep.subr.mxu0 0.0
    %4919 = vmatpush1.msra.mxu0 0.0
    %4920 = vmatprep.subr.mxu0 0.0
    %4921 = vmatpush1.msra.mxu0 0.0
    %4922 = vmatprep.subr.mxu0 0.0
    %4923 = vmatpush1.msra.mxu0 0.0
    %4924 = vmatprep.subr.mxu0 0.0
    %v4925 = vand.u32 %v4426, 4294901760
    %4926 = vmatpush1.msra.mxu0 %v4925
    %4927 = vmatprep.subr.mxu0 0.0
    %v4928 = vand.u32 %v4425, 4294901760
    %4929 = vmatpush1.msra.mxu0 %v4928
    %4930 = vmatprep.subr.mxu0 0.0
    %v4931 = vand.u32 %v4424, 4294901760
    %4932 = vmatpush1.msra.mxu0 %v4931
    %4933 = vmatprep.subr.mxu0 0.0
    %v4934 = vand.u32 %v4423, 4294901760
    %4935 = vmatpush1.msra.mxu0 %v4934
    %4936 = vmatprep.subr.mxu0 0.0
    %4937 = vmatpush2.msra.mxu0 0.0
    %4938 = vmatprep.subr.mxu0 0.0
    %4939 = vmatpush2.msra.mxu0 0.0
    %4940 = vmatprep.subr.mxu0 0.0
    %4941 = vmatpush2.msra.mxu0 0.0
    %4942 = vmatprep.subr.mxu0 0.0
    %4943 = vmatpush2.msra.mxu0 0.0
    %4944 = vmatprep.subr.mxu0 0.0
    %4945 = vmatpush2.msra.mxu0 0.0
    %4946 = vmatprep.subr.mxu0 0.0
    %4947 = vmatpush2.msra.mxu0 0.0
    %4948 = vmatprep.subr.mxu0 0.0
    %4949 = vmatpush2.msra.mxu0 0.0
    %4950 = vmatprep.subr.mxu0 0.0
    %4951 = vmatpush2.msra.mxu0 0.0
    %4952 = vmatprep.subr.mxu0 0.0
    %4953 = vmatpush2.msra.mxu0 0.0
    %4954 = vmatprep.subr.mxu0 0.0
    %4955 = vmatpush2.msra.mxu0 0.0
    %4956 = vmatprep.subr.mxu0 0.0
    %4957 = vmatpush2.msra.mxu0 0.0
    %4958 = vmatprep.subr.mxu0 0.0
    %4959 = vmatpush2.msra.mxu0 0.0
    %4960 = vmatprep.subr.mxu0 0.0
    %4961 = vmatpush2.msra.mxu0 0.0
    %4962 = vmatprep.subr.mxu0 0.0
    %4963 = vmatpush2.msra.mxu0 0.0
    %4964 = vmatprep.subr.mxu0 0.0
    %4965 = vmatpush2.msra.mxu0 0.0
    %4966 = vmatprep.subr.mxu0 0.0
    %4967 = vmatpush2.msra.mxu0 0.0
    %4968 = vmatprep.mubr.f32.mxu0 0.0
    %v4969 = vand.u32 %v4448, 4294901760
    %4970 = vmatmul.mubr.f32.gmra.mxu0 %v4969
    %v4971 = vpop.f32.mrf.mxu0
    %v4972 = vadd.f32 %v4891, %v4971
    %v4973 = vpop.f32.mrf.mxu0
    %4974 = vmatprep.mubr.f32.mxu0 0.0
    %v4975 = vand.u32 %v4451, 4294901760
    %4976 = vmatmul.mubr.f32.gmra.mxu0 %v4975
    %v4977 = vpop.f32.mrf.mxu0
    %v4978 = vadd.f32 %v4897, %v4977
    %v4979 = vpop.f32.mrf.mxu0
    %4980 = vdwg.mxu0
    %v4981 = vmul.f32 %v4972, %v4427
    %v4982 = vmul.f32 %v4978, %v4428
    %v4984 = vsel %vm3902, 1.0, 0
    %4986 = vmatprep.subr.mxu0 0.0
    %4987 = vmatpush1.msra.mxu0 0.0
    %4988 = vmatprep.subr.mxu0 0.0
    %4989 = vmatpush1.msra.mxu0 0.0
    %4990 = vmatprep.subr.mxu0 0.0
    %4991 = vmatpush1.msra.mxu0 0.0
    %4992 = vmatprep.subr.mxu0 0.0
    %4993 = vmatpush1.msra.mxu0 0.0
    %4994 = vmatprep.subr.mxu0 0.0
    %4995 = vmatpush1.msra.mxu0 0.0
    %4996 = vmatprep.subr.mxu0 0.0
    %4997 = vmatpush1.msra.mxu0 0.0
    %4998 = vmatprep.subr.mxu0 0.0
    %4999 = vmatpush1.msra.mxu0 0.0
    %5000 = vmatprep.subr.mxu0 0.0
    %5001 = vmatpush1.msra.mxu0 0.0
    %5002 = vmatprep.subr.mxu0 0.0
    %5003 = vmatpush1.msra.mxu0 0.0
    %5004 = vmatprep.subr.mxu0 0.0
    %5005 = vmatpush1.msra.mxu0 0.0
    %5006 = vmatprep.subr.mxu0 0.0
    %5007 = vmatpush1.msra.mxu0 0.0
    %5008 = vmatprep.subr.mxu0 0.0
    %5009 = vmatpush1.msra.mxu0 0.0
    %5010 = vmatprep.subr.mxu0 0.0
    %5011 = vmatpush1.msra.mxu0 0.0
    %5012 = vmatprep.subr.mxu0 0.0
    %5013 = vmatpush1.msra.mxu0 0.0
    %5014 = vmatprep.subr.mxu0 0.0
    %v5015 = vand.u32 %v4982, 4294901760
    %5016 = vmatpush1.msra.mxu0 %v5015
    %5017 = vmatprep.subr.mxu0 0.0
    %v5018 = vand.u32 %v4981, 4294901760
    %5019 = vmatpush1.msra.mxu0 %v5018
    %5020 = vmatprep.subr.mxu0 0.0
    %5021 = vmatpush2.msra.mxu0 0.0
    %5022 = vmatprep.subr.mxu0 0.0
    %5023 = vmatpush2.msra.mxu0 0.0
    %5024 = vmatprep.subr.mxu0 0.0
    %5025 = vmatpush2.msra.mxu0 0.0
    %5026 = vmatprep.subr.mxu0 0.0
    %5027 = vmatpush2.msra.mxu0 0.0
    %5028 = vmatprep.subr.mxu0 0.0
    %5029 = vmatpush2.msra.mxu0 0.0
    %5030 = vmatprep.subr.mxu0 0.0
    %5031 = vmatpush2.msra.mxu0 0.0
    %5032 = vmatprep.subr.mxu0 0.0
    %5033 = vmatpush2.msra.mxu0 0.0
    %5034 = vmatprep.subr.mxu0 0.0
    %5035 = vmatpush2.msra.mxu0 0.0
    %5036 = vmatprep.subr.mxu0 0.0
    %5037 = vmatpush2.msra.mxu0 0.0
    %5038 = vmatprep.subr.mxu0 0.0
    %5039 = vmatpush2.msra.mxu0 0.0
    %5040 = vmatprep.subr.mxu0 0.0
    %5041 = vmatpush2.msra.mxu0 0.0
    %5042 = vmatprep.subr.mxu0 0.0
    %5043 = vmatpush2.msra.mxu0 0.0
    %5044 = vmatprep.subr.mxu0 0.0
    %5045 = vmatpush2.msra.mxu0 0.0
    %5046 = vmatprep.subr.mxu0 0.0
    %5047 = vmatpush2.msra.mxu0 0.0
    %5048 = vmatprep.subr.mxu0 0.0
    %5049 = vmatpush2.msra.mxu0 0.0
    %5050 = vmatprep.subr.mxu0 0.0
    %5051 = vmatpush2.msra.mxu0 0.0
    %5052 = vmatprep.mubr.f32.mxu0 0.0
    %v5053 = vand.u32 %v4984, 4294901760
    %v5054 = vsub.f32 %v4984, %v5053
    %v5055 = vand.u32 %v5054, 4294901760
    %v5056 = vsub.f32 %v5054, %v5055
    %v5057 = vand.u32 %v5056, 4294901760
    %5058 = vmatmul.mubr.f32.gmra.mxu0 %v5057
    %v5059 = vpop.f32.mrf.mxu0
    %v5060 = vadd.f32 0.0, %v5059
    %v5061 = vpop.f32.mrf.mxu0
    %5062 = vdwg.mxu0
    %5063 = vmatprep.subr.mxu0 0.0
    %5064 = vmatpush1.msra.mxu0 0.0
    %5065 = vmatprep.subr.mxu0 0.0
    %5066 = vmatpush1.msra.mxu0 0.0
    %5067 = vmatprep.subr.mxu0 0.0
    %5068 = vmatpush1.msra.mxu0 0.0
    %5069 = vmatprep.subr.mxu0 0.0
    %5070 = vmatpush1.msra.mxu0 0.0
    %5071 = vmatprep.subr.mxu0 0.0
    %5072 = vmatpush1.msra.mxu0 0.0
    %5073 = vmatprep.subr.mxu0 0.0
    %5074 = vmatpush1.msra.mxu0 0.0
    %5075 = vmatprep.subr.mxu0 0.0
    %5076 = vmatpush1.msra.mxu0 0.0
    %5077 = vmatprep.subr.mxu0 0.0
    %5078 = vmatpush1.msra.mxu0 0.0
    %5079 = vmatprep.subr.mxu0 0.0
    %5080 = vmatpush1.msra.mxu0 0.0
    %5081 = vmatprep.subr.mxu0 0.0
    %5082 = vmatpush1.msra.mxu0 0.0
    %5083 = vmatprep.subr.mxu0 0.0
    %5084 = vmatpush1.msra.mxu0 0.0
    %5085 = vmatprep.subr.mxu0 0.0
    %5086 = vmatpush1.msra.mxu0 0.0
    %5087 = vmatprep.subr.mxu0 0.0
    %5088 = vmatpush1.msra.mxu0 0.0
    %5089 = vmatprep.subr.mxu0 0.0
    %5090 = vmatpush1.msra.mxu0 0.0
    %5091 = vmatprep.subr.mxu0 0.0
    %v5092 = vand.u32 %v4982, 4294901760
    %v5093 = vsub.f32 %v4982, %v5092
    %v5094 = vand.u32 %v5093, 4294901760
    %v5095 = vsub.f32 %v5093, %v5094
    %v5096 = vand.u32 %v5095, 4294901760
    %5097 = vmatpush1.msra.mxu0 %v5096
    %5098 = vmatprep.subr.mxu0 0.0
    %v5099 = vand.u32 %v4981, 4294901760
    %v5100 = vsub.f32 %v4981, %v5099
    %v5101 = vand.u32 %v5100, 4294901760
    %v5102 = vsub.f32 %v5100, %v5101
    %v5103 = vand.u32 %v5102, 4294901760
    %5104 = vmatpush1.msra.mxu0 %v5103
    %5105 = vmatprep.subr.mxu0 0.0
    %5106 = vmatpush2.msra.mxu0 0.0
    %5107 = vmatprep.subr.mxu0 0.0
    %5108 = vmatpush2.msra.mxu0 0.0
    %5109 = vmatprep.subr.mxu0 0.0
    %5110 = vmatpush2.msra.mxu0 0.0
    %5111 = vmatprep.subr.mxu0 0.0
    %5112 = vmatpush2.msra.mxu0 0.0
    %5113 = vmatprep.subr.mxu0 0.0
    %5114 = vmatpush2.msra.mxu0 0.0
    %5115 = vmatprep.subr.mxu0 0.0
    %5116 = vmatpush2.msra.mxu0 0.0
    %5117 = vmatprep.subr.mxu0 0.0
    %5118 = vmatpush2.msra.mxu0 0.0
    %5119 = vmatprep.subr.mxu0 0.0
    %5120 = vmatpush2.msra.mxu0 0.0
    %5121 = vmatprep.subr.mxu0 0.0
    %5122 = vmatpush2.msra.mxu0 0.0
    %5123 = vmatprep.subr.mxu0 0.0
    %5124 = vmatpush2.msra.mxu0 0.0
    %5125 = vmatprep.subr.mxu0 0.0
    %5126 = vmatpush2.msra.mxu0 0.0
    %5127 = vmatprep.subr.mxu0 0.0
    %5128 = vmatpush2.msra.mxu0 0.0
    %5129 = vmatprep.subr.mxu0 0.0
    %5130 = vmatpush2.msra.mxu0 0.0
    %5131 = vmatprep.subr.mxu0 0.0
    %5132 = vmatpush2.msra.mxu0 0.0
    %5133 = vmatprep.subr.mxu0 0.0
    %5134 = vmatpush2.msra.mxu0 0.0
    %5135 = vmatprep.subr.mxu0 0.0
    %5136 = vmatpush2.msra.mxu0 0.0
    %5137 = vmatprep.mubr.f32.mxu0 0.0
    %v5138 = vand.u32 %v4984, 4294901760
    %5139 = vmatmul.mubr.f32.gmra.mxu0 %v5138
    %v5140 = vpop.f32.mrf.mxu0
    %v5141 = vadd.f32 %v5060, %v5140
    %v5142 = vpop.f32.mrf.mxu0
    %5143 = vdwg.mxu0
    %5144 = vmatprep.subr.mxu0 0.0
    %5145 = vmatpush1.msra.mxu0 0.0
    %5146 = vmatprep.subr.mxu0 0.0
    %5147 = vmatpush1.msra.mxu0 0.0
    %5148 = vmatprep.subr.mxu0 0.0
    %5149 = vmatpush1.msra.mxu0 0.0
    %5150 = vmatprep.subr.mxu0 0.0
    %5151 = vmatpush1.msra.mxu0 0.0
    %5152 = vmatprep.subr.mxu0 0.0
    %5153 = vmatpush1.msra.mxu0 0.0
    %5154 = vmatprep.subr.mxu0 0.0
    %5155 = vmatpush1.msra.mxu0 0.0
    %5156 = vmatprep.subr.mxu0 0.0
    %5157 = vmatpush1.msra.mxu0 0.0
    %5158 = vmatprep.subr.mxu0 0.0
    %5159 = vmatpush1.msra.mxu0 0.0
    %5160 = vmatprep.subr.mxu0 0.0
    %5161 = vmatpush1.msra.mxu0 0.0
    %5162 = vmatprep.subr.mxu0 0.0
    %5163 = vmatpush1.msra.mxu0 0.0
    %5164 = vmatprep.subr.mxu0 0.0
    %5165 = vmatpush1.msra.mxu0 0.0
    %5166 = vmatprep.subr.mxu0 0.0
    %5167 = vmatpush1.msra.mxu0 0.0
    %5168 = vmatprep.subr.mxu0 0.0
    %5169 = vmatpush1.msra.mxu0 0.0
    %5170 = vmatprep.subr.mxu0 0.0
    %5171 = vmatpush1.msra.mxu0 0.0
    %5172 = vmatprep.subr.mxu0 0.0
    %v5173 = vand.u32 %v4982, 4294901760
    %v5174 = vsub.f32 %v4982, %v5173
    %5175 = vmatpush1.msra.mxu0 %v5174
    %5176 = vmatprep.subr.mxu0 0.0
    %v5177 = vand.u32 %v4981, 4294901760
    %v5178 = vsub.f32 %v4981, %v5177
    %5179 = vmatpush1.msra.mxu0 %v5178
    %5180 = vmatprep.subr.mxu0 0.0
    %5181 = vmatpush2.msra.mxu0 0.0
    %5182 = vmatprep.subr.mxu0 0.0
    %5183 = vmatpush2.msra.mxu0 0.0
    %5184 = vmatprep.subr.mxu0 0.0
    %5185 = vmatpush2.msra.mxu0 0.0
    %5186 = vmatprep.subr.mxu0 0.0
    %5187 = vmatpush2.msra.mxu0 0.0
    %5188 = vmatprep.subr.mxu0 0.0
    %5189 = vmatpush2.msra.mxu0 0.0
    %5190 = vmatprep.subr.mxu0 0.0
    %5191 = vmatpush2.msra.mxu0 0.0
    %5192 = vmatprep.subr.mxu0 0.0
    %5193 = vmatpush2.msra.mxu0 0.0
    %5194 = vmatprep.subr.mxu0 0.0
    %5195 = vmatpush2.msra.mxu0 0.0
    %5196 = vmatprep.subr.mxu0 0.0
    %5197 = vmatpush2.msra.mxu0 0.0
    %5198 = vmatprep.subr.mxu0 0.0
    %5199 = vmatpush2.msra.mxu0 0.0
    %5200 = vmatprep.subr.mxu0 0.0
    %5201 = vmatpush2.msra.mxu0 0.0
    %5202 = vmatprep.subr.mxu0 0.0
    %5203 = vmatpush2.msra.mxu0 0.0
    %5204 = vmatprep.subr.mxu0 0.0
    %5205 = vmatpush2.msra.mxu0 0.0
    %5206 = vmatprep.subr.mxu0 0.0
    %5207 = vmatpush2.msra.mxu0 0.0
    %5208 = vmatprep.subr.mxu0 0.0
    %5209 = vmatpush2.msra.mxu0 0.0
    %5210 = vmatprep.subr.mxu0 0.0
    %5211 = vmatpush2.msra.mxu0 0.0
    %5212 = vmatprep.mubr.f32.mxu0 0.0
    %v5213 = vand.u32 %v4984, 4294901760
    %v5214 = vsub.f32 %v4984, %v5213
    %5215 = vmatmul.mubr.f32.gmra.mxu0 %v5214
    %v5216 = vpop.f32.mrf.mxu0
    %v5217 = vadd.f32 %v5141, %v5216
    %v5218 = vpop.f32.mrf.mxu0
    %5219 = vdwg.mxu0
    %5220 = vmatprep.subr.mxu0 0.0
    %5221 = vmatpush1.msra.mxu0 0.0
    %5222 = vmatprep.subr.mxu0 0.0
    %5223 = vmatpush1.msra.mxu0 0.0
    %5224 = vmatprep.subr.mxu0 0.0
    %5225 = vmatpush1.msra.mxu0 0.0
    %5226 = vmatprep.subr.mxu0 0.0
    %5227 = vmatpush1.msra.mxu0 0.0
    %5228 = vmatprep.subr.mxu0 0.0
    %5229 = vmatpush1.msra.mxu0 0.0
    %5230 = vmatprep.subr.mxu0 0.0
    %5231 = vmatpush1.msra.mxu0 0.0
    %5232 = vmatprep.subr.mxu0 0.0
    %5233 = vmatpush1.msra.mxu0 0.0
    %5234 = vmatprep.subr.mxu0 0.0
    %5235 = vmatpush1.msra.mxu0 0.0
    %5236 = vmatprep.subr.mxu0 0.0
    %5237 = vmatpush1.msra.mxu0 0.0
    %5238 = vmatprep.subr.mxu0 0.0
    %5239 = vmatpush1.msra.mxu0 0.0
    %5240 = vmatprep.subr.mxu0 0.0
    %5241 = vmatpush1.msra.mxu0 0.0
    %5242 = vmatprep.subr.mxu0 0.0
    %5243 = vmatpush1.msra.mxu0 0.0
    %5244 = vmatprep.subr.mxu0 0.0
    %5245 = vmatpush1.msra.mxu0 0.0
    %5246 = vmatprep.subr.mxu0 0.0
    %5247 = vmatpush1.msra.mxu0 0.0
    %5248 = vmatprep.subr.mxu0 0.0
    %v5249 = vand.u32 %v4982, 4294901760
    %5250 = vmatpush1.msra.mxu0 %v5249
    %5251 = vmatprep.subr.mxu0 0.0
    %v5252 = vand.u32 %v4981, 4294901760
    %5253 = vmatpush1.msra.mxu0 %v5252
    %5254 = vmatprep.subr.mxu0 0.0
    %5255 = vmatpush2.msra.mxu0 0.0
    %5256 = vmatprep.subr.mxu0 0.0
    %5257 = vmatpush2.msra.mxu0 0.0
    %5258 = vmatprep.subr.mxu0 0.0
    %5259 = vmatpush2.msra.mxu0 0.0
    %5260 = vmatprep.subr.mxu0 0.0
    %5261 = vmatpush2.msra.mxu0 0.0
    %5262 = vmatprep.subr.mxu0 0.0
    %5263 = vmatpush2.msra.mxu0 0.0
    %5264 = vmatprep.subr.mxu0 0.0
    %5265 = vmatpush2.msra.mxu0 0.0
    %5266 = vmatprep.subr.mxu0 0.0
    %5267 = vmatpush2.msra.mxu0 0.0
    %5268 = vmatprep.subr.mxu0 0.0
    %5269 = vmatpush2.msra.mxu0 0.0
    %5270 = vmatprep.subr.mxu0 0.0
    %5271 = vmatpush2.msra.mxu0 0.0
    %5272 = vmatprep.subr.mxu0 0.0
    %5273 = vmatpush2.msra.mxu0 0.0
    %5274 = vmatprep.subr.mxu0 0.0
    %5275 = vmatpush2.msra.mxu0 0.0
    %5276 = vmatprep.subr.mxu0 0.0
    %5277 = vmatpush2.msra.mxu0 0.0
    %5278 = vmatprep.subr.mxu0 0.0
    %5279 = vmatpush2.msra.mxu0 0.0
    %5280 = vmatprep.subr.mxu0 0.0
    %5281 = vmatpush2.msra.mxu0 0.0
    %5282 = vmatprep.subr.mxu0 0.0
    %5283 = vmatpush2.msra.mxu0 0.0
    %5284 = vmatprep.subr.mxu0 0.0
    %5285 = vmatpush2.msra.mxu0 0.0
    %5286 = vmatprep.mubr.f32.mxu0 0.0
    %v5287 = vand.u32 %v4984, 4294901760
    %v5288 = vsub.f32 %v4984, %v5287
    %v5289 = vand.u32 %v5288, 4294901760
    %5290 = vmatmul.mubr.f32.gmra.mxu0 %v5289
    %v5291 = vpop.f32.mrf.mxu0
    %v5292 = vadd.f32 %v5217, %v5291
    %v5293 = vpop.f32.mrf.mxu0
    %5294 = vdwg.mxu0
    %5295 = vmatprep.subr.mxu0 0.0
    %5296 = vmatpush1.msra.mxu0 0.0
    %5297 = vmatprep.subr.mxu0 0.0
    %5298 = vmatpush1.msra.mxu0 0.0
    %5299 = vmatprep.subr.mxu0 0.0
    %5300 = vmatpush1.msra.mxu0 0.0
    %5301 = vmatprep.subr.mxu0 0.0
    %5302 = vmatpush1.msra.mxu0 0.0
    %5303 = vmatprep.subr.mxu0 0.0
    %5304 = vmatpush1.msra.mxu0 0.0
    %5305 = vmatprep.subr.mxu0 0.0
    %5306 = vmatpush1.msra.mxu0 0.0
    %5307 = vmatprep.subr.mxu0 0.0
    %5308 = vmatpush1.msra.mxu0 0.0
    %5309 = vmatprep.subr.mxu0 0.0
    %5310 = vmatpush1.msra.mxu0 0.0
    %5311 = vmatprep.subr.mxu0 0.0
    %5312 = vmatpush1.msra.mxu0 0.0
    %5313 = vmatprep.subr.mxu0 0.0
    %5314 = vmatpush1.msra.mxu0 0.0
    %5315 = vmatprep.subr.mxu0 0.0
    %5316 = vmatpush1.msra.mxu0 0.0
    %5317 = vmatprep.subr.mxu0 0.0
    %5318 = vmatpush1.msra.mxu0 0.0
    %5319 = vmatprep.subr.mxu0 0.0
    %5320 = vmatpush1.msra.mxu0 0.0
    %5321 = vmatprep.subr.mxu0 0.0
    %5322 = vmatpush1.msra.mxu0 0.0
    %5323 = vmatprep.subr.mxu0 0.0
    %v5324 = vand.u32 %v4982, 4294901760
    %v5325 = vsub.f32 %v4982, %v5324
    %v5326 = vand.u32 %v5325, 4294901760
    %5327 = vmatpush1.msra.mxu0 %v5326
    %5328 = vmatprep.subr.mxu0 0.0
    %v5329 = vand.u32 %v4981, 4294901760
    %v5330 = vsub.f32 %v4981, %v5329
    %v5331 = vand.u32 %v5330, 4294901760
    %5332 = vmatpush1.msra.mxu0 %v5331
    %5333 = vmatprep.subr.mxu0 0.0
    %5334 = vmatpush2.msra.mxu0 0.0
    %5335 = vmatprep.subr.mxu0 0.0
    %5336 = vmatpush2.msra.mxu0 0.0
    %5337 = vmatprep.subr.mxu0 0.0
    %5338 = vmatpush2.msra.mxu0 0.0
    %5339 = vmatprep.subr.mxu0 0.0
    %5340 = vmatpush2.msra.mxu0 0.0
    %5341 = vmatprep.subr.mxu0 0.0
    %5342 = vmatpush2.msra.mxu0 0.0
    %5343 = vmatprep.subr.mxu0 0.0
    %5344 = vmatpush2.msra.mxu0 0.0
    %5345 = vmatprep.subr.mxu0 0.0
    %5346 = vmatpush2.msra.mxu0 0.0
    %5347 = vmatprep.subr.mxu0 0.0
    %5348 = vmatpush2.msra.mxu0 0.0
    %5349 = vmatprep.subr.mxu0 0.0
    %5350 = vmatpush2.msra.mxu0 0.0
    %5351 = vmatprep.subr.mxu0 0.0
    %5352 = vmatpush2.msra.mxu0 0.0
    %5353 = vmatprep.subr.mxu0 0.0
    %5354 = vmatpush2.msra.mxu0 0.0
    %5355 = vmatprep.subr.mxu0 0.0
    %5356 = vmatpush2.msra.mxu0 0.0
    %5357 = vmatprep.subr.mxu0 0.0
    %5358 = vmatpush2.msra.mxu0 0.0
    %5359 = vmatprep.subr.mxu0 0.0
    %5360 = vmatpush2.msra.mxu0 0.0
    %5361 = vmatprep.subr.mxu0 0.0
    %5362 = vmatpush2.msra.mxu0 0.0
    %5363 = vmatprep.subr.mxu0 0.0
    %5364 = vmatpush2.msra.mxu0 0.0
    %5365 = vmatprep.mubr.f32.mxu0 0.0
    %v5366 = vand.u32 %v4984, 4294901760
    %5367 = vmatmul.mubr.f32.gmra.mxu0 %v5366
    %v5368 = vpop.f32.mrf.mxu0
    %v5369 = vadd.f32 %v5292, %v5368
    %v5370 = vpop.f32.mrf.mxu0
    %5371 = vdwg.mxu0
    %5372 = vmatprep.subr.mxu0 0.0
    %5373 = vmatpush1.msra.mxu0 0.0
    %5374 = vmatprep.subr.mxu0 0.0
    %5375 = vmatpush1.msra.mxu0 0.0
    %5376 = vmatprep.subr.mxu0 0.0
    %5377 = vmatpush1.msra.mxu0 0.0
    %5378 = vmatprep.subr.mxu0 0.0
    %5379 = vmatpush1.msra.mxu0 0.0
    %5380 = vmatprep.subr.mxu0 0.0
    %5381 = vmatpush1.msra.mxu0 0.0
    %5382 = vmatprep.subr.mxu0 0.0
    %5383 = vmatpush1.msra.mxu0 0.0
    %5384 = vmatprep.subr.mxu0 0.0
    %5385 = vmatpush1.msra.mxu0 0.0
    %5386 = vmatprep.subr.mxu0 0.0
    %5387 = vmatpush1.msra.mxu0 0.0
    %5388 = vmatprep.subr.mxu0 0.0
    %5389 = vmatpush1.msra.mxu0 0.0
    %5390 = vmatprep.subr.mxu0 0.0
    %5391 = vmatpush1.msra.mxu0 0.0
    %5392 = vmatprep.subr.mxu0 0.0
    %5393 = vmatpush1.msra.mxu0 0.0
    %5394 = vmatprep.subr.mxu0 0.0
    %5395 = vmatpush1.msra.mxu0 0.0
    %5396 = vmatprep.subr.mxu0 0.0
    %5397 = vmatpush1.msra.mxu0 0.0
    %5398 = vmatprep.subr.mxu0 0.0
    %5399 = vmatpush1.msra.mxu0 0.0
    %5400 = vmatprep.subr.mxu0 0.0
    %v5401 = vand.u32 %v4982, 4294901760
    %5402 = vmatpush1.msra.mxu0 %v5401
    %5403 = vmatprep.subr.mxu0 0.0
    %v5404 = vand.u32 %v4981, 4294901760
    %5405 = vmatpush1.msra.mxu0 %v5404
    %5406 = vmatprep.subr.mxu0 0.0
    %5407 = vmatpush2.msra.mxu0 0.0
    %5408 = vmatprep.subr.mxu0 0.0
    %5409 = vmatpush2.msra.mxu0 0.0
    %5410 = vmatprep.subr.mxu0 0.0
    %5411 = vmatpush2.msra.mxu0 0.0
    %5412 = vmatprep.subr.mxu0 0.0
    %5413 = vmatpush2.msra.mxu0 0.0
    %5414 = vmatprep.subr.mxu0 0.0
    %5415 = vmatpush2.msra.mxu0 0.0
    %5416 = vmatprep.subr.mxu0 0.0
    %5417 = vmatpush2.msra.mxu0 0.0
    %5418 = vmatprep.subr.mxu0 0.0
    %5419 = vmatpush2.msra.mxu0 0.0
    %5420 = vmatprep.subr.mxu0 0.0
    %5421 = vmatpush2.msra.mxu0 0.0
    %5422 = vmatprep.subr.mxu0 0.0
    %5423 = vmatpush2.msra.mxu0 0.0
    %5424 = vmatprep.subr.mxu0 0.0
    %5425 = vmatpush2.msra.mxu0 0.0
    %5426 = vmatprep.subr.mxu0 0.0
    %5427 = vmatpush2.msra.mxu0 0.0
    %5428 = vmatprep.subr.mxu0 0.0
    %5429 = vmatpush2.msra.mxu0 0.0
    %5430 = vmatprep.subr.mxu0 0.0
    %5431 = vmatpush2.msra.mxu0 0.0
    %5432 = vmatprep.subr.mxu0 0.0
    %5433 = vmatpush2.msra.mxu0 0.0
    %5434 = vmatprep.subr.mxu0 0.0
    %5435 = vmatpush2.msra.mxu0 0.0
    %5436 = vmatprep.subr.mxu0 0.0
    %5437 = vmatpush2.msra.mxu0 0.0
    %5438 = vmatprep.mubr.f32.mxu0 0.0
    %v5439 = vand.u32 %v4984, 4294901760
    %5440 = vmatmul.mubr.f32.gmra.mxu0 %v5439
    %v5441 = vpop.f32.mrf.mxu0
    %v5442 = vadd.f32 %v5369, %v5441
    %v5443 = vpop.f32.mrf.mxu0
    %5444 = vdwg.mxu0
    %vm5445 = vcmask 523264
    %v5447 = vsel %vm5445, %v5442, 0
    %5449 = vmatprep.subr.mxu0 0.0
    %5450 = vmatpush1.msra.mxu0 0.0
    %5451 = vmatprep.subr.mxu0 0.0
    %5452 = vmatpush1.msra.mxu0 0.0
    %5453 = vmatprep.subr.mxu0 0.0
    %5454 = vmatpush1.msra.mxu0 0.0
    %5455 = vmatprep.subr.mxu0 0.0
    %5456 = vmatpush1.msra.mxu0 0.0
    %5457 = vmatprep.subr.mxu0 0.0
    %5458 = vmatpush1.msra.mxu0 0.0
    %5459 = vmatprep.subr.mxu0 0.0
    %5460 = vmatpush1.msra.mxu0 0.0
    %5461 = vmatprep.subr.mxu0 0.0
    %5462 = vmatpush1.msra.mxu0 0.0
    %5463 = vmatprep.subr.mxu0 0.0
    %5464 = vmatpush1.msra.mxu0 0.0
    %5465 = vmatprep.subr.mxu0 0.0
    %v5466 = vand.u32 %v4436, 4294901760
    %5467 = vmatpush1.msra.mxu0 %v5466
    %5468 = vmatprep.subr.mxu0 0.0
    %v5469 = vand.u32 %v4435, 4294901760
    %5470 = vmatpush1.msra.mxu0 %v5469
    %5471 = vmatprep.subr.mxu0 0.0
    %v5472 = vand.u32 %v4434, 4294901760
    %5473 = vmatpush1.msra.mxu0 %v5472
    %5474 = vmatprep.subr.mxu0 0.0
    %v5475 = vand.u32 %v4433, 4294901760
    %5476 = vmatpush1.msra.mxu0 %v5475
    %5477 = vmatprep.subr.mxu0 0.0
    %v5478 = vand.u32 %v4432, 4294901760
    %5479 = vmatpush1.msra.mxu0 %v5478
    %5480 = vmatprep.subr.mxu0 0.0
    %v5481 = vand.u32 %v4431, 4294901760
    %5482 = vmatpush1.msra.mxu0 %v5481
    %5483 = vmatprep.subr.mxu0 0.0
    %v5484 = vand.u32 %v4430, 4294901760
    %5485 = vmatpush1.msra.mxu0 %v5484
    %5486 = vmatprep.subr.mxu0 0.0
    %v5487 = vand.u32 %v4429, 4294901760
    %5488 = vmatpush1.msra.mxu0 %v5487
    %5489 = vmatprep.subr.mxu0 0.0
    %5490 = vmatpush2.msra.mxu0 0.0
    %5491 = vmatprep.subr.mxu0 0.0
    %5492 = vmatpush2.msra.mxu0 0.0
    %5493 = vmatprep.subr.mxu0 0.0
    %5494 = vmatpush2.msra.mxu0 0.0
    %5495 = vmatprep.subr.mxu0 0.0
    %5496 = vmatpush2.msra.mxu0 0.0
    %5497 = vmatprep.subr.mxu0 0.0
    %5498 = vmatpush2.msra.mxu0 0.0
    %5499 = vmatprep.subr.mxu0 0.0
    %5500 = vmatpush2.msra.mxu0 0.0
    %5501 = vmatprep.subr.mxu0 0.0
    %5502 = vmatpush2.msra.mxu0 0.0
    %5503 = vmatprep.subr.mxu0 0.0
    %5504 = vmatpush2.msra.mxu0 0.0
    %5505 = vmatprep.subr.mxu0 0.0
    %5506 = vmatpush2.msra.mxu0 0.0
    %5507 = vmatprep.subr.mxu0 0.0
    %5508 = vmatpush2.msra.mxu0 0.0
    %5509 = vmatprep.subr.mxu0 0.0
    %5510 = vmatpush2.msra.mxu0 0.0
    %5511 = vmatprep.subr.mxu0 0.0
    %5512 = vmatpush2.msra.mxu0 0.0
    %5513 = vmatprep.subr.mxu0 0.0
    %5514 = vmatpush2.msra.mxu0 0.0
    %5515 = vmatprep.subr.mxu0 0.0
    %5516 = vmatpush2.msra.mxu0 0.0
    %5517 = vmatprep.subr.mxu0 0.0
    %5518 = vmatpush2.msra.mxu0 0.0
    %5519 = vmatprep.subr.mxu0 0.0
    %5520 = vmatpush2.msra.mxu0 0.0
    %5521 = vmatprep.mubr.f32.mxu0 0.0
    %v5522 = vand.u32 %v5447, 4294901760
    %v5523 = vsub.f32 %v5447, %v5522
    %v5524 = vand.u32 %v5523, 4294901760
    %v5525 = vsub.f32 %v5523, %v5524
    %v5526 = vand.u32 %v5525, 4294901760
    %5527 = vmatmul.mubr.f32.gmra.mxu0 %v5526
    %v5528 = vpop.f32.mrf.mxu0
    %v5529 = vadd.f32 %v4437, %v5528
    %v5530 = vpop.f32.mrf.mxu0
    %5531 = vdwg.mxu0
    %5532 = vmatprep.subr.mxu0 0.0
    %5533 = vmatpush1.msra.mxu0 0.0
    %5534 = vmatprep.subr.mxu0 0.0
    %5535 = vmatpush1.msra.mxu0 0.0
    %5536 = vmatprep.subr.mxu0 0.0
    %5537 = vmatpush1.msra.mxu0 0.0
    %5538 = vmatprep.subr.mxu0 0.0
    %5539 = vmatpush1.msra.mxu0 0.0
    %5540 = vmatprep.subr.mxu0 0.0
    %5541 = vmatpush1.msra.mxu0 0.0
    %5542 = vmatprep.subr.mxu0 0.0
    %5543 = vmatpush1.msra.mxu0 0.0
    %5544 = vmatprep.subr.mxu0 0.0
    %5545 = vmatpush1.msra.mxu0 0.0
    %5546 = vmatprep.subr.mxu0 0.0
    %5547 = vmatpush1.msra.mxu0 0.0
    %5548 = vmatprep.subr.mxu0 0.0
    %v5549 = vand.u32 %v4436, 4294901760
    %v5550 = vsub.f32 %v4436, %v5549
    %v5551 = vand.u32 %v5550, 4294901760
    %v5552 = vsub.f32 %v5550, %v5551
    %v5553 = vand.u32 %v5552, 4294901760
    %5554 = vmatpush1.msra.mxu0 %v5553
    %5555 = vmatprep.subr.mxu0 0.0
    %v5556 = vand.u32 %v4435, 4294901760
    %v5557 = vsub.f32 %v4435, %v5556
    %v5558 = vand.u32 %v5557, 4294901760
    %v5559 = vsub.f32 %v5557, %v5558
    %v5560 = vand.u32 %v5559, 4294901760
    %5561 = vmatpush1.msra.mxu0 %v5560
    %5562 = vmatprep.subr.mxu0 0.0
    %v5563 = vand.u32 %v4434, 4294901760
    %v5564 = vsub.f32 %v4434, %v5563
    %v5565 = vand.u32 %v5564, 4294901760
    %v5566 = vsub.f32 %v5564, %v5565
    %v5567 = vand.u32 %v5566, 4294901760
    %5568 = vmatpush1.msra.mxu0 %v5567
    %5569 = vmatprep.subr.mxu0 0.0
    %v5570 = vand.u32 %v4433, 4294901760
    %v5571 = vsub.f32 %v4433, %v5570
    %v5572 = vand.u32 %v5571, 4294901760
    %v5573 = vsub.f32 %v5571, %v5572
    %v5574 = vand.u32 %v5573, 4294901760
    %5575 = vmatpush1.msra.mxu0 %v5574
    %5576 = vmatprep.subr.mxu0 0.0
    %v5577 = vand.u32 %v4432, 4294901760
    %v5578 = vsub.f32 %v4432, %v5577
    %v5579 = vand.u32 %v5578, 4294901760
    %v5580 = vsub.f32 %v5578, %v5579
    %v5581 = vand.u32 %v5580, 4294901760
    %5582 = vmatpush1.msra.mxu0 %v5581
    %5583 = vmatprep.subr.mxu0 0.0
    %v5584 = vand.u32 %v4431, 4294901760
    %v5585 = vsub.f32 %v4431, %v5584
    %v5586 = vand.u32 %v5585, 4294901760
    %v5587 = vsub.f32 %v5585, %v5586
    %v5588 = vand.u32 %v5587, 4294901760
    %5589 = vmatpush1.msra.mxu0 %v5588
    %5590 = vmatprep.subr.mxu0 0.0
    %v5591 = vand.u32 %v4430, 4294901760
    %v5592 = vsub.f32 %v4430, %v5591
    %v5593 = vand.u32 %v5592, 4294901760
    %v5594 = vsub.f32 %v5592, %v5593
    %v5595 = vand.u32 %v5594, 4294901760
    %5596 = vmatpush1.msra.mxu0 %v5595
    %5597 = vmatprep.subr.mxu0 0.0
    %v5598 = vand.u32 %v4429, 4294901760
    %v5599 = vsub.f32 %v4429, %v5598
    %v5600 = vand.u32 %v5599, 4294901760
    %v5601 = vsub.f32 %v5599, %v5600
    %v5602 = vand.u32 %v5601, 4294901760
    %5603 = vmatpush1.msra.mxu0 %v5602
    %5604 = vmatprep.subr.mxu0 0.0
    %5605 = vmatpush2.msra.mxu0 0.0
    %5606 = vmatprep.subr.mxu0 0.0
    %5607 = vmatpush2.msra.mxu0 0.0
    %5608 = vmatprep.subr.mxu0 0.0
    %5609 = vmatpush2.msra.mxu0 0.0
    %5610 = vmatprep.subr.mxu0 0.0
    %5611 = vmatpush2.msra.mxu0 0.0
    %5612 = vmatprep.subr.mxu0 0.0
    %5613 = vmatpush2.msra.mxu0 0.0
    %5614 = vmatprep.subr.mxu0 0.0
    %5615 = vmatpush2.msra.mxu0 0.0
    %5616 = vmatprep.subr.mxu0 0.0
    %5617 = vmatpush2.msra.mxu0 0.0
    %5618 = vmatprep.subr.mxu0 0.0
    %5619 = vmatpush2.msra.mxu0 0.0
    %5620 = vmatprep.subr.mxu0 0.0
    %5621 = vmatpush2.msra.mxu0 0.0
    %5622 = vmatprep.subr.mxu0 0.0
    %5623 = vmatpush2.msra.mxu0 0.0
    %5624 = vmatprep.subr.mxu0 0.0
    %5625 = vmatpush2.msra.mxu0 0.0
    %5626 = vmatprep.subr.mxu0 0.0
    %5627 = vmatpush2.msra.mxu0 0.0
    %5628 = vmatprep.subr.mxu0 0.0
    %5629 = vmatpush2.msra.mxu0 0.0
    %5630 = vmatprep.subr.mxu0 0.0
    %5631 = vmatpush2.msra.mxu0 0.0
    %5632 = vmatprep.subr.mxu0 0.0
    %5633 = vmatpush2.msra.mxu0 0.0
    %5634 = vmatprep.subr.mxu0 0.0
    %5635 = vmatpush2.msra.mxu0 0.0
    %5636 = vmatprep.mubr.f32.mxu0 0.0
    %v5637 = vand.u32 %v5447, 4294901760
    %5638 = vmatmul.mubr.f32.gmra.mxu0 %v5637
    %v5639 = vpop.f32.mrf.mxu0
    %v5640 = vadd.f32 %v5529, %v5639
    %v5641 = vpop.f32.mrf.mxu0
    %5642 = vdwg.mxu0
    %5643 = vmatprep.subr.mxu0 0.0
    %5644 = vmatpush1.msra.mxu0 0.0
    %5645 = vmatprep.subr.mxu0 0.0
    %5646 = vmatpush1.msra.mxu0 0.0
    %5647 = vmatprep.subr.mxu0 0.0
    %5648 = vmatpush1.msra.mxu0 0.0
    %5649 = vmatprep.subr.mxu0 0.0
    %5650 = vmatpush1.msra.mxu0 0.0
    %5651 = vmatprep.subr.mxu0 0.0
    %5652 = vmatpush1.msra.mxu0 0.0
    %5653 = vmatprep.subr.mxu0 0.0
    %5654 = vmatpush1.msra.mxu0 0.0
    %5655 = vmatprep.subr.mxu0 0.0
    %5656 = vmatpush1.msra.mxu0 0.0
    %5657 = vmatprep.subr.mxu0 0.0
    %5658 = vmatpush1.msra.mxu0 0.0
    %5659 = vmatprep.subr.mxu0 0.0
    %v5660 = vand.u32 %v4436, 4294901760
    %v5661 = vsub.f32 %v4436, %v5660
    %5662 = vmatpush1.msra.mxu0 %v5661
    %5663 = vmatprep.subr.mxu0 0.0
    %v5664 = vand.u32 %v4435, 4294901760
    %v5665 = vsub.f32 %v4435, %v5664
    %5666 = vmatpush1.msra.mxu0 %v5665
    %5667 = vmatprep.subr.mxu0 0.0
    %v5668 = vand.u32 %v4434, 4294901760
    %v5669 = vsub.f32 %v4434, %v5668
    %5670 = vmatpush1.msra.mxu0 %v5669
    %5671 = vmatprep.subr.mxu0 0.0
    %v5672 = vand.u32 %v4433, 4294901760
    %v5673 = vsub.f32 %v4433, %v5672
    %5674 = vmatpush1.msra.mxu0 %v5673
    %5675 = vmatprep.subr.mxu0 0.0
    %v5676 = vand.u32 %v4432, 4294901760
    %v5677 = vsub.f32 %v4432, %v5676
    %5678 = vmatpush1.msra.mxu0 %v5677
    %5679 = vmatprep.subr.mxu0 0.0
    %v5680 = vand.u32 %v4431, 4294901760
    %v5681 = vsub.f32 %v4431, %v5680
    %5682 = vmatpush1.msra.mxu0 %v5681
    %5683 = vmatprep.subr.mxu0 0.0
    %v5684 = vand.u32 %v4430, 4294901760
    %v5685 = vsub.f32 %v4430, %v5684
    %5686 = vmatpush1.msra.mxu0 %v5685
    %5687 = vmatprep.subr.mxu0 0.0
    %v5688 = vand.u32 %v4429, 4294901760
    %v5689 = vsub.f32 %v4429, %v5688
    %5690 = vmatpush1.msra.mxu0 %v5689
    %5691 = vmatprep.subr.mxu0 0.0
    %5692 = vmatpush2.msra.mxu0 0.0
    %5693 = vmatprep.subr.mxu0 0.0
    %5694 = vmatpush2.msra.mxu0 0.0
    %5695 = vmatprep.subr.mxu0 0.0
    %5696 = vmatpush2.msra.mxu0 0.0
    %5697 = vmatprep.subr.mxu0 0.0
    %5698 = vmatpush2.msra.mxu0 0.0
    %5699 = vmatprep.subr.mxu0 0.0
    %5700 = vmatpush2.msra.mxu0 0.0
    %5701 = vmatprep.subr.mxu0 0.0
    %5702 = vmatpush2.msra.mxu0 0.0
    %5703 = vmatprep.subr.mxu0 0.0
    %5704 = vmatpush2.msra.mxu0 0.0
    %5705 = vmatprep.subr.mxu0 0.0
    %5706 = vmatpush2.msra.mxu0 0.0
    %5707 = vmatprep.subr.mxu0 0.0
    %5708 = vmatpush2.msra.mxu0 0.0
    %5709 = vmatprep.subr.mxu0 0.0
    %5710 = vmatpush2.msra.mxu0 0.0
    %5711 = vmatprep.subr.mxu0 0.0
    %5712 = vmatpush2.msra.mxu0 0.0
    %5713 = vmatprep.subr.mxu0 0.0
    %5714 = vmatpush2.msra.mxu0 0.0
    %5715 = vmatprep.subr.mxu0 0.0
    %5716 = vmatpush2.msra.mxu0 0.0
    %5717 = vmatprep.subr.mxu0 0.0
    %5718 = vmatpush2.msra.mxu0 0.0
    %5719 = vmatprep.subr.mxu0 0.0
    %5720 = vmatpush2.msra.mxu0 0.0
    %5721 = vmatprep.subr.mxu0 0.0
    %5722 = vmatpush2.msra.mxu0 0.0
    %5723 = vmatprep.mubr.f32.mxu0 0.0
    %v5724 = vand.u32 %v5447, 4294901760
    %v5725 = vsub.f32 %v5447, %v5724
    %5726 = vmatmul.mubr.f32.gmra.mxu0 %v5725
    %v5727 = vpop.f32.mrf.mxu0
    %v5728 = vadd.f32 %v5640, %v5727
    %v5729 = vpop.f32.mrf.mxu0
    %5730 = vdwg.mxu0
    %5731 = vmatprep.subr.mxu0 0.0
    %5732 = vmatpush1.msra.mxu0 0.0
    %5733 = vmatprep.subr.mxu0 0.0
    %5734 = vmatpush1.msra.mxu0 0.0
    %5735 = vmatprep.subr.mxu0 0.0
    %5736 = vmatpush1.msra.mxu0 0.0
    %5737 = vmatprep.subr.mxu0 0.0
    %5738 = vmatpush1.msra.mxu0 0.0
    %5739 = vmatprep.subr.mxu0 0.0
    %5740 = vmatpush1.msra.mxu0 0.0
    %5741 = vmatprep.subr.mxu0 0.0
    %5742 = vmatpush1.msra.mxu0 0.0
    %5743 = vmatprep.subr.mxu0 0.0
    %5744 = vmatpush1.msra.mxu0 0.0
    %5745 = vmatprep.subr.mxu0 0.0
    %5746 = vmatpush1.msra.mxu0 0.0
    %5747 = vmatprep.subr.mxu0 0.0
    %v5748 = vand.u32 %v4436, 4294901760
    %5749 = vmatpush1.msra.mxu0 %v5748
    %5750 = vmatprep.subr.mxu0 0.0
    %v5751 = vand.u32 %v4435, 4294901760
    %5752 = vmatpush1.msra.mxu0 %v5751
    %5753 = vmatprep.subr.mxu0 0.0
    %v5754 = vand.u32 %v4434, 4294901760
    %5755 = vmatpush1.msra.mxu0 %v5754
    %5756 = vmatprep.subr.mxu0 0.0
    %v5757 = vand.u32 %v4433, 4294901760
    %5758 = vmatpush1.msra.mxu0 %v5757
    %5759 = vmatprep.subr.mxu0 0.0
    %v5760 = vand.u32 %v4432, 4294901760
    %5761 = vmatpush1.msra.mxu0 %v5760
    %5762 = vmatprep.subr.mxu0 0.0
    %v5763 = vand.u32 %v4431, 4294901760
    %5764 = vmatpush1.msra.mxu0 %v5763
    %5765 = vmatprep.subr.mxu0 0.0
    %v5766 = vand.u32 %v4430, 4294901760
    %5767 = vmatpush1.msra.mxu0 %v5766
    %5768 = vmatprep.subr.mxu0 0.0
    %v5769 = vand.u32 %v4429, 4294901760
    %5770 = vmatpush1.msra.mxu0 %v5769
    %5771 = vmatprep.subr.mxu0 0.0
    %5772 = vmatpush2.msra.mxu0 0.0
    %5773 = vmatprep.subr.mxu0 0.0
    %5774 = vmatpush2.msra.mxu0 0.0
    %5775 = vmatprep.subr.mxu0 0.0
    %5776 = vmatpush2.msra.mxu0 0.0
    %5777 = vmatprep.subr.mxu0 0.0
    %5778 = vmatpush2.msra.mxu0 0.0
    %5779 = vmatprep.subr.mxu0 0.0
    %5780 = vmatpush2.msra.mxu0 0.0
    %5781 = vmatprep.subr.mxu0 0.0
    %5782 = vmatpush2.msra.mxu0 0.0
    %5783 = vmatprep.subr.mxu0 0.0
    %5784 = vmatpush2.msra.mxu0 0.0
    %5785 = vmatprep.subr.mxu0 0.0
    %5786 = vmatpush2.msra.mxu0 0.0
    %5787 = vmatprep.subr.mxu0 0.0
    %5788 = vmatpush2.msra.mxu0 0.0
    %5789 = vmatprep.subr.mxu0 0.0
    %5790 = vmatpush2.msra.mxu0 0.0
    %5791 = vmatprep.subr.mxu0 0.0
    %5792 = vmatpush2.msra.mxu0 0.0
    %5793 = vmatprep.subr.mxu0 0.0
    %5794 = vmatpush2.msra.mxu0 0.0
    %5795 = vmatprep.subr.mxu0 0.0
    %5796 = vmatpush2.msra.mxu0 0.0
    %5797 = vmatprep.subr.mxu0 0.0
    %5798 = vmatpush2.msra.mxu0 0.0
    %5799 = vmatprep.subr.mxu0 0.0
    %5800 = vmatpush2.msra.mxu0 0.0
    %5801 = vmatprep.subr.mxu0 0.0
    %5802 = vmatpush2.msra.mxu0 0.0
    %5803 = vmatprep.mubr.f32.mxu0 0.0
    %v5804 = vand.u32 %v5447, 4294901760
    %v5805 = vsub.f32 %v5447, %v5804
    %v5806 = vand.u32 %v5805, 4294901760
    %5807 = vmatmul.mubr.f32.gmra.mxu0 %v5806
    %v5808 = vpop.f32.mrf.mxu0
    %v5809 = vadd.f32 %v5728, %v5808
    %v5810 = vpop.f32.mrf.mxu0
    %5811 = vdwg.mxu0
    %5812 = vmatprep.subr.mxu0 0.0
    %5813 = vmatpush1.msra.mxu0 0.0
    %5814 = vmatprep.subr.mxu0 0.0
    %5815 = vmatpush1.msra.mxu0 0.0
    %5816 = vmatprep.subr.mxu0 0.0
    %5817 = vmatpush1.msra.mxu0 0.0
    %5818 = vmatprep.subr.mxu0 0.0
    %5819 = vmatpush1.msra.mxu0 0.0
    %5820 = vmatprep.subr.mxu0 0.0
    %5821 = vmatpush1.msra.mxu0 0.0
    %5822 = vmatprep.subr.mxu0 0.0
    %5823 = vmatpush1.msra.mxu0 0.0
    %5824 = vmatprep.subr.mxu0 0.0
    %5825 = vmatpush1.msra.mxu0 0.0
    %5826 = vmatprep.subr.mxu0 0.0
    %5827 = vmatpush1.msra.mxu0 0.0
    %5828 = vmatprep.subr.mxu0 0.0
    %v5829 = vand.u32 %v4436, 4294901760
    %v5830 = vsub.f32 %v4436, %v5829
    %v5831 = vand.u32 %v5830, 4294901760
    %5832 = vmatpush1.msra.mxu0 %v5831
    %5833 = vmatprep.subr.mxu0 0.0
    %v5834 = vand.u32 %v4435, 4294901760
    %v5835 = vsub.f32 %v4435, %v5834
    %v5836 = vand.u32 %v5835, 4294901760
    %5837 = vmatpush1.msra.mxu0 %v5836
    %5838 = vmatprep.subr.mxu0 0.0
    %v5839 = vand.u32 %v4434, 4294901760
    %v5840 = vsub.f32 %v4434, %v5839
    %v5841 = vand.u32 %v5840, 4294901760
    %5842 = vmatpush1.msra.mxu0 %v5841
    %5843 = vmatprep.subr.mxu0 0.0
    %v5844 = vand.u32 %v4433, 4294901760
    %v5845 = vsub.f32 %v4433, %v5844
    %v5846 = vand.u32 %v5845, 4294901760
    %5847 = vmatpush1.msra.mxu0 %v5846
    %5848 = vmatprep.subr.mxu0 0.0
    %v5849 = vand.u32 %v4432, 4294901760
    %v5850 = vsub.f32 %v4432, %v5849
    %v5851 = vand.u32 %v5850, 4294901760
    %5852 = vmatpush1.msra.mxu0 %v5851
    %5853 = vmatprep.subr.mxu0 0.0
    %v5854 = vand.u32 %v4431, 4294901760
    %v5855 = vsub.f32 %v4431, %v5854
    %v5856 = vand.u32 %v5855, 4294901760
    %5857 = vmatpush1.msra.mxu0 %v5856
    %5858 = vmatprep.subr.mxu0 0.0
    %v5859 = vand.u32 %v4430, 4294901760
    %v5860 = vsub.f32 %v4430, %v5859
    %v5861 = vand.u32 %v5860, 4294901760
    %5862 = vmatpush1.msra.mxu0 %v5861
    %5863 = vmatprep.subr.mxu0 0.0
    %v5864 = vand.u32 %v4429, 4294901760
    %v5865 = vsub.f32 %v4429, %v5864
    %v5866 = vand.u32 %v5865, 4294901760
    %5867 = vmatpush1.msra.mxu0 %v5866
    %5868 = vmatprep.subr.mxu0 0.0
    %5869 = vmatpush2.msra.mxu0 0.0
    %5870 = vmatprep.subr.mxu0 0.0
    %5871 = vmatpush2.msra.mxu0 0.0
    %5872 = vmatprep.subr.mxu0 0.0
    %5873 = vmatpush2.msra.mxu0 0.0
    %5874 = vmatprep.subr.mxu0 0.0
    %5875 = vmatpush2.msra.mxu0 0.0
    %5876 = vmatprep.subr.mxu0 0.0
    %5877 = vmatpush2.msra.mxu0 0.0
    %5878 = vmatprep.subr.mxu0 0.0
    %5879 = vmatpush2.msra.mxu0 0.0
    %5880 = vmatprep.subr.mxu0 0.0
    %5881 = vmatpush2.msra.mxu0 0.0
    %5882 = vmatprep.subr.mxu0 0.0
    %5883 = vmatpush2.msra.mxu0 0.0
    %5884 = vmatprep.subr.mxu0 0.0
    %5885 = vmatpush2.msra.mxu0 0.0
    %5886 = vmatprep.subr.mxu0 0.0
    %5887 = vmatpush2.msra.mxu0 0.0
    %5888 = vmatprep.subr.mxu0 0.0
    %5889 = vmatpush2.msra.mxu0 0.0
    %5890 = vmatprep.subr.mxu0 0.0
    %5891 = vmatpush2.msra.mxu0 0.0
    %5892 = vmatprep.subr.mxu0 0.0
    %5893 = vmatpush2.msra.mxu0 0.0
    %5894 = vmatprep.subr.mxu0 0.0
    %5895 = vmatpush2.msra.mxu0 0.0
    %5896 = vmatprep.subr.mxu0 0.0
    %5897 = vmatpush2.msra.mxu0 0.0
    %5898 = vmatprep.subr.mxu0 0.0
    %5899 = vmatpush2.msra.mxu0 0.0
    %5900 = vmatprep.mubr.f32.mxu0 0.0
    %v5901 = vand.u32 %v5447, 4294901760
    %5902 = vmatmul.mubr.f32.gmra.mxu0 %v5901
    %v5903 = vpop.f32.mrf.mxu0
    %v5904 = vadd.f32 %v5809, %v5903
    %v5905 = vpop.f32.mrf.mxu0
    %5906 = vdwg.mxu0
    %5907 = vmatprep.subr.mxu0 0.0
    %5908 = vmatpush1.msra.mxu0 0.0
    %5909 = vmatprep.subr.mxu0 0.0
    %5910 = vmatpush1.msra.mxu0 0.0
    %5911 = vmatprep.subr.mxu0 0.0
    %5912 = vmatpush1.msra.mxu0 0.0
    %5913 = vmatprep.subr.mxu0 0.0
    %5914 = vmatpush1.msra.mxu0 0.0
    %5915 = vmatprep.subr.mxu0 0.0
    %5916 = vmatpush1.msra.mxu0 0.0
    %5917 = vmatprep.subr.mxu0 0.0
    %5918 = vmatpush1.msra.mxu0 0.0
    %5919 = vmatprep.subr.mxu0 0.0
    %5920 = vmatpush1.msra.mxu0 0.0
    %5921 = vmatprep.subr.mxu0 0.0
    %5922 = vmatpush1.msra.mxu0 0.0
    %5923 = vmatprep.subr.mxu0 0.0
    %v5924 = vand.u32 %v4436, 4294901760
    %5925 = vmatpush1.msra.mxu0 %v5924
    %5926 = vmatprep.subr.mxu0 0.0
    %v5927 = vand.u32 %v4435, 4294901760
    %5928 = vmatpush1.msra.mxu0 %v5927
    %5929 = vmatprep.subr.mxu0 0.0
    %v5930 = vand.u32 %v4434, 4294901760
    %5931 = vmatpush1.msra.mxu0 %v5930
    %5932 = vmatprep.subr.mxu0 0.0
    %v5933 = vand.u32 %v4433, 4294901760
    %5934 = vmatpush1.msra.mxu0 %v5933
    %5935 = vmatprep.subr.mxu0 0.0
    %v5936 = vand.u32 %v4432, 4294901760
    %5937 = vmatpush1.msra.mxu0 %v5936
    %5938 = vmatprep.subr.mxu0 0.0
    %v5939 = vand.u32 %v4431, 4294901760
    %5940 = vmatpush1.msra.mxu0 %v5939
    %5941 = vmatprep.subr.mxu0 0.0
    %v5942 = vand.u32 %v4430, 4294901760
    %5943 = vmatpush1.msra.mxu0 %v5942
    %5944 = vmatprep.subr.mxu0 0.0
    %v5945 = vand.u32 %v4429, 4294901760
    %5946 = vmatpush1.msra.mxu0 %v5945
    %5947 = vmatprep.subr.mxu0 0.0
    %5948 = vmatpush2.msra.mxu0 0.0
    %5949 = vmatprep.subr.mxu0 0.0
    %5950 = vmatpush2.msra.mxu0 0.0
    %5951 = vmatprep.subr.mxu0 0.0
    %5952 = vmatpush2.msra.mxu0 0.0
    %5953 = vmatprep.subr.mxu0 0.0
    %5954 = vmatpush2.msra.mxu0 0.0
    %5955 = vmatprep.subr.mxu0 0.0
    %5956 = vmatpush2.msra.mxu0 0.0
    %5957 = vmatprep.subr.mxu0 0.0
    %5958 = vmatpush2.msra.mxu0 0.0
    %5959 = vmatprep.subr.mxu0 0.0
    %5960 = vmatpush2.msra.mxu0 0.0
    %5961 = vmatprep.subr.mxu0 0.0
    %5962 = vmatpush2.msra.mxu0 0.0
    %5963 = vmatprep.subr.mxu0 0.0
    %5964 = vmatpush2.msra.mxu0 0.0
    %5965 = vmatprep.subr.mxu0 0.0
    %5966 = vmatpush2.msra.mxu0 0.0
    %5967 = vmatprep.subr.mxu0 0.0
    %5968 = vmatpush2.msra.mxu0 0.0
    %5969 = vmatprep.subr.mxu0 0.0
    %5970 = vmatpush2.msra.mxu0 0.0
    %5971 = vmatprep.subr.mxu0 0.0
    %5972 = vmatpush2.msra.mxu0 0.0
    %5973 = vmatprep.subr.mxu0 0.0
    %5974 = vmatpush2.msra.mxu0 0.0
    %5975 = vmatprep.subr.mxu0 0.0
    %5976 = vmatpush2.msra.mxu0 0.0
    %5977 = vmatprep.subr.mxu0 0.0
    %5978 = vmatpush2.msra.mxu0 0.0
    %5979 = vmatprep.mubr.f32.mxu0 0.0
    %v5980 = vand.u32 %v5447, 4294901760
    %5981 = vmatmul.mubr.f32.gmra.mxu0 %v5980
    %v5982 = vpop.f32.mrf.mxu0
    %v5983 = vadd.f32 %v5904, %v5982
    %v5984 = vpop.f32.mrf.mxu0
    %5985 = vdwg.mxu0
    %5986 = vmatprep.subr.mxu0 0.0
    %5987 = vmatpush1.msra.mxu0 0.0
    %5988 = vmatprep.subr.mxu0 0.0
    %5989 = vmatpush1.msra.mxu0 0.0
    %5990 = vmatprep.subr.mxu0 0.0
    %5991 = vmatpush1.msra.mxu0 0.0
    %5992 = vmatprep.subr.mxu0 0.0
    %5993 = vmatpush1.msra.mxu0 0.0
    %5994 = vmatprep.subr.mxu0 0.0
    %5995 = vmatpush1.msra.mxu0 0.0
    %5996 = vmatprep.subr.mxu0 0.0
    %5997 = vmatpush1.msra.mxu0 0.0
    %5998 = vmatprep.subr.mxu0 0.0
    %5999 = vmatpush1.msra.mxu0 0.0
    %6000 = vmatprep.subr.mxu0 0.0
    %6001 = vmatpush1.msra.mxu0 0.0
    %6002 = vmatprep.subr.mxu0 0.0
    %v6003 = vand.u32 %v4445, 4294901760
    %6004 = vmatpush1.msra.mxu0 %v6003
    %6005 = vmatprep.subr.mxu0 0.0
    %v6006 = vand.u32 %v4444, 4294901760
    %6007 = vmatpush1.msra.mxu0 %v6006
    %6008 = vmatprep.subr.mxu0 0.0
    %v6009 = vand.u32 %v4443, 4294901760
    %6010 = vmatpush1.msra.mxu0 %v6009
    %6011 = vmatprep.subr.mxu0 0.0
    %v6012 = vand.u32 %v4442, 4294901760
    %6013 = vmatpush1.msra.mxu0 %v6012
    %6014 = vmatprep.subr.mxu0 0.0
    %v6015 = vand.u32 %v4441, 4294901760
    %6016 = vmatpush1.msra.mxu0 %v6015
    %6017 = vmatprep.subr.mxu0 0.0
    %v6018 = vand.u32 %v4440, 4294901760
    %6019 = vmatpush1.msra.mxu0 %v6018
    %6020 = vmatprep.subr.mxu0 0.0
    %v6021 = vand.u32 %v4439, 4294901760
    %6022 = vmatpush1.msra.mxu0 %v6021
    %6023 = vmatprep.subr.mxu0 0.0
    %v6024 = vand.u32 %v4438, 4294901760
    %6025 = vmatpush1.msra.mxu0 %v6024
    %6026 = vmatprep.subr.mxu0 0.0
    %6027 = vmatpush2.msra.mxu0 0.0
    %6028 = vmatprep.subr.mxu0 0.0
    %6029 = vmatpush2.msra.mxu0 0.0
    %6030 = vmatprep.subr.mxu0 0.0
    %6031 = vmatpush2.msra.mxu0 0.0
    %6032 = vmatprep.subr.mxu0 0.0
    %6033 = vmatpush2.msra.mxu0 0.0
    %6034 = vmatprep.subr.mxu0 0.0
    %6035 = vmatpush2.msra.mxu0 0.0
    %6036 = vmatprep.subr.mxu0 0.0
    %6037 = vmatpush2.msra.mxu0 0.0
    %6038 = vmatprep.subr.mxu0 0.0
    %6039 = vmatpush2.msra.mxu0 0.0
    %6040 = vmatprep.subr.mxu0 0.0
    %6041 = vmatpush2.msra.mxu0 0.0
    %6042 = vmatprep.subr.mxu0 0.0
    %6043 = vmatpush2.msra.mxu0 0.0
    %6044 = vmatprep.subr.mxu0 0.0
    %6045 = vmatpush2.msra.mxu0 0.0
    %6046 = vmatprep.subr.mxu0 0.0
    %6047 = vmatpush2.msra.mxu0 0.0
    %6048 = vmatprep.subr.mxu0 0.0
    %6049 = vmatpush2.msra.mxu0 0.0
    %6050 = vmatprep.subr.mxu0 0.0
    %6051 = vmatpush2.msra.mxu0 0.0
    %6052 = vmatprep.subr.mxu0 0.0
    %6053 = vmatpush2.msra.mxu0 0.0
    %6054 = vmatprep.subr.mxu0 0.0
    %6055 = vmatpush2.msra.mxu0 0.0
    %6056 = vmatprep.subr.mxu0 0.0
    %6057 = vmatpush2.msra.mxu0 0.0
    %6058 = vmatprep.mubr.f32.mxu0 0.0
    %v6059 = vand.u32 %v5447, 4294901760
    %v6060 = vsub.f32 %v5447, %v6059
    %v6061 = vand.u32 %v6060, 4294901760
    %v6062 = vsub.f32 %v6060, %v6061
    %v6063 = vand.u32 %v6062, 4294901760
    %6064 = vmatmul.mubr.f32.gmra.mxu0 %v6063
    %v6065 = vpop.f32.mrf.mxu0
    %v6066 = vadd.f32 %v4446, %v6065
    %v6067 = vpop.f32.mrf.mxu0
    %6068 = vdwg.mxu0
    %6069 = vmatprep.subr.mxu0 0.0
    %6070 = vmatpush1.msra.mxu0 0.0
    %6071 = vmatprep.subr.mxu0 0.0
    %6072 = vmatpush1.msra.mxu0 0.0
    %6073 = vmatprep.subr.mxu0 0.0
    %6074 = vmatpush1.msra.mxu0 0.0
    %6075 = vmatprep.subr.mxu0 0.0
    %6076 = vmatpush1.msra.mxu0 0.0
    %6077 = vmatprep.subr.mxu0 0.0
    %6078 = vmatpush1.msra.mxu0 0.0
    %6079 = vmatprep.subr.mxu0 0.0
    %6080 = vmatpush1.msra.mxu0 0.0
    %6081 = vmatprep.subr.mxu0 0.0
    %6082 = vmatpush1.msra.mxu0 0.0
    %6083 = vmatprep.subr.mxu0 0.0
    %6084 = vmatpush1.msra.mxu0 0.0
    %6085 = vmatprep.subr.mxu0 0.0
    %v6086 = vand.u32 %v4445, 4294901760
    %v6087 = vsub.f32 %v4445, %v6086
    %v6088 = vand.u32 %v6087, 4294901760
    %v6089 = vsub.f32 %v6087, %v6088
    %v6090 = vand.u32 %v6089, 4294901760
    %6091 = vmatpush1.msra.mxu0 %v6090
    %6092 = vmatprep.subr.mxu0 0.0
    %v6093 = vand.u32 %v4444, 4294901760
    %v6094 = vsub.f32 %v4444, %v6093
    %v6095 = vand.u32 %v6094, 4294901760
    %v6096 = vsub.f32 %v6094, %v6095
    %v6097 = vand.u32 %v6096, 4294901760
    %6098 = vmatpush1.msra.mxu0 %v6097
    %6099 = vmatprep.subr.mxu0 0.0
    %v6100 = vand.u32 %v4443, 4294901760
    %v6101 = vsub.f32 %v4443, %v6100
    %v6102 = vand.u32 %v6101, 4294901760
    %v6103 = vsub.f32 %v6101, %v6102
    %v6104 = vand.u32 %v6103, 4294901760
    %6105 = vmatpush1.msra.mxu0 %v6104
    %6106 = vmatprep.subr.mxu0 0.0
    %v6107 = vand.u32 %v4442, 4294901760
    %v6108 = vsub.f32 %v4442, %v6107
    %v6109 = vand.u32 %v6108, 4294901760
    %v6110 = vsub.f32 %v6108, %v6109
    %v6111 = vand.u32 %v6110, 4294901760
    %6112 = vmatpush1.msra.mxu0 %v6111
    %6113 = vmatprep.subr.mxu0 0.0
    %v6114 = vand.u32 %v4441, 4294901760
    %v6115 = vsub.f32 %v4441, %v6114
    %v6116 = vand.u32 %v6115, 4294901760
    %v6117 = vsub.f32 %v6115, %v6116
    %v6118 = vand.u32 %v6117, 4294901760
    %6119 = vmatpush1.msra.mxu0 %v6118
    %6120 = vmatprep.subr.mxu0 0.0
    %v6121 = vand.u32 %v4440, 4294901760
    %v6122 = vsub.f32 %v4440, %v6121
    %v6123 = vand.u32 %v6122, 4294901760
    %v6124 = vsub.f32 %v6122, %v6123
    %v6125 = vand.u32 %v6124, 4294901760
    %6126 = vmatpush1.msra.mxu0 %v6125
    %6127 = vmatprep.subr.mxu0 0.0
    %v6128 = vand.u32 %v4439, 4294901760
    %v6129 = vsub.f32 %v4439, %v6128
    %v6130 = vand.u32 %v6129, 4294901760
    %v6131 = vsub.f32 %v6129, %v6130
    %v6132 = vand.u32 %v6131, 4294901760
    %6133 = vmatpush1.msra.mxu0 %v6132
    %6134 = vmatprep.subr.mxu0 0.0
    %v6135 = vand.u32 %v4438, 4294901760
    %v6136 = vsub.f32 %v4438, %v6135
    %v6137 = vand.u32 %v6136, 4294901760
    %v6138 = vsub.f32 %v6136, %v6137
    %v6139 = vand.u32 %v6138, 4294901760
    %6140 = vmatpush1.msra.mxu0 %v6139
    %6141 = vmatprep.subr.mxu0 0.0
    %6142 = vmatpush2.msra.mxu0 0.0
    %6143 = vmatprep.subr.mxu0 0.0
    %6144 = vmatpush2.msra.mxu0 0.0
    %6145 = vmatprep.subr.mxu0 0.0
    %6146 = vmatpush2.msra.mxu0 0.0
    %6147 = vmatprep.subr.mxu0 0.0
    %6148 = vmatpush2.msra.mxu0 0.0
    %6149 = vmatprep.subr.mxu0 0.0
    %6150 = vmatpush2.msra.mxu0 0.0
    %6151 = vmatprep.subr.mxu0 0.0
    %6152 = vmatpush2.msra.mxu0 0.0
    %6153 = vmatprep.subr.mxu0 0.0
    %6154 = vmatpush2.msra.mxu0 0.0
    %6155 = vmatprep.subr.mxu0 0.0
    %6156 = vmatpush2.msra.mxu0 0.0
    %6157 = vmatprep.subr.mxu0 0.0
    %6158 = vmatpush2.msra.mxu0 0.0
    %6159 = vmatprep.subr.mxu0 0.0
    %6160 = vmatpush2.msra.mxu0 0.0
    %6161 = vmatprep.subr.mxu0 0.0
    %6162 = vmatpush2.msra.mxu0 0.0
    %6163 = vmatprep.subr.mxu0 0.0
    %6164 = vmatpush2.msra.mxu0 0.0
    %6165 = vmatprep.subr.mxu0 0.0
    %6166 = vmatpush2.msra.mxu0 0.0
    %6167 = vmatprep.subr.mxu0 0.0
    %6168 = vmatpush2.msra.mxu0 0.0
    %6169 = vmatprep.subr.mxu0 0.0
    %6170 = vmatpush2.msra.mxu0 0.0
    %6171 = vmatprep.subr.mxu0 0.0
    %6172 = vmatpush2.msra.mxu0 0.0
    %6173 = vmatprep.mubr.f32.mxu0 0.0
    %v6174 = vand.u32 %v5447, 4294901760
    %6175 = vmatmul.mubr.f32.gmra.mxu0 %v6174
    %v6176 = vpop.f32.mrf.mxu0
    %v6177 = vadd.f32 %v6066, %v6176
    %v6178 = vpop.f32.mrf.mxu0
    %6179 = vdwg.mxu0
    %6180 = vmatprep.subr.mxu0 0.0
    %6181 = vmatpush1.msra.mxu0 0.0
    %6182 = vmatprep.subr.mxu0 0.0
    %6183 = vmatpush1.msra.mxu0 0.0
    %6184 = vmatprep.subr.mxu0 0.0
    %6185 = vmatpush1.msra.mxu0 0.0
    %6186 = vmatprep.subr.mxu0 0.0
    %6187 = vmatpush1.msra.mxu0 0.0
    %6188 = vmatprep.subr.mxu0 0.0
    %6189 = vmatpush1.msra.mxu0 0.0
    %6190 = vmatprep.subr.mxu0 0.0
    %6191 = vmatpush1.msra.mxu0 0.0
    %6192 = vmatprep.subr.mxu0 0.0
    %6193 = vmatpush1.msra.mxu0 0.0
    %6194 = vmatprep.subr.mxu0 0.0
    %6195 = vmatpush1.msra.mxu0 0.0
    %6196 = vmatprep.subr.mxu0 0.0
    %v6197 = vand.u32 %v4445, 4294901760
    %v6198 = vsub.f32 %v4445, %v6197
    %6199 = vmatpush1.msra.mxu0 %v6198
    %6200 = vmatprep.subr.mxu0 0.0
    %v6201 = vand.u32 %v4444, 4294901760
    %v6202 = vsub.f32 %v4444, %v6201
    %6203 = vmatpush1.msra.mxu0 %v6202
    %6204 = vmatprep.subr.mxu0 0.0
    %v6205 = vand.u32 %v4443, 4294901760
    %v6206 = vsub.f32 %v4443, %v6205
    %6207 = vmatpush1.msra.mxu0 %v6206
    %6208 = vmatprep.subr.mxu0 0.0
    %v6209 = vand.u32 %v4442, 4294901760
    %v6210 = vsub.f32 %v4442, %v6209
    %6211 = vmatpush1.msra.mxu0 %v6210
    %6212 = vmatprep.subr.mxu0 0.0
    %v6213 = vand.u32 %v4441, 4294901760
    %v6214 = vsub.f32 %v4441, %v6213
    %6215 = vmatpush1.msra.mxu0 %v6214
    %6216 = vmatprep.subr.mxu0 0.0
    %v6217 = vand.u32 %v4440, 4294901760
    %v6218 = vsub.f32 %v4440, %v6217
    %6219 = vmatpush1.msra.mxu0 %v6218
    %6220 = vmatprep.subr.mxu0 0.0
    %v6221 = vand.u32 %v4439, 4294901760
    %v6222 = vsub.f32 %v4439, %v6221
    %6223 = vmatpush1.msra.mxu0 %v6222
    %6224 = vmatprep.subr.mxu0 0.0
    %v6225 = vand.u32 %v4438, 4294901760
    %v6226 = vsub.f32 %v4438, %v6225
    %6227 = vmatpush1.msra.mxu0 %v6226
    %6228 = vmatprep.subr.mxu0 0.0
    %6229 = vmatpush2.msra.mxu0 0.0
    %6230 = vmatprep.subr.mxu0 0.0
    %6231 = vmatpush2.msra.mxu0 0.0
    %6232 = vmatprep.subr.mxu0 0.0
    %6233 = vmatpush2.msra.mxu0 0.0
    %6234 = vmatprep.subr.mxu0 0.0
    %6235 = vmatpush2.msra.mxu0 0.0
    %6236 = vmatprep.subr.mxu0 0.0
    %6237 = vmatpush2.msra.mxu0 0.0
    %6238 = vmatprep.subr.mxu0 0.0
    %6239 = vmatpush2.msra.mxu0 0.0
    %6240 = vmatprep.subr.mxu0 0.0
    %6241 = vmatpush2.msra.mxu0 0.0
    %6242 = vmatprep.subr.mxu0 0.0
    %6243 = vmatpush2.msra.mxu0 0.0
    %6244 = vmatprep.subr.mxu0 0.0
    %6245 = vmatpush2.msra.mxu0 0.0
    %6246 = vmatprep.subr.mxu0 0.0
    %6247 = vmatpush2.msra.mxu0 0.0
    %6248 = vmatprep.subr.mxu0 0.0
    %6249 = vmatpush2.msra.mxu0 0.0
    %6250 = vmatprep.subr.mxu0 0.0
    %6251 = vmatpush2.msra.mxu0 0.0
    %6252 = vmatprep.subr.mxu0 0.0
    %6253 = vmatpush2.msra.mxu0 0.0
    %6254 = vmatprep.subr.mxu0 0.0
    %6255 = vmatpush2.msra.mxu0 0.0
    %6256 = vmatprep.subr.mxu0 0.0
    %6257 = vmatpush2.msra.mxu0 0.0
    %6258 = vmatprep.subr.mxu0 0.0
    %6259 = vmatpush2.msra.mxu0 0.0
    %6260 = vmatprep.mubr.f32.mxu0 0.0
    %v6261 = vand.u32 %v5447, 4294901760
    %v6262 = vsub.f32 %v5447, %v6261
    %6263 = vmatmul.mubr.f32.gmra.mxu0 %v6262
    %v6264 = vpop.f32.mrf.mxu0
    %v6265 = vadd.f32 %v6177, %v6264
    %v6266 = vpop.f32.mrf.mxu0
    %6267 = vdwg.mxu0
    %6268 = vmatprep.subr.mxu0 0.0
    %6269 = vmatpush1.msra.mxu0 0.0
    %6270 = vmatprep.subr.mxu0 0.0
    %6271 = vmatpush1.msra.mxu0 0.0
    %6272 = vmatprep.subr.mxu0 0.0
    %6273 = vmatpush1.msra.mxu0 0.0
    %6274 = vmatprep.subr.mxu0 0.0
    %6275 = vmatpush1.msra.mxu0 0.0
    %6276 = vmatprep.subr.mxu0 0.0
    %6277 = vmatpush1.msra.mxu0 0.0
    %6278 = vmatprep.subr.mxu0 0.0
    %6279 = vmatpush1.msra.mxu0 0.0
    %6280 = vmatprep.subr.mxu0 0.0
    %6281 = vmatpush1.msra.mxu0 0.0
    %6282 = vmatprep.subr.mxu0 0.0
    %6283 = vmatpush1.msra.mxu0 0.0
    %6284 = vmatprep.subr.mxu0 0.0
    %v6285 = vand.u32 %v4445, 4294901760
    %6286 = vmatpush1.msra.mxu0 %v6285
    %6287 = vmatprep.subr.mxu0 0.0
    %v6288 = vand.u32 %v4444, 4294901760
    %6289 = vmatpush1.msra.mxu0 %v6288
    %6290 = vmatprep.subr.mxu0 0.0
    %v6291 = vand.u32 %v4443, 4294901760
    %6292 = vmatpush1.msra.mxu0 %v6291
    %6293 = vmatprep.subr.mxu0 0.0
    %v6294 = vand.u32 %v4442, 4294901760
    %6295 = vmatpush1.msra.mxu0 %v6294
    %6296 = vmatprep.subr.mxu0 0.0
    %v6297 = vand.u32 %v4441, 4294901760
    %6298 = vmatpush1.msra.mxu0 %v6297
    %6299 = vmatprep.subr.mxu0 0.0
    %v6300 = vand.u32 %v4440, 4294901760
    %6301 = vmatpush1.msra.mxu0 %v6300
    %6302 = vmatprep.subr.mxu0 0.0
    %v6303 = vand.u32 %v4439, 4294901760
    %6304 = vmatpush1.msra.mxu0 %v6303
    %6305 = vmatprep.subr.mxu0 0.0
    %v6306 = vand.u32 %v4438, 4294901760
    %6307 = vmatpush1.msra.mxu0 %v6306
    %6308 = vmatprep.subr.mxu0 0.0
    %6309 = vmatpush2.msra.mxu0 0.0
    %6310 = vmatprep.subr.mxu0 0.0
    %6311 = vmatpush2.msra.mxu0 0.0
    %6312 = vmatprep.subr.mxu0 0.0
    %6313 = vmatpush2.msra.mxu0 0.0
    %6314 = vmatprep.subr.mxu0 0.0
    %6315 = vmatpush2.msra.mxu0 0.0
    %6316 = vmatprep.subr.mxu0 0.0
    %6317 = vmatpush2.msra.mxu0 0.0
    %6318 = vmatprep.subr.mxu0 0.0
    %6319 = vmatpush2.msra.mxu0 0.0
    %6320 = vmatprep.subr.mxu0 0.0
    %6321 = vmatpush2.msra.mxu0 0.0
    %6322 = vmatprep.subr.mxu0 0.0
    %6323 = vmatpush2.msra.mxu0 0.0
    %6324 = vmatprep.subr.mxu0 0.0
    %6325 = vmatpush2.msra.mxu0 0.0
    %6326 = vmatprep.subr.mxu0 0.0
    %6327 = vmatpush2.msra.mxu0 0.0
    %6328 = vmatprep.subr.mxu0 0.0
    %6329 = vmatpush2.msra.mxu0 0.0
    %6330 = vmatprep.subr.mxu0 0.0
    %6331 = vmatpush2.msra.mxu0 0.0
    %6332 = vmatprep.subr.mxu0 0.0
    %6333 = vmatpush2.msra.mxu0 0.0
    %6334 = vmatprep.subr.mxu0 0.0
    %6335 = vmatpush2.msra.mxu0 0.0
    %6336 = vmatprep.subr.mxu0 0.0
    %6337 = vmatpush2.msra.mxu0 0.0
    %6338 = vmatprep.subr.mxu0 0.0
    %6339 = vmatpush2.msra.mxu0 0.0
    %6340 = vmatprep.mubr.f32.mxu0 0.0
    %v6341 = vand.u32 %v5447, 4294901760
    %v6342 = vsub.f32 %v5447, %v6341
    %v6343 = vand.u32 %v6342, 4294901760
    %6344 = vmatmul.mubr.f32.gmra.mxu0 %v6343
    %v6345 = vpop.f32.mrf.mxu0
    %v6346 = vadd.f32 %v6265, %v6345
    %v6347 = vpop.f32.mrf.mxu0
    %6348 = vdwg.mxu0
    %6349 = vmatprep.subr.mxu0 0.0
    %6350 = vmatpush1.msra.mxu0 0.0
    %6351 = vmatprep.subr.mxu0 0.0
    %6352 = vmatpush1.msra.mxu0 0.0
    %6353 = vmatprep.subr.mxu0 0.0
    %6354 = vmatpush1.msra.mxu0 0.0
    %6355 = vmatprep.subr.mxu0 0.0
    %6356 = vmatpush1.msra.mxu0 0.0
    %6357 = vmatprep.subr.mxu0 0.0
    %6358 = vmatpush1.msra.mxu0 0.0
    %6359 = vmatprep.subr.mxu0 0.0
    %6360 = vmatpush1.msra.mxu0 0.0
    %6361 = vmatprep.subr.mxu0 0.0
    %6362 = vmatpush1.msra.mxu0 0.0
    %6363 = vmatprep.subr.mxu0 0.0
    %6364 = vmatpush1.msra.mxu0 0.0
    %6365 = vmatprep.subr.mxu0 0.0
    %v6366 = vand.u32 %v4445, 4294901760
    %v6367 = vsub.f32 %v4445, %v6366
    %v6368 = vand.u32 %v6367, 4294901760
    %6369 = vmatpush1.msra.mxu0 %v6368
    %6370 = vmatprep.subr.mxu0 0.0
    %v6371 = vand.u32 %v4444, 4294901760
    %v6372 = vsub.f32 %v4444, %v6371
    %v6373 = vand.u32 %v6372, 4294901760
    %6374 = vmatpush1.msra.mxu0 %v6373
    %6375 = vmatprep.subr.mxu0 0.0
    %v6376 = vand.u32 %v4443, 4294901760
    %v6377 = vsub.f32 %v4443, %v6376
    %v6378 = vand.u32 %v6377, 4294901760
    %6379 = vmatpush1.msra.mxu0 %v6378
    %6380 = vmatprep.subr.mxu0 0.0
    %v6381 = vand.u32 %v4442, 4294901760
    %v6382 = vsub.f32 %v4442, %v6381
    %v6383 = vand.u32 %v6382, 4294901760
    %6384 = vmatpush1.msra.mxu0 %v6383
    %6385 = vmatprep.subr.mxu0 0.0
    %v6386 = vand.u32 %v4441, 4294901760
    %v6387 = vsub.f32 %v4441, %v6386
    %v6388 = vand.u32 %v6387, 4294901760
    %6389 = vmatpush1.msra.mxu0 %v6388
    %6390 = vmatprep.subr.mxu0 0.0
    %v6391 = vand.u32 %v4440, 4294901760
    %v6392 = vsub.f32 %v4440, %v6391
    %v6393 = vand.u32 %v6392, 4294901760
    %6394 = vmatpush1.msra.mxu0 %v6393
    %6395 = vmatprep.subr.mxu0 0.0
    %v6396 = vand.u32 %v4439, 4294901760
    %v6397 = vsub.f32 %v4439, %v6396
    %v6398 = vand.u32 %v6397, 4294901760
    %6399 = vmatpush1.msra.mxu0 %v6398
    %6400 = vmatprep.subr.mxu0 0.0
    %v6401 = vand.u32 %v4438, 4294901760
    %v6402 = vsub.f32 %v4438, %v6401
    %v6403 = vand.u32 %v6402, 4294901760
    %6404 = vmatpush1.msra.mxu0 %v6403
    %6405 = vmatprep.subr.mxu0 0.0
    %6406 = vmatpush2.msra.mxu0 0.0
    %6407 = vmatprep.subr.mxu0 0.0
    %6408 = vmatpush2.msra.mxu0 0.0
    %6409 = vmatprep.subr.mxu0 0.0
    %6410 = vmatpush2.msra.mxu0 0.0
    %6411 = vmatprep.subr.mxu0 0.0
    %6412 = vmatpush2.msra.mxu0 0.0
    %6413 = vmatprep.subr.mxu0 0.0
    %6414 = vmatpush2.msra.mxu0 0.0
    %6415 = vmatprep.subr.mxu0 0.0
    %6416 = vmatpush2.msra.mxu0 0.0
    %6417 = vmatprep.subr.mxu0 0.0
    %6418 = vmatpush2.msra.mxu0 0.0
    %6419 = vmatprep.subr.mxu0 0.0
    %6420 = vmatpush2.msra.mxu0 0.0
    %6421 = vmatprep.subr.mxu0 0.0
    %6422 = vmatpush2.msra.mxu0 0.0
    %6423 = vmatprep.subr.mxu0 0.0
    %6424 = vmatpush2.msra.mxu0 0.0
    %6425 = vmatprep.subr.mxu0 0.0
    %6426 = vmatpush2.msra.mxu0 0.0
    %6427 = vmatprep.subr.mxu0 0.0
    %6428 = vmatpush2.msra.mxu0 0.0
    %6429 = vmatprep.subr.mxu0 0.0
    %6430 = vmatpush2.msra.mxu0 0.0
    %6431 = vmatprep.subr.mxu0 0.0
    %6432 = vmatpush2.msra.mxu0 0.0
    %6433 = vmatprep.subr.mxu0 0.0
    %6434 = vmatpush2.msra.mxu0 0.0
    %6435 = vmatprep.subr.mxu0 0.0
    %6436 = vmatpush2.msra.mxu0 0.0
    %6437 = vmatprep.mubr.f32.mxu0 0.0
    %v6438 = vand.u32 %v5447, 4294901760
    %6439 = vmatmul.mubr.f32.gmra.mxu0 %v6438
    %v6440 = vpop.f32.mrf.mxu0
    %v6441 = vadd.f32 %v6346, %v6440
    %v6442 = vpop.f32.mrf.mxu0
    %6443 = vdwg.mxu0
    %6444 = vmatprep.subr.mxu0 0.0
    %6445 = vmatpush1.msra.mxu0 0.0
    %6446 = vmatprep.subr.mxu0 0.0
    %6447 = vmatpush1.msra.mxu0 0.0
    %6448 = vmatprep.subr.mxu0 0.0
    %6449 = vmatpush1.msra.mxu0 0.0
    %6450 = vmatprep.subr.mxu0 0.0
    %6451 = vmatpush1.msra.mxu0 0.0
    %6452 = vmatprep.subr.mxu0 0.0
    %6453 = vmatpush1.msra.mxu0 0.0
    %6454 = vmatprep.subr.mxu0 0.0
    %6455 = vmatpush1.msra.mxu0 0.0
    %6456 = vmatprep.subr.mxu0 0.0
    %6457 = vmatpush1.msra.mxu0 0.0
    %6458 = vmatprep.subr.mxu0 0.0
    %6459 = vmatpush1.msra.mxu0 0.0
    %6460 = vmatprep.subr.mxu0 0.0
    %v6461 = vand.u32 %v4445, 4294901760
    %6462 = vmatpush1.msra.mxu0 %v6461
    %6463 = vmatprep.subr.mxu0 0.0
    %v6464 = vand.u32 %v4444, 4294901760
    %6465 = vmatpush1.msra.mxu0 %v6464
    %6466 = vmatprep.subr.mxu0 0.0
    %v6467 = vand.u32 %v4443, 4294901760
    %6468 = vmatpush1.msra.mxu0 %v6467
    %6469 = vmatprep.subr.mxu0 0.0
    %v6470 = vand.u32 %v4442, 4294901760
    %6471 = vmatpush1.msra.mxu0 %v6470
    %6472 = vmatprep.subr.mxu0 0.0
    %v6473 = vand.u32 %v4441, 4294901760
    %6474 = vmatpush1.msra.mxu0 %v6473
    %6475 = vmatprep.subr.mxu0 0.0
    %v6476 = vand.u32 %v4440, 4294901760
    %6477 = vmatpush1.msra.mxu0 %v6476
    %6478 = vmatprep.subr.mxu0 0.0
    %v6479 = vand.u32 %v4439, 4294901760
    %6480 = vmatpush1.msra.mxu0 %v6479
    %6481 = vmatprep.subr.mxu0 0.0
    %v6482 = vand.u32 %v4438, 4294901760
    %6483 = vmatpush1.msra.mxu0 %v6482
    %6484 = vmatprep.subr.mxu0 0.0
    %6485 = vmatpush2.msra.mxu0 0.0
    %6486 = vmatprep.subr.mxu0 0.0
    %6487 = vmatpush2.msra.mxu0 0.0
    %6488 = vmatprep.subr.mxu0 0.0
    %6489 = vmatpush2.msra.mxu0 0.0
    %6490 = vmatprep.subr.mxu0 0.0
    %6491 = vmatpush2.msra.mxu0 0.0
    %6492 = vmatprep.subr.mxu0 0.0
    %6493 = vmatpush2.msra.mxu0 0.0
    %6494 = vmatprep.subr.mxu0 0.0
    %6495 = vmatpush2.msra.mxu0 0.0
    %6496 = vmatprep.subr.mxu0 0.0
    %6497 = vmatpush2.msra.mxu0 0.0
    %6498 = vmatprep.subr.mxu0 0.0
    %6499 = vmatpush2.msra.mxu0 0.0
    %6500 = vmatprep.subr.mxu0 0.0
    %6501 = vmatpush2.msra.mxu0 0.0
    %6502 = vmatprep.subr.mxu0 0.0
    %6503 = vmatpush2.msra.mxu0 0.0
    %6504 = vmatprep.subr.mxu0 0.0
    %6505 = vmatpush2.msra.mxu0 0.0
    %6506 = vmatprep.subr.mxu0 0.0
    %6507 = vmatpush2.msra.mxu0 0.0
    %6508 = vmatprep.subr.mxu0 0.0
    %6509 = vmatpush2.msra.mxu0 0.0
    %6510 = vmatprep.subr.mxu0 0.0
    %6511 = vmatpush2.msra.mxu0 0.0
    %6512 = vmatprep.subr.mxu0 0.0
    %6513 = vmatpush2.msra.mxu0 0.0
    %6514 = vmatprep.subr.mxu0 0.0
    %6515 = vmatpush2.msra.mxu0 0.0
    %6516 = vmatprep.mubr.f32.mxu0 0.0
    %v6517 = vand.u32 %v5447, 4294901760
    %6518 = vmatmul.mubr.f32.gmra.mxu0 %v6517
    %v6519 = vpop.f32.mrf.mxu0
    %v6520 = vadd.f32 %v6441, %v6519
    %v6521 = vpop.f32.mrf.mxu0
    %6522 = vdwg.mxu0
    %6523 = vrot.lane.b32.xlu0 %v5442, 4
    %v6524 = vpop.permute.xlu0 %6523
    %6527 = vrot.lane.b32.xlu0 %v6520, 68
    %v6528 = vpop.permute.xlu0 %6527
    %v6530 = vsel %vm46, %v5983, %v6524
    %vm6531 = vcmask 556032
    %v6532 = vsel %vm6531, %v6530, %v6528
    %v6533 = vsel %vm6531, %v6528, 0.0
    %v6536 = vcombine.low %v6532, %v6533
    %v6538 = vunpack.c.l.s4 1966171168
    %v6539 = vunpack.c.0.s8 %v6538
    %v6540 = vlaneseq
    %v6541 = vshrl.u32 %v6540, 7
    %v6542 = vsub.s32 %v6539, %v6541
    %v6543 = vrot.slane %v6536, %v6542
    %v6545 = vunpack.c.l.s4 1966171168
    %v6546 = vunpack.c.0.s8 %v6545
    %v6547 = vlaneseq
    %v6548 = vshrl.u32 %v6547, 7
    %v6549 = vsub.s32 %v6546, %v6548
    %v6550 = vrot.slane %v6543, %v6549
    %v6552 = vlaneseq
    %vm6553 = vcmp.ge.s32.totalorder %v6552, 0
    %vm6554 = vcmp.lt.s32.totalorder %v6552, 256
    %vm6555 = vmand %vm6553, %vm6554
    %6556 = vst.msk [vmem:[#allocation9] ss:$2 sm:$0x3] %vm6555, %v6550
    %6557 = vrot.lane.b32.xlu0 %v4421, 96
    %v6558 = vpop.permute.xlu0 %6557
    %6559 = vrot.lane.b32.xlu0 %v4422, 96
    %v6560 = vpop.permute.xlu0 %6559
    %v6561 = vsel %vm3885, %v6558, 0
    %v6563 = vsel %vm3885, %v6560, 0
    %6565 = vmatprep.subr.mxu0 0.0
    %6566 = vmatpush1.msra.mxu0 0.0
    %6567 = vmatprep.subr.mxu0 0.0
    %6568 = vmatpush1.msra.mxu0 0.0
    %6569 = vmatprep.subr.mxu0 0.0
    %6570 = vmatpush1.msra.mxu0 0.0
    %6571 = vmatprep.subr.mxu0 0.0
    %6572 = vmatpush1.msra.mxu0 0.0
    %6573 = vmatprep.subr.mxu0 0.0
    %6574 = vmatpush1.msra.mxu0 0.0
    %6575 = vmatprep.subr.mxu0 0.0
    %6576 = vmatpush1.msra.mxu0 0.0
    %6577 = vmatprep.subr.mxu0 0.0
    %6578 = vmatpush1.msra.mxu0 0.0
    %6579 = vmatprep.subr.mxu0 0.0
    %6580 = vmatpush1.msra.mxu0 0.0
    %6581 = vmatprep.subr.mxu0 0.0
    %6582 = vmatpush1.msra.mxu0 0.0
    %6583 = vmatprep.subr.mxu0 0.0
    %6584 = vmatpush1.msra.mxu0 0.0
    %6585 = vmatprep.subr.mxu0 0.0
    %6586 = vmatpush1.msra.mxu0 0.0
    %6587 = vmatprep.subr.mxu0 0.0
    %6588 = vmatpush1.msra.mxu0 0.0
    %6589 = vmatprep.subr.mxu0 0.0
    %v6590 = vand.u32 %v4426, 4294901760
    %6591 = vmatpush1.msra.mxu0 %v6590
    %6592 = vmatprep.subr.mxu0 0.0
    %v6593 = vand.u32 %v4425, 4294901760
    %6594 = vmatpush1.msra.mxu0 %v6593
    %6595 = vmatprep.subr.mxu0 0.0
    %v6596 = vand.u32 %v4424, 4294901760
    %6597 = vmatpush1.msra.mxu0 %v6596
    %6598 = vmatprep.subr.mxu0 0.0
    %v6599 = vand.u32 %v4423, 4294901760
    %6600 = vmatpush1.msra.mxu0 %v6599
    %6601 = vmatprep.subr.mxu0 0.0
    %6602 = vmatpush2.msra.mxu0 0.0
    %6603 = vmatprep.subr.mxu0 0.0
    %6604 = vmatpush2.msra.mxu0 0.0
    %6605 = vmatprep.subr.mxu0 0.0
    %6606 = vmatpush2.msra.mxu0 0.0
    %6607 = vmatprep.subr.mxu0 0.0
    %6608 = vmatpush2.msra.mxu0 0.0
    %6609 = vmatprep.subr.mxu0 0.0
    %6610 = vmatpush2.msra.mxu0 0.0
    %6611 = vmatprep.subr.mxu0 0.0
    %6612 = vmatpush2.msra.mxu0 0.0
    %6613 = vmatprep.subr.mxu0 0.0
    %6614 = vmatpush2.msra.mxu0 0.0
    %6615 = vmatprep.subr.mxu0 0.0
    %6616 = vmatpush2.msra.mxu0 0.0
    %6617 = vmatprep.subr.mxu0 0.0
    %6618 = vmatpush2.msra.mxu0 0.0
    %6619 = vmatprep.subr.mxu0 0.0
    %6620 = vmatpush2.msra.mxu0 0.0
    %6621 = vmatprep.subr.mxu0 0.0
    %6622 = vmatpush2.msra.mxu0 0.0
    %6623 = vmatprep.subr.mxu0 0.0
    %6624 = vmatpush2.msra.mxu0 0.0
    %6625 = vmatprep.subr.mxu0 0.0
    %6626 = vmatpush2.msra.mxu0 0.0
    %6627 = vmatprep.subr.mxu0 0.0
    %6628 = vmatpush2.msra.mxu0 0.0
    %6629 = vmatprep.subr.mxu0 0.0
    %6630 = vmatpush2.msra.mxu0 0.0
    %6631 = vmatprep.subr.mxu0 0.0
    %6632 = vmatpush2.msra.mxu0 0.0
    %6633 = vmatprep.mubr.f32.mxu0 0.0
    %v6634 = vand.u32 %v6561, 4294901760
    %v6635 = vsub.f32 %v6561, %v6634
    %v6636 = vand.u32 %v6635, 4294901760
    %v6637 = vsub.f32 %v6635, %v6636
    %v6638 = vand.u32 %v6637, 4294901760
    %6639 = vmatmul.mubr.f32.gmra.mxu0 %v6638
    %v6640 = vpop.f32.mrf.mxu0
    %v6641 = vadd.f32 0.0, %v6640
    %v6642 = vpop.f32.mrf.mxu0
    %6643 = vmatprep.mubr.f32.mxu0 0.0
    %v6644 = vand.u32 %v6563, 4294901760
    %v6645 = vsub.f32 %v6563, %v6644
    %v6646 = vand.u32 %v6645, 4294901760
    %v6647 = vsub.f32 %v6645, %v6646
    %v6648 = vand.u32 %v6647, 4294901760
    %6649 = vmatmul.mubr.f32.gmra.mxu0 %v6648
    %v6650 = vpop.f32.mrf.mxu0
    %v6651 = vadd.f32 0.0, %v6650
    %v6652 = vpop.f32.mrf.mxu0
    %6653 = vdwg.mxu0
    %6654 = vmatprep.subr.mxu0 0.0
    %6655 = vmatpush1.msra.mxu0 0.0
    %6656 = vmatprep.subr.mxu0 0.0
    %6657 = vmatpush1.msra.mxu0 0.0
    %6658 = vmatprep.subr.mxu0 0.0
    %6659 = vmatpush1.msra.mxu0 0.0
    %6660 = vmatprep.subr.mxu0 0.0
    %6661 = vmatpush1.msra.mxu0 0.0
    %6662 = vmatprep.subr.mxu0 0.0
    %6663 = vmatpush1.msra.mxu0 0.0
    %6664 = vmatprep.subr.mxu0 0.0
    %6665 = vmatpush1.msra.mxu0 0.0
    %6666 = vmatprep.subr.mxu0 0.0
    %6667 = vmatpush1.msra.mxu0 0.0
    %6668 = vmatprep.subr.mxu0 0.0
    %6669 = vmatpush1.msra.mxu0 0.0
    %6670 = vmatprep.subr.mxu0 0.0
    %6671 = vmatpush1.msra.mxu0 0.0
    %6672 = vmatprep.subr.mxu0 0.0
    %6673 = vmatpush1.msra.mxu0 0.0
    %6674 = vmatprep.subr.mxu0 0.0
    %6675 = vmatpush1.msra.mxu0 0.0
    %6676 = vmatprep.subr.mxu0 0.0
    %6677 = vmatpush1.msra.mxu0 0.0
    %6678 = vmatprep.subr.mxu0 0.0
    %v6679 = vand.u32 %v4426, 4294901760
    %v6680 = vsub.f32 %v4426, %v6679
    %v6681 = vand.u32 %v6680, 4294901760
    %v6682 = vsub.f32 %v6680, %v6681
    %v6683 = vand.u32 %v6682, 4294901760
    %6684 = vmatpush1.msra.mxu0 %v6683
    %6685 = vmatprep.subr.mxu0 0.0
    %v6686 = vand.u32 %v4425, 4294901760
    %v6687 = vsub.f32 %v4425, %v6686
    %v6688 = vand.u32 %v6687, 4294901760
    %v6689 = vsub.f32 %v6687, %v6688
    %v6690 = vand.u32 %v6689, 4294901760
    %6691 = vmatpush1.msra.mxu0 %v6690
    %6692 = vmatprep.subr.mxu0 0.0
    %v6693 = vand.u32 %v4424, 4294901760
    %v6694 = vsub.f32 %v4424, %v6693
    %v6695 = vand.u32 %v6694, 4294901760
    %v6696 = vsub.f32 %v6694, %v6695
    %v6697 = vand.u32 %v6696, 4294901760
    %6698 = vmatpush1.msra.mxu0 %v6697
    %6699 = vmatprep.subr.mxu0 0.0
    %v6700 = vand.u32 %v4423, 4294901760
    %v6701 = vsub.f32 %v4423, %v6700
    %v6702 = vand.u32 %v6701, 4294901760
    %v6703 = vsub.f32 %v6701, %v6702
    %v6704 = vand.u32 %v6703, 4294901760
    %6705 = vmatpush1.msra.mxu0 %v6704
    %6706 = vmatprep.subr.mxu0 0.0
    %6707 = vmatpush2.msra.mxu0 0.0
    %6708 = vmatprep.subr.mxu0 0.0
    %6709 = vmatpush2.msra.mxu0 0.0
    %6710 = vmatprep.subr.mxu0 0.0
    %6711 = vmatpush2.msra.mxu0 0.0
    %6712 = vmatprep.subr.mxu0 0.0
    %6713 = vmatpush2.msra.mxu0 0.0
    %6714 = vmatprep.subr.mxu0 0.0
    %6715 = vmatpush2.msra.mxu0 0.0
    %6716 = vmatprep.subr.mxu0 0.0
    %6717 = vmatpush2.msra.mxu0 0.0
    %6718 = vmatprep.subr.mxu0 0.0
    %6719 = vmatpush2.msra.mxu0 0.0
    %6720 = vmatprep.subr.mxu0 0.0
    %6721 = vmatpush2.msra.mxu0 0.0
    %6722 = vmatprep.subr.mxu0 0.0
    %6723 = vmatpush2.msra.mxu0 0.0
    %6724 = vmatprep.subr.mxu0 0.0
    %6725 = vmatpush2.msra.mxu0 0.0
    %6726 = vmatprep.subr.mxu0 0.0
    %6727 = vmatpush2.msra.mxu0 0.0
    %6728 = vmatprep.subr.mxu0 0.0
    %6729 = vmatpush2.msra.mxu0 0.0
    %6730 = vmatprep.subr.mxu0 0.0
    %6731 = vmatpush2.msra.mxu0 0.0
    %6732 = vmatprep.subr.mxu0 0.0
    %6733 = vmatpush2.msra.mxu0 0.0
    %6734 = vmatprep.subr.mxu0 0.0
    %6735 = vmatpush2.msra.mxu0 0.0
    %6736 = vmatprep.subr.mxu0 0.0
    %6737 = vmatpush2.msra.mxu0 0.0
    %6738 = vmatprep.mubr.f32.mxu0 0.0
    %v6739 = vand.u32 %v6561, 4294901760
    %6740 = vmatmul.mubr.f32.gmra.mxu0 %v6739
    %v6741 = vpop.f32.mrf.mxu0
    %v6742 = vadd.f32 %v6641, %v6741
    %v6743 = vpop.f32.mrf.mxu0
    %6744 = vmatprep.mubr.f32.mxu0 0.0
    %v6745 = vand.u32 %v6563, 4294901760
    %6746 = vmatmul.mubr.f32.gmra.mxu0 %v6745
    %v6747 = vpop.f32.mrf.mxu0
    %v6748 = vadd.f32 %v6651, %v6747
    %v6749 = vpop.f32.mrf.mxu0
    %6750 = vdwg.mxu0
    %6751 = vmatprep.subr.mxu0 0.0
    %6752 = vmatpush1.msra.mxu0 0.0
    %6753 = vmatprep.subr.mxu0 0.0
    %6754 = vmatpush1.msra.mxu0 0.0
    %6755 = vmatprep.subr.mxu0 0.0
    %6756 = vmatpush1.msra.mxu0 0.0
    %6757 = vmatprep.subr.mxu0 0.0
    %6758 = vmatpush1.msra.mxu0 0.0
    %6759 = vmatprep.subr.mxu0 0.0
    %6760 = vmatpush1.msra.mxu0 0.0
    %6761 = vmatprep.subr.mxu0 0.0
    %6762 = vmatpush1.msra.mxu0 0.0
    %6763 = vmatprep.subr.mxu0 0.0
    %6764 = vmatpush1.msra.mxu0 0.0
    %6765 = vmatprep.subr.mxu0 0.0
    %6766 = vmatpush1.msra.mxu0 0.0
    %6767 = vmatprep.subr.mxu0 0.0
    %6768 = vmatpush1.msra.mxu0 0.0
    %6769 = vmatprep.subr.mxu0 0.0
    %6770 = vmatpush1.msra.mxu0 0.0
    %6771 = vmatprep.subr.mxu0 0.0
    %6772 = vmatpush1.msra.mxu0 0.0
    %6773 = vmatprep.subr.mxu0 0.0
    %6774 = vmatpush1.msra.mxu0 0.0
    %6775 = vmatprep.subr.mxu0 0.0
    %v6776 = vand.u32 %v4426, 4294901760
    %v6777 = vsub.f32 %v4426, %v6776
    %6778 = vmatpush1.msra.mxu0 %v6777
    %6779 = vmatprep.subr.mxu0 0.0
    %v6780 = vand.u32 %v4425, 4294901760
    %v6781 = vsub.f32 %v4425, %v6780
    %6782 = vmatpush1.msra.mxu0 %v6781
    %6783 = vmatprep.subr.mxu0 0.0
    %v6784 = vand.u32 %v4424, 4294901760
    %v6785 = vsub.f32 %v4424, %v6784
    %6786 = vmatpush1.msra.mxu0 %v6785
    %6787 = vmatprep.subr.mxu0 0.0
    %v6788 = vand.u32 %v4423, 4294901760
    %v6789 = vsub.f32 %v4423, %v6788
    %6790 = vmatpush1.msra.mxu0 %v6789
    %6791 = vmatprep.subr.mxu0 0.0
    %6792 = vmatpush2.msra.mxu0 0.0
    %6793 = vmatprep.subr.mxu0 0.0
    %6794 = vmatpush2.msra.mxu0 0.0
    %6795 = vmatprep.subr.mxu0 0.0
    %6796 = vmatpush2.msra.mxu0 0.0
    %6797 = vmatprep.subr.mxu0 0.0
    %6798 = vmatpush2.msra.mxu0 0.0
    %6799 = vmatprep.subr.mxu0 0.0
    %6800 = vmatpush2.msra.mxu0 0.0
    %6801 = vmatprep.subr.mxu0 0.0
    %6802 = vmatpush2.msra.mxu0 0.0
    %6803 = vmatprep.subr.mxu0 0.0
    %6804 = vmatpush2.msra.mxu0 0.0
    %6805 = vmatprep.subr.mxu0 0.0
    %6806 = vmatpush2.msra.mxu0 0.0
    %6807 = vmatprep.subr.mxu0 0.0
    %6808 = vmatpush2.msra.mxu0 0.0
    %6809 = vmatprep.subr.mxu0 0.0
    %6810 = vmatpush2.msra.mxu0 0.0
    %6811 = vmatprep.subr.mxu0 0.0
    %6812 = vmatpush2.msra.mxu0 0.0
    %6813 = vmatprep.subr.mxu0 0.0
    %6814 = vmatpush2.msra.mxu0 0.0
    %6815 = vmatprep.subr.mxu0 0.0
    %6816 = vmatpush2.msra.mxu0 0.0
    %6817 = vmatprep.subr.mxu0 0.0
    %6818 = vmatpush2.msra.mxu0 0.0
    %6819 = vmatprep.subr.mxu0 0.0
    %6820 = vmatpush2.msra.mxu0 0.0
    %6821 = vmatprep.subr.mxu0 0.0
    %6822 = vmatpush2.msra.mxu0 0.0
    %6823 = vmatprep.mubr.f32.mxu0 0.0
    %v6824 = vand.u32 %v6561, 4294901760
    %v6825 = vsub.f32 %v6561, %v6824
    %6826 = vmatmul.mubr.f32.gmra.mxu0 %v6825
    %v6827 = vpop.f32.mrf.mxu0
    %v6828 = vadd.f32 %v6742, %v6827
    %v6829 = vpop.f32.mrf.mxu0
    %6830 = vmatprep.mubr.f32.mxu0 0.0
    %v6831 = vand.u32 %v6563, 4294901760
    %v6832 = vsub.f32 %v6563, %v6831
    %6833 = vmatmul.mubr.f32.gmra.mxu0 %v6832
    %v6834 = vpop.f32.mrf.mxu0
    %v6835 = vadd.f32 %v6748, %v6834
    %v6836 = vpop.f32.mrf.mxu0
    %6837 = vdwg.mxu0
    %6838 = vmatprep.subr.mxu0 0.0
    %6839 = vmatpush1.msra.mxu0 0.0
    %6840 = vmatprep.subr.mxu0 0.0
    %6841 = vmatpush1.msra.mxu0 0.0
    %6842 = vmatprep.subr.mxu0 0.0
    %6843 = vmatpush1.msra.mxu0 0.0
    %6844 = vmatprep.subr.mxu0 0.0
    %6845 = vmatpush1.msra.mxu0 0.0
    %6846 = vmatprep.subr.mxu0 0.0
    %6847 = vmatpush1.msra.mxu0 0.0
    %6848 = vmatprep.subr.mxu0 0.0
    %6849 = vmatpush1.msra.mxu0 0.0
    %6850 = vmatprep.subr.mxu0 0.0
    %6851 = vmatpush1.msra.mxu0 0.0
    %6852 = vmatprep.subr.mxu0 0.0
    %6853 = vmatpush1.msra.mxu0 0.0
    %6854 = vmatprep.subr.mxu0 0.0
    %6855 = vmatpush1.msra.mxu0 0.0
    %6856 = vmatprep.subr.mxu0 0.0
    %6857 = vmatpush1.msra.mxu0 0.0
    %6858 = vmatprep.subr.mxu0 0.0
    %6859 = vmatpush1.msra.mxu0 0.0
    %6860 = vmatprep.subr.mxu0 0.0
    %6861 = vmatpush1.msra.mxu0 0.0
    %6862 = vmatprep.subr.mxu0 0.0
    %v6863 = vand.u32 %v4426, 4294901760
    %6864 = vmatpush1.msra.mxu0 %v6863
    %6865 = vmatprep.subr.mxu0 0.0
    %v6866 = vand.u32 %v4425, 4294901760
    %6867 = vmatpush1.msra.mxu0 %v6866
    %6868 = vmatprep.subr.mxu0 0.0
    %v6869 = vand.u32 %v4424, 4294901760
    %6870 = vmatpush1.msra.mxu0 %v6869
    %6871 = vmatprep.subr.mxu0 0.0
    %v6872 = vand.u32 %v4423, 4294901760
    %6873 = vmatpush1.msra.mxu0 %v6872
    %6874 = vmatprep.subr.mxu0 0.0
    %6875 = vmatpush2.msra.mxu0 0.0
    %6876 = vmatprep.subr.mxu0 0.0
    %6877 = vmatpush2.msra.mxu0 0.0
    %6878 = vmatprep.subr.mxu0 0.0
    %6879 = vmatpush2.msra.mxu0 0.0
    %6880 = vmatprep.subr.mxu0 0.0
    %6881 = vmatpush2.msra.mxu0 0.0
    %6882 = vmatprep.subr.mxu0 0.0
    %6883 = vmatpush2.msra.mxu0 0.0
    %6884 = vmatprep.subr.mxu0 0.0
    %6885 = vmatpush2.msra.mxu0 0.0
    %6886 = vmatprep.subr.mxu0 0.0
    %6887 = vmatpush2.msra.mxu0 0.0
    %6888 = vmatprep.subr.mxu0 0.0
    %6889 = vmatpush2.msra.mxu0 0.0
    %6890 = vmatprep.subr.mxu0 0.0
    %6891 = vmatpush2.msra.mxu0 0.0
    %6892 = vmatprep.subr.mxu0 0.0
    %6893 = vmatpush2.msra.mxu0 0.0
    %6894 = vmatprep.subr.mxu0 0.0
    %6895 = vmatpush2.msra.mxu0 0.0
    %6896 = vmatprep.subr.mxu0 0.0
    %6897 = vmatpush2.msra.mxu0 0.0
    %6898 = vmatprep.subr.mxu0 0.0
    %6899 = vmatpush2.msra.mxu0 0.0
    %6900 = vmatprep.subr.mxu0 0.0
    %6901 = vmatpush2.msra.mxu0 0.0
    %6902 = vmatprep.subr.mxu0 0.0
    %6903 = vmatpush2.msra.mxu0 0.0
    %6904 = vmatprep.subr.mxu0 0.0
    %6905 = vmatpush2.msra.mxu0 0.0
    %6906 = vmatprep.mubr.f32.mxu0 0.0
    %v6907 = vand.u32 %v6561, 4294901760
    %v6908 = vsub.f32 %v6561, %v6907
    %v6909 = vand.u32 %v6908, 4294901760
    %6910 = vmatmul.mubr.f32.gmra.mxu0 %v6909
    %v6911 = vpop.f32.mrf.mxu0
    %v6912 = vadd.f32 %v6828, %v6911
    %v6913 = vpop.f32.mrf.mxu0
    %6914 = vmatprep.mubr.f32.mxu0 0.0
    %v6915 = vand.u32 %v6563, 4294901760
    %v6916 = vsub.f32 %v6563, %v6915
    %v6917 = vand.u32 %v6916, 4294901760
    %6918 = vmatmul.mubr.f32.gmra.mxu0 %v6917
    %v6919 = vpop.f32.mrf.mxu0
    %v6920 = vadd.f32 %v6835, %v6919
    %v6921 = vpop.f32.mrf.mxu0
    %6922 = vdwg.mxu0
    %6923 = vmatprep.subr.mxu0 0.0
    %6924 = vmatpush1.msra.mxu0 0.0
    %6925 = vmatprep.subr.mxu0 0.0
    %6926 = vmatpush1.msra.mxu0 0.0
    %6927 = vmatprep.subr.mxu0 0.0
    %6928 = vmatpush1.msra.mxu0 0.0
    %6929 = vmatprep.subr.mxu0 0.0
    %6930 = vmatpush1.msra.mxu0 0.0
    %6931 = vmatprep.subr.mxu0 0.0
    %6932 = vmatpush1.msra.mxu0 0.0
    %6933 = vmatprep.subr.mxu0 0.0
    %6934 = vmatpush1.msra.mxu0 0.0
    %6935 = vmatprep.subr.mxu0 0.0
    %6936 = vmatpush1.msra.mxu0 0.0
    %6937 = vmatprep.subr.mxu0 0.0
    %6938 = vmatpush1.msra.mxu0 0.0
    %6939 = vmatprep.subr.mxu0 0.0
    %6940 = vmatpush1.msra.mxu0 0.0
    %6941 = vmatprep.subr.mxu0 0.0
    %6942 = vmatpush1.msra.mxu0 0.0
    %6943 = vmatprep.subr.mxu0 0.0
    %6944 = vmatpush1.msra.mxu0 0.0
    %6945 = vmatprep.subr.mxu0 0.0
    %6946 = vmatpush1.msra.mxu0 0.0
    %6947 = vmatprep.subr.mxu0 0.0
    %v6948 = vand.u32 %v4426, 4294901760
    %v6949 = vsub.f32 %v4426, %v6948
    %v6950 = vand.u32 %v6949, 4294901760
    %6951 = vmatpush1.msra.mxu0 %v6950
    %6952 = vmatprep.subr.mxu0 0.0
    %v6953 = vand.u32 %v4425, 4294901760
    %v6954 = vsub.f32 %v4425, %v6953
    %v6955 = vand.u32 %v6954, 4294901760
    %6956 = vmatpush1.msra.mxu0 %v6955
    %6957 = vmatprep.subr.mxu0 0.0
    %v6958 = vand.u32 %v4424, 4294901760
    %v6959 = vsub.f32 %v4424, %v6958
    %v6960 = vand.u32 %v6959, 4294901760
    %6961 = vmatpush1.msra.mxu0 %v6960
    %6962 = vmatprep.subr.mxu0 0.0
    %v6963 = vand.u32 %v4423, 4294901760
    %v6964 = vsub.f32 %v4423, %v6963
    %v6965 = vand.u32 %v6964, 4294901760
    %6966 = vmatpush1.msra.mxu0 %v6965
    %6967 = vmatprep.subr.mxu0 0.0
    %6968 = vmatpush2.msra.mxu0 0.0
    %6969 = vmatprep.subr.mxu0 0.0
    %6970 = vmatpush2.msra.mxu0 0.0
    %6971 = vmatprep.subr.mxu0 0.0
    %6972 = vmatpush2.msra.mxu0 0.0
    %6973 = vmatprep.subr.mxu0 0.0
    %6974 = vmatpush2.msra.mxu0 0.0
    %6975 = vmatprep.subr.mxu0 0.0
    %6976 = vmatpush2.msra.mxu0 0.0
    %6977 = vmatprep.subr.mxu0 0.0
    %6978 = vmatpush2.msra.mxu0 0.0
    %6979 = vmatprep.subr.mxu0 0.0
    %6980 = vmatpush2.msra.mxu0 0.0
    %6981 = vmatprep.subr.mxu0 0.0
    %6982 = vmatpush2.msra.mxu0 0.0
    %6983 = vmatprep.subr.mxu0 0.0
    %6984 = vmatpush2.msra.mxu0 0.0
    %6985 = vmatprep.subr.mxu0 0.0
    %6986 = vmatpush2.msra.mxu0 0.0
    %6987 = vmatprep.subr.mxu0 0.0
    %6988 = vmatpush2.msra.mxu0 0.0
    %6989 = vmatprep.subr.mxu0 0.0
    %6990 = vmatpush2.msra.mxu0 0.0
    %6991 = vmatprep.subr.mxu0 0.0
    %6992 = vmatpush2.msra.mxu0 0.0
    %6993 = vmatprep.subr.mxu0 0.0
    %6994 = vmatpush2.msra.mxu0 0.0
    %6995 = vmatprep.subr.mxu0 0.0
    %6996 = vmatpush2.msra.mxu0 0.0
    %6997 = vmatprep.subr.mxu0 0.0
    %6998 = vmatpush2.msra.mxu0 0.0
    %6999 = vmatprep.mubr.f32.mxu0 0.0
    %v7000 = vand.u32 %v6561, 4294901760
    %7001 = vmatmul.mubr.f32.gmra.mxu0 %v7000
    %v7002 = vpop.f32.mrf.mxu0
    %v7003 = vadd.f32 %v6912, %v7002
    %v7004 = vpop.f32.mrf.mxu0
    %7005 = vmatprep.mubr.f32.mxu0 0.0
    %v7006 = vand.u32 %v6563, 4294901760
    %7007 = vmatmul.mubr.f32.gmra.mxu0 %v7006
    %v7008 = vpop.f32.mrf.mxu0
    %v7009 = vadd.f32 %v6920, %v7008
    %v7010 = vpop.f32.mrf.mxu0
    %7011 = vdwg.mxu0
    %7012 = vmatprep.subr.mxu0 0.0
    %7013 = vmatpush1.msra.mxu0 0.0
    %7014 = vmatprep.subr.mxu0 0.0
    %7015 = vmatpush1.msra.mxu0 0.0
    %7016 = vmatprep.subr.mxu0 0.0
    %7017 = vmatpush1.msra.mxu0 0.0
    %7018 = vmatprep.subr.mxu0 0.0
    %7019 = vmatpush1.msra.mxu0 0.0
    %7020 = vmatprep.subr.mxu0 0.0
    %7021 = vmatpush1.msra.mxu0 0.0
    %7022 = vmatprep.subr.mxu0 0.0
    %7023 = vmatpush1.msra.mxu0 0.0
    %7024 = vmatprep.subr.mxu0 0.0
    %7025 = vmatpush1.msra.mxu0 0.0
    %7026 = vmatprep.subr.mxu0 0.0
    %7027 = vmatpush1.msra.mxu0 0.0
    %7028 = vmatprep.subr.mxu0 0.0
    %7029 = vmatpush1.msra.mxu0 0.0
    %7030 = vmatprep.subr.mxu0 0.0
    %7031 = vmatpush1.msra.mxu0 0.0
    %7032 = vmatprep.subr.mxu0 0.0
    %7033 = vmatpush1.msra.mxu0 0.0
    %7034 = vmatprep.subr.mxu0 0.0
    %7035 = vmatpush1.msra.mxu0 0.0
    %7036 = vmatprep.subr.mxu0 0.0
    %v7037 = vand.u32 %v4426, 4294901760
    %7038 = vmatpush1.msra.mxu0 %v7037
    %7039 = vmatprep.subr.mxu0 0.0
    %v7040 = vand.u32 %v4425, 4294901760
    %7041 = vmatpush1.msra.mxu0 %v7040
    %7042 = vmatprep.subr.mxu0 0.0
    %v7043 = vand.u32 %v4424, 4294901760
    %7044 = vmatpush1.msra.mxu0 %v7043
    %7045 = vmatprep.subr.mxu0 0.0
    %v7046 = vand.u32 %v4423, 4294901760
    %7047 = vmatpush1.msra.mxu0 %v7046
    %7048 = vmatprep.subr.mxu0 0.0
    %7049 = vmatpush2.msra.mxu0 0.0
    %7050 = vmatprep.subr.mxu0 0.0
    %7051 = vmatpush2.msra.mxu0 0.0
    %7052 = vmatprep.subr.mxu0 0.0
    %7053 = vmatpush2.msra.mxu0 0.0
    %7054 = vmatprep.subr.mxu0 0.0
    %7055 = vmatpush2.msra.mxu0 0.0
    %7056 = vmatprep.subr.mxu0 0.0
    %7057 = vmatpush2.msra.mxu0 0.0
    %7058 = vmatprep.subr.mxu0 0.0
    %7059 = vmatpush2.msra.mxu0 0.0
    %7060 = vmatprep.subr.mxu0 0.0
    %7061 = vmatpush2.msra.mxu0 0.0
    %7062 = vmatprep.subr.mxu0 0.0
    %7063 = vmatpush2.msra.mxu0 0.0
    %7064 = vmatprep.subr.mxu0 0.0
    %7065 = vmatpush2.msra.mxu0 0.0
    %7066 = vmatprep.subr.mxu0 0.0
    %7067 = vmatpush2.msra.mxu0 0.0
    %7068 = vmatprep.subr.mxu0 0.0
    %7069 = vmatpush2.msra.mxu0 0.0
    %7070 = vmatprep.subr.mxu0 0.0
    %7071 = vmatpush2.msra.mxu0 0.0
    %7072 = vmatprep.subr.mxu0 0.0
    %7073 = vmatpush2.msra.mxu0 0.0
    %7074 = vmatprep.subr.mxu0 0.0
    %7075 = vmatpush2.msra.mxu0 0.0
    %7076 = vmatprep.subr.mxu0 0.0
    %7077 = vmatpush2.msra.mxu0 0.0
    %7078 = vmatprep.subr.mxu0 0.0
    %7079 = vmatpush2.msra.mxu0 0.0
    %7080 = vmatprep.mubr.f32.mxu0 0.0
    %v7081 = vand.u32 %v6561, 4294901760
    %7082 = vmatmul.mubr.f32.gmra.mxu0 %v7081
    %v7083 = vpop.f32.mrf.mxu0
    %v7084 = vadd.f32 %v7003, %v7083
    %v7085 = vpop.f32.mrf.mxu0
    %7086 = vmatprep.mubr.f32.mxu0 0.0
    %v7087 = vand.u32 %v6563, 4294901760
    %7088 = vmatmul.mubr.f32.gmra.mxu0 %v7087
    %v7089 = vpop.f32.mrf.mxu0
    %v7090 = vadd.f32 %v7009, %v7089
    %v7091 = vpop.f32.mrf.mxu0
    %7092 = vdwg.mxu0
    %v7093 = vmul.f32 %v7084, %v4427
    %v7094 = vmul.f32 %v7090, %v4428
    %7095 = vmatprep.subr.mxu0 0.0
    %7096 = vmatpush1.msra.mxu0 0.0
    %7097 = vmatprep.subr.mxu0 0.0
    %7098 = vmatpush1.msra.mxu0 0.0
    %7099 = vmatprep.subr.mxu0 0.0
    %7100 = vmatpush1.msra.mxu0 0.0
    %7101 = vmatprep.subr.mxu0 0.0
    %7102 = vmatpush1.msra.mxu0 0.0
    %7103 = vmatprep.subr.mxu0 0.0
    %7104 = vmatpush1.msra.mxu0 0.0
    %7105 = vmatprep.subr.mxu0 0.0
    %7106 = vmatpush1.msra.mxu0 0.0
    %7107 = vmatprep.subr.mxu0 0.0
    %7108 = vmatpush1.msra.mxu0 0.0
    %7109 = vmatprep.subr.mxu0 0.0
    %7110 = vmatpush1.msra.mxu0 0.0
    %7111 = vmatprep.subr.mxu0 0.0
    %7112 = vmatpush1.msra.mxu0 0.0
    %7113 = vmatprep.subr.mxu0 0.0
    %7114 = vmatpush1.msra.mxu0 0.0
    %7115 = vmatprep.subr.mxu0 0.0
    %7116 = vmatpush1.msra.mxu0 0.0
    %7117 = vmatprep.subr.mxu0 0.0
    %7118 = vmatpush1.msra.mxu0 0.0
    %7119 = vmatprep.subr.mxu0 0.0
    %7120 = vmatpush1.msra.mxu0 0.0
    %7121 = vmatprep.subr.mxu0 0.0
    %7122 = vmatpush1.msra.mxu0 0.0
    %7123 = vmatprep.subr.mxu0 0.0
    %v7124 = vand.u32 %v7094, 4294901760
    %7125 = vmatpush1.msra.mxu0 %v7124
    %7126 = vmatprep.subr.mxu0 0.0
    %v7127 = vand.u32 %v7093, 4294901760
    %7128 = vmatpush1.msra.mxu0 %v7127
    %7129 = vmatprep.subr.mxu0 0.0
    %7130 = vmatpush2.msra.mxu0 0.0
    %7131 = vmatprep.subr.mxu0 0.0
    %7132 = vmatpush2.msra.mxu0 0.0
    %7133 = vmatprep.subr.mxu0 0.0
    %7134 = vmatpush2.msra.mxu0 0.0
    %7135 = vmatprep.subr.mxu0 0.0
    %7136 = vmatpush2.msra.mxu0 0.0
    %7137 = vmatprep.subr.mxu0 0.0
    %7138 = vmatpush2.msra.mxu0 0.0
    %7139 = vmatprep.subr.mxu0 0.0
    %7140 = vmatpush2.msra.mxu0 0.0
    %7141 = vmatprep.subr.mxu0 0.0
    %7142 = vmatpush2.msra.mxu0 0.0
    %7143 = vmatprep.subr.mxu0 0.0
    %7144 = vmatpush2.msra.mxu0 0.0
    %7145 = vmatprep.subr.mxu0 0.0
    %7146 = vmatpush2.msra.mxu0 0.0
    %7147 = vmatprep.subr.mxu0 0.0
    %7148 = vmatpush2.msra.mxu0 0.0
    %7149 = vmatprep.subr.mxu0 0.0
    %7150 = vmatpush2.msra.mxu0 0.0
    %7151 = vmatprep.subr.mxu0 0.0
    %7152 = vmatpush2.msra.mxu0 0.0
    %7153 = vmatprep.subr.mxu0 0.0
    %7154 = vmatpush2.msra.mxu0 0.0
    %7155 = vmatprep.subr.mxu0 0.0
    %7156 = vmatpush2.msra.mxu0 0.0
    %7157 = vmatprep.subr.mxu0 0.0
    %7158 = vmatpush2.msra.mxu0 0.0
    %7159 = vmatprep.subr.mxu0 0.0
    %7160 = vmatpush2.msra.mxu0 0.0
    %7161 = vmatprep.mubr.f32.mxu0 0.0
    %v7162 = vand.u32 %v4984, 4294901760
    %v7163 = vsub.f32 %v4984, %v7162
    %v7164 = vand.u32 %v7163, 4294901760
    %v7165 = vsub.f32 %v7163, %v7164
    %v7166 = vand.u32 %v7165, 4294901760
    %7167 = vmatmul.mubr.f32.gmra.mxu0 %v7166
    %v7168 = vpop.f32.mrf.mxu0
    %v7169 = vadd.f32 0.0, %v7168
    %v7170 = vpop.f32.mrf.mxu0
    %7171 = vdwg.mxu0
    %7172 = vmatprep.subr.mxu0 0.0
    %7173 = vmatpush1.msra.mxu0 0.0
    %7174 = vmatprep.subr.mxu0 0.0
    %7175 = vmatpush1.msra.mxu0 0.0
    %7176 = vmatprep.subr.mxu0 0.0
    %7177 = vmatpush1.msra.mxu0 0.0
    %7178 = vmatprep.subr.mxu0 0.0
    %7179 = vmatpush1.msra.mxu0 0.0
    %7180 = vmatprep.subr.mxu0 0.0
    %7181 = vmatpush1.msra.mxu0 0.0
    %7182 = vmatprep.subr.mxu0 0.0
    %7183 = vmatpush1.msra.mxu0 0.0
    %7184 = vmatprep.subr.mxu0 0.0
    %7185 = vmatpush1.msra.mxu0 0.0
    %7186 = vmatprep.subr.mxu0 0.0
    %7187 = vmatpush1.msra.mxu0 0.0
    %7188 = vmatprep.subr.mxu0 0.0
    %7189 = vmatpush1.msra.mxu0 0.0
    %7190 = vmatprep.subr.mxu0 0.0
    %7191 = vmatpush1.msra.mxu0 0.0
    %7192 = vmatprep.subr.mxu0 0.0
    %7193 = vmatpush1.msra.mxu0 0.0
    %7194 = vmatprep.subr.mxu0 0.0
    %7195 = vmatpush1.msra.mxu0 0.0
    %7196 = vmatprep.subr.mxu0 0.0
    %7197 = vmatpush1.msra.mxu0 0.0
    %7198 = vmatprep.subr.mxu0 0.0
    %7199 = vmatpush1.msra.mxu0 0.0
    %7200 = vmatprep.subr.mxu0 0.0
    %v7201 = vand.u32 %v7094, 4294901760
    %v7202 = vsub.f32 %v7094, %v7201
    %v7203 = vand.u32 %v7202, 4294901760
    %v7204 = vsub.f32 %v7202, %v7203
    %v7205 = vand.u32 %v7204, 4294901760
    %7206 = vmatpush1.msra.mxu0 %v7205
    %7207 = vmatprep.subr.mxu0 0.0
    %v7208 = vand.u32 %v7093, 4294901760
    %v7209 = vsub.f32 %v7093, %v7208
    %v7210 = vand.u32 %v7209, 4294901760
    %v7211 = vsub.f32 %v7209, %v7210
    %v7212 = vand.u32 %v7211, 4294901760
    %7213 = vmatpush1.msra.mxu0 %v7212
    %7214 = vmatprep.subr.mxu0 0.0
    %7215 = vmatpush2.msra.mxu0 0.0
    %7216 = vmatprep.subr.mxu0 0.0
    %7217 = vmatpush2.msra.mxu0 0.0
    %7218 = vmatprep.subr.mxu0 0.0
    %7219 = vmatpush2.msra.mxu0 0.0
    %7220 = vmatprep.subr.mxu0 0.0
    %7221 = vmatpush2.msra.mxu0 0.0
    %7222 = vmatprep.subr.mxu0 0.0
    %7223 = vmatpush2.msra.mxu0 0.0
    %7224 = vmatprep.subr.mxu0 0.0
    %7225 = vmatpush2.msra.mxu0 0.0
    %7226 = vmatprep.subr.mxu0 0.0
    %7227 = vmatpush2.msra.mxu0 0.0
    %7228 = vmatprep.subr.mxu0 0.0
    %7229 = vmatpush2.msra.mxu0 0.0
    %7230 = vmatprep.subr.mxu0 0.0
    %7231 = vmatpush2.msra.mxu0 0.0
    %7232 = vmatprep.subr.mxu0 0.0
    %7233 = vmatpush2.msra.mxu0 0.0
    %7234 = vmatprep.subr.mxu0 0.0
    %7235 = vmatpush2.msra.mxu0 0.0
    %7236 = vmatprep.subr.mxu0 0.0
    %7237 = vmatpush2.msra.mxu0 0.0
    %7238 = vmatprep.subr.mxu0 0.0
    %7239 = vmatpush2.msra.mxu0 0.0
    %7240 = vmatprep.subr.mxu0 0.0
    %7241 = vmatpush2.msra.mxu0 0.0
    %7242 = vmatprep.subr.mxu0 0.0
    %7243 = vmatpush2.msra.mxu0 0.0
    %7244 = vmatprep.subr.mxu0 0.0
    %7245 = vmatpush2.msra.mxu0 0.0
    %7246 = vmatprep.mubr.f32.mxu0 0.0
    %v7247 = vand.u32 %v4984, 4294901760
    %7248 = vmatmul.mubr.f32.gmra.mxu0 %v7247
    %v7249 = vpop.f32.mrf.mxu0
    %v7250 = vadd.f32 %v7169, %v7249
    %v7251 = vpop.f32.mrf.mxu0
    %7252 = vdwg.mxu0
    %7253 = vmatprep.subr.mxu0 0.0
    %7254 = vmatpush1.msra.mxu0 0.0
    %7255 = vmatprep.subr.mxu0 0.0
    %7256 = vmatpush1.msra.mxu0 0.0
    %7257 = vmatprep.subr.mxu0 0.0
    %7258 = vmatpush1.msra.mxu0 0.0
    %7259 = vmatprep.subr.mxu0 0.0
    %7260 = vmatpush1.msra.mxu0 0.0
    %7261 = vmatprep.subr.mxu0 0.0
    %7262 = vmatpush1.msra.mxu0 0.0
    %7263 = vmatprep.subr.mxu0 0.0
    %7264 = vmatpush1.msra.mxu0 0.0
    %7265 = vmatprep.subr.mxu0 0.0
    %7266 = vmatpush1.msra.mxu0 0.0
    %7267 = vmatprep.subr.mxu0 0.0
    %7268 = vmatpush1.msra.mxu0 0.0
    %7269 = vmatprep.subr.mxu0 0.0
    %7270 = vmatpush1.msra.mxu0 0.0
    %7271 = vmatprep.subr.mxu0 0.0
    %7272 = vmatpush1.msra.mxu0 0.0
    %7273 = vmatprep.subr.mxu0 0.0
    %7274 = vmatpush1.msra.mxu0 0.0
    %7275 = vmatprep.subr.mxu0 0.0
    %7276 = vmatpush1.msra.mxu0 0.0
    %7277 = vmatprep.subr.mxu0 0.0
    %7278 = vmatpush1.msra.mxu0 0.0
    %7279 = vmatprep.subr.mxu0 0.0
    %7280 = vmatpush1.msra.mxu0 0.0
    %7281 = vmatprep.subr.mxu0 0.0
    %v7282 = vand.u32 %v7094, 4294901760
    %v7283 = vsub.f32 %v7094, %v7282
    %7284 = vmatpush1.msra.mxu0 %v7283
    %7285 = vmatprep.subr.mxu0 0.0
    %v7286 = vand.u32 %v7093, 4294901760
    %v7287 = vsub.f32 %v7093, %v7286
    %7288 = vmatpush1.msra.mxu0 %v7287
    %7289 = vmatprep.subr.mxu0 0.0
    %7290 = vmatpush2.msra.mxu0 0.0
    %7291 = vmatprep.subr.mxu0 0.0
    %7292 = vmatpush2.msra.mxu0 0.0
    %7293 = vmatprep.subr.mxu0 0.0
    %7294 = vmatpush2.msra.mxu0 0.0
    %7295 = vmatprep.subr.mxu0 0.0
    %7296 = vmatpush2.msra.mxu0 0.0
    %7297 = vmatprep.subr.mxu0 0.0
    %7298 = vmatpush2.msra.mxu0 0.0
    %7299 = vmatprep.subr.mxu0 0.0
    %7300 = vmatpush2.msra.mxu0 0.0
    %7301 = vmatprep.subr.mxu0 0.0
    %7302 = vmatpush2.msra.mxu0 0.0
    %7303 = vmatprep.subr.mxu0 0.0
    %7304 = vmatpush2.msra.mxu0 0.0
    %7305 = vmatprep.subr.mxu0 0.0
    %7306 = vmatpush2.msra.mxu0 0.0
    %7307 = vmatprep.subr.mxu0 0.0
    %7308 = vmatpush2.msra.mxu0 0.0
    %7309 = vmatprep.subr.mxu0 0.0
    %7310 = vmatpush2.msra.mxu0 0.0
    %7311 = vmatprep.subr.mxu0 0.0
    %7312 = vmatpush2.msra.mxu0 0.0
    %7313 = vmatprep.subr.mxu0 0.0
    %7314 = vmatpush2.msra.mxu0 0.0
    %7315 = vmatprep.subr.mxu0 0.0
    %7316 = vmatpush2.msra.mxu0 0.0
    %7317 = vmatprep.subr.mxu0 0.0
    %7318 = vmatpush2.msra.mxu0 0.0
    %7319 = vmatprep.subr.mxu0 0.0
    %7320 = vmatpush2.msra.mxu0 0.0
    %7321 = vmatprep.mubr.f32.mxu0 0.0
    %v7322 = vand.u32 %v4984, 4294901760
    %v7323 = vsub.f32 %v4984, %v7322
    %7324 = vmatmul.mubr.f32.gmra.mxu0 %v7323
    %v7325 = vpop.f32.mrf.mxu0
    %v7326 = vadd.f32 %v7250, %v7325
    %v7327 = vpop.f32.mrf.mxu0
    %7328 = vdwg.mxu0
    %7329 = vmatprep.subr.mxu0 0.0
    %7330 = vmatpush1.msra.mxu0 0.0
    %7331 = vmatprep.subr.mxu0 0.0
    %7332 = vmatpush1.msra.mxu0 0.0
    %7333 = vmatprep.subr.mxu0 0.0
    %7334 = vmatpush1.msra.mxu0 0.0
    %7335 = vmatprep.subr.mxu0 0.0
    %7336 = vmatpush1.msra.mxu0 0.0
    %7337 = vmatprep.subr.mxu0 0.0
    %7338 = vmatpush1.msra.mxu0 0.0
    %7339 = vmatprep.subr.mxu0 0.0
    %7340 = vmatpush1.msra.mxu0 0.0
    %7341 = vmatprep.subr.mxu0 0.0
    %7342 = vmatpush1.msra.mxu0 0.0
    %7343 = vmatprep.subr.mxu0 0.0
    %7344 = vmatpush1.msra.mxu0 0.0
    %7345 = vmatprep.subr.mxu0 0.0
    %7346 = vmatpush1.msra.mxu0 0.0
    %7347 = vmatprep.subr.mxu0 0.0
    %7348 = vmatpush1.msra.mxu0 0.0
    %7349 = vmatprep.subr.mxu0 0.0
    %7350 = vmatpush1.msra.mxu0 0.0
    %7351 = vmatprep.subr.mxu0 0.0
    %7352 = vmatpush1.msra.mxu0 0.0
    %7353 = vmatprep.subr.mxu0 0.0
    %7354 = vmatpush1.msra.mxu0 0.0
    %7355 = vmatprep.subr.mxu0 0.0
    %7356 = vmatpush1.msra.mxu0 0.0
    %7357 = vmatprep.subr.mxu0 0.0
    %v7358 = vand.u32 %v7094, 4294901760
    %7359 = vmatpush1.msra.mxu0 %v7358
    %7360 = vmatprep.subr.mxu0 0.0
    %v7361 = vand.u32 %v7093, 4294901760
    %7362 = vmatpush1.msra.mxu0 %v7361
    %7363 = vmatprep.subr.mxu0 0.0
    %7364 = vmatpush2.msra.mxu0 0.0
    %7365 = vmatprep.subr.mxu0 0.0
    %7366 = vmatpush2.msra.mxu0 0.0
    %7367 = vmatprep.subr.mxu0 0.0
    %7368 = vmatpush2.msra.mxu0 0.0
    %7369 = vmatprep.subr.mxu0 0.0
    %7370 = vmatpush2.msra.mxu0 0.0
    %7371 = vmatprep.subr.mxu0 0.0
    %7372 = vmatpush2.msra.mxu0 0.0
    %7373 = vmatprep.subr.mxu0 0.0
    %7374 = vmatpush2.msra.mxu0 0.0
    %7375 = vmatprep.subr.mxu0 0.0
    %7376 = vmatpush2.msra.mxu0 0.0
    %7377 = vmatprep.subr.mxu0 0.0
    %7378 = vmatpush2.msra.mxu0 0.0
    %7379 = vmatprep.subr.mxu0 0.0
    %7380 = vmatpush2.msra.mxu0 0.0
    %7381 = vmatprep.subr.mxu0 0.0
    %7382 = vmatpush2.msra.mxu0 0.0
    %7383 = vmatprep.subr.mxu0 0.0
    %7384 = vmatpush2.msra.mxu0 0.0
    %7385 = vmatprep.subr.mxu0 0.0
    %7386 = vmatpush2.msra.mxu0 0.0
    %7387 = vmatprep.subr.mxu0 0.0
    %7388 = vmatpush2.msra.mxu0 0.0
    %7389 = vmatprep.subr.mxu0 0.0
    %7390 = vmatpush2.msra.mxu0 0.0
    %7391 = vmatprep.subr.mxu0 0.0
    %7392 = vmatpush2.msra.mxu0 0.0
    %7393 = vmatprep.subr.mxu0 0.0
    %7394 = vmatpush2.msra.mxu0 0.0
    %7395 = vmatprep.mubr.f32.mxu0 0.0
    %v7396 = vand.u32 %v4984, 4294901760
    %v7397 = vsub.f32 %v4984, %v7396
    %v7398 = vand.u32 %v7397, 4294901760
    %7399 = vmatmul.mubr.f32.gmra.mxu0 %v7398
    %v7400 = vpop.f32.mrf.mxu0
    %v7401 = vadd.f32 %v7326, %v7400
    %v7402 = vpop.f32.mrf.mxu0
    %7403 = vdwg.mxu0
    %7404 = vmatprep.subr.mxu0 0.0
    %7405 = vmatpush1.msra.mxu0 0.0
    %7406 = vmatprep.subr.mxu0 0.0
    %7407 = vmatpush1.msra.mxu0 0.0
    %7408 = vmatprep.subr.mxu0 0.0
    %7409 = vmatpush1.msra.mxu0 0.0
    %7410 = vmatprep.subr.mxu0 0.0
    %7411 = vmatpush1.msra.mxu0 0.0
    %7412 = vmatprep.subr.mxu0 0.0
    %7413 = vmatpush1.msra.mxu0 0.0
    %7414 = vmatprep.subr.mxu0 0.0
    %7415 = vmatpush1.msra.mxu0 0.0
    %7416 = vmatprep.subr.mxu0 0.0
    %7417 = vmatpush1.msra.mxu0 0.0
    %7418 = vmatprep.subr.mxu0 0.0
    %7419 = vmatpush1.msra.mxu0 0.0
    %7420 = vmatprep.subr.mxu0 0.0
    %7421 = vmatpush1.msra.mxu0 0.0
    %7422 = vmatprep.subr.mxu0 0.0
    %7423 = vmatpush1.msra.mxu0 0.0
    %7424 = vmatprep.subr.mxu0 0.0
    %7425 = vmatpush1.msra.mxu0 0.0
    %7426 = vmatprep.subr.mxu0 0.0
    %7427 = vmatpush1.msra.mxu0 0.0
    %7428 = vmatprep.subr.mxu0 0.0
    %7429 = vmatpush1.msra.mxu0 0.0
    %7430 = vmatprep.subr.mxu0 0.0
    %7431 = vmatpush1.msra.mxu0 0.0
    %7432 = vmatprep.subr.mxu0 0.0
    %v7433 = vand.u32 %v7094, 4294901760
    %v7434 = vsub.f32 %v7094, %v7433
    %v7435 = vand.u32 %v7434, 4294901760
    %7436 = vmatpush1.msra.mxu0 %v7435
    %7437 = vmatprep.subr.mxu0 0.0
    %v7438 = vand.u32 %v7093, 4294901760
    %v7439 = vsub.f32 %v7093, %v7438
    %v7440 = vand.u32 %v7439, 4294901760
    %7441 = vmatpush1.msra.mxu0 %v7440
    %7442 = vmatprep.subr.mxu0 0.0
    %7443 = vmatpush2.msra.mxu0 0.0
    %7444 = vmatprep.subr.mxu0 0.0
    %7445 = vmatpush2.msra.mxu0 0.0
    %7446 = vmatprep.subr.mxu0 0.0
    %7447 = vmatpush2.msra.mxu0 0.0
    %7448 = vmatprep.subr.mxu0 0.0
    %7449 = vmatpush2.msra.mxu0 0.0
    %7450 = vmatprep.subr.mxu0 0.0
    %7451 = vmatpush2.msra.mxu0 0.0
    %7452 = vmatprep.subr.mxu0 0.0
    %7453 = vmatpush2.msra.mxu0 0.0
    %7454 = vmatprep.subr.mxu0 0.0
    %7455 = vmatpush2.msra.mxu0 0.0
    %7456 = vmatprep.subr.mxu0 0.0
    %7457 = vmatpush2.msra.mxu0 0.0
    %7458 = vmatprep.subr.mxu0 0.0
    %7459 = vmatpush2.msra.mxu0 0.0
    %7460 = vmatprep.subr.mxu0 0.0
    %7461 = vmatpush2.msra.mxu0 0.0
    %7462 = vmatprep.subr.mxu0 0.0
    %7463 = vmatpush2.msra.mxu0 0.0
    %7464 = vmatprep.subr.mxu0 0.0
    %7465 = vmatpush2.msra.mxu0 0.0
    %7466 = vmatprep.subr.mxu0 0.0
    %7467 = vmatpush2.msra.mxu0 0.0
    %7468 = vmatprep.subr.mxu0 0.0
    %7469 = vmatpush2.msra.mxu0 0.0
    %7470 = vmatprep.subr.mxu0 0.0
    %7471 = vmatpush2.msra.mxu0 0.0
    %7472 = vmatprep.subr.mxu0 0.0
    %7473 = vmatpush2.msra.mxu0 0.0
    %7474 = vmatprep.mubr.f32.mxu0 0.0
    %v7475 = vand.u32 %v4984, 4294901760
    %7476 = vmatmul.mubr.f32.gmra.mxu0 %v7475
    %v7477 = vpop.f32.mrf.mxu0
    %v7478 = vadd.f32 %v7401, %v7477
    %v7479 = vpop.f32.mrf.mxu0
    %7480 = vdwg.mxu0
    %7481 = vmatprep.subr.mxu0 0.0
    %7482 = vmatpush1.msra.mxu0 0.0
    %7483 = vmatprep.subr.mxu0 0.0
    %7484 = vmatpush1.msra.mxu0 0.0
    %7485 = vmatprep.subr.mxu0 0.0
    %7486 = vmatpush1.msra.mxu0 0.0
    %7487 = vmatprep.subr.mxu0 0.0
    %7488 = vmatpush1.msra.mxu0 0.0
    %7489 = vmatprep.subr.mxu0 0.0
    %7490 = vmatpush1.msra.mxu0 0.0
    %7491 = vmatprep.subr.mxu0 0.0
    %7492 = vmatpush1.msra.mxu0 0.0
    %7493 = vmatprep.subr.mxu0 0.0
    %7494 = vmatpush1.msra.mxu0 0.0
    %7495 = vmatprep.subr.mxu0 0.0
    %7496 = vmatpush1.msra.mxu0 0.0
    %7497 = vmatprep.subr.mxu0 0.0
    %7498 = vmatpush1.msra.mxu0 0.0
    %7499 = vmatprep.subr.mxu0 0.0
    %7500 = vmatpush1.msra.mxu0 0.0
    %7501 = vmatprep.subr.mxu0 0.0
    %7502 = vmatpush1.msra.mxu0 0.0
    %7503 = vmatprep.subr.mxu0 0.0
    %7504 = vmatpush1.msra.mxu0 0.0
    %7505 = vmatprep.subr.mxu0 0.0
    %7506 = vmatpush1.msra.mxu0 0.0
    %7507 = vmatprep.subr.mxu0 0.0
    %7508 = vmatpush1.msra.mxu0 0.0
    %7509 = vmatprep.subr.mxu0 0.0
    %v7510 = vand.u32 %v7094, 4294901760
    %7511 = vmatpush1.msra.mxu0 %v7510
    %7512 = vmatprep.subr.mxu0 0.0
    %v7513 = vand.u32 %v7093, 4294901760
    %7514 = vmatpush1.msra.mxu0 %v7513
    %7515 = vmatprep.subr.mxu0 0.0
    %7516 = vmatpush2.msra.mxu0 0.0
    %7517 = vmatprep.subr.mxu0 0.0
    %7518 = vmatpush2.msra.mxu0 0.0
    %7519 = vmatprep.subr.mxu0 0.0
    %7520 = vmatpush2.msra.mxu0 0.0
    %7521 = vmatprep.subr.mxu0 0.0
    %7522 = vmatpush2.msra.mxu0 0.0
    %7523 = vmatprep.subr.mxu0 0.0
    %7524 = vmatpush2.msra.mxu0 0.0
    %7525 = vmatprep.subr.mxu0 0.0
    %7526 = vmatpush2.msra.mxu0 0.0
    %7527 = vmatprep.subr.mxu0 0.0
    %7528 = vmatpush2.msra.mxu0 0.0
    %7529 = vmatprep.subr.mxu0 0.0
    %7530 = vmatpush2.msra.mxu0 0.0
    %7531 = vmatprep.subr.mxu0 0.0
    %7532 = vmatpush2.msra.mxu0 0.0
    %7533 = vmatprep.subr.mxu0 0.0
    %7534 = vmatpush2.msra.mxu0 0.0
    %7535 = vmatprep.subr.mxu0 0.0
    %7536 = vmatpush2.msra.mxu0 0.0
    %7537 = vmatprep.subr.mxu0 0.0
    %7538 = vmatpush2.msra.mxu0 0.0
    %7539 = vmatprep.subr.mxu0 0.0
    %7540 = vmatpush2.msra.mxu0 0.0
    %7541 = vmatprep.subr.mxu0 0.0
    %7542 = vmatpush2.msra.mxu0 0.0
    %7543 = vmatprep.subr.mxu0 0.0
    %7544 = vmatpush2.msra.mxu0 0.0
    %7545 = vmatprep.subr.mxu0 0.0
    %7546 = vmatpush2.msra.mxu0 0.0
    %7547 = vmatprep.mubr.f32.mxu0 0.0
    %v7548 = vand.u32 %v4984, 4294901760
    %7549 = vmatmul.mubr.f32.gmra.mxu0 %v7548
    %v7550 = vpop.f32.mrf.mxu0
    %v7551 = vadd.f32 %v7478, %v7550
    %v7552 = vpop.f32.mrf.mxu0
    %7553 = vdwg.mxu0
    %v7555 = vsel %vm5445, %v7551, 0
    %7557 = vmatprep.subr.mxu0 0.0
    %7558 = vmatpush1.msra.mxu0 0.0
    %7559 = vmatprep.subr.mxu0 0.0
    %7560 = vmatpush1.msra.mxu0 0.0
    %7561 = vmatprep.subr.mxu0 0.0
    %7562 = vmatpush1.msra.mxu0 0.0
    %7563 = vmatprep.subr.mxu0 0.0
    %7564 = vmatpush1.msra.mxu0 0.0
    %7565 = vmatprep.subr.mxu0 0.0
    %7566 = vmatpush1.msra.mxu0 0.0
    %7567 = vmatprep.subr.mxu0 0.0
    %7568 = vmatpush1.msra.mxu0 0.0
    %7569 = vmatprep.subr.mxu0 0.0
    %7570 = vmatpush1.msra.mxu0 0.0
    %7571 = vmatprep.subr.mxu0 0.0
    %7572 = vmatpush1.msra.mxu0 0.0
    %7573 = vmatprep.subr.mxu0 0.0
    %v7574 = vand.u32 %v4436, 4294901760
    %7575 = vmatpush1.msra.mxu0 %v7574
    %7576 = vmatprep.subr.mxu0 0.0
    %v7577 = vand.u32 %v4435, 4294901760
    %7578 = vmatpush1.msra.mxu0 %v7577
    %7579 = vmatprep.subr.mxu0 0.0
    %v7580 = vand.u32 %v4434, 4294901760
    %7581 = vmatpush1.msra.mxu0 %v7580
    %7582 = vmatprep.subr.mxu0 0.0
    %v7583 = vand.u32 %v4433, 4294901760
    %7584 = vmatpush1.msra.mxu0 %v7583
    %7585 = vmatprep.subr.mxu0 0.0
    %v7586 = vand.u32 %v4432, 4294901760
    %7587 = vmatpush1.msra.mxu0 %v7586
    %7588 = vmatprep.subr.mxu0 0.0
    %v7589 = vand.u32 %v4431, 4294901760
    %7590 = vmatpush1.msra.mxu0 %v7589
    %7591 = vmatprep.subr.mxu0 0.0
    %v7592 = vand.u32 %v4430, 4294901760
    %7593 = vmatpush1.msra.mxu0 %v7592
    %7594 = vmatprep.subr.mxu0 0.0
    %v7595 = vand.u32 %v4429, 4294901760
    %7596 = vmatpush1.msra.mxu0 %v7595
    %7597 = vmatprep.subr.mxu0 0.0
    %7598 = vmatpush2.msra.mxu0 0.0
    %7599 = vmatprep.subr.mxu0 0.0
    %7600 = vmatpush2.msra.mxu0 0.0
    %7601 = vmatprep.subr.mxu0 0.0
    %7602 = vmatpush2.msra.mxu0 0.0
    %7603 = vmatprep.subr.mxu0 0.0
    %7604 = vmatpush2.msra.mxu0 0.0
    %7605 = vmatprep.subr.mxu0 0.0
    %7606 = vmatpush2.msra.mxu0 0.0
    %7607 = vmatprep.subr.mxu0 0.0
    %7608 = vmatpush2.msra.mxu0 0.0
    %7609 = vmatprep.subr.mxu0 0.0
    %7610 = vmatpush2.msra.mxu0 0.0
    %7611 = vmatprep.subr.mxu0 0.0
    %7612 = vmatpush2.msra.mxu0 0.0
    %7613 = vmatprep.subr.mxu0 0.0
    %7614 = vmatpush2.msra.mxu0 0.0
    %7615 = vmatprep.subr.mxu0 0.0
    %7616 = vmatpush2.msra.mxu0 0.0
    %7617 = vmatprep.subr.mxu0 0.0
    %7618 = vmatpush2.msra.mxu0 0.0
    %7619 = vmatprep.subr.mxu0 0.0
    %7620 = vmatpush2.msra.mxu0 0.0
    %7621 = vmatprep.subr.mxu0 0.0
    %7622 = vmatpush2.msra.mxu0 0.0
    %7623 = vmatprep.subr.mxu0 0.0
    %7624 = vmatpush2.msra.mxu0 0.0
    %7625 = vmatprep.subr.mxu0 0.0
    %7626 = vmatpush2.msra.mxu0 0.0
    %7627 = vmatprep.subr.mxu0 0.0
    %7628 = vmatpush2.msra.mxu0 0.0
    %7629 = vmatprep.mubr.f32.mxu0 0.0
    %v7630 = vand.u32 %v7555, 4294901760
    %v7631 = vsub.f32 %v7555, %v7630
    %v7632 = vand.u32 %v7631, 4294901760
    %v7633 = vsub.f32 %v7631, %v7632
    %v7634 = vand.u32 %v7633, 4294901760
    %7635 = vmatmul.mubr.f32.gmra.mxu0 %v7634
    %v7636 = vpop.f32.mrf.mxu0
    %v7637 = vadd.f32 %v4437, %v7636
    %v7638 = vpop.f32.mrf.mxu0
    %7639 = vdwg.mxu0
    %7640 = vmatprep.subr.mxu0 0.0
    %7641 = vmatpush1.msra.mxu0 0.0
    %7642 = vmatprep.subr.mxu0 0.0
    %7643 = vmatpush1.msra.mxu0 0.0
    %7644 = vmatprep.subr.mxu0 0.0
    %7645 = vmatpush1.msra.mxu0 0.0
    %7646 = vmatprep.subr.mxu0 0.0
    %7647 = vmatpush1.msra.mxu0 0.0
    %7648 = vmatprep.subr.mxu0 0.0
    %7649 = vmatpush1.msra.mxu0 0.0
    %7650 = vmatprep.subr.mxu0 0.0
    %7651 = vmatpush1.msra.mxu0 0.0
    %7652 = vmatprep.subr.mxu0 0.0
    %7653 = vmatpush1.msra.mxu0 0.0
    %7654 = vmatprep.subr.mxu0 0.0
    %7655 = vmatpush1.msra.mxu0 0.0
    %7656 = vmatprep.subr.mxu0 0.0
    %v7657 = vand.u32 %v4436, 4294901760
    %v7658 = vsub.f32 %v4436, %v7657
    %v7659 = vand.u32 %v7658, 4294901760
    %v7660 = vsub.f32 %v7658, %v7659
    %v7661 = vand.u32 %v7660, 4294901760
    %7662 = vmatpush1.msra.mxu0 %v7661
    %7663 = vmatprep.subr.mxu0 0.0
    %v7664 = vand.u32 %v4435, 4294901760
    %v7665 = vsub.f32 %v4435, %v7664
    %v7666 = vand.u32 %v7665, 4294901760
    %v7667 = vsub.f32 %v7665, %v7666
    %v7668 = vand.u32 %v7667, 4294901760
    %7669 = vmatpush1.msra.mxu0 %v7668
    %7670 = vmatprep.subr.mxu0 0.0
    %v7671 = vand.u32 %v4434, 4294901760
    %v7672 = vsub.f32 %v4434, %v7671
    %v7673 = vand.u32 %v7672, 4294901760
    %v7674 = vsub.f32 %v7672, %v7673
    %v7675 = vand.u32 %v7674, 4294901760
    %7676 = vmatpush1.msra.mxu0 %v7675
    %7677 = vmatprep.subr.mxu0 0.0
    %v7678 = vand.u32 %v4433, 4294901760
    %v7679 = vsub.f32 %v4433, %v7678
    %v7680 = vand.u32 %v7679, 4294901760
    %v7681 = vsub.f32 %v7679, %v7680
    %v7682 = vand.u32 %v7681, 4294901760
    %7683 = vmatpush1.msra.mxu0 %v7682
    %7684 = vmatprep.subr.mxu0 0.0
    %v7685 = vand.u32 %v4432, 4294901760
    %v7686 = vsub.f32 %v4432, %v7685
    %v7687 = vand.u32 %v7686, 4294901760
    %v7688 = vsub.f32 %v7686, %v7687
    %v7689 = vand.u32 %v7688, 4294901760
    %7690 = vmatpush1.msra.mxu0 %v7689
    %7691 = vmatprep.subr.mxu0 0.0
    %v7692 = vand.u32 %v4431, 4294901760
    %v7693 = vsub.f32 %v4431, %v7692
    %v7694 = vand.u32 %v7693, 4294901760
    %v7695 = vsub.f32 %v7693, %v7694
    %v7696 = vand.u32 %v7695, 4294901760
    %7697 = vmatpush1.msra.mxu0 %v7696
    %7698 = vmatprep.subr.mxu0 0.0
    %v7699 = vand.u32 %v4430, 4294901760
    %v7700 = vsub.f32 %v4430, %v7699
    %v7701 = vand.u32 %v7700, 4294901760
    %v7702 = vsub.f32 %v7700, %v7701
    %v7703 = vand.u32 %v7702, 4294901760
    %7704 = vmatpush1.msra.mxu0 %v7703
    %7705 = vmatprep.subr.mxu0 0.0
    %v7706 = vand.u32 %v4429, 4294901760
    %v7707 = vsub.f32 %v4429, %v7706
    %v7708 = vand.u32 %v7707, 4294901760
    %v7709 = vsub.f32 %v7707, %v7708
    %v7710 = vand.u32 %v7709, 4294901760
    %7711 = vmatpush1.msra.mxu0 %v7710
    %7712 = vmatprep.subr.mxu0 0.0
    %7713 = vmatpush2.msra.mxu0 0.0
    %7714 = vmatprep.subr.mxu0 0.0
    %7715 = vmatpush2.msra.mxu0 0.0
    %7716 = vmatprep.subr.mxu0 0.0
    %7717 = vmatpush2.msra.mxu0 0.0
    %7718 = vmatprep.subr.mxu0 0.0
    %7719 = vmatpush2.msra.mxu0 0.0
    %7720 = vmatprep.subr.mxu0 0.0
    %7721 = vmatpush2.msra.mxu0 0.0
    %7722 = vmatprep.subr.mxu0 0.0
    %7723 = vmatpush2.msra.mxu0 0.0
    %7724 = vmatprep.subr.mxu0 0.0
    %7725 = vmatpush2.msra.mxu0 0.0
    %7726 = vmatprep.subr.mxu0 0.0
    %7727 = vmatpush2.msra.mxu0 0.0
    %7728 = vmatprep.subr.mxu0 0.0
    %7729 = vmatpush2.msra.mxu0 0.0
    %7730 = vmatprep.subr.mxu0 0.0
    %7731 = vmatpush2.msra.mxu0 0.0
    %7732 = vmatprep.subr.mxu0 0.0
    %7733 = vmatpush2.msra.mxu0 0.0
    %7734 = vmatprep.subr.mxu0 0.0
    %7735 = vmatpush2.msra.mxu0 0.0
    %7736 = vmatprep.subr.mxu0 0.0
    %7737 = vmatpush2.msra.mxu0 0.0
    %7738 = vmatprep.subr.mxu0 0.0
    %7739 = vmatpush2.msra.mxu0 0.0
    %7740 = vmatprep.subr.mxu0 0.0
    %7741 = vmatpush2.msra.mxu0 0.0
    %7742 = vmatprep.subr.mxu0 0.0
    %7743 = vmatpush2.msra.mxu0 0.0
    %7744 = vmatprep.mubr.f32.mxu0 0.0
    %v7745 = vand.u32 %v7555, 4294901760
    %7746 = vmatmul.mubr.f32.gmra.mxu0 %v7745
    %v7747 = vpop.f32.mrf.mxu0
    %v7748 = vadd.f32 %v7637, %v7747
    %v7749 = vpop.f32.mrf.mxu0
    %7750 = vdwg.mxu0
    %7751 = vmatprep.subr.mxu0 0.0
    %7752 = vmatpush1.msra.mxu0 0.0
    %7753 = vmatprep.subr.mxu0 0.0
    %7754 = vmatpush1.msra.mxu0 0.0
    %7755 = vmatprep.subr.mxu0 0.0
    %7756 = vmatpush1.msra.mxu0 0.0
    %7757 = vmatprep.subr.mxu0 0.0
    %7758 = vmatpush1.msra.mxu0 0.0
    %7759 = vmatprep.subr.mxu0 0.0
    %7760 = vmatpush1.msra.mxu0 0.0
    %7761 = vmatprep.subr.mxu0 0.0
    %7762 = vmatpush1.msra.mxu0 0.0
    %7763 = vmatprep.subr.mxu0 0.0
    %7764 = vmatpush1.msra.mxu0 0.0
    %7765 = vmatprep.subr.mxu0 0.0
    %7766 = vmatpush1.msra.mxu0 0.0
    %7767 = vmatprep.subr.mxu0 0.0
    %v7768 = vand.u32 %v4436, 4294901760
    %v7769 = vsub.f32 %v4436, %v7768
    %7770 = vmatpush1.msra.mxu0 %v7769
    %7771 = vmatprep.subr.mxu0 0.0
    %v7772 = vand.u32 %v4435, 4294901760
    %v7773 = vsub.f32 %v4435, %v7772
    %7774 = vmatpush1.msra.mxu0 %v7773
    %7775 = vmatprep.subr.mxu0 0.0
    %v7776 = vand.u32 %v4434, 4294901760
    %v7777 = vsub.f32 %v4434, %v7776
    %7778 = vmatpush1.msra.mxu0 %v7777
    %7779 = vmatprep.subr.mxu0 0.0
    %v7780 = vand.u32 %v4433, 4294901760
    %v7781 = vsub.f32 %v4433, %v7780
    %7782 = vmatpush1.msra.mxu0 %v7781
    %7783 = vmatprep.subr.mxu0 0.0
    %v7784 = vand.u32 %v4432, 4294901760
    %v7785 = vsub.f32 %v4432, %v7784
    %7786 = vmatpush1.msra.mxu0 %v7785
    %7787 = vmatprep.subr.mxu0 0.0
    %v7788 = vand.u32 %v4431, 4294901760
    %v7789 = vsub.f32 %v4431, %v7788
    %7790 = vmatpush1.msra.mxu0 %v7789
    %7791 = vmatprep.subr.mxu0 0.0
    %v7792 = vand.u32 %v4430, 4294901760
    %v7793 = vsub.f32 %v4430, %v7792
    %7794 = vmatpush1.msra.mxu0 %v7793
    %7795 = vmatprep.subr.mxu0 0.0
    %v7796 = vand.u32 %v4429, 4294901760
    %v7797 = vsub.f32 %v4429, %v7796
    %7798 = vmatpush1.msra.mxu0 %v7797
    %7799 = vmatprep.subr.mxu0 0.0
    %7800 = vmatpush2.msra.mxu0 0.0
    %7801 = vmatprep.subr.mxu0 0.0
    %7802 = vmatpush2.msra.mxu0 0.0
    %7803 = vmatprep.subr.mxu0 0.0
    %7804 = vmatpush2.msra.mxu0 0.0
    %7805 = vmatprep.subr.mxu0 0.0
    %7806 = vmatpush2.msra.mxu0 0.0
    %7807 = vmatprep.subr.mxu0 0.0
    %7808 = vmatpush2.msra.mxu0 0.0
    %7809 = vmatprep.subr.mxu0 0.0
    %7810 = vmatpush2.msra.mxu0 0.0
    %7811 = vmatprep.subr.mxu0 0.0
    %7812 = vmatpush2.msra.mxu0 0.0
    %7813 = vmatprep.subr.mxu0 0.0
    %7814 = vmatpush2.msra.mxu0 0.0
    %7815 = vmatprep.subr.mxu0 0.0
    %7816 = vmatpush2.msra.mxu0 0.0
    %7817 = vmatprep.subr.mxu0 0.0
    %7818 = vmatpush2.msra.mxu0 0.0
    %7819 = vmatprep.subr.mxu0 0.0
    %7820 = vmatpush2.msra.mxu0 0.0
    %7821 = vmatprep.subr.mxu0 0.0
    %7822 = vmatpush2.msra.mxu0 0.0
    %7823 = vmatprep.subr.mxu0 0.0
    %7824 = vmatpush2.msra.mxu0 0.0
    %7825 = vmatprep.subr.mxu0 0.0
    %7826 = vmatpush2.msra.mxu0 0.0
    %7827 = vmatprep.subr.mxu0 0.0
    %7828 = vmatpush2.msra.mxu0 0.0
    %7829 = vmatprep.subr.mxu0 0.0
    %7830 = vmatpush2.msra.mxu0 0.0
    %7831 = vmatprep.mubr.f32.mxu0 0.0
    %v7832 = vand.u32 %v7555, 4294901760
    %v7833 = vsub.f32 %v7555, %v7832
    %7834 = vmatmul.mubr.f32.gmra.mxu0 %v7833
    %v7835 = vpop.f32.mrf.mxu0
    %v7836 = vadd.f32 %v7748, %v7835
    %v7837 = vpop.f32.mrf.mxu0
    %7838 = vdwg.mxu0
    %7839 = vmatprep.subr.mxu0 0.0
    %7840 = vmatpush1.msra.mxu0 0.0
    %7841 = vmatprep.subr.mxu0 0.0
    %7842 = vmatpush1.msra.mxu0 0.0
    %7843 = vmatprep.subr.mxu0 0.0
    %7844 = vmatpush1.msra.mxu0 0.0
    %7845 = vmatprep.subr.mxu0 0.0
    %7846 = vmatpush1.msra.mxu0 0.0
    %7847 = vmatprep.subr.mxu0 0.0
    %7848 = vmatpush1.msra.mxu0 0.0
    %7849 = vmatprep.subr.mxu0 0.0
    %7850 = vmatpush1.msra.mxu0 0.0
    %7851 = vmatprep.subr.mxu0 0.0
    %7852 = vmatpush1.msra.mxu0 0.0
    %7853 = vmatprep.subr.mxu0 0.0
    %7854 = vmatpush1.msra.mxu0 0.0
    %7855 = vmatprep.subr.mxu0 0.0
    %v7856 = vand.u32 %v4436, 4294901760
    %7857 = vmatpush1.msra.mxu0 %v7856
    %7858 = vmatprep.subr.mxu0 0.0
    %v7859 = vand.u32 %v4435, 4294901760
    %7860 = vmatpush1.msra.mxu0 %v7859
    %7861 = vmatprep.subr.mxu0 0.0
    %v7862 = vand.u32 %v4434, 4294901760
    %7863 = vmatpush1.msra.mxu0 %v7862
    %7864 = vmatprep.subr.mxu0 0.0
    %v7865 = vand.u32 %v4433, 4294901760
    %7866 = vmatpush1.msra.mxu0 %v7865
    %7867 = vmatprep.subr.mxu0 0.0
    %v7868 = vand.u32 %v4432, 4294901760
    %7869 = vmatpush1.msra.mxu0 %v7868
    %7870 = vmatprep.subr.mxu0 0.0
    %v7871 = vand.u32 %v4431, 4294901760
    %7872 = vmatpush1.msra.mxu0 %v7871
    %7873 = vmatprep.subr.mxu0 0.0
    %v7874 = vand.u32 %v4430, 4294901760
    %7875 = vmatpush1.msra.mxu0 %v7874
    %7876 = vmatprep.subr.mxu0 0.0
    %v7877 = vand.u32 %v4429, 4294901760
    %7878 = vmatpush1.msra.mxu0 %v7877
    %7879 = vmatprep.subr.mxu0 0.0
    %7880 = vmatpush2.msra.mxu0 0.0
    %7881 = vmatprep.subr.mxu0 0.0
    %7882 = vmatpush2.msra.mxu0 0.0
    %7883 = vmatprep.subr.mxu0 0.0
    %7884 = vmatpush2.msra.mxu0 0.0
    %7885 = vmatprep.subr.mxu0 0.0
    %7886 = vmatpush2.msra.mxu0 0.0
    %7887 = vmatprep.subr.mxu0 0.0
    %7888 = vmatpush2.msra.mxu0 0.0
    %7889 = vmatprep.subr.mxu0 0.0
    %7890 = vmatpush2.msra.mxu0 0.0
    %7891 = vmatprep.subr.mxu0 0.0
    %7892 = vmatpush2.msra.mxu0 0.0
    %7893 = vmatprep.subr.mxu0 0.0
    %7894 = vmatpush2.msra.mxu0 0.0
    %7895 = vmatprep.subr.mxu0 0.0
    %7896 = vmatpush2.msra.mxu0 0.0
    %7897 = vmatprep.subr.mxu0 0.0
    %7898 = vmatpush2.msra.mxu0 0.0
    %7899 = vmatprep.subr.mxu0 0.0
    %7900 = vmatpush2.msra.mxu0 0.0
    %7901 = vmatprep.subr.mxu0 0.0
    %7902 = vmatpush2.msra.mxu0 0.0
    %7903 = vmatprep.subr.mxu0 0.0
    %7904 = vmatpush2.msra.mxu0 0.0
    %7905 = vmatprep.subr.mxu0 0.0
    %7906 = vmatpush2.msra.mxu0 0.0
    %7907 = vmatprep.subr.mxu0 0.0
    %7908 = vmatpush2.msra.mxu0 0.0
    %7909 = vmatprep.subr.mxu0 0.0
    %7910 = vmatpush2.msra.mxu0 0.0
    %7911 = vmatprep.mubr.f32.mxu0 0.0
    %v7912 = vand.u32 %v7555, 4294901760
    %v7913 = vsub.f32 %v7555, %v7912
    %v7914 = vand.u32 %v7913, 4294901760
    %7915 = vmatmul.mubr.f32.gmra.mxu0 %v7914
    %v7916 = vpop.f32.mrf.mxu0
    %v7917 = vadd.f32 %v7836, %v7916
    %v7918 = vpop.f32.mrf.mxu0
    %7919 = vdwg.mxu0
    %7920 = vmatprep.subr.mxu0 0.0
    %7921 = vmatpush1.msra.mxu0 0.0
    %7922 = vmatprep.subr.mxu0 0.0
    %7923 = vmatpush1.msra.mxu0 0.0
    %7924 = vmatprep.subr.mxu0 0.0
    %7925 = vmatpush1.msra.mxu0 0.0
    %7926 = vmatprep.subr.mxu0 0.0
    %7927 = vmatpush1.msra.mxu0 0.0
    %7928 = vmatprep.subr.mxu0 0.0
    %7929 = vmatpush1.msra.mxu0 0.0
    %7930 = vmatprep.subr.mxu0 0.0
    %7931 = vmatpush1.msra.mxu0 0.0
    %7932 = vmatprep.subr.mxu0 0.0
    %7933 = vmatpush1.msra.mxu0 0.0
    %7934 = vmatprep.subr.mxu0 0.0
    %7935 = vmatpush1.msra.mxu0 0.0
    %7936 = vmatprep.subr.mxu0 0.0
    %v7937 = vand.u32 %v4436, 4294901760
    %v7938 = vsub.f32 %v4436, %v7937
    %v7939 = vand.u32 %v7938, 4294901760
    %7940 = vmatpush1.msra.mxu0 %v7939
    %7941 = vmatprep.subr.mxu0 0.0
    %v7942 = vand.u32 %v4435, 4294901760
    %v7943 = vsub.f32 %v4435, %v7942
    %v7944 = vand.u32 %v7943, 4294901760
    %7945 = vmatpush1.msra.mxu0 %v7944
    %7946 = vmatprep.subr.mxu0 0.0
    %v7947 = vand.u32 %v4434, 4294901760
    %v7948 = vsub.f32 %v4434, %v7947
    %v7949 = vand.u32 %v7948, 4294901760
    %7950 = vmatpush1.msra.mxu0 %v7949
    %7951 = vmatprep.subr.mxu0 0.0
    %v7952 = vand.u32 %v4433, 4294901760
    %v7953 = vsub.f32 %v4433, %v7952
    %v7954 = vand.u32 %v7953, 4294901760
    %7955 = vmatpush1.msra.mxu0 %v7954
    %7956 = vmatprep.subr.mxu0 0.0
    %v7957 = vand.u32 %v4432, 4294901760
    %v7958 = vsub.f32 %v4432, %v7957
    %v7959 = vand.u32 %v7958, 4294901760
    %7960 = vmatpush1.msra.mxu0 %v7959
    %7961 = vmatprep.subr.mxu0 0.0
    %v7962 = vand.u32 %v4431, 4294901760
    %v7963 = vsub.f32 %v4431, %v7962
    %v7964 = vand.u32 %v7963, 4294901760
    %7965 = vmatpush1.msra.mxu0 %v7964
    %7966 = vmatprep.subr.mxu0 0.0
    %v7967 = vand.u32 %v4430, 4294901760
    %v7968 = vsub.f32 %v4430, %v7967
    %v7969 = vand.u32 %v7968, 4294901760
    %7970 = vmatpush1.msra.mxu0 %v7969
    %7971 = vmatprep.subr.mxu0 0.0
    %v7972 = vand.u32 %v4429, 4294901760
    %v7973 = vsub.f32 %v4429, %v7972
    %v7974 = vand.u32 %v7973, 4294901760
    %7975 = vmatpush1.msra.mxu0 %v7974
    %7976 = vmatprep.subr.mxu0 0.0
    %7977 = vmatpush2.msra.mxu0 0.0
    %7978 = vmatprep.subr.mxu0 0.0
    %7979 = vmatpush2.msra.mxu0 0.0
    %7980 = vmatprep.subr.mxu0 0.0
    %7981 = vmatpush2.msra.mxu0 0.0
    %7982 = vmatprep.subr.mxu0 0.0
    %7983 = vmatpush2.msra.mxu0 0.0
    %7984 = vmatprep.subr.mxu0 0.0
    %7985 = vmatpush2.msra.mxu0 0.0
    %7986 = vmatprep.subr.mxu0 0.0
    %7987 = vmatpush2.msra.mxu0 0.0
    %7988 = vmatprep.subr.mxu0 0.0
    %7989 = vmatpush2.msra.mxu0 0.0
    %7990 = vmatprep.subr.mxu0 0.0
    %7991 = vmatpush2.msra.mxu0 0.0
    %7992 = vmatprep.subr.mxu0 0.0
    %7993 = vmatpush2.msra.mxu0 0.0
    %7994 = vmatprep.subr.mxu0 0.0
    %7995 = vmatpush2.msra.mxu0 0.0
    %7996 = vmatprep.subr.mxu0 0.0
    %7997 = vmatpush2.msra.mxu0 0.0
    %7998 = vmatprep.subr.mxu0 0.0
    %7999 = vmatpush2.msra.mxu0 0.0
    %8000 = vmatprep.subr.mxu0 0.0
    %8001 = vmatpush2.msra.mxu0 0.0
    %8002 = vmatprep.subr.mxu0 0.0
    %8003 = vmatpush2.msra.mxu0 0.0
    %8004 = vmatprep.subr.mxu0 0.0
    %8005 = vmatpush2.msra.mxu0 0.0
    %8006 = vmatprep.subr.mxu0 0.0
    %8007 = vmatpush2.msra.mxu0 0.0
    %8008 = vmatprep.mubr.f32.mxu0 0.0
    %v8009 = vand.u32 %v7555, 4294901760
    %8010 = vmatmul.mubr.f32.gmra.mxu0 %v8009
    %v8011 = vpop.f32.mrf.mxu0
    %v8012 = vadd.f32 %v7917, %v8011
    %v8013 = vpop.f32.mrf.mxu0
    %8014 = vdwg.mxu0
    %8015 = vmatprep.subr.mxu0 0.0
    %8016 = vmatpush1.msra.mxu0 0.0
    %8017 = vmatprep.subr.mxu0 0.0
    %8018 = vmatpush1.msra.mxu0 0.0
    %8019 = vmatprep.subr.mxu0 0.0
    %8020 = vmatpush1.msra.mxu0 0.0
    %8021 = vmatprep.subr.mxu0 0.0
    %8022 = vmatpush1.msra.mxu0 0.0
    %8023 = vmatprep.subr.mxu0 0.0
    %8024 = vmatpush1.msra.mxu0 0.0
    %8025 = vmatprep.subr.mxu0 0.0
    %8026 = vmatpush1.msra.mxu0 0.0
    %8027 = vmatprep.subr.mxu0 0.0
    %8028 = vmatpush1.msra.mxu0 0.0
    %8029 = vmatprep.subr.mxu0 0.0
    %8030 = vmatpush1.msra.mxu0 0.0
    %8031 = vmatprep.subr.mxu0 0.0
    %v8032 = vand.u32 %v4436, 4294901760
    %8033 = vmatpush1.msra.mxu0 %v8032
    %8034 = vmatprep.subr.mxu0 0.0
    %v8035 = vand.u32 %v4435, 4294901760
    %8036 = vmatpush1.msra.mxu0 %v8035
    %8037 = vmatprep.subr.mxu0 0.0
    %v8038 = vand.u32 %v4434, 4294901760
    %8039 = vmatpush1.msra.mxu0 %v8038
    %8040 = vmatprep.subr.mxu0 0.0
    %v8041 = vand.u32 %v4433, 4294901760
    %8042 = vmatpush1.msra.mxu0 %v8041
    %8043 = vmatprep.subr.mxu0 0.0
    %v8044 = vand.u32 %v4432, 4294901760
    %8045 = vmatpush1.msra.mxu0 %v8044
    %8046 = vmatprep.subr.mxu0 0.0
    %v8047 = vand.u32 %v4431, 4294901760
    %8048 = vmatpush1.msra.mxu0 %v8047
    %8049 = vmatprep.subr.mxu0 0.0
    %v8050 = vand.u32 %v4430, 4294901760
    %8051 = vmatpush1.msra.mxu0 %v8050
    %8052 = vmatprep.subr.mxu0 0.0
    %v8053 = vand.u32 %v4429, 4294901760
    %8054 = vmatpush1.msra.mxu0 %v8053
    %8055 = vmatprep.subr.mxu0 0.0
    %8056 = vmatpush2.msra.mxu0 0.0
    %8057 = vmatprep.subr.mxu0 0.0
    %8058 = vmatpush2.msra.mxu0 0.0
    %8059 = vmatprep.subr.mxu0 0.0
    %8060 = vmatpush2.msra.mxu0 0.0
    %8061 = vmatprep.subr.mxu0 0.0
    %8062 = vmatpush2.msra.mxu0 0.0
    %8063 = vmatprep.subr.mxu0 0.0
    %8064 = vmatpush2.msra.mxu0 0.0
    %8065 = vmatprep.subr.mxu0 0.0
    %8066 = vmatpush2.msra.mxu0 0.0
    %8067 = vmatprep.subr.mxu0 0.0
    %8068 = vmatpush2.msra.mxu0 0.0
    %8069 = vmatprep.subr.mxu0 0.0
    %8070 = vmatpush2.msra.mxu0 0.0
    %8071 = vmatprep.subr.mxu0 0.0
    %8072 = vmatpush2.msra.mxu0 0.0
    %8073 = vmatprep.subr.mxu0 0.0
    %8074 = vmatpush2.msra.mxu0 0.0
    %8075 = vmatprep.subr.mxu0 0.0
    %8076 = vmatpush2.msra.mxu0 0.0
    %8077 = vmatprep.subr.mxu0 0.0
    %8078 = vmatpush2.msra.mxu0 0.0
    %8079 = vmatprep.subr.mxu0 0.0
    %8080 = vmatpush2.msra.mxu0 0.0
    %8081 = vmatprep.subr.mxu0 0.0
    %8082 = vmatpush2.msra.mxu0 0.0
    %8083 = vmatprep.subr.mxu0 0.0
    %8084 = vmatpush2.msra.mxu0 0.0
    %8085 = vmatprep.subr.mxu0 0.0
    %8086 = vmatpush2.msra.mxu0 0.0
    %8087 = vmatprep.mubr.f32.mxu0 0.0
    %v8088 = vand.u32 %v7555, 4294901760
    %8089 = vmatmul.mubr.f32.gmra.mxu0 %v8088
    %v8090 = vpop.f32.mrf.mxu0
    %v8091 = vadd.f32 %v8012, %v8090
    %v8092 = vpop.f32.mrf.mxu0
    %8093 = vdwg.mxu0
    %8094 = vmatprep.subr.mxu0 0.0
    %8095 = vmatpush1.msra.mxu0 0.0
    %8096 = vmatprep.subr.mxu0 0.0
    %8097 = vmatpush1.msra.mxu0 0.0
    %8098 = vmatprep.subr.mxu0 0.0
    %8099 = vmatpush1.msra.mxu0 0.0
    %8100 = vmatprep.subr.mxu0 0.0
    %8101 = vmatpush1.msra.mxu0 0.0
    %8102 = vmatprep.subr.mxu0 0.0
    %8103 = vmatpush1.msra.mxu0 0.0
    %8104 = vmatprep.subr.mxu0 0.0
    %8105 = vmatpush1.msra.mxu0 0.0
    %8106 = vmatprep.subr.mxu0 0.0
    %8107 = vmatpush1.msra.mxu0 0.0
    %8108 = vmatprep.subr.mxu0 0.0
    %8109 = vmatpush1.msra.mxu0 0.0
    %8110 = vmatprep.subr.mxu0 0.0
    %v8111 = vand.u32 %v4445, 4294901760
    %8112 = vmatpush1.msra.mxu0 %v8111
    %8113 = vmatprep.subr.mxu0 0.0
    %v8114 = vand.u32 %v4444, 4294901760
    %8115 = vmatpush1.msra.mxu0 %v8114
    %8116 = vmatprep.subr.mxu0 0.0
    %v8117 = vand.u32 %v4443, 4294901760
    %8118 = vmatpush1.msra.mxu0 %v8117
    %8119 = vmatprep.subr.mxu0 0.0
    %v8120 = vand.u32 %v4442, 4294901760
    %8121 = vmatpush1.msra.mxu0 %v8120
    %8122 = vmatprep.subr.mxu0 0.0
    %v8123 = vand.u32 %v4441, 4294901760
    %8124 = vmatpush1.msra.mxu0 %v8123
    %8125 = vmatprep.subr.mxu0 0.0
    %v8126 = vand.u32 %v4440, 4294901760
    %8127 = vmatpush1.msra.mxu0 %v8126
    %8128 = vmatprep.subr.mxu0 0.0
    %v8129 = vand.u32 %v4439, 4294901760
    %8130 = vmatpush1.msra.mxu0 %v8129
    %8131 = vmatprep.subr.mxu0 0.0
    %v8132 = vand.u32 %v4438, 4294901760
    %8133 = vmatpush1.msra.mxu0 %v8132
    %8134 = vmatprep.subr.mxu0 0.0
    %8135 = vmatpush2.msra.mxu0 0.0
    %8136 = vmatprep.subr.mxu0 0.0
    %8137 = vmatpush2.msra.mxu0 0.0
    %8138 = vmatprep.subr.mxu0 0.0
    %8139 = vmatpush2.msra.mxu0 0.0
    %8140 = vmatprep.subr.mxu0 0.0
    %8141 = vmatpush2.msra.mxu0 0.0
    %8142 = vmatprep.subr.mxu0 0.0
    %8143 = vmatpush2.msra.mxu0 0.0
    %8144 = vmatprep.subr.mxu0 0.0
    %8145 = vmatpush2.msra.mxu0 0.0
    %8146 = vmatprep.subr.mxu0 0.0
    %8147 = vmatpush2.msra.mxu0 0.0
    %8148 = vmatprep.subr.mxu0 0.0
    %8149 = vmatpush2.msra.mxu0 0.0
    %8150 = vmatprep.subr.mxu0 0.0
    %8151 = vmatpush2.msra.mxu0 0.0
    %8152 = vmatprep.subr.mxu0 0.0
    %8153 = vmatpush2.msra.mxu0 0.0
    %8154 = vmatprep.subr.mxu0 0.0
    %8155 = vmatpush2.msra.mxu0 0.0
    %8156 = vmatprep.subr.mxu0 0.0
    %8157 = vmatpush2.msra.mxu0 0.0
    %8158 = vmatprep.subr.mxu0 0.0
    %8159 = vmatpush2.msra.mxu0 0.0
    %8160 = vmatprep.subr.mxu0 0.0
    %8161 = vmatpush2.msra.mxu0 0.0
    %8162 = vmatprep.subr.mxu0 0.0
    %8163 = vmatpush2.msra.mxu0 0.0
    %8164 = vmatprep.subr.mxu0 0.0
    %8165 = vmatpush2.msra.mxu0 0.0
    %8166 = vmatprep.mubr.f32.mxu0 0.0
    %v8167 = vand.u32 %v7555, 4294901760
    %v8168 = vsub.f32 %v7555, %v8167
    %v8169 = vand.u32 %v8168, 4294901760
    %v8170 = vsub.f32 %v8168, %v8169
    %v8171 = vand.u32 %v8170, 4294901760
    %8172 = vmatmul.mubr.f32.gmra.mxu0 %v8171
    %v8173 = vpop.f32.mrf.mxu0
    %v8174 = vadd.f32 %v4446, %v8173
    %v8175 = vpop.f32.mrf.mxu0
    %8176 = vdwg.mxu0
    %8177 = vmatprep.subr.mxu0 0.0
    %8178 = vmatpush1.msra.mxu0 0.0
    %8179 = vmatprep.subr.mxu0 0.0
    %8180 = vmatpush1.msra.mxu0 0.0
    %8181 = vmatprep.subr.mxu0 0.0
    %8182 = vmatpush1.msra.mxu0 0.0
    %8183 = vmatprep.subr.mxu0 0.0
    %8184 = vmatpush1.msra.mxu0 0.0
    %8185 = vmatprep.subr.mxu0 0.0
    %8186 = vmatpush1.msra.mxu0 0.0
    %8187 = vmatprep.subr.mxu0 0.0
    %8188 = vmatpush1.msra.mxu0 0.0
    %8189 = vmatprep.subr.mxu0 0.0
    %8190 = vmatpush1.msra.mxu0 0.0
    %8191 = vmatprep.subr.mxu0 0.0
    %8192 = vmatpush1.msra.mxu0 0.0
    %8193 = vmatprep.subr.mxu0 0.0
    %v8194 = vand.u32 %v4445, 4294901760
    %v8195 = vsub.f32 %v4445, %v8194
    %v8196 = vand.u32 %v8195, 4294901760
    %v8197 = vsub.f32 %v8195, %v8196
    %v8198 = vand.u32 %v8197, 4294901760
    %8199 = vmatpush1.msra.mxu0 %v8198
    %8200 = vmatprep.subr.mxu0 0.0
    %v8201 = vand.u32 %v4444, 4294901760
    %v8202 = vsub.f32 %v4444, %v8201
    %v8203 = vand.u32 %v8202, 4294901760
    %v8204 = vsub.f32 %v8202, %v8203
    %v8205 = vand.u32 %v8204, 4294901760
    %8206 = vmatpush1.msra.mxu0 %v8205
    %8207 = vmatprep.subr.mxu0 0.0
    %v8208 = vand.u32 %v4443, 4294901760
    %v8209 = vsub.f32 %v4443, %v8208
    %v8210 = vand.u32 %v8209, 4294901760
    %v8211 = vsub.f32 %v8209, %v8210
    %v8212 = vand.u32 %v8211, 4294901760
    %8213 = vmatpush1.msra.mxu0 %v8212
    %8214 = vmatprep.subr.mxu0 0.0
    %v8215 = vand.u32 %v4442, 4294901760
    %v8216 = vsub.f32 %v4442, %v8215
    %v8217 = vand.u32 %v8216, 4294901760
    %v8218 = vsub.f32 %v8216, %v8217
    %v8219 = vand.u32 %v8218, 4294901760
    %8220 = vmatpush1.msra.mxu0 %v8219
    %8221 = vmatprep.subr.mxu0 0.0
    %v8222 = vand.u32 %v4441, 4294901760
    %v8223 = vsub.f32 %v4441, %v8222
    %v8224 = vand.u32 %v8223, 4294901760
    %v8225 = vsub.f32 %v8223, %v8224
    %v8226 = vand.u32 %v8225, 4294901760
    %8227 = vmatpush1.msra.mxu0 %v8226
    %8228 = vmatprep.subr.mxu0 0.0
    %v8229 = vand.u32 %v4440, 4294901760
    %v8230 = vsub.f32 %v4440, %v8229
    %v8231 = vand.u32 %v8230, 4294901760
    %v8232 = vsub.f32 %v8230, %v8231
    %v8233 = vand.u32 %v8232, 4294901760
    %8234 = vmatpush1.msra.mxu0 %v8233
    %8235 = vmatprep.subr.mxu0 0.0
    %v8236 = vand.u32 %v4439, 4294901760
    %v8237 = vsub.f32 %v4439, %v8236
    %v8238 = vand.u32 %v8237, 4294901760
    %v8239 = vsub.f32 %v8237, %v8238
    %v8240 = vand.u32 %v8239, 4294901760
    %8241 = vmatpush1.msra.mxu0 %v8240
    %8242 = vmatprep.subr.mxu0 0.0
    %v8243 = vand.u32 %v4438, 4294901760
    %v8244 = vsub.f32 %v4438, %v8243
    %v8245 = vand.u32 %v8244, 4294901760
    %v8246 = vsub.f32 %v8244, %v8245
    %v8247 = vand.u32 %v8246, 4294901760
    %8248 = vmatpush1.msra.mxu0 %v8247
    %8249 = vmatprep.subr.mxu0 0.0
    %8250 = vmatpush2.msra.mxu0 0.0
    %8251 = vmatprep.subr.mxu0 0.0
    %8252 = vmatpush2.msra.mxu0 0.0
    %8253 = vmatprep.subr.mxu0 0.0
    %8254 = vmatpush2.msra.mxu0 0.0
    %8255 = vmatprep.subr.mxu0 0.0
    %8256 = vmatpush2.msra.mxu0 0.0
    %8257 = vmatprep.subr.mxu0 0.0
    %8258 = vmatpush2.msra.mxu0 0.0
    %8259 = vmatprep.subr.mxu0 0.0
    %8260 = vmatpush2.msra.mxu0 0.0
    %8261 = vmatprep.subr.mxu0 0.0
    %8262 = vmatpush2.msra.mxu0 0.0
    %8263 = vmatprep.subr.mxu0 0.0
    %8264 = vmatpush2.msra.mxu0 0.0
    %8265 = vmatprep.subr.mxu0 0.0
    %8266 = vmatpush2.msra.mxu0 0.0
    %8267 = vmatprep.subr.mxu0 0.0
    %8268 = vmatpush2.msra.mxu0 0.0
    %8269 = vmatprep.subr.mxu0 0.0
    %8270 = vmatpush2.msra.mxu0 0.0
    %8271 = vmatprep.subr.mxu0 0.0
    %8272 = vmatpush2.msra.mxu0 0.0
    %8273 = vmatprep.subr.mxu0 0.0
    %8274 = vmatpush2.msra.mxu0 0.0
    %8275 = vmatprep.subr.mxu0 0.0
    %8276 = vmatpush2.msra.mxu0 0.0
    %8277 = vmatprep.subr.mxu0 0.0
    %8278 = vmatpush2.msra.mxu0 0.0
    %8279 = vmatprep.subr.mxu0 0.0
    %8280 = vmatpush2.msra.mxu0 0.0
    %8281 = vmatprep.mubr.f32.mxu0 0.0
    %v8282 = vand.u32 %v7555, 4294901760
    %8283 = vmatmul.mubr.f32.gmra.mxu0 %v8282
    %v8284 = vpop.f32.mrf.mxu0
    %v8285 = vadd.f32 %v8174, %v8284
    %v8286 = vpop.f32.mrf.mxu0
    %8287 = vdwg.mxu0
    %8288 = vmatprep.subr.mxu0 0.0
    %8289 = vmatpush1.msra.mxu0 0.0
    %8290 = vmatprep.subr.mxu0 0.0
    %8291 = vmatpush1.msra.mxu0 0.0
    %8292 = vmatprep.subr.mxu0 0.0
    %8293 = vmatpush1.msra.mxu0 0.0
    %8294 = vmatprep.subr.mxu0 0.0
    %8295 = vmatpush1.msra.mxu0 0.0
    %8296 = vmatprep.subr.mxu0 0.0
    %8297 = vmatpush1.msra.mxu0 0.0
    %8298 = vmatprep.subr.mxu0 0.0
    %8299 = vmatpush1.msra.mxu0 0.0
    %8300 = vmatprep.subr.mxu0 0.0
    %8301 = vmatpush1.msra.mxu0 0.0
    %8302 = vmatprep.subr.mxu0 0.0
    %8303 = vmatpush1.msra.mxu0 0.0
    %8304 = vmatprep.subr.mxu0 0.0
    %v8305 = vand.u32 %v4445, 4294901760
    %v8306 = vsub.f32 %v4445, %v8305
    %8307 = vmatpush1.msra.mxu0 %v8306
    %8308 = vmatprep.subr.mxu0 0.0
    %v8309 = vand.u32 %v4444, 4294901760
    %v8310 = vsub.f32 %v4444, %v8309
    %8311 = vmatpush1.msra.mxu0 %v8310
    %8312 = vmatprep.subr.mxu0 0.0
    %v8313 = vand.u32 %v4443, 4294901760
    %v8314 = vsub.f32 %v4443, %v8313
    %8315 = vmatpush1.msra.mxu0 %v8314
    %8316 = vmatprep.subr.mxu0 0.0
    %v8317 = vand.u32 %v4442, 4294901760
    %v8318 = vsub.f32 %v4442, %v8317
    %8319 = vmatpush1.msra.mxu0 %v8318
    %8320 = vmatprep.subr.mxu0 0.0
    %v8321 = vand.u32 %v4441, 4294901760
    %v8322 = vsub.f32 %v4441, %v8321
    %8323 = vmatpush1.msra.mxu0 %v8322
    %8324 = vmatprep.subr.mxu0 0.0
    %v8325 = vand.u32 %v4440, 4294901760
    %v8326 = vsub.f32 %v4440, %v8325
    %8327 = vmatpush1.msra.mxu0 %v8326
    %8328 = vmatprep.subr.mxu0 0.0
    %v8329 = vand.u32 %v4439, 4294901760
    %v8330 = vsub.f32 %v4439, %v8329
    %8331 = vmatpush1.msra.mxu0 %v8330
    %8332 = vmatprep.subr.mxu0 0.0
    %v8333 = vand.u32 %v4438, 4294901760
    %v8334 = vsub.f32 %v4438, %v8333
    %8335 = vmatpush1.msra.mxu0 %v8334
    %8336 = vmatprep.subr.mxu0 0.0
    %8337 = vmatpush2.msra.mxu0 0.0
    %8338 = vmatprep.subr.mxu0 0.0
    %8339 = vmatpush2.msra.mxu0 0.0
    %8340 = vmatprep.subr.mxu0 0.0
    %8341 = vmatpush2.msra.mxu0 0.0
    %8342 = vmatprep.subr.mxu0 0.0
    %8343 = vmatpush2.msra.mxu0 0.0
    %8344 = vmatprep.subr.mxu0 0.0
    %8345 = vmatpush2.msra.mxu0 0.0
    %8346 = vmatprep.subr.mxu0 0.0
    %8347 = vmatpush2.msra.mxu0 0.0
    %8348 = vmatprep.subr.mxu0 0.0
    %8349 = vmatpush2.msra.mxu0 0.0
    %8350 = vmatprep.subr.mxu0 0.0
    %8351 = vmatpush2.msra.mxu0 0.0
    %8352 = vmatprep.subr.mxu0 0.0
    %8353 = vmatpush2.msra.mxu0 0.0
    %8354 = vmatprep.subr.mxu0 0.0
    %8355 = vmatpush2.msra.mxu0 0.0
    %8356 = vmatprep.subr.mxu0 0.0
    %8357 = vmatpush2.msra.mxu0 0.0
    %8358 = vmatprep.subr.mxu0 0.0
    %8359 = vmatpush2.msra.mxu0 0.0
    %8360 = vmatprep.subr.mxu0 0.0
    %8361 = vmatpush2.msra.mxu0 0.0
    %8362 = vmatprep.subr.mxu0 0.0
    %8363 = vmatpush2.msra.mxu0 0.0
    %8364 = vmatprep.subr.mxu0 0.0
    %8365 = vmatpush2.msra.mxu0 0.0
    %8366 = vmatprep.subr.mxu0 0.0
    %8367 = vmatpush2.msra.mxu0 0.0
    %8368 = vmatprep.mubr.f32.mxu0 0.0
    %v8369 = vand.u32 %v7555, 4294901760
    %v8370 = vsub.f32 %v7555, %v8369
    %8371 = vmatmul.mubr.f32.gmra.mxu0 %v8370
    %v8372 = vpop.f32.mrf.mxu0
    %v8373 = vadd.f32 %v8285, %v8372
    %v8374 = vpop.f32.mrf.mxu0
    %8375 = vdwg.mxu0
    %8376 = vmatprep.subr.mxu0 0.0
    %8377 = vmatpush1.msra.mxu0 0.0
    %8378 = vmatprep.subr.mxu0 0.0
    %8379 = vmatpush1.msra.mxu0 0.0
    %8380 = vmatprep.subr.mxu0 0.0
    %8381 = vmatpush1.msra.mxu0 0.0
    %8382 = vmatprep.subr.mxu0 0.0
    %8383 = vmatpush1.msra.mxu0 0.0
    %8384 = vmatprep.subr.mxu0 0.0
    %8385 = vmatpush1.msra.mxu0 0.0
    %8386 = vmatprep.subr.mxu0 0.0
    %8387 = vmatpush1.msra.mxu0 0.0
    %8388 = vmatprep.subr.mxu0 0.0
    %8389 = vmatpush1.msra.mxu0 0.0
    %8390 = vmatprep.subr.mxu0 0.0
    %8391 = vmatpush1.msra.mxu0 0.0
    %8392 = vmatprep.subr.mxu0 0.0
    %v8393 = vand.u32 %v4445, 4294901760
    %8394 = vmatpush1.msra.mxu0 %v8393
    %8395 = vmatprep.subr.mxu0 0.0
    %v8396 = vand.u32 %v4444, 4294901760
    %8397 = vmatpush1.msra.mxu0 %v8396
    %8398 = vmatprep.subr.mxu0 0.0
    %v8399 = vand.u32 %v4443, 4294901760
    %8400 = vmatpush1.msra.mxu0 %v8399
    %8401 = vmatprep.subr.mxu0 0.0
    %v8402 = vand.u32 %v4442, 4294901760
    %8403 = vmatpush1.msra.mxu0 %v8402
    %8404 = vmatprep.subr.mxu0 0.0
    %v8405 = vand.u32 %v4441, 4294901760
    %8406 = vmatpush1.msra.mxu0 %v8405
    %8407 = vmatprep.subr.mxu0 0.0
    %v8408 = vand.u32 %v4440, 4294901760
    %8409 = vmatpush1.msra.mxu0 %v8408
    %8410 = vmatprep.subr.mxu0 0.0
    %v8411 = vand.u32 %v4439, 4294901760
    %8412 = vmatpush1.msra.mxu0 %v8411
    %8413 = vmatprep.subr.mxu0 0.0
    %v8414 = vand.u32 %v4438, 4294901760
    %8415 = vmatpush1.msra.mxu0 %v8414
    %8416 = vmatprep.subr.mxu0 0.0
    %8417 = vmatpush2.msra.mxu0 0.0
    %8418 = vmatprep.subr.mxu0 0.0
    %8419 = vmatpush2.msra.mxu0 0.0
    %8420 = vmatprep.subr.mxu0 0.0
    %8421 = vmatpush2.msra.mxu0 0.0
    %8422 = vmatprep.subr.mxu0 0.0
    %8423 = vmatpush2.msra.mxu0 0.0
    %8424 = vmatprep.subr.mxu0 0.0
    %8425 = vmatpush2.msra.mxu0 0.0
    %8426 = vmatprep.subr.mxu0 0.0
    %8427 = vmatpush2.msra.mxu0 0.0
    %8428 = vmatprep.subr.mxu0 0.0
    %8429 = vmatpush2.msra.mxu0 0.0
    %8430 = vmatprep.subr.mxu0 0.0
    %8431 = vmatpush2.msra.mxu0 0.0
    %8432 = vmatprep.subr.mxu0 0.0
    %8433 = vmatpush2.msra.mxu0 0.0
    %8434 = vmatprep.subr.mxu0 0.0
    %8435 = vmatpush2.msra.mxu0 0.0
    %8436 = vmatprep.subr.mxu0 0.0
    %8437 = vmatpush2.msra.mxu0 0.0
    %8438 = vmatprep.subr.mxu0 0.0
    %8439 = vmatpush2.msra.mxu0 0.0
    %8440 = vmatprep.subr.mxu0 0.0
    %8441 = vmatpush2.msra.mxu0 0.0
    %8442 = vmatprep.subr.mxu0 0.0
    %8443 = vmatpush2.msra.mxu0 0.0
    %8444 = vmatprep.subr.mxu0 0.0
    %8445 = vmatpush2.msra.mxu0 0.0
    %8446 = vmatprep.subr.mxu0 0.0
    %8447 = vmatpush2.msra.mxu0 0.0
    %8448 = vmatprep.mubr.f32.mxu0 0.0
    %v8449 = vand.u32 %v7555, 4294901760
    %v8450 = vsub.f32 %v7555, %v8449
    %v8451 = vand.u32 %v8450, 4294901760
    %8452 = vmatmul.mubr.f32.gmra.mxu0 %v8451
    %v8453 = vpop.f32.mrf.mxu0
    %v8454 = vadd.f32 %v8373, %v8453
    %v8455 = vpop.f32.mrf.mxu0
    %8456 = vdwg.mxu0
    %8457 = vmatprep.subr.mxu0 0.0
    %8458 = vmatpush1.msra.mxu0 0.0
    %8459 = vmatprep.subr.mxu0 0.0
    %8460 = vmatpush1.msra.mxu0 0.0
    %8461 = vmatprep.subr.mxu0 0.0
    %8462 = vmatpush1.msra.mxu0 0.0
    %8463 = vmatprep.subr.mxu0 0.0
    %8464 = vmatpush1.msra.mxu0 0.0
    %8465 = vmatprep.subr.mxu0 0.0
    %8466 = vmatpush1.msra.mxu0 0.0
    %8467 = vmatprep.subr.mxu0 0.0
    %8468 = vmatpush1.msra.mxu0 0.0
    %8469 = vmatprep.subr.mxu0 0.0
    %8470 = vmatpush1.msra.mxu0 0.0
    %8471 = vmatprep.subr.mxu0 0.0
    %8472 = vmatpush1.msra.mxu0 0.0
    %8473 = vmatprep.subr.mxu0 0.0
    %v8474 = vand.u32 %v4445, 4294901760
    %v8475 = vsub.f32 %v4445, %v8474
    %v8476 = vand.u32 %v8475, 4294901760
    %8477 = vmatpush1.msra.mxu0 %v8476
    %8478 = vmatprep.subr.mxu0 0.0
    %v8479 = vand.u32 %v4444, 4294901760
    %v8480 = vsub.f32 %v4444, %v8479
    %v8481 = vand.u32 %v8480, 4294901760
    %8482 = vmatpush1.msra.mxu0 %v8481
    %8483 = vmatprep.subr.mxu0 0.0
    %v8484 = vand.u32 %v4443, 4294901760
    %v8485 = vsub.f32 %v4443, %v8484
    %v8486 = vand.u32 %v8485, 4294901760
    %8487 = vmatpush1.msra.mxu0 %v8486
    %8488 = vmatprep.subr.mxu0 0.0
    %v8489 = vand.u32 %v4442, 4294901760
    %v8490 = vsub.f32 %v4442, %v8489
    %v8491 = vand.u32 %v8490, 4294901760
    %8492 = vmatpush1.msra.mxu0 %v8491
    %8493 = vmatprep.subr.mxu0 0.0
    %v8494 = vand.u32 %v4441, 4294901760
    %v8495 = vsub.f32 %v4441, %v8494
    %v8496 = vand.u32 %v8495, 4294901760
    %8497 = vmatpush1.msra.mxu0 %v8496
    %8498 = vmatprep.subr.mxu0 0.0
    %v8499 = vand.u32 %v4440, 4294901760
    %v8500 = vsub.f32 %v4440, %v8499
    %v8501 = vand.u32 %v8500, 4294901760
    %8502 = vmatpush1.msra.mxu0 %v8501
    %8503 = vmatprep.subr.mxu0 0.0
    %v8504 = vand.u32 %v4439, 4294901760
    %v8505 = vsub.f32 %v4439, %v8504
    %v8506 = vand.u32 %v8505, 4294901760
    %8507 = vmatpush1.msra.mxu0 %v8506
    %8508 = vmatprep.subr.mxu0 0.0
    %v8509 = vand.u32 %v4438, 4294901760
    %v8510 = vsub.f32 %v4438, %v8509
    %v8511 = vand.u32 %v8510, 4294901760
    %8512 = vmatpush1.msra.mxu0 %v8511
    %8513 = vmatprep.subr.mxu0 0.0
    %8514 = vmatpush2.msra.mxu0 0.0
    %8515 = vmatprep.subr.mxu0 0.0
    %8516 = vmatpush2.msra.mxu0 0.0
    %8517 = vmatprep.subr.mxu0 0.0
    %8518 = vmatpush2.msra.mxu0 0.0
    %8519 = vmatprep.subr.mxu0 0.0
    %8520 = vmatpush2.msra.mxu0 0.0
    %8521 = vmatprep.subr.mxu0 0.0
    %8522 = vmatpush2.msra.mxu0 0.0
    %8523 = vmatprep.subr.mxu0 0.0
    %8524 = vmatpush2.msra.mxu0 0.0
    %8525 = vmatprep.subr.mxu0 0.0
    %8526 = vmatpush2.msra.mxu0 0.0
    %8527 = vmatprep.subr.mxu0 0.0
    %8528 = vmatpush2.msra.mxu0 0.0
    %8529 = vmatprep.subr.mxu0 0.0
    %8530 = vmatpush2.msra.mxu0 0.0
    %8531 = vmatprep.subr.mxu0 0.0
    %8532 = vmatpush2.msra.mxu0 0.0
    %8533 = vmatprep.subr.mxu0 0.0
    %8534 = vmatpush2.msra.mxu0 0.0
    %8535 = vmatprep.subr.mxu0 0.0
    %8536 = vmatpush2.msra.mxu0 0.0
    %8537 = vmatprep.subr.mxu0 0.0
    %8538 = vmatpush2.msra.mxu0 0.0
    %8539 = vmatprep.subr.mxu0 0.0
    %8540 = vmatpush2.msra.mxu0 0.0
    %8541 = vmatprep.subr.mxu0 0.0
    %8542 = vmatpush2.msra.mxu0 0.0
    %8543 = vmatprep.subr.mxu0 0.0
    %8544 = vmatpush2.msra.mxu0 0.0
    %8545 = vmatprep.mubr.f32.mxu0 0.0
    %v8546 = vand.u32 %v7555, 4294901760
    %8547 = vmatmul.mubr.f32.gmra.mxu0 %v8546
    %v8548 = vpop.f32.mrf.mxu0
    %v8549 = vadd.f32 %v8454, %v8548
    %v8550 = vpop.f32.mrf.mxu0
    %8551 = vdwg.mxu0
    %8552 = vmatprep.subr.mxu0 0.0
    %8553 = vmatpush1.msra.mxu0 0.0
    %8554 = vmatprep.subr.mxu0 0.0
    %8555 = vmatpush1.msra.mxu0 0.0
    %8556 = vmatprep.subr.mxu0 0.0
    %8557 = vmatpush1.msra.mxu0 0.0
    %8558 = vmatprep.subr.mxu0 0.0
    %8559 = vmatpush1.msra.mxu0 0.0
    %8560 = vmatprep.subr.mxu0 0.0
    %8561 = vmatpush1.msra.mxu0 0.0
    %8562 = vmatprep.subr.mxu0 0.0
    %8563 = vmatpush1.msra.mxu0 0.0
    %8564 = vmatprep.subr.mxu0 0.0
    %8565 = vmatpush1.msra.mxu0 0.0
    %8566 = vmatprep.subr.mxu0 0.0
    %8567 = vmatpush1.msra.mxu0 0.0
    %8568 = vmatprep.subr.mxu0 0.0
    %v8569 = vand.u32 %v4445, 4294901760
    %8570 = vmatpush1.msra.mxu0 %v8569
    %8571 = vmatprep.subr.mxu0 0.0
    %v8572 = vand.u32 %v4444, 4294901760
    %8573 = vmatpush1.msra.mxu0 %v8572
    %8574 = vmatprep.subr.mxu0 0.0
    %v8575 = vand.u32 %v4443, 4294901760
    %8576 = vmatpush1.msra.mxu0 %v8575
    %8577 = vmatprep.subr.mxu0 0.0
    %v8578 = vand.u32 %v4442, 4294901760
    %8579 = vmatpush1.msra.mxu0 %v8578
    %8580 = vmatprep.subr.mxu0 0.0
    %v8581 = vand.u32 %v4441, 4294901760
    %8582 = vmatpush1.msra.mxu0 %v8581
    %8583 = vmatprep.subr.mxu0 0.0
    %v8584 = vand.u32 %v4440, 4294901760
    %8585 = vmatpush1.msra.mxu0 %v8584
    %8586 = vmatprep.subr.mxu0 0.0
    %v8587 = vand.u32 %v4439, 4294901760
    %8588 = vmatpush1.msra.mxu0 %v8587
    %8589 = vmatprep.subr.mxu0 0.0
    %v8590 = vand.u32 %v4438, 4294901760
    %8591 = vmatpush1.msra.mxu0 %v8590
    %8592 = vmatprep.subr.mxu0 0.0
    %8593 = vmatpush2.msra.mxu0 0.0
    %8594 = vmatprep.subr.mxu0 0.0
    %8595 = vmatpush2.msra.mxu0 0.0
    %8596 = vmatprep.subr.mxu0 0.0
    %8597 = vmatpush2.msra.mxu0 0.0
    %8598 = vmatprep.subr.mxu0 0.0
    %8599 = vmatpush2.msra.mxu0 0.0
    %8600 = vmatprep.subr.mxu0 0.0
    %8601 = vmatpush2.msra.mxu0 0.0
    %8602 = vmatprep.subr.mxu0 0.0
    %8603 = vmatpush2.msra.mxu0 0.0
    %8604 = vmatprep.subr.mxu0 0.0
    %8605 = vmatpush2.msra.mxu0 0.0
    %8606 = vmatprep.subr.mxu0 0.0
    %8607 = vmatpush2.msra.mxu0 0.0
    %8608 = vmatprep.subr.mxu0 0.0
    %8609 = vmatpush2.msra.mxu0 0.0
    %8610 = vmatprep.subr.mxu0 0.0
    %8611 = vmatpush2.msra.mxu0 0.0
    %8612 = vmatprep.subr.mxu0 0.0
    %8613 = vmatpush2.msra.mxu0 0.0
    %8614 = vmatprep.subr.mxu0 0.0
    %8615 = vmatpush2.msra.mxu0 0.0
    %8616 = vmatprep.subr.mxu0 0.0
    %8617 = vmatpush2.msra.mxu0 0.0
    %8618 = vmatprep.subr.mxu0 0.0
    %8619 = vmatpush2.msra.mxu0 0.0
    %8620 = vmatprep.subr.mxu0 0.0
    %8621 = vmatpush2.msra.mxu0 0.0
    %8622 = vmatprep.subr.mxu0 0.0
    %8623 = vmatpush2.msra.mxu0 0.0
    %8624 = vmatprep.mubr.f32.mxu0 0.0
    %v8625 = vand.u32 %v7555, 4294901760
    %8626 = vmatmul.mubr.f32.gmra.mxu0 %v8625
    %v8627 = vpop.f32.mrf.mxu0
    %v8628 = vadd.f32 %v8549, %v8627
    %v8629 = vpop.f32.mrf.mxu0
    %8630 = vdwg.mxu0
    %8631 = vrot.lane.b32.xlu0 %v7551, 4
    %v8632 = vpop.permute.xlu0 %8631
    %8635 = vrot.lane.b32.xlu0 %v8628, 68
    %v8636 = vpop.permute.xlu0 %8635
    %v8638 = vsel %vm46, %v8091, %v8632
    %v8639 = vsel %vm6531, %v8638, %v8636
    %v8640 = vsel %vm6531, %v8636, 0.0
    %v8643 = vcombine.low %v8639, %v8640
    %v8645 = vunpack.c.l.s4 1966171168
    %v8646 = vunpack.c.0.s8 %v8645
    %v8647 = vlaneseq
    %v8648 = vshrl.u32 %v8647, 7
    %v8649 = vsub.s32 %v8646, %v8648
    %v8650 = vrot.slane %v8643, %v8649
    %v8652 = vunpack.c.l.s4 1966171168
    %v8653 = vunpack.c.0.s8 %v8652
    %v8654 = vlaneseq
    %v8655 = vshrl.u32 %v8654, 7
    %v8656 = vsub.s32 %v8653, %v8655
    %v8657 = vrot.slane %v8650, %v8656
    %s8659 = scalar_lea.vmem [#allocation9], 1
    %8660 = vst.msk [vmem:[%s8659] ss:$2 sm:$0x3] %vm6555, %v8657
    // Predicated region
    $region18: #{tpu_custom_call.1} parent=1 // pred_check
      _
    $region19: #{tpu_custom_call.1} parent=1 // pred_check_branch
      %8662 = sbr.rel (0) target = $region21
    $region20: #{tpu_custom_call.1} parent=1 // pred_region
      %s8664 = ssub.s32 64, 64
      %8665 = vsyncadd [#allocation6], %s8664
      %s8667 = sshll.u32 [#allocation9], 4
      %s8668 = int_to_ptr.vmem [resolvable:$true] %s8667
      %8670 = dma.vmem_to_hbm [thread:$0]  %s8668, 64, %s2, [#allocation6]
    $region21: #{tpu_custom_call.1} parent=1 // pred_fallthru
      _
    // Predicated region
    $region22: #{tpu_custom_call.1} parent=1 // pred_check
      _
    $region23: #{tpu_custom_call.1} parent=1 // pred_check_branch
      %8672 = sbr.rel (0) target = $region25
    $region24: #{tpu_custom_call.1} parent=1 // pred_region
      %8673 = dma.done [#allocation6], 64
    $region25: #{tpu_custom_call.1} parent=1 // pred_fallthru
      _
    %8674 = vsyncpa [#allocation5], 1
    %8675 = vsyncpa [#allocation8], 1
    %8676 = vsyncpa [#allocation6], 1

</llo_original>
